<compile_context>
chip_gen: v5e
topology: v5e:2x2
jax: 0.10.0
libtpu: 0.0.40
codegen_flags: <defaults>
</compile_context>

<pallas_src>
import functools

import jax
import jax.numpy as jnp
from jax.experimental import pallas as pl
from jax.experimental.pallas import tpu as pltpu


def _round_up(n, m):
    return (n + m - 1) // m * m


def _vmem_capacity_bytes():
    """Physical VMEM of the local chip; conservative fallback = v7x (64 MiB)."""
    try:
        return int(pltpu.get_tpu_info().vmem_capacity_bytes)
    except Exception:
        return 64 << 20


# ---------------------------------------------------------------------------
# Fused kernel: whole MLP, grid over layer-4 output-feature tiles only.
# ---------------------------------------------------------------------------
def _fused_mlp_kernel(x_ref, w1_ref, b1_ref, w2_ref, b2_ref, w3_ref, b3_ref,
                      w4_ref, b4_ref, o_ref):
    # Layers 1-3 recomputed per output tile (tiny M => hides under the W4 DMA;
    # keeps the "parallel" grid axis megacore-safe on v7x).
    h = jnp.dot(x_ref[...], w1_ref[...], preferred_element_type=jnp.float32)
    h = jnp.maximum(h + b1_ref[...], 0.0)
    h = jnp.dot(h.astype(w2_ref.dtype), w2_ref[...],
                preferred_element_type=jnp.float32)
    h = jnp.maximum(h + b2_ref[...], 0.0)
    h = jnp.dot(h.astype(w3_ref.dtype), w3_ref[...],
                preferred_element_type=jnp.float32)
    h = jnp.maximum(h + b3_ref[...], 0.0)
    # Layer 4 (no activation, matching the PyTorch forward).
    out = jnp.dot(h.astype(w4_ref.dtype), w4_ref[...],
                  preferred_element_type=jnp.float32)
    out = out + b4_ref[...].astype(jnp.float32)
    o_ref[...] = out.astype(o_ref.dtype)


# ---------------------------------------------------------------------------
# Parameter init (matches contact_mlp_decoder.__init__ shapes/init).
# ---------------------------------------------------------------------------
def init_contact_mlp_decoder_params(key, dim_ft, dim_out):
    """Weights: kaiming_normal (fan_in, relu) => std = sqrt(2 / fan_in).
    Biases : PyTorch Linear default uniform(-1/sqrt(fan_in), 1/sqrt(fan_in)).
    Stored as (in_features, out_features) = PyTorch weight transposed."""
    dims = [dim_ft, 512, 1024, 2048, dim_out]
    params = []
    for i in range(4):
        fan_in, fan_out = dims[i], dims[i + 1]
        key, kw, kb = jax.random.split(key, 3)
        std = (2.0 / fan_in) ** 0.5
        w = std * jax.random.normal(kw, (fan_in, fan_out), dtype=jnp.float32)
        bound = 1.0 / (fan_in ** 0.5)
        b = jax.random.uniform(
            kb, (fan_out,), minval=-bound, maxval=bound, dtype=jnp.float32)
        params.append((w, b))
    return params


def prepare_contact_mlp_decoder_params(params, *, param_dtype=None,
                                       tn_max=None):
    """ONE-TIME prep (do not call in the hot loop):
      * optional dtype cast (e.g. bf16 weights: halves all weight HBM traffic,
        f32 accumulation and f32 output preserved),
      * pads layer-4 out-features once to a lane-dense multiple of the chosen
        tile width, so the per-call forward never touches jnp.pad,
      * reshapes biases to (1, n) row vectors for broadcast adds.
    Returns a dict consumed by contact_mlp_decoder_forward."""
    (w1, b1), (w2, b2), (w3, b3), (w4, b4) = params
    if param_dtype is not None:
        cast = lambda a: a.astype(param_dtype)
        w1, b1, w2, b2, w3, b3, w4, b4 = map(
            cast, (w1, b1, w2, b2, w3, b3, w4, b4))

    N = w4.shape[1]
    itemsize = jnp.dtype(w4.dtype).itemsize
    if tn_max is None:
        # f32 weight slabs at tn=2048 mean 2x16 MB double-buffered W4 tiles
        # (+ ~10.5 MB resident hidden weights): fine in 128 MiB VMEM
        # (v5e/v6e), too tight for v7x's 64 MiB -> stay at 1024 there.
        # Sub-4-byte weights always take the 2048-wide tile.
        if itemsize >= 4 and _vmem_capacity_bytes() < (96 << 20):
            tn_max = 1024
        else:
            tn_max = 2048
    # Lane-dense tile; for small dim_out shrink the tile (multiple of 128)
    # instead of over-padding. Default dim_out = 150**2 = 22500 -> n_pad=22528,
    # exactly 11 or 22 tiles.
    tn = min(tn_max, _round_up(N, 128))
    n_pad = _round_up(N, tn)
    if n_pad != N:
        w4 = jnp.pad(w4, ((0, 0), (0, n_pad - N)))
        b4 = jnp.pad(b4, (0, n_pad - N))

    return {
        "w1": w1, "b1": b1.reshape(1, -1),
        "w2": w2, "b2": b2.reshape(1, -1),
        "w3": w3, "b3": b3.reshape(1, -1),
        "w4": w4, "b4": b4.reshape(1, -1),
        "dim_out": N, "n_pad": n_pad, "tn": tn,
    }


# ---------------------------------------------------------------------------
# Forward (matches contact_mlp_decoder.forward): 3x (linear+ReLU) then linear.
# ---------------------------------------------------------------------------
def contact_mlp_decoder_forward(prepared, x):
    w1, b1 = prepared["w1"], prepared["b1"]
    w2, b2 = prepared["w2"], prepared["b2"]
    w3, b3 = prepared["w3"], prepared["b3"]
    w4, b4 = prepared["w4"], prepared["b4"]
    N, n_pad, tn = prepared["dim_out"], prepared["n_pad"], prepared["tn"]

    M, dim_ft = x.shape
    assert dim_ft == w1.shape[0]
    x = x.astype(w1.dtype)
    K4 = w4.shape[0]  # 2048

    grid = (n_pad // tn,)

    def _bytes(a):
        return int(a.size) * a.dtype.itemsize

    # Conservative scoped-VMEM budget: every operand double-buffered + slack.
    block_bytes = (_bytes(x) + _bytes(w1) + _bytes(b1) + _bytes(w2)
                   + _bytes(b2) + _bytes(w3) + _bytes(b3)
                   + K4 * tn * w4.dtype.itemsize + tn * b4.dtype.itemsize
                   + M * tn * 4)
    vmem_limit = int(min(2 * block_bytes + (8 << 20), 110 << 20))

    out = pl.pallas_call(
        _fused_mlp_kernel,
        out_shape=jax.ShapeDtypeStruct((M, n_pad), jnp.float32),
        grid=grid,
        in_specs=[
            pl.BlockSpec((M, dim_ft), lambda j: (0, 0)),   # x, resident
            pl.BlockSpec(w1.shape, lambda j: (0, 0)),      # W1, resident
            pl.BlockSpec(b1.shape, lambda j: (0, 0)),
            pl.BlockSpec(w2.shape, lambda j: (0, 0)),      # W2, resident
            pl.BlockSpec(b2.shape, lambda j: (0, 0)),
            pl.BlockSpec(w3.shape, lambda j: (0, 0)),      # W3, resident
            pl.BlockSpec(b3.shape, lambda j: (0, 0)),
            pl.BlockSpec((K4, tn), lambda j: (0, j)),      # W4 slab, streamed
            pl.BlockSpec((1, tn), lambda j: (0, j)),       # b4 slab
        ],
        out_specs=pl.BlockSpec((M, tn), lambda j: (0, j)),
        compiler_params=pltpu.CompilerParams(
            dimension_semantics=("parallel",),   # megacore-shard N on v7x
            vmem_limit_bytes=vmem_limit,
        ),
    )(x, w1, b1, w2, b2, w3, b3, w4, b4)

    return out if n_pad == N else out[:, :N]


if __name__ == "__main__":
    key = jax.random.PRNGKey(0)
    key, kx = jax.random.split(key)

    # Small shapes: batch=8, dim_ft=32. dim_out=300 is deliberately NOT a
    # multiple of 128 to exercise the (one-time) padding path the module
    # default dim_out = 150**2 = 22500 needs. Hidden dims 512/1024/2048 are
    # fixed by the module.
    batch, dim_ft, dim_out = 8, 32, 300

    raw_params = init_contact_mlp_decoder_params(key, dim_ft, dim_out)
    x = jax.random.normal(kx, (batch, dim_ft), dtype=jnp.float32)

    # Pure-JAX reference (f32).
    ref = x
    for i, (w, b) in enumerate(raw_params):
        ref = ref @ w + b
        if i < 3:
            ref = jnp.maximum(ref, 0.0)

    # f32 weight path (exact PyTorch semantics).
    prepared_f32 = prepare_contact_mlp_decoder_params(raw_params)
    out = jax.block_until_ready(contact_mlp_decoder_forward(prepared_f32, x))
    assert out.shape == (batch, dim_out)
    assert out.dtype == jnp.float32
    assert jnp.allclose(out, ref, atol=2e-3, rtol=2e-3)

    # bf16 weight path: halves every layer's HBM weight traffic; output stays
    # f32 (accumulation is f32 via preferred_element_type).
    prepared_bf16 = prepare_contact_mlp_decoder_params(
        raw_params, param_dtype=jnp.bfloat16)
    out_bf16 = jax.block_until_ready(
        contact_mlp_decoder_forward(prepared_bf16, x))
    assert out_bf16.shape == (batch, dim_out)
    assert out_bf16.dtype == jnp.float32
    assert jnp.allclose(out_bf16, ref, atol=1e-1, rtol=5e-2)

    print("KERNEL_OK")
</pallas_src>

<mosaic_0001>
module attributes {stable_mosaic.version = 11 : i64} {
  func.func @_fused_mlp_kernel(%arg0: i32, %arg1: memref<8x32xf32, #tpu.memory_space<vmem>>, %arg2: memref<32x512xf32, #tpu.memory_space<vmem>>, %arg3: memref<1x512xf32, #tpu.memory_space<vmem>>, %arg4: memref<512x1024xf32, #tpu.memory_space<vmem>>, %arg5: memref<1x1024xf32, #tpu.memory_space<vmem>>, %arg6: memref<1024x2048xf32, #tpu.memory_space<vmem>>, %arg7: memref<1x2048xf32, #tpu.memory_space<vmem>>, %arg8: memref<2048x384xf32, #tpu.memory_space<vmem>>, %arg9: memref<1x384xf32, #tpu.memory_space<vmem>>, %arg10: memref<8x384xf32, #tpu.memory_space<vmem>>) attributes {dimension_semantics = [#tpu.dimension_semantics<parallel>], iteration_bounds = array<i64: 1>, scalar_prefetch = 0 : i64, scratch_operands = 0 : i64, tpu.core_type = #tpu.core_type<tc>, window_params = [{pipeline_mode = #tpu.pipeline_mode<synchronous>, transform_indices = @transform_0, window_bounds = array<i64: 8, 32>}, {pipeline_mode = #tpu.pipeline_mode<synchronous>, transform_indices = @transform_1, window_bounds = array<i64: 32, 512>}, {pipeline_mode = #tpu.pipeline_mode<synchronous>, transform_indices = @transform_2, window_bounds = array<i64: 1, 512>}, {pipeline_mode = #tpu.pipeline_mode<synchronous>, transform_indices = @transform_3, window_bounds = array<i64: 512, 1024>}, {pipeline_mode = #tpu.pipeline_mode<synchronous>, transform_indices = @transform_4, window_bounds = array<i64: 1, 1024>}, {pipeline_mode = #tpu.pipeline_mode<synchronous>, transform_indices = @transform_5, window_bounds = array<i64: 1024, 2048>}, {pipeline_mode = #tpu.pipeline_mode<synchronous>, transform_indices = @transform_6, window_bounds = array<i64: 1, 2048>}, {transform_indices = @transform_7, window_bounds = array<i64: 2048, 384>}, {transform_indices = @transform_8, window_bounds = array<i64: 1, 384>}, {transform_indices = @transform_9, window_bounds = array<i64: 8, 384>}]} {
    %c0 = arith.constant 0 : index
    %c0_0 = arith.constant 0 : index
    %0 = vector.load %arg1[%c0, %c0_0] : memref<8x32xf32, #tpu.memory_space<vmem>>, vector<8x32xf32>
    %c0_1 = arith.constant 0 : index
    %c0_2 = arith.constant 0 : index
    %1 = vector.load %arg2[%c0_1, %c0_2] : memref<32x512xf32, #tpu.memory_space<vmem>>, vector<32x512xf32>
    %cst = arith.constant dense<0.000000e+00> : vector<8x512xf32>
    %2 = tpu.matmul %0, %1, %cst {dimension_numbers = #tpu.dot_dimension_numbers<[1], [0], [0], [1], [0, 0, 1, 1], [], []>} : vector<8x32xf32>, vector<32x512xf32>, vector<8x512xf32> -> vector<8x512xf32>
    %c0_3 = arith.constant 0 : index
    %c0_4 = arith.constant 0 : index
    %3 = vector.load %arg3[%c0_3, %c0_4] : memref<1x512xf32, #tpu.memory_space<vmem>>, vector<1x512xf32>
    %4 = vector.broadcast %3 : vector<1x512xf32> to vector<8x512xf32>
    %5 = arith.addf %2, %4 : vector<8x512xf32>
    %cst_5 = arith.constant 0.000000e+00 : f32
    %6 = vector.broadcast %cst_5 : f32 to vector<8x512xf32>
    %7 = arith.maximumf %5, %6 : vector<8x512xf32>
    %c0_6 = arith.constant 0 : index
    %c0_7 = arith.constant 0 : index
    %8 = vector.load %arg4[%c0_6, %c0_7] : memref<512x1024xf32, #tpu.memory_space<vmem>>, vector<512x1024xf32>
    %cst_8 = arith.constant dense<0.000000e+00> : vector<8x1024xf32>
    %9 = tpu.matmul %7, %8, %cst_8 {dimension_numbers = #tpu.dot_dimension_numbers<[1], [0], [0], [1], [0, 0, 1, 1], [], []>} : vector<8x512xf32>, vector<512x1024xf32>, vector<8x1024xf32> -> vector<8x1024xf32>
    %c0_9 = arith.constant 0 : index
    %c0_10 = arith.constant 0 : index
    %10 = vector.load %arg5[%c0_9, %c0_10] : memref<1x1024xf32, #tpu.memory_space<vmem>>, vector<1x1024xf32>
    %11 = vector.broadcast %10 : vector<1x1024xf32> to vector<8x1024xf32>
    %12 = arith.addf %9, %11 : vector<8x1024xf32>
    %cst_11 = arith.constant 0.000000e+00 : f32
    %13 = vector.broadcast %cst_11 : f32 to vector<8x1024xf32>
    %14 = arith.maximumf %12, %13 : vector<8x1024xf32>
    %c0_12 = arith.constant 0 : index
    %c0_13 = arith.constant 0 : index
    %15 = vector.load %arg6[%c0_12, %c0_13] : memref<1024x2048xf32, #tpu.memory_space<vmem>>, vector<1024x2048xf32>
    %cst_14 = arith.constant dense<0.000000e+00> : vector<8x2048xf32>
    %16 = tpu.matmul %14, %15, %cst_14 {dimension_numbers = #tpu.dot_dimension_numbers<[1], [0], [0], [1], [0, 0, 1, 1], [], []>} : vector<8x1024xf32>, vector<1024x2048xf32>, vector<8x2048xf32> -> vector<8x2048xf32>
    %c0_15 = arith.constant 0 : index
    %c0_16 = arith.constant 0 : index
    %17 = vector.load %arg7[%c0_15, %c0_16] : memref<1x2048xf32, #tpu.memory_space<vmem>>, vector<1x2048xf32>
    %18 = vector.broadcast %17 : vector<1x2048xf32> to vector<8x2048xf32>
    %19 = arith.addf %16, %18 : vector<8x2048xf32>
    %cst_17 = arith.constant 0.000000e+00 : f32
    %20 = vector.broadcast %cst_17 : f32 to vector<8x2048xf32>
    %21 = arith.maximumf %19, %20 : vector<8x2048xf32>
    %c0_18 = arith.constant 0 : index
    %c0_19 = arith.constant 0 : index
    %22 = vector.load %arg8[%c0_18, %c0_19] : memref<2048x384xf32, #tpu.memory_space<vmem>>, vector<2048x384xf32>
    %cst_20 = arith.constant dense<0.000000e+00> : vector<8x384xf32>
    %23 = tpu.matmul %21, %22, %cst_20 {dimension_numbers = #tpu.dot_dimension_numbers<[1], [0], [0], [1], [0, 0, 1, 1], [], []>} : vector<8x2048xf32>, vector<2048x384xf32>, vector<8x384xf32> -> vector<8x384xf32>
    %c0_21 = arith.constant 0 : index
    %c0_22 = arith.constant 0 : index
    %24 = vector.load %arg9[%c0_21, %c0_22] : memref<1x384xf32, #tpu.memory_space<vmem>>, vector<1x384xf32>
    %25 = vector.broadcast %24 : vector<1x384xf32> to vector<8x384xf32>
    %26 = arith.addf %23, %25 : vector<8x384xf32>
    %c0_23 = arith.constant 0 : index
    %c0_24 = arith.constant 0 : index
    %27 = vector.load %arg10[%c0_23, %c0_24] : memref<8x384xf32, #tpu.memory_space<vmem>>, vector<8x384xf32>
    tpu.vector_store %arg10[%c0_23, %c0_24], %26 {strides = array<i32>} : memref<8x384xf32, #tpu.memory_space<vmem>>, vector<8x384xf32>,
    return
  }
  func.func @transform_0(%arg0: i32) -> (i32, i32) {
    %c0_i32 = arith.constant 0 : i32
    %c0_i32_0 = arith.constant 0 : i32
    %c0_i32_1 = arith.constant 0 : i32
    return %c0_i32, %c0_i32_0 : i32, i32
  }
  func.func @transform_1(%arg0: i32) -> (i32, i32) {
    %c0_i32 = arith.constant 0 : i32
    %c0_i32_0 = arith.constant 0 : i32
    %c0_i32_1 = arith.constant 0 : i32
    return %c0_i32, %c0_i32_0 : i32, i32
  }
  func.func @transform_2(%arg0: i32) -> (i32, i32) {
    %c0_i32 = arith.constant 0 : i32
    %c0_i32_0 = arith.constant 0 : i32
    %c0_i32_1 = arith.constant 0 : i32
    return %c0_i32, %c0_i32_0 : i32, i32
  }
  func.func @transform_3(%arg0: i32) -> (i32, i32) {
    %c0_i32 = arith.constant 0 : i32
    %c0_i32_0 = arith.constant 0 : i32
    %c0_i32_1 = arith.constant 0 : i32
    return %c0_i32, %c0_i32_0 : i32, i32
  }
  func.func @transform_4(%arg0: i32) -> (i32, i32) {
    %c0_i32 = arith.constant 0 : i32
    %c0_i32_0 = arith.constant 0 : i32
    %c0_i32_1 = arith.constant 0 : i32
    return %c0_i32, %c0_i32_0 : i32, i32
  }
  func.func @transform_5(%arg0: i32) -> (i32, i32) {
    %c0_i32 = arith.constant 0 : i32
    %c0_i32_0 = arith.constant 0 : i32
    %c0_i32_1 = arith.constant 0 : i32
    return %c0_i32, %c0_i32_0 : i32, i32
  }
  func.func @transform_6(%arg0: i32) -> (i32, i32) {
    %c0_i32 = arith.constant 0 : i32
    %c0_i32_0 = arith.constant 0 : i32
    %c0_i32_1 = arith.constant 0 : i32
    return %c0_i32, %c0_i32_0 : i32, i32
  }
  func.func @transform_7(%arg0: i32) -> (i32, i32) {
    %c0_i32 = arith.constant 0 : i32
    %c0_i32_0 = arith.constant 0 : i32
    return %c0_i32, %arg0 : i32, i32
  }
  func.func @transform_8(%arg0: i32) -> (i32, i32) {
    %c0_i32 = arith.constant 0 : i32
    %c0_i32_0 = arith.constant 0 : i32
    return %c0_i32, %arg0 : i32, i32
  }
  func.func @transform_9(%arg0: i32) -> (i32, i32) {
    %c0_i32 = arith.constant 0 : i32
    %c0_i32_0 = arith.constant 0 : i32
    return %c0_i32, %arg0 : i32, i32
  }
}

</mosaic_0001>

<llo_original>
// kernel: tpu_custom_call.1
$region0: #{tpu_custom_call.1}
  #allocation0 [shape = 'u32[]', space=smem, size = 0x4, offset = 0x4, fixed_abs, tag = 'smem constant byte address 0x4 - core index']
  #allocation1 [shape = 'u32[72,128]{1,0:T(1,128)}', space=vmem, size = 0x9000, scoped, tag = 'internal scratch']
  %s0 = inlined_call_operand.hbm [shape: f32[8,32], index: 0, kind: input, shape index: {}]
  %s1 = inlined_call_operand.hbm [shape: f32[32,512], index: 1, kind: input, shape index: {}]
  %s2 = inlined_call_operand.hbm [shape: f32[1,512], index: 2, kind: input, shape index: {}]
  %s3 = inlined_call_operand.hbm [shape: f32[512,1024], index: 3, kind: input, shape index: {}]
  %s4 = inlined_call_operand.hbm [shape: f32[1,1024], index: 4, kind: input, shape index: {}]
  %s5 = inlined_call_operand.hbm [shape: f32[1024,2048], index: 5, kind: input, shape index: {}]
  %s6 = inlined_call_operand.hbm [shape: f32[1,2048], index: 6, kind: input, shape index: {}]
  %s7 = inlined_call_operand.hbm [shape: f32[2048,384], index: 7, kind: input, shape index: {}]
  %s8 = inlined_call_operand.hbm [shape: f32[1,384], index: 8, kind: input, shape index: {}]
  %s9 = inlined_call_operand.hbm [shape: f32[8,384], index: 9, kind: output, shape index: {}]
  %s10 = sld [smem:[#allocation0]]
  $region82: #{tpu_custom_call.1} parent=0
    _
  %s12 = ssub.s32 1, %s10
  %s13 = scalar_select 0, %s12, %s10
  $region1: #{tpu_custom_call.1} parent=0
    #allocation2 [shape = 'u8[4096]{0}', space=vmem, size = 0x1000, scoped, tag = 'input window, operand 0, single buffered']
    #allocation3 [shape = 's32[1]{0}', space=sflag, size = 0x4, scoped, tag = 'scoped memory for tpu_custom_call.1']
    #allocation4 [shape = 's32[1]{0}', space=sflag, size = 0x4, scoped, tag = 'scoped memory for tpu_custom_call.1']
    #allocation5 [shape = 'u8[65536]{0}', space=vmem, size = 0x10000, scoped, tag = 'input window, operand 1, single buffered']
    #allocation6 [shape = 's32[1]{0}', space=sflag, size = 0x4, scoped, tag = 'scoped memory for tpu_custom_call.1']
    #allocation7 [shape = 'u8[2048]{0}', space=vmem, size = 0x800, scoped, tag = 'input window, operand 2, single buffered']
    #allocation8 [shape = 'u8[2097152]{0}', space=vmem, size = 0x200000, scoped, tag = 'input window, operand 3, single buffered']
    #allocation9 [shape = 's32[1]{0}', space=sflag, size = 0x4, scoped, tag = 'scoped memory for tpu_custom_call.1']
    #allocation10 [shape = 'u8[4096]{0}', space=vmem, size = 0x1000, scoped, tag = 'input window, operand 4, single buffered']
    #allocation11 [shape = 'u8[8388608]{0}', space=vmem, size = 0x800000, scoped, tag = 'input window, operand 5, single buffered']
    #allocation12 [shape = 's32[1]{0}', space=sflag, size = 0x4, scoped, tag = 'scoped memory for tpu_custom_call.1']
    #allocation13 [shape = 'u8[8192]{0}', space=vmem, size = 0x2000, scoped, tag = 'input window, operand 6, single buffered']
    #allocation14 [shape = 'u8[3145728]{0}', space=vmem, size = 0x300000, scoped, tag = 'input window, operand 7, single buffered']
    #allocation15 [shape = 's32[1]{0}', space=sflag, size = 0x4, scoped, tag = 'scoped memory for tpu_custom_call.1']
    #allocation16 [shape = 'u8[1536]{0}', space=vmem, size = 0x800, scoped, tag = 'input window, operand 8, single buffered']
    #allocation17 [shape = 'u8[12288]{0}', space=vmem, size = 0x3000, scoped, tag = 'output window, operand 0, single buffered']
    %14 = vsyncpa [#allocation3], 0
    %15 = vsyncpa [#allocation6], 0
    %16 = vsyncpa [#allocation9], 0
    %17 = vsyncpa [#allocation12], 0
    %18 = vsyncpa [#allocation15], 0
    %19 = vsyncpa [#allocation4], 0
    // Predicated region
    $region2: #{tpu_custom_call.1} parent=1 // pred_check
      _
    $region3: #{tpu_custom_call.1} parent=1 // pred_check_branch
      %21 = sbr.rel (0) target = $region5
    $region4: #{tpu_custom_call.1} parent=1 // pred_region
      %23 = vsyncadd [#allocation3], 0
      %s25 = sshll.u32 %s0, 4
      %s26 = int_to_ptr.hbm [resolvable:$true] %s25
      %s27 = sshll.u32 [#allocation2], 4
      %s28 = int_to_ptr.vmem [resolvable:$true] %s27
      %30 = dma.hbm_to_vmem [thread:$0]  %s26, 128, %s28, [#allocation3]
    $region5: #{tpu_custom_call.1} parent=1 // pred_fallthru
      _
    // Predicated region
    $region6: #{tpu_custom_call.1} parent=1 // pred_check
      _
    $region7: #{tpu_custom_call.1} parent=1 // pred_check_branch
      %32 = sbr.rel (0) target = $region9
    $region8: #{tpu_custom_call.1} parent=1 // pred_region
      %34 = vsyncadd [#allocation6], 0
      %s35 = sshll.u32 %s1, 4
      %s36 = int_to_ptr.hbm [resolvable:$true] %s35
      %s37 = sshll.u32 [#allocation5], 4
      %s38 = int_to_ptr.vmem [resolvable:$true] %s37
      %43 = dma.hbm_to_vmem [thread:$0]  %s36, 2048, %s38, [#allocation6], 512, 512, 32
    $region9: #{tpu_custom_call.1} parent=1 // pred_fallthru
      _
    // Predicated region
    $region10: #{tpu_custom_call.1} parent=1 // pred_check
      _
    $region11: #{tpu_custom_call.1} parent=1 // pred_check_branch
      %45 = sbr.rel (0) target = $region13
    $region12: #{tpu_custom_call.1} parent=1 // pred_region
      %47 = vsyncadd [#allocation6], 0
      %s49 = sshll.u32 %s2, 4
      %s50 = int_to_ptr.hbm [resolvable:$true] %s49
      %s51 = sshll.u32 [#allocation7], 4
      %s52 = int_to_ptr.vmem [resolvable:$true] %s51
      %54 = dma.hbm_to_vmem [thread:$0]  %s50, 64, %s52, [#allocation6]
    $region13: #{tpu_custom_call.1} parent=1 // pred_fallthru
      _
    // Predicated region
    $region14: #{tpu_custom_call.1} parent=1 // pred_check
      _
    $region15: #{tpu_custom_call.1} parent=1 // pred_check_branch
      %56 = sbr.rel (0) target = $region17
    $region16: #{tpu_custom_call.1} parent=1 // pred_region
      %58 = vsyncadd [#allocation9], 0
      %s59 = sshll.u32 %s3, 4
      %s60 = int_to_ptr.hbm [resolvable:$true] %s59
      %s61 = sshll.u32 [#allocation8], 4
      %s62 = int_to_ptr.vmem [resolvable:$true] %s61
      %67 = dma.hbm_to_vmem [thread:$0]  %s60, 65536, %s62, [#allocation9], 1024, 1024, 64
    $region17: #{tpu_custom_call.1} parent=1 // pred_fallthru
      _
    // Predicated region
    $region18: #{tpu_custom_call.1} parent=1 // pred_check
      _
    $region19: #{tpu_custom_call.1} parent=1 // pred_check_branch
      %69 = sbr.rel (0) target = $region21
    $region20: #{tpu_custom_call.1} parent=1 // pred_region
      %71 = vsyncadd [#allocation9], 0
      %s73 = sshll.u32 %s4, 4
      %s74 = int_to_ptr.hbm [resolvable:$true] %s73
      %s75 = sshll.u32 [#allocation10], 4
      %s76 = int_to_ptr.vmem [resolvable:$true] %s75
      %78 = dma.hbm_to_vmem [thread:$0]  %s74, 128, %s76, [#allocation9]
    $region21: #{tpu_custom_call.1} parent=1 // pred_fallthru
      _
    // Predicated region
    $region22: #{tpu_custom_call.1} parent=1 // pred_check
      _
    $region23: #{tpu_custom_call.1} parent=1 // pred_check_branch
      %80 = sbr.rel (0) target = $region25
    $region24: #{tpu_custom_call.1} parent=1 // pred_region
      %82 = vsyncadd [#allocation12], 0
      %s83 = sshll.u32 %s5, 4
      %s84 = int_to_ptr.hbm [resolvable:$true] %s83
      %s85 = sshll.u32 [#allocation11], 4
      %s86 = int_to_ptr.vmem [resolvable:$true] %s85
      %91 = dma.hbm_to_vmem [thread:$0]  %s84, 262144, %s86, [#allocation12], 2048, 2048, 128
    $region25: #{tpu_custom_call.1} parent=1 // pred_fallthru
      _
    // Predicated region
    $region26: #{tpu_custom_call.1} parent=1 // pred_check
      _
    $region27: #{tpu_custom_call.1} parent=1 // pred_check_branch
      %93 = sbr.rel (0) target = $region29
    $region28: #{tpu_custom_call.1} parent=1 // pred_region
      %95 = vsyncadd [#allocation12], 0
      %s97 = sshll.u32 %s6, 4
      %s98 = int_to_ptr.hbm [resolvable:$true] %s97
      %s99 = sshll.u32 [#allocation13], 4
      %s100 = int_to_ptr.vmem [resolvable:$true] %s99
      %102 = dma.hbm_to_vmem [thread:$0]  %s98, 256, %s100, [#allocation12]
    $region29: #{tpu_custom_call.1} parent=1 // pred_fallthru
      _
    // Predicated region
    $region30: #{tpu_custom_call.1} parent=1 // pred_check
      _
    $region31: #{tpu_custom_call.1} parent=1 // pred_check_branch
      %104 = sbr.rel (0) target = $region33
    $region32: #{tpu_custom_call.1} parent=1 // pred_region
      %106 = vsyncadd [#allocation15], 0
      %s107 = sshll.u32 %s7, 4
      %s108 = int_to_ptr.hbm [resolvable:$true] %s107
      %s109 = sshll.u32 [#allocation14], 4
      %s110 = int_to_ptr.vmem [resolvable:$true] %s109
      %115 = dma.hbm_to_vmem [thread:$0]  %s108, 98304, %s110, [#allocation15], 384, 384, 24
    $region33: #{tpu_custom_call.1} parent=1 // pred_fallthru
      _
    // Predicated region
    $region34: #{tpu_custom_call.1} parent=1 // pred_check
      _
    $region35: #{tpu_custom_call.1} parent=1 // pred_check_branch
      %117 = sbr.rel (0) target = $region37
    $region36: #{tpu_custom_call.1} parent=1 // pred_region
      %119 = vsyncadd [#allocation15], 0
      %s121 = sshll.u32 %s8, 4
      %s122 = int_to_ptr.hbm [resolvable:$true] %s121
      %s123 = sshll.u32 [#allocation16], 4
      %s124 = int_to_ptr.vmem [resolvable:$true] %s123
      %126 = dma.hbm_to_vmem [thread:$0]  %s122, 48, %s124, [#allocation15]
    $region37: #{tpu_custom_call.1} parent=1 // pred_fallthru
      _
    // Predicated region
    $region38: #{tpu_custom_call.1} parent=1 // pred_check
      _
    $region39: #{tpu_custom_call.1} parent=1 // pred_check_branch
      %128 = sbr.rel (0) target = $region41
    $region40: #{tpu_custom_call.1} parent=1 // pred_region
      %130 = dma.done [#allocation3], 128
    $region41: #{tpu_custom_call.1} parent=1 // pred_fallthru
      _
    // Predicated region
    $region42: #{tpu_custom_call.1} parent=1 // pred_check
      _
    $region43: #{tpu_custom_call.1} parent=1 // pred_check_branch
      %132 = sbr.rel (0) target = $region45
    $region44: #{tpu_custom_call.1} parent=1 // pred_region
      %134 = dma.done [#allocation6], 2048
    $region45: #{tpu_custom_call.1} parent=1 // pred_fallthru
      _
    // Predicated region
    $region46: #{tpu_custom_call.1} parent=1 // pred_check
      _
    $region47: #{tpu_custom_call.1} parent=1 // pred_check_branch
      %136 = sbr.rel (0) target = $region49
    $region48: #{tpu_custom_call.1} parent=1 // pred_region
      %138 = dma.done [#allocation6], 64
    $region49: #{tpu_custom_call.1} parent=1 // pred_fallthru
      _
    // Predicated region
    $region50: #{tpu_custom_call.1} parent=1 // pred_check
      _
    $region51: #{tpu_custom_call.1} parent=1 // pred_check_branch
      %140 = sbr.rel (0) target = $region53
    $region52: #{tpu_custom_call.1} parent=1 // pred_region
      %142 = dma.done [#allocation9], 65536
    $region53: #{tpu_custom_call.1} parent=1 // pred_fallthru
      _
    // Predicated region
    $region54: #{tpu_custom_call.1} parent=1 // pred_check
      _
    $region55: #{tpu_custom_call.1} parent=1 // pred_check_branch
      %144 = sbr.rel (0) target = $region57
    $region56: #{tpu_custom_call.1} parent=1 // pred_region
      %146 = dma.done [#allocation9], 128
    $region57: #{tpu_custom_call.1} parent=1 // pred_fallthru
      _
    // Predicated region
    $region58: #{tpu_custom_call.1} parent=1 // pred_check
      _
    $region59: #{tpu_custom_call.1} parent=1 // pred_check_branch
      %148 = sbr.rel (0) target = $region61
    $region60: #{tpu_custom_call.1} parent=1 // pred_region
      %150 = dma.done [#allocation12], 262144
    $region61: #{tpu_custom_call.1} parent=1 // pred_fallthru
      _
    // Predicated region
    $region62: #{tpu_custom_call.1} parent=1 // pred_check
      _
    $region63: #{tpu_custom_call.1} parent=1 // pred_check_branch
      %152 = sbr.rel (0) target = $region65
    $region64: #{tpu_custom_call.1} parent=1 // pred_region
      %154 = dma.done [#allocation12], 256
    $region65: #{tpu_custom_call.1} parent=1 // pred_fallthru
      _
    // Predicated region
    $region66: #{tpu_custom_call.1} parent=1 // pred_check
      _
    $region67: #{tpu_custom_call.1} parent=1 // pred_check_branch
      %156 = sbr.rel (0) target = $region69
    $region68: #{tpu_custom_call.1} parent=1 // pred_region
      %158 = dma.done [#allocation15], 98304
    $region69: #{tpu_custom_call.1} parent=1 // pred_fallthru
      _
    // Predicated region
    $region70: #{tpu_custom_call.1} parent=1 // pred_check
      _
    $region71: #{tpu_custom_call.1} parent=1 // pred_check_branch
      %160 = sbr.rel (0) target = $region73
    $region72: #{tpu_custom_call.1} parent=1 // pred_region
      %162 = dma.done [#allocation15], 48
    $region73: #{tpu_custom_call.1} parent=1 // pred_fallthru
      _
    %v163 = vld [vmem:[#allocation2] sm:$0xff]
    %v164 = vld [vmem:[#allocation5] sm:$0xff]
    %v165 = vld [vmem:[#allocation5 + $0x8] sm:$0xff]
    %v166 = vld [vmem:[#allocation5 + $0x10] sm:$0xff]
    %v167 = vld [vmem:[#allocation5 + $0x18] sm:$0xff]
    %v168 = vld [vmem:[#allocation5 + $0x20] sm:$0xff]
    %v169 = vld [vmem:[#allocation5 + $0x28] sm:$0xff]
    %v170 = vld [vmem:[#allocation5 + $0x30] sm:$0xff]
    %v171 = vld [vmem:[#allocation5 + $0x38] sm:$0xff]
    %v172 = vld [vmem:[#allocation5 + $0x40] sm:$0xff]
    %v173 = vld [vmem:[#allocation5 + $0x48] sm:$0xff]
    %v174 = vld [vmem:[#allocation5 + $0x50] sm:$0xff]
    %v175 = vld [vmem:[#allocation5 + $0x58] sm:$0xff]
    %v176 = vld [vmem:[#allocation5 + $0x60] sm:$0xff]
    %v177 = vld [vmem:[#allocation5 + $0x68] sm:$0xff]
    %v178 = vld [vmem:[#allocation5 + $0x70] sm:$0xff]
    %v179 = vld [vmem:[#allocation5 + $0x78] sm:$0xff]
    %v180 = vld [vmem:[#allocation7] sm:$0xf]
    %v182 = vperm.slane %v180, 0
    %v183 = vperm.slane %v180, 1
    %v184 = vperm.slane %v180, 2
    %v185 = vperm.slane %v180, 3
    %vm190 = vcmask 261120
    %v192 = vsel %vm190, %v163, 0
    %194 = vmatpush.msra.mxu0 0.0
    %195 = vmatpush.msra.mxu0 0.0
    %196 = vmatpush.msra.mxu0 0.0
    %197 = vmatpush.msra.mxu0 0.0
    %198 = vmatpush.msra.mxu0 0.0
    %199 = vmatpush.msra.mxu0 0.0
    %200 = vmatpush.msra.mxu0 0.0
    %201 = vmatpush.msra.mxu0 0.0
    %202 = vmatpush.msra.mxu0 0.0
    %203 = vmatpush.msra.mxu0 0.0
    %204 = vmatpush.msra.mxu0 0.0
    %205 = vmatpush.msra.mxu0 0.0
    %206 = vmatpush.msra.mxu0 %v176
    %207 = vmatpush.msra.mxu0 %v172
    %208 = vmatpush.msra.mxu0 %v168
    %209 = vmatpush.msra.mxu0 %v164
    %210 = vmatmul.f32.gmra.mxu0 %v192
    %v211 = vpop.f32.mrf.mxu0
    %v212 = vadd.f32 %v182, %v211
    %213 = vdwg.mxu0
    %214 = vmatpush.msra.mxu0 0.0
    %215 = vmatpush.msra.mxu0 0.0
    %216 = vmatpush.msra.mxu0 0.0
    %217 = vmatpush.msra.mxu0 0.0
    %218 = vmatpush.msra.mxu0 0.0
    %219 = vmatpush.msra.mxu0 0.0
    %220 = vmatpush.msra.mxu0 0.0
    %221 = vmatpush.msra.mxu0 0.0
    %222 = vmatpush.msra.mxu0 0.0
    %223 = vmatpush.msra.mxu0 0.0
    %224 = vmatpush.msra.mxu0 0.0
    %225 = vmatpush.msra.mxu0 0.0
    %226 = vmatpush.msra.mxu0 %v177
    %227 = vmatpush.msra.mxu0 %v173
    %228 = vmatpush.msra.mxu0 %v169
    %229 = vmatpush.msra.mxu0 %v165
    %230 = vmatmul.f32.gmra.mxu0 %v192
    %v231 = vpop.f32.mrf.mxu0
    %v232 = vadd.f32 %v183, %v231
    %233 = vdwg.mxu0
    %234 = vmatpush.msra.mxu0 0.0
    %235 = vmatpush.msra.mxu0 0.0
    %236 = vmatpush.msra.mxu0 0.0
    %237 = vmatpush.msra.mxu0 0.0
    %238 = vmatpush.msra.mxu0 0.0
    %239 = vmatpush.msra.mxu0 0.0
    %240 = vmatpush.msra.mxu0 0.0
    %241 = vmatpush.msra.mxu0 0.0
    %242 = vmatpush.msra.mxu0 0.0
    %243 = vmatpush.msra.mxu0 0.0
    %244 = vmatpush.msra.mxu0 0.0
    %245 = vmatpush.msra.mxu0 0.0
    %246 = vmatpush.msra.mxu0 %v178
    %247 = vmatpush.msra.mxu0 %v174
    %248 = vmatpush.msra.mxu0 %v170
    %249 = vmatpush.msra.mxu0 %v166
    %250 = vmatmul.f32.gmra.mxu0 %v192
    %v251 = vpop.f32.mrf.mxu0
    %v252 = vadd.f32 %v184, %v251
    %253 = vdwg.mxu0
    %254 = vmatpush.msra.mxu0 0.0
    %255 = vmatpush.msra.mxu0 0.0
    %256 = vmatpush.msra.mxu0 0.0
    %257 = vmatpush.msra.mxu0 0.0
    %258 = vmatpush.msra.mxu0 0.0
    %259 = vmatpush.msra.mxu0 0.0
    %260 = vmatpush.msra.mxu0 0.0
    %261 = vmatpush.msra.mxu0 0.0
    %262 = vmatpush.msra.mxu0 0.0
    %263 = vmatpush.msra.mxu0 0.0
    %264 = vmatpush.msra.mxu0 0.0
    %265 = vmatpush.msra.mxu0 0.0
    %266 = vmatpush.msra.mxu0 %v179
    %267 = vmatpush.msra.mxu0 %v175
    %268 = vmatpush.msra.mxu0 %v171
    %269 = vmatpush.msra.mxu0 %v167
    %270 = vmatmul.f32.gmra.mxu0 %v192
    %v271 = vpop.f32.mrf.mxu0
    %v272 = vadd.f32 %v185, %v271
    %273 = vdwg.mxu0
    %v274 = vmax.f32 %v212, 0.0
    %v275 = vmax.f32 %v232, 0.0
    %v276 = vmax.f32 %v252, 0.0
    %v277 = vmax.f32 %v272, 0.0
    %v278 = vld [vmem:[#allocation8] sm:$0xff]
    %v279 = vld [vmem:[#allocation8 + $0x8] sm:$0xff]
    %v280 = vld [vmem:[#allocation8 + $0x10] sm:$0xff]
    %v281 = vld [vmem:[#allocation8 + $0x18] sm:$0xff]
    %v282 = vld [vmem:[#allocation8 + $0x20] sm:$0xff]
    %v283 = vld [vmem:[#allocation8 + $0x28] sm:$0xff]
    %v284 = vld [vmem:[#allocation8 + $0x30] sm:$0xff]
    %v285 = vld [vmem:[#allocation8 + $0x38] sm:$0xff]
    %v286 = vld [vmem:[#allocation8 + $0x40] sm:$0xff]
    %v287 = vld [vmem:[#allocation8 + $0x48] sm:$0xff]
    %v288 = vld [vmem:[#allocation8 + $0x50] sm:$0xff]
    %v289 = vld [vmem:[#allocation8 + $0x58] sm:$0xff]
    %v290 = vld [vmem:[#allocation8 + $0x60] sm:$0xff]
    %v291 = vld [vmem:[#allocation8 + $0x68] sm:$0xff]
    %v292 = vld [vmem:[#allocation8 + $0x70] sm:$0xff]
    %v293 = vld [vmem:[#allocation8 + $0x78] sm:$0xff]
    %v294 = vld [vmem:[#allocation8 + $0x80] sm:$0xff]
    %v295 = vld [vmem:[#allocation8 + $0x88] sm:$0xff]
    %v296 = vld [vmem:[#allocation8 + $0x90] sm:$0xff]
    %v297 = vld [vmem:[#allocation8 + $0x98] sm:$0xff]
    %v298 = vld [vmem:[#allocation8 + $0xa0] sm:$0xff]
    %v299 = vld [vmem:[#allocation8 + $0xa8] sm:$0xff]
    %v300 = vld [vmem:[#allocation8 + $0xb0] sm:$0xff]
    %v301 = vld [vmem:[#allocation8 + $0xb8] sm:$0xff]
    %v302 = vld [vmem:[#allocation8 + $0xc0] sm:$0xff]
    %v303 = vld [vmem:[#allocation8 + $0xc8] sm:$0xff]
    %v304 = vld [vmem:[#allocation8 + $0xd0] sm:$0xff]
    %v305 = vld [vmem:[#allocation8 + $0xd8] sm:$0xff]
    %v306 = vld [vmem:[#allocation8 + $0xe0] sm:$0xff]
    %v307 = vld [vmem:[#allocation8 + $0xe8] sm:$0xff]
    %v308 = vld [vmem:[#allocation8 + $0xf0] sm:$0xff]
    %v309 = vld [vmem:[#allocation8 + $0xf8] sm:$0xff]
    %v310 = vld [vmem:[#allocation8 + $0x100] sm:$0xff]
    %v311 = vld [vmem:[#allocation8 + $0x108] sm:$0xff]
    %v312 = vld [vmem:[#allocation8 + $0x110] sm:$0xff]
    %v313 = vld [vmem:[#allocation8 + $0x118] sm:$0xff]
    %v314 = vld [vmem:[#allocation8 + $0x120] sm:$0xff]
    %v315 = vld [vmem:[#allocation8 + $0x128] sm:$0xff]
    %v316 = vld [vmem:[#allocation8 + $0x130] sm:$0xff]
    %v317 = vld [vmem:[#allocation8 + $0x138] sm:$0xff]
    %v318 = vld [vmem:[#allocation8 + $0x140] sm:$0xff]
    %v319 = vld [vmem:[#allocation8 + $0x148] sm:$0xff]
    %v320 = vld [vmem:[#allocation8 + $0x150] sm:$0xff]
    %v321 = vld [vmem:[#allocation8 + $0x158] sm:$0xff]
    %v322 = vld [vmem:[#allocation8 + $0x160] sm:$0xff]
    %v323 = vld [vmem:[#allocation8 + $0x168] sm:$0xff]
    %v324 = vld [vmem:[#allocation8 + $0x170] sm:$0xff]
    %v325 = vld [vmem:[#allocation8 + $0x178] sm:$0xff]
    %v326 = vld [vmem:[#allocation8 + $0x180] sm:$0xff]
    %v327 = vld [vmem:[#allocation8 + $0x188] sm:$0xff]
    %v328 = vld [vmem:[#allocation8 + $0x190] sm:$0xff]
    %v329 = vld [vmem:[#allocation8 + $0x198] sm:$0xff]
    %v330 = vld [vmem:[#allocation8 + $0x1a0] sm:$0xff]
    %v331 = vld [vmem:[#allocation8 + $0x1a8] sm:$0xff]
    %v332 = vld [vmem:[#allocation8 + $0x1b0] sm:$0xff]
    %v333 = vld [vmem:[#allocation8 + $0x1b8] sm:$0xff]
    %v334 = vld [vmem:[#allocation8 + $0x1c0] sm:$0xff]
    %v335 = vld [vmem:[#allocation8 + $0x1c8] sm:$0xff]
    %v336 = vld [vmem:[#allocation8 + $0x1d0] sm:$0xff]
    %v337 = vld [vmem:[#allocation8 + $0x1d8] sm:$0xff]
    %v338 = vld [vmem:[#allocation8 + $0x1e0] sm:$0xff]
    %v339 = vld [vmem:[#allocation8 + $0x1e8] sm:$0xff]
    %v340 = vld [vmem:[#allocation8 + $0x1f0] sm:$0xff]
    %v341 = vld [vmem:[#allocation8 + $0x1f8] sm:$0xff]
    %v342 = vld [vmem:[#allocation8 + $0x200] sm:$0xff]
    %v343 = vld [vmem:[#allocation8 + $0x208] sm:$0xff]
    %v344 = vld [vmem:[#allocation8 + $0x210] sm:$0xff]
    %v345 = vld [vmem:[#allocation8 + $0x218] sm:$0xff]
    %v346 = vld [vmem:[#allocation8 + $0x220] sm:$0xff]
    %v347 = vld [vmem:[#allocation8 + $0x228] sm:$0xff]
    %v348 = vld [vmem:[#allocation8 + $0x230] sm:$0xff]
    %v349 = vld [vmem:[#allocation8 + $0x238] sm:$0xff]
    %v350 = vld [vmem:[#allocation8 + $0x240] sm:$0xff]
    %v351 = vld [vmem:[#allocation8 + $0x248] sm:$0xff]
    %v352 = vld [vmem:[#allocation8 + $0x250] sm:$0xff]
    %v353 = vld [vmem:[#allocation8 + $0x258] sm:$0xff]
    %v354 = vld [vmem:[#allocation8 + $0x260] sm:$0xff]
    %v355 = vld [vmem:[#allocation8 + $0x268] sm:$0xff]
    %v356 = vld [vmem:[#allocation8 + $0x270] sm:$0xff]
    %v357 = vld [vmem:[#allocation8 + $0x278] sm:$0xff]
    %v358 = vld [vmem:[#allocation8 + $0x280] sm:$0xff]
    %v359 = vld [vmem:[#allocation8 + $0x288] sm:$0xff]
    %v360 = vld [vmem:[#allocation8 + $0x290] sm:$0xff]
    %v361 = vld [vmem:[#allocation8 + $0x298] sm:$0xff]
    %v362 = vld [vmem:[#allocation8 + $0x2a0] sm:$0xff]
    %v363 = vld [vmem:[#allocation8 + $0x2a8] sm:$0xff]
    %v364 = vld [vmem:[#allocation8 + $0x2b0] sm:$0xff]
    %v365 = vld [vmem:[#allocation8 + $0x2b8] sm:$0xff]
    %v366 = vld [vmem:[#allocation8 + $0x2c0] sm:$0xff]
    %v367 = vld [vmem:[#allocation8 + $0x2c8] sm:$0xff]
    %v368 = vld [vmem:[#allocation8 + $0x2d0] sm:$0xff]
    %v369 = vld [vmem:[#allocation8 + $0x2d8] sm:$0xff]
    %v370 = vld [vmem:[#allocation8 + $0x2e0] sm:$0xff]
    %v371 = vld [vmem:[#allocation8 + $0x2e8] sm:$0xff]
    %v372 = vld [vmem:[#allocation8 + $0x2f0] sm:$0xff]
    %v373 = vld [vmem:[#allocation8 + $0x2f8] sm:$0xff]
    %v374 = vld [vmem:[#allocation8 + $0x300] sm:$0xff]
    %v375 = vld [vmem:[#allocation8 + $0x308] sm:$0xff]
    %v376 = vld [vmem:[#allocation8 + $0x310] sm:$0xff]
    %v377 = vld [vmem:[#allocation8 + $0x318] sm:$0xff]
    %v378 = vld [vmem:[#allocation8 + $0x320] sm:$0xff]
    %v379 = vld [vmem:[#allocation8 + $0x328] sm:$0xff]
    %v380 = vld [vmem:[#allocation8 + $0x330] sm:$0xff]
    %v381 = vld [vmem:[#allocation8 + $0x338] sm:$0xff]
    %v382 = vld [vmem:[#allocation8 + $0x340] sm:$0xff]
    %v383 = vld [vmem:[#allocation8 + $0x348] sm:$0xff]
    %v384 = vld [vmem:[#allocation8 + $0x350] sm:$0xff]
    %v385 = vld [vmem:[#allocation8 + $0x358] sm:$0xff]
    %v386 = vld [vmem:[#allocation8 + $0x360] sm:$0xff]
    %v387 = vld [vmem:[#allocation8 + $0x368] sm:$0xff]
    %v388 = vld [vmem:[#allocation8 + $0x370] sm:$0xff]
    %v389 = vld [vmem:[#allocation8 + $0x378] sm:$0xff]
    %v390 = vld [vmem:[#allocation8 + $0x380] sm:$0xff]
    %v391 = vld [vmem:[#allocation8 + $0x388] sm:$0xff]
    %v392 = vld [vmem:[#allocation8 + $0x390] sm:$0xff]
    %v393 = vld [vmem:[#allocation8 + $0x398] sm:$0xff]
    %v394 = vld [vmem:[#allocation8 + $0x3a0] sm:$0xff]
    %v395 = vld [vmem:[#allocation8 + $0x3a8] sm:$0xff]
    %v396 = vld [vmem:[#allocation8 + $0x3b0] sm:$0xff]
    %v397 = vld [vmem:[#allocation8 + $0x3b8] sm:$0xff]
    %v398 = vld [vmem:[#allocation8 + $0x3c0] sm:$0xff]
    %v399 = vld [vmem:[#allocation8 + $0x3c8] sm:$0xff]
    %v400 = vld [vmem:[#allocation8 + $0x3d0] sm:$0xff]
    %v401 = vld [vmem:[#allocation8 + $0x3d8] sm:$0xff]
    %v402 = vld [vmem:[#allocation8 + $0x3e0] sm:$0xff]
    %v403 = vld [vmem:[#allocation8 + $0x3e8] sm:$0xff]
    %v404 = vld [vmem:[#allocation8 + $0x3f0] sm:$0xff]
    %v405 = vld [vmem:[#allocation8 + $0x3f8] sm:$0xff]
    %v406 = vld [vmem:[#allocation8 + $0x400] sm:$0xff]
    %v407 = vld [vmem:[#allocation8 + $0x408] sm:$0xff]
    %v408 = vld [vmem:[#allocation8 + $0x410] sm:$0xff]
    %v409 = vld [vmem:[#allocation8 + $0x418] sm:$0xff]
    %v410 = vld [vmem:[#allocation8 + $0x420] sm:$0xff]
    %v411 = vld [vmem:[#allocation8 + $0x428] sm:$0xff]
    %v412 = vld [vmem:[#allocation8 + $0x430] sm:$0xff]
    %v413 = vld [vmem:[#allocation8 + $0x438] sm:$0xff]
    %v414 = vld [vmem:[#allocation8 + $0x440] sm:$0xff]
    %v415 = vld [vmem:[#allocation8 + $0x448] sm:$0xff]
    %v416 = vld [vmem:[#allocation8 + $0x450] sm:$0xff]
    %v417 = vld [vmem:[#allocation8 + $0x458] sm:$0xff]
    %v418 = vld [vmem:[#allocation8 + $0x460] sm:$0xff]
    %v419 = vld [vmem:[#allocation8 + $0x468] sm:$0xff]
    %v420 = vld [vmem:[#allocation8 + $0x470] sm:$0xff]
    %v421 = vld [vmem:[#allocation8 + $0x478] sm:$0xff]
    %v422 = vld [vmem:[#allocation8 + $0x480] sm:$0xff]
    %v423 = vld [vmem:[#allocation8 + $0x488] sm:$0xff]
    %v424 = vld [vmem:[#allocation8 + $0x490] sm:$0xff]
    %v425 = vld [vmem:[#allocation8 + $0x498] sm:$0xff]
    %v426 = vld [vmem:[#allocation8 + $0x4a0] sm:$0xff]
    %v427 = vld [vmem:[#allocation8 + $0x4a8] sm:$0xff]
    %v428 = vld [vmem:[#allocation8 + $0x4b0] sm:$0xff]
    %v429 = vld [vmem:[#allocation8 + $0x4b8] sm:$0xff]
    %v430 = vld [vmem:[#allocation8 + $0x4c0] sm:$0xff]
    %v431 = vld [vmem:[#allocation8 + $0x4c8] sm:$0xff]
    %v432 = vld [vmem:[#allocation8 + $0x4d0] sm:$0xff]
    %v433 = vld [vmem:[#allocation8 + $0x4d8] sm:$0xff]
    %v434 = vld [vmem:[#allocation8 + $0x4e0] sm:$0xff]
    %v435 = vld [vmem:[#allocation8 + $0x4e8] sm:$0xff]
    %v436 = vld [vmem:[#allocation8 + $0x4f0] sm:$0xff]
    %v437 = vld [vmem:[#allocation8 + $0x4f8] sm:$0xff]
    %v438 = vld [vmem:[#allocation8 + $0x500] sm:$0xff]
    %v439 = vld [vmem:[#allocation8 + $0x508] sm:$0xff]
    %v440 = vld [vmem:[#allocation8 + $0x510] sm:$0xff]
    %v441 = vld [vmem:[#allocation8 + $0x518] sm:$0xff]
    %v442 = vld [vmem:[#allocation8 + $0x520] sm:$0xff]
    %v443 = vld [vmem:[#allocation8 + $0x528] sm:$0xff]
    %v444 = vld [vmem:[#allocation8 + $0x530] sm:$0xff]
    %v445 = vld [vmem:[#allocation8 + $0x538] sm:$0xff]
    %v446 = vld [vmem:[#allocation8 + $0x540] sm:$0xff]
    %v447 = vld [vmem:[#allocation8 + $0x548] sm:$0xff]
    %v448 = vld [vmem:[#allocation8 + $0x550] sm:$0xff]
    %v449 = vld [vmem:[#allocation8 + $0x558] sm:$0xff]
    %v450 = vld [vmem:[#allocation8 + $0x560] sm:$0xff]
    %v451 = vld [vmem:[#allocation8 + $0x568] sm:$0xff]
    %v452 = vld [vmem:[#allocation8 + $0x570] sm:$0xff]
    %v453 = vld [vmem:[#allocation8 + $0x578] sm:$0xff]
    %v454 = vld [vmem:[#allocation8 + $0x580] sm:$0xff]
    %v455 = vld [vmem:[#allocation8 + $0x588] sm:$0xff]
    %v456 = vld [vmem:[#allocation8 + $0x590] sm:$0xff]
    %v457 = vld [vmem:[#allocation8 + $0x598] sm:$0xff]
    %v458 = vld [vmem:[#allocation8 + $0x5a0] sm:$0xff]
    %v459 = vld [vmem:[#allocation8 + $0x5a8] sm:$0xff]
    %v460 = vld [vmem:[#allocation8 + $0x5b0] sm:$0xff]
    %v461 = vld [vmem:[#allocation8 + $0x5b8] sm:$0xff]
    %v462 = vld [vmem:[#allocation8 + $0x5c0] sm:$0xff]
    %v463 = vld [vmem:[#allocation8 + $0x5c8] sm:$0xff]
    %v464 = vld [vmem:[#allocation8 + $0x5d0] sm:$0xff]
    %v465 = vld [vmem:[#allocation8 + $0x5d8] sm:$0xff]
    %v466 = vld [vmem:[#allocation8 + $0x5e0] sm:$0xff]
    %v467 = vld [vmem:[#allocation8 + $0x5e8] sm:$0xff]
    %v468 = vld [vmem:[#allocation8 + $0x5f0] sm:$0xff]
    %v469 = vld [vmem:[#allocation8 + $0x5f8] sm:$0xff]
    %v470 = vld [vmem:[#allocation8 + $0x600] sm:$0xff]
    %v471 = vld [vmem:[#allocation8 + $0x608] sm:$0xff]
    %v472 = vld [vmem:[#allocation8 + $0x610] sm:$0xff]
    %v473 = vld [vmem:[#allocation8 + $0x618] sm:$0xff]
    %v474 = vld [vmem:[#allocation8 + $0x620] sm:$0xff]
    %v475 = vld [vmem:[#allocation8 + $0x628] sm:$0xff]
    %v476 = vld [vmem:[#allocation8 + $0x630] sm:$0xff]
    %v477 = vld [vmem:[#allocation8 + $0x638] sm:$0xff]
    %v478 = vld [vmem:[#allocation8 + $0x640] sm:$0xff]
    %v479 = vld [vmem:[#allocation8 + $0x648] sm:$0xff]
    %v480 = vld [vmem:[#allocation8 + $0x650] sm:$0xff]
    %v481 = vld [vmem:[#allocation8 + $0x658] sm:$0xff]
    %v482 = vld [vmem:[#allocation8 + $0x660] sm:$0xff]
    %v483 = vld [vmem:[#allocation8 + $0x668] sm:$0xff]
    %v484 = vld [vmem:[#allocation8 + $0x670] sm:$0xff]
    %v485 = vld [vmem:[#allocation8 + $0x678] sm:$0xff]
    %v486 = vld [vmem:[#allocation8 + $0x680] sm:$0xff]
    %v487 = vld [vmem:[#allocation8 + $0x688] sm:$0xff]
    %v488 = vld [vmem:[#allocation8 + $0x690] sm:$0xff]
    %v489 = vld [vmem:[#allocation8 + $0x698] sm:$0xff]
    %v490 = vld [vmem:[#allocation8 + $0x6a0] sm:$0xff]
    %v491 = vld [vmem:[#allocation8 + $0x6a8] sm:$0xff]
    %v492 = vld [vmem:[#allocation8 + $0x6b0] sm:$0xff]
    %v493 = vld [vmem:[#allocation8 + $0x6b8] sm:$0xff]
    %v494 = vld [vmem:[#allocation8 + $0x6c0] sm:$0xff]
    %v495 = vld [vmem:[#allocation8 + $0x6c8] sm:$0xff]
    %v496 = vld [vmem:[#allocation8 + $0x6d0] sm:$0xff]
    %v497 = vld [vmem:[#allocation8 + $0x6d8] sm:$0xff]
    %v498 = vld [vmem:[#allocation8 + $0x6e0] sm:$0xff]
    %v499 = vld [vmem:[#allocation8 + $0x6e8] sm:$0xff]
    %v500 = vld [vmem:[#allocation8 + $0x6f0] sm:$0xff]
    %v501 = vld [vmem:[#allocation8 + $0x6f8] sm:$0xff]
    %v502 = vld [vmem:[#allocation8 + $0x700] sm:$0xff]
    %v503 = vld [vmem:[#allocation8 + $0x708] sm:$0xff]
    %v504 = vld [vmem:[#allocation8 + $0x710] sm:$0xff]
    %v505 = vld [vmem:[#allocation8 + $0x718] sm:$0xff]
    %v506 = vld [vmem:[#allocation8 + $0x720] sm:$0xff]
    %v507 = vld [vmem:[#allocation8 + $0x728] sm:$0xff]
    %v508 = vld [vmem:[#allocation8 + $0x730] sm:$0xff]
    %v509 = vld [vmem:[#allocation8 + $0x738] sm:$0xff]
    %v510 = vld [vmem:[#allocation8 + $0x740] sm:$0xff]
    %v511 = vld [vmem:[#allocation8 + $0x748] sm:$0xff]
    %v512 = vld [vmem:[#allocation8 + $0x750] sm:$0xff]
    %v513 = vld [vmem:[#allocation8 + $0x758] sm:$0xff]
    %v514 = vld [vmem:[#allocation8 + $0x760] sm:$0xff]
    %v515 = vld [vmem:[#allocation8 + $0x768] sm:$0xff]
    %v516 = vld [vmem:[#allocation8 + $0x770] sm:$0xff]
    %v517 = vld [vmem:[#allocation8 + $0x778] sm:$0xff]
    %v518 = vld [vmem:[#allocation8 + $0x780] sm:$0xff]
    %v519 = vld [vmem:[#allocation8 + $0x788] sm:$0xff]
    %v520 = vld [vmem:[#allocation8 + $0x790] sm:$0xff]
    %v521 = vld [vmem:[#allocation8 + $0x798] sm:$0xff]
    %v522 = vld [vmem:[#allocation8 + $0x7a0] sm:$0xff]
    %v523 = vld [vmem:[#allocation8 + $0x7a8] sm:$0xff]
    %v524 = vld [vmem:[#allocation8 + $0x7b0] sm:$0xff]
    %v525 = vld [vmem:[#allocation8 + $0x7b8] sm:$0xff]
    %v526 = vld [vmem:[#allocation8 + $0x7c0] sm:$0xff]
    %v527 = vld [vmem:[#allocation8 + $0x7c8] sm:$0xff]
    %v528 = vld [vmem:[#allocation8 + $0x7d0] sm:$0xff]
    %v529 = vld [vmem:[#allocation8 + $0x7d8] sm:$0xff]
    %v530 = vld [vmem:[#allocation8 + $0x7e0] sm:$0xff]
    %v531 = vld [vmem:[#allocation8 + $0x7e8] sm:$0xff]
    %v532 = vld [vmem:[#allocation8 + $0x7f0] sm:$0xff]
    %v533 = vld [vmem:[#allocation8 + $0x7f8] sm:$0xff]
    %v534 = vld [vmem:[#allocation8 + $0x800] sm:$0xff]
    %v535 = vld [vmem:[#allocation8 + $0x808] sm:$0xff]
    %v536 = vld [vmem:[#allocation8 + $0x810] sm:$0xff]
    %v537 = vld [vmem:[#allocation8 + $0x818] sm:$0xff]
    %v538 = vld [vmem:[#allocation8 + $0x820] sm:$0xff]
    %v539 = vld [vmem:[#allocation8 + $0x828] sm:$0xff]
    %v540 = vld [vmem:[#allocation8 + $0x830] sm:$0xff]
    %v541 = vld [vmem:[#allocation8 + $0x838] sm:$0xff]
    %v542 = vld [vmem:[#allocation8 + $0x840] sm:$0xff]
    %v543 = vld [vmem:[#allocation8 + $0x848] sm:$0xff]
    %v544 = vld [vmem:[#allocation8 + $0x850] sm:$0xff]
    %v545 = vld [vmem:[#allocation8 + $0x858] sm:$0xff]
    %v546 = vld [vmem:[#allocation8 + $0x860] sm:$0xff]
    %v547 = vld [vmem:[#allocation8 + $0x868] sm:$0xff]
    %v548 = vld [vmem:[#allocation8 + $0x870] sm:$0xff]
    %v549 = vld [vmem:[#allocation8 + $0x878] sm:$0xff]
    %v550 = vld [vmem:[#allocation8 + $0x880] sm:$0xff]
    %v551 = vld [vmem:[#allocation8 + $0x888] sm:$0xff]
    %v552 = vld [vmem:[#allocation8 + $0x890] sm:$0xff]
    %v553 = vld [vmem:[#allocation8 + $0x898] sm:$0xff]
    %v554 = vld [vmem:[#allocation8 + $0x8a0] sm:$0xff]
    %v555 = vld [vmem:[#allocation8 + $0x8a8] sm:$0xff]
    %v556 = vld [vmem:[#allocation8 + $0x8b0] sm:$0xff]
    %v557 = vld [vmem:[#allocation8 + $0x8b8] sm:$0xff]
    %v558 = vld [vmem:[#allocation8 + $0x8c0] sm:$0xff]
    %v559 = vld [vmem:[#allocation8 + $0x8c8] sm:$0xff]
    %v560 = vld [vmem:[#allocation8 + $0x8d0] sm:$0xff]
    %v561 = vld [vmem:[#allocation8 + $0x8d8] sm:$0xff]
    %v562 = vld [vmem:[#allocation8 + $0x8e0] sm:$0xff]
    %v563 = vld [vmem:[#allocation8 + $0x8e8] sm:$0xff]
    %v564 = vld [vmem:[#allocation8 + $0x8f0] sm:$0xff]
    %v565 = vld [vmem:[#allocation8 + $0x8f8] sm:$0xff]
    %v566 = vld [vmem:[#allocation8 + $0x900] sm:$0xff]
    %v567 = vld [vmem:[#allocation8 + $0x908] sm:$0xff]
    %v568 = vld [vmem:[#allocation8 + $0x910] sm:$0xff]
    %v569 = vld [vmem:[#allocation8 + $0x918] sm:$0xff]
    %v570 = vld [vmem:[#allocation8 + $0x920] sm:$0xff]
    %v571 = vld [vmem:[#allocation8 + $0x928] sm:$0xff]
    %v572 = vld [vmem:[#allocation8 + $0x930] sm:$0xff]
    %v573 = vld [vmem:[#allocation8 + $0x938] sm:$0xff]
    %v574 = vld [vmem:[#allocation8 + $0x940] sm:$0xff]
    %v575 = vld [vmem:[#allocation8 + $0x948] sm:$0xff]
    %v576 = vld [vmem:[#allocation8 + $0x950] sm:$0xff]
    %v577 = vld [vmem:[#allocation8 + $0x958] sm:$0xff]
    %v578 = vld [vmem:[#allocation8 + $0x960] sm:$0xff]
    %v579 = vld [vmem:[#allocation8 + $0x968] sm:$0xff]
    %v580 = vld [vmem:[#allocation8 + $0x970] sm:$0xff]
    %v581 = vld [vmem:[#allocation8 + $0x978] sm:$0xff]
    %v582 = vld [vmem:[#allocation8 + $0x980] sm:$0xff]
    %v583 = vld [vmem:[#allocation8 + $0x988] sm:$0xff]
    %v584 = vld [vmem:[#allocation8 + $0x990] sm:$0xff]
    %v585 = vld [vmem:[#allocation8 + $0x998] sm:$0xff]
    %v586 = vld [vmem:[#allocation8 + $0x9a0] sm:$0xff]
    %v587 = vld [vmem:[#allocation8 + $0x9a8] sm:$0xff]
    %v588 = vld [vmem:[#allocation8 + $0x9b0] sm:$0xff]
    %v589 = vld [vmem:[#allocation8 + $0x9b8] sm:$0xff]
    %v590 = vld [vmem:[#allocation8 + $0x9c0] sm:$0xff]
    %v591 = vld [vmem:[#allocation8 + $0x9c8] sm:$0xff]
    %v592 = vld [vmem:[#allocation8 + $0x9d0] sm:$0xff]
    %v593 = vld [vmem:[#allocation8 + $0x9d8] sm:$0xff]
    %v594 = vld [vmem:[#allocation8 + $0x9e0] sm:$0xff]
    %v595 = vld [vmem:[#allocation8 + $0x9e8] sm:$0xff]
    %v596 = vld [vmem:[#allocation8 + $0x9f0] sm:$0xff]
    %v597 = vld [vmem:[#allocation8 + $0x9f8] sm:$0xff]
    %v598 = vld [vmem:[#allocation8 + $0xa00] sm:$0xff]
    %v599 = vld [vmem:[#allocation8 + $0xa08] sm:$0xff]
    %v600 = vld [vmem:[#allocation8 + $0xa10] sm:$0xff]
    %v601 = vld [vmem:[#allocation8 + $0xa18] sm:$0xff]
    %v602 = vld [vmem:[#allocation8 + $0xa20] sm:$0xff]
    %v603 = vld [vmem:[#allocation8 + $0xa28] sm:$0xff]
    %v604 = vld [vmem:[#allocation8 + $0xa30] sm:$0xff]
    %v605 = vld [vmem:[#allocation8 + $0xa38] sm:$0xff]
    %v606 = vld [vmem:[#allocation8 + $0xa40] sm:$0xff]
    %v607 = vld [vmem:[#allocation8 + $0xa48] sm:$0xff]
    %v608 = vld [vmem:[#allocation8 + $0xa50] sm:$0xff]
    %v609 = vld [vmem:[#allocation8 + $0xa58] sm:$0xff]
    %v610 = vld [vmem:[#allocation8 + $0xa60] sm:$0xff]
    %v611 = vld [vmem:[#allocation8 + $0xa68] sm:$0xff]
    %v612 = vld [vmem:[#allocation8 + $0xa70] sm:$0xff]
    %v613 = vld [vmem:[#allocation8 + $0xa78] sm:$0xff]
    %v614 = vld [vmem:[#allocation8 + $0xa80] sm:$0xff]
    %v615 = vld [vmem:[#allocation8 + $0xa88] sm:$0xff]
    %v616 = vld [vmem:[#allocation8 + $0xa90] sm:$0xff]
    %v617 = vld [vmem:[#allocation8 + $0xa98] sm:$0xff]
    %v618 = vld [vmem:[#allocation8 + $0xaa0] sm:$0xff]
    %v619 = vld [vmem:[#allocation8 + $0xaa8] sm:$0xff]
    %v620 = vld [vmem:[#allocation8 + $0xab0] sm:$0xff]
    %v621 = vld [vmem:[#allocation8 + $0xab8] sm:$0xff]
    %v622 = vld [vmem:[#allocation8 + $0xac0] sm:$0xff]
    %v623 = vld [vmem:[#allocation8 + $0xac8] sm:$0xff]
    %v624 = vld [vmem:[#allocation8 + $0xad0] sm:$0xff]
    %v625 = vld [vmem:[#allocation8 + $0xad8] sm:$0xff]
    %v626 = vld [vmem:[#allocation8 + $0xae0] sm:$0xff]
    %v627 = vld [vmem:[#allocation8 + $0xae8] sm:$0xff]
    %v628 = vld [vmem:[#allocation8 + $0xaf0] sm:$0xff]
    %v629 = vld [vmem:[#allocation8 + $0xaf8] sm:$0xff]
    %v630 = vld [vmem:[#allocation8 + $0xb00] sm:$0xff]
    %v631 = vld [vmem:[#allocation8 + $0xb08] sm:$0xff]
    %v632 = vld [vmem:[#allocation8 + $0xb10] sm:$0xff]
    %v633 = vld [vmem:[#allocation8 + $0xb18] sm:$0xff]
    %v634 = vld [vmem:[#allocation8 + $0xb20] sm:$0xff]
    %v635 = vld [vmem:[#allocation8 + $0xb28] sm:$0xff]
    %v636 = vld [vmem:[#allocation8 + $0xb30] sm:$0xff]
    %v637 = vld [vmem:[#allocation8 + $0xb38] sm:$0xff]
    %v638 = vld [vmem:[#allocation8 + $0xb40] sm:$0xff]
    %v639 = vld [vmem:[#allocation8 + $0xb48] sm:$0xff]
    %v640 = vld [vmem:[#allocation8 + $0xb50] sm:$0xff]
    %v641 = vld [vmem:[#allocation8 + $0xb58] sm:$0xff]
    %v642 = vld [vmem:[#allocation8 + $0xb60] sm:$0xff]
    %v643 = vld [vmem:[#allocation8 + $0xb68] sm:$0xff]
    %v644 = vld [vmem:[#allocation8 + $0xb70] sm:$0xff]
    %v645 = vld [vmem:[#allocation8 + $0xb78] sm:$0xff]
    %v646 = vld [vmem:[#allocation8 + $0xb80] sm:$0xff]
    %v647 = vld [vmem:[#allocation8 + $0xb88] sm:$0xff]
    %v648 = vld [vmem:[#allocation8 + $0xb90] sm:$0xff]
    %v649 = vld [vmem:[#allocation8 + $0xb98] sm:$0xff]
    %v650 = vld [vmem:[#allocation8 + $0xba0] sm:$0xff]
    %v651 = vld [vmem:[#allocation8 + $0xba8] sm:$0xff]
    %v652 = vld [vmem:[#allocation8 + $0xbb0] sm:$0xff]
    %v653 = vld [vmem:[#allocation8 + $0xbb8] sm:$0xff]
    %v654 = vld [vmem:[#allocation8 + $0xbc0] sm:$0xff]
    %v655 = vld [vmem:[#allocation8 + $0xbc8] sm:$0xff]
    %v656 = vld [vmem:[#allocation8 + $0xbd0] sm:$0xff]
    %v657 = vld [vmem:[#allocation8 + $0xbd8] sm:$0xff]
    %v658 = vld [vmem:[#allocation8 + $0xbe0] sm:$0xff]
    %v659 = vld [vmem:[#allocation8 + $0xbe8] sm:$0xff]
    %v660 = vld [vmem:[#allocation8 + $0xbf0] sm:$0xff]
    %v661 = vld [vmem:[#allocation8 + $0xbf8] sm:$0xff]
    %v662 = vld [vmem:[#allocation8 + $0xc00] sm:$0xff]
    %v663 = vld [vmem:[#allocation8 + $0xc08] sm:$0xff]
    %v664 = vld [vmem:[#allocation8 + $0xc10] sm:$0xff]
    %v665 = vld [vmem:[#allocation8 + $0xc18] sm:$0xff]
    %v666 = vld [vmem:[#allocation8 + $0xc20] sm:$0xff]
    %v667 = vld [vmem:[#allocation8 + $0xc28] sm:$0xff]
    %v668 = vld [vmem:[#allocation8 + $0xc30] sm:$0xff]
    %v669 = vld [vmem:[#allocation8 + $0xc38] sm:$0xff]
    %v670 = vld [vmem:[#allocation8 + $0xc40] sm:$0xff]
    %v671 = vld [vmem:[#allocation8 + $0xc48] sm:$0xff]
    %v672 = vld [vmem:[#allocation8 + $0xc50] sm:$0xff]
    %v673 = vld [vmem:[#allocation8 + $0xc58] sm:$0xff]
    %v674 = vld [vmem:[#allocation8 + $0xc60] sm:$0xff]
    %v675 = vld [vmem:[#allocation8 + $0xc68] sm:$0xff]
    %v676 = vld [vmem:[#allocation8 + $0xc70] sm:$0xff]
    %v677 = vld [vmem:[#allocation8 + $0xc78] sm:$0xff]
    %v678 = vld [vmem:[#allocation8 + $0xc80] sm:$0xff]
    %v679 = vld [vmem:[#allocation8 + $0xc88] sm:$0xff]
    %v680 = vld [vmem:[#allocation8 + $0xc90] sm:$0xff]
    %v681 = vld [vmem:[#allocation8 + $0xc98] sm:$0xff]
    %v682 = vld [vmem:[#allocation8 + $0xca0] sm:$0xff]
    %v683 = vld [vmem:[#allocation8 + $0xca8] sm:$0xff]
    %v684 = vld [vmem:[#allocation8 + $0xcb0] sm:$0xff]
    %v685 = vld [vmem:[#allocation8 + $0xcb8] sm:$0xff]
    %v686 = vld [vmem:[#allocation8 + $0xcc0] sm:$0xff]
    %v687 = vld [vmem:[#allocation8 + $0xcc8] sm:$0xff]
    %v688 = vld [vmem:[#allocation8 + $0xcd0] sm:$0xff]
    %v689 = vld [vmem:[#allocation8 + $0xcd8] sm:$0xff]
    %v690 = vld [vmem:[#allocation8 + $0xce0] sm:$0xff]
    %v691 = vld [vmem:[#allocation8 + $0xce8] sm:$0xff]
    %v692 = vld [vmem:[#allocation8 + $0xcf0] sm:$0xff]
    %v693 = vld [vmem:[#allocation8 + $0xcf8] sm:$0xff]
    %v694 = vld [vmem:[#allocation8 + $0xd00] sm:$0xff]
    %v695 = vld [vmem:[#allocation8 + $0xd08] sm:$0xff]
    %v696 = vld [vmem:[#allocation8 + $0xd10] sm:$0xff]
    %v697 = vld [vmem:[#allocation8 + $0xd18] sm:$0xff]
    %v698 = vld [vmem:[#allocation8 + $0xd20] sm:$0xff]
    %v699 = vld [vmem:[#allocation8 + $0xd28] sm:$0xff]
    %v700 = vld [vmem:[#allocation8 + $0xd30] sm:$0xff]
    %v701 = vld [vmem:[#allocation8 + $0xd38] sm:$0xff]
    %v702 = vld [vmem:[#allocation8 + $0xd40] sm:$0xff]
    %v703 = vld [vmem:[#allocation8 + $0xd48] sm:$0xff]
    %v704 = vld [vmem:[#allocation8 + $0xd50] sm:$0xff]
    %v705 = vld [vmem:[#allocation8 + $0xd58] sm:$0xff]
    %v706 = vld [vmem:[#allocation8 + $0xd60] sm:$0xff]
    %v707 = vld [vmem:[#allocation8 + $0xd68] sm:$0xff]
    %v708 = vld [vmem:[#allocation8 + $0xd70] sm:$0xff]
    %v709 = vld [vmem:[#allocation8 + $0xd78] sm:$0xff]
    %v710 = vld [vmem:[#allocation8 + $0xd80] sm:$0xff]
    %v711 = vld [vmem:[#allocation8 + $0xd88] sm:$0xff]
    %v712 = vld [vmem:[#allocation8 + $0xd90] sm:$0xff]
    %v713 = vld [vmem:[#allocation8 + $0xd98] sm:$0xff]
    %v714 = vld [vmem:[#allocation8 + $0xda0] sm:$0xff]
    %v715 = vld [vmem:[#allocation8 + $0xda8] sm:$0xff]
    %v716 = vld [vmem:[#allocation8 + $0xdb0] sm:$0xff]
    %v717 = vld [vmem:[#allocation8 + $0xdb8] sm:$0xff]
    %v718 = vld [vmem:[#allocation8 + $0xdc0] sm:$0xff]
    %v719 = vld [vmem:[#allocation8 + $0xdc8] sm:$0xff]
    %v720 = vld [vmem:[#allocation8 + $0xdd0] sm:$0xff]
    %v721 = vld [vmem:[#allocation8 + $0xdd8] sm:$0xff]
    %v722 = vld [vmem:[#allocation8 + $0xde0] sm:$0xff]
    %v723 = vld [vmem:[#allocation8 + $0xde8] sm:$0xff]
    %v724 = vld [vmem:[#allocation8 + $0xdf0] sm:$0xff]
    %v725 = vld [vmem:[#allocation8 + $0xdf8] sm:$0xff]
    %v726 = vld [vmem:[#allocation8 + $0xe00] sm:$0xff]
    %v727 = vld [vmem:[#allocation8 + $0xe08] sm:$0xff]
    %v728 = vld [vmem:[#allocation8 + $0xe10] sm:$0xff]
    %v729 = vld [vmem:[#allocation8 + $0xe18] sm:$0xff]
    %v730 = vld [vmem:[#allocation8 + $0xe20] sm:$0xff]
    %v731 = vld [vmem:[#allocation8 + $0xe28] sm:$0xff]
    %v732 = vld [vmem:[#allocation8 + $0xe30] sm:$0xff]
    %v733 = vld [vmem:[#allocation8 + $0xe38] sm:$0xff]
    %v734 = vld [vmem:[#allocation8 + $0xe40] sm:$0xff]
    %v735 = vld [vmem:[#allocation8 + $0xe48] sm:$0xff]
    %v736 = vld [vmem:[#allocation8 + $0xe50] sm:$0xff]
    %v737 = vld [vmem:[#allocation8 + $0xe58] sm:$0xff]
    %v738 = vld [vmem:[#allocation8 + $0xe60] sm:$0xff]
    %v739 = vld [vmem:[#allocation8 + $0xe68] sm:$0xff]
    %v740 = vld [vmem:[#allocation8 + $0xe70] sm:$0xff]
    %v741 = vld [vmem:[#allocation8 + $0xe78] sm:$0xff]
    %v742 = vld [vmem:[#allocation8 + $0xe80] sm:$0xff]
    %v743 = vld [vmem:[#allocation8 + $0xe88] sm:$0xff]
    %v744 = vld [vmem:[#allocation8 + $0xe90] sm:$0xff]
    %v745 = vld [vmem:[#allocation8 + $0xe98] sm:$0xff]
    %v746 = vld [vmem:[#allocation8 + $0xea0] sm:$0xff]
    %v747 = vld [vmem:[#allocation8 + $0xea8] sm:$0xff]
    %v748 = vld [vmem:[#allocation8 + $0xeb0] sm:$0xff]
    %v749 = vld [vmem:[#allocation8 + $0xeb8] sm:$0xff]
    %v750 = vld [vmem:[#allocation8 + $0xec0] sm:$0xff]
    %v751 = vld [vmem:[#allocation8 + $0xec8] sm:$0xff]
    %v752 = vld [vmem:[#allocation8 + $0xed0] sm:$0xff]
    %v753 = vld [vmem:[#allocation8 + $0xed8] sm:$0xff]
    %v754 = vld [vmem:[#allocation8 + $0xee0] sm:$0xff]
    %v755 = vld [vmem:[#allocation8 + $0xee8] sm:$0xff]
    %v756 = vld [vmem:[#allocation8 + $0xef0] sm:$0xff]
    %v757 = vld [vmem:[#allocation8 + $0xef8] sm:$0xff]
    %v758 = vld [vmem:[#allocation8 + $0xf00] sm:$0xff]
    %v759 = vld [vmem:[#allocation8 + $0xf08] sm:$0xff]
    %v760 = vld [vmem:[#allocation8 + $0xf10] sm:$0xff]
    %v761 = vld [vmem:[#allocation8 + $0xf18] sm:$0xff]
    %v762 = vld [vmem:[#allocation8 + $0xf20] sm:$0xff]
    %v763 = vld [vmem:[#allocation8 + $0xf28] sm:$0xff]
    %v764 = vld [vmem:[#allocation8 + $0xf30] sm:$0xff]
    %v765 = vld [vmem:[#allocation8 + $0xf38] sm:$0xff]
    %v766 = vld [vmem:[#allocation8 + $0xf40] sm:$0xff]
    %v767 = vld [vmem:[#allocation8 + $0xf48] sm:$0xff]
    %v768 = vld [vmem:[#allocation8 + $0xf50] sm:$0xff]
    %v769 = vld [vmem:[#allocation8 + $0xf58] sm:$0xff]
    %v770 = vld [vmem:[#allocation8 + $0xf60] sm:$0xff]
    %v771 = vld [vmem:[#allocation8 + $0xf68] sm:$0xff]
    %v772 = vld [vmem:[#allocation8 + $0xf70] sm:$0xff]
    %v773 = vld [vmem:[#allocation8 + $0xf78] sm:$0xff]
    %v774 = vld [vmem:[#allocation8 + $0xf80] sm:$0xff]
    %v775 = vld [vmem:[#allocation8 + $0xf88] sm:$0xff]
    %v776 = vld [vmem:[#allocation8 + $0xf90] sm:$0xff]
    %v777 = vld [vmem:[#allocation8 + $0xf98] sm:$0xff]
    %v778 = vld [vmem:[#allocation8 + $0xfa0] sm:$0xff]
    %v779 = vld [vmem:[#allocation8 + $0xfa8] sm:$0xff]
    %v780 = vld [vmem:[#allocation8 + $0xfb0] sm:$0xff]
    %v781 = vld [vmem:[#allocation8 + $0xfb8] sm:$0xff]
    %v782 = vld [vmem:[#allocation8 + $0xfc0] sm:$0xff]
    %v783 = vld [vmem:[#allocation8 + $0xfc8] sm:$0xff]
    %v784 = vld [vmem:[#allocation8 + $0xfd0] sm:$0xff]
    %v785 = vld [vmem:[#allocation8 + $0xfd8] sm:$0xff]
    %v786 = vld [vmem:[#allocation8 + $0xfe0] sm:$0xff]
    %v787 = vld [vmem:[#allocation8 + $0xfe8] sm:$0xff]
    %v788 = vld [vmem:[#allocation8 + $0xff0] sm:$0xff]
    %v789 = vld [vmem:[#allocation8 + $0xff8] sm:$0xff]
    %v790 = vld [vmem:[#allocation10] sm:$0xff]
    %v792 = vperm.slane %v790, 0
    %v793 = vperm.slane %v790, 1
    %v794 = vperm.slane %v790, 2
    %v795 = vperm.slane %v790, 3
    %v796 = vperm.slane %v790, 4
    %v797 = vperm.slane %v790, 5
    %v798 = vperm.slane %v790, 6
    %v799 = vperm.slane %v790, 7
    %808 = vmatpush.msra.mxu0 %v398
    %809 = vmatpush.msra.mxu0 %v390
    %810 = vmatpush.msra.mxu0 %v382
    %811 = vmatpush.msra.mxu0 %v374
    %812 = vmatpush.msra.mxu0 %v366
    %813 = vmatpush.msra.mxu0 %v358
    %814 = vmatpush.msra.mxu0 %v350
    %815 = vmatpush.msra.mxu0 %v342
    %816 = vmatpush.msra.mxu0 %v334
    %817 = vmatpush.msra.mxu0 %v326
    %818 = vmatpush.msra.mxu0 %v318
    %819 = vmatpush.msra.mxu0 %v310
    %820 = vmatpush.msra.mxu0 %v302
    %821 = vmatpush.msra.mxu0 %v294
    %822 = vmatpush.msra.mxu0 %v286
    %823 = vmatpush.msra.mxu0 %v278
    %824 = vmatmul.f32.gmra.mxu0 %v274
    %v825 = vpop.f32.mrf.mxu0
    %v826 = vadd.f32 %v792, %v825
    %827 = vdwg.mxu0
    %828 = vmatpush.msra.mxu0 %v526
    %829 = vmatpush.msra.mxu0 %v518
    %830 = vmatpush.msra.mxu0 %v510
    %831 = vmatpush.msra.mxu0 %v502
    %832 = vmatpush.msra.mxu0 %v494
    %833 = vmatpush.msra.mxu0 %v486
    %834 = vmatpush.msra.mxu0 %v478
    %835 = vmatpush.msra.mxu0 %v470
    %836 = vmatpush.msra.mxu0 %v462
    %837 = vmatpush.msra.mxu0 %v454
    %838 = vmatpush.msra.mxu0 %v446
    %839 = vmatpush.msra.mxu0 %v438
    %840 = vmatpush.msra.mxu0 %v430
    %841 = vmatpush.msra.mxu0 %v422
    %842 = vmatpush.msra.mxu0 %v414
    %843 = vmatpush.msra.mxu0 %v406
    %844 = vmatmul.f32.gmra.mxu0 %v275
    %v845 = vpop.f32.mrf.mxu0
    %v846 = vadd.f32 %v826, %v845
    %847 = vdwg.mxu0
    %848 = vmatpush.msra.mxu0 %v654
    %849 = vmatpush.msra.mxu0 %v646
    %850 = vmatpush.msra.mxu0 %v638
    %851 = vmatpush.msra.mxu0 %v630
    %852 = vmatpush.msra.mxu0 %v622
    %853 = vmatpush.msra.mxu0 %v614
    %854 = vmatpush.msra.mxu0 %v606
    %855 = vmatpush.msra.mxu0 %v598
    %856 = vmatpush.msra.mxu0 %v590
    %857 = vmatpush.msra.mxu0 %v582
    %858 = vmatpush.msra.mxu0 %v574
    %859 = vmatpush.msra.mxu0 %v566
    %860 = vmatpush.msra.mxu0 %v558
    %861 = vmatpush.msra.mxu0 %v550
    %862 = vmatpush.msra.mxu0 %v542
    %863 = vmatpush.msra.mxu0 %v534
    %864 = vmatmul.f32.gmra.mxu0 %v276
    %v865 = vpop.f32.mrf.mxu0
    %v866 = vadd.f32 %v846, %v865
    %867 = vdwg.mxu0
    %868 = vmatpush.msra.mxu0 %v782
    %869 = vmatpush.msra.mxu0 %v774
    %870 = vmatpush.msra.mxu0 %v766
    %871 = vmatpush.msra.mxu0 %v758
    %872 = vmatpush.msra.mxu0 %v750
    %873 = vmatpush.msra.mxu0 %v742
    %874 = vmatpush.msra.mxu0 %v734
    %875 = vmatpush.msra.mxu0 %v726
    %876 = vmatpush.msra.mxu0 %v718
    %877 = vmatpush.msra.mxu0 %v710
    %878 = vmatpush.msra.mxu0 %v702
    %879 = vmatpush.msra.mxu0 %v694
    %880 = vmatpush.msra.mxu0 %v686
    %881 = vmatpush.msra.mxu0 %v678
    %882 = vmatpush.msra.mxu0 %v670
    %883 = vmatpush.msra.mxu0 %v662
    %884 = vmatmul.f32.gmra.mxu0 %v277
    %v885 = vpop.f32.mrf.mxu0
    %v886 = vadd.f32 %v866, %v885
    %887 = vdwg.mxu0
    %888 = vmatpush.msra.mxu0 %v399
    %889 = vmatpush.msra.mxu0 %v391
    %890 = vmatpush.msra.mxu0 %v383
    %891 = vmatpush.msra.mxu0 %v375
    %892 = vmatpush.msra.mxu0 %v367
    %893 = vmatpush.msra.mxu0 %v359
    %894 = vmatpush.msra.mxu0 %v351
    %895 = vmatpush.msra.mxu0 %v343
    %896 = vmatpush.msra.mxu0 %v335
    %897 = vmatpush.msra.mxu0 %v327
    %898 = vmatpush.msra.mxu0 %v319
    %899 = vmatpush.msra.mxu0 %v311
    %900 = vmatpush.msra.mxu0 %v303
    %901 = vmatpush.msra.mxu0 %v295
    %902 = vmatpush.msra.mxu0 %v287
    %903 = vmatpush.msra.mxu0 %v279
    %904 = vmatmul.f32.gmra.mxu0 %v274
    %v905 = vpop.f32.mrf.mxu0
    %v906 = vadd.f32 %v793, %v905
    %907 = vdwg.mxu0
    %908 = vmatpush.msra.mxu0 %v527
    %909 = vmatpush.msra.mxu0 %v519
    %910 = vmatpush.msra.mxu0 %v511
    %911 = vmatpush.msra.mxu0 %v503
    %912 = vmatpush.msra.mxu0 %v495
    %913 = vmatpush.msra.mxu0 %v487
    %914 = vmatpush.msra.mxu0 %v479
    %915 = vmatpush.msra.mxu0 %v471
    %916 = vmatpush.msra.mxu0 %v463
    %917 = vmatpush.msra.mxu0 %v455
    %918 = vmatpush.msra.mxu0 %v447
    %919 = vmatpush.msra.mxu0 %v439
    %920 = vmatpush.msra.mxu0 %v431
    %921 = vmatpush.msra.mxu0 %v423
    %922 = vmatpush.msra.mxu0 %v415
    %923 = vmatpush.msra.mxu0 %v407
    %924 = vmatmul.f32.gmra.mxu0 %v275
    %v925 = vpop.f32.mrf.mxu0
    %v926 = vadd.f32 %v906, %v925
    %927 = vdwg.mxu0
    %928 = vmatpush.msra.mxu0 %v655
    %929 = vmatpush.msra.mxu0 %v647
    %930 = vmatpush.msra.mxu0 %v639
    %931 = vmatpush.msra.mxu0 %v631
    %932 = vmatpush.msra.mxu0 %v623
    %933 = vmatpush.msra.mxu0 %v615
    %934 = vmatpush.msra.mxu0 %v607
    %935 = vmatpush.msra.mxu0 %v599
    %936 = vmatpush.msra.mxu0 %v591
    %937 = vmatpush.msra.mxu0 %v583
    %938 = vmatpush.msra.mxu0 %v575
    %939 = vmatpush.msra.mxu0 %v567
    %940 = vmatpush.msra.mxu0 %v559
    %941 = vmatpush.msra.mxu0 %v551
    %942 = vmatpush.msra.mxu0 %v543
    %943 = vmatpush.msra.mxu0 %v535
    %944 = vmatmul.f32.gmra.mxu0 %v276
    %v945 = vpop.f32.mrf.mxu0
    %v946 = vadd.f32 %v926, %v945
    %947 = vdwg.mxu0
    %948 = vmatpush.msra.mxu0 %v783
    %949 = vmatpush.msra.mxu0 %v775
    %950 = vmatpush.msra.mxu0 %v767
    %951 = vmatpush.msra.mxu0 %v759
    %952 = vmatpush.msra.mxu0 %v751
    %953 = vmatpush.msra.mxu0 %v743
    %954 = vmatpush.msra.mxu0 %v735
    %955 = vmatpush.msra.mxu0 %v727
    %956 = vmatpush.msra.mxu0 %v719
    %957 = vmatpush.msra.mxu0 %v711
    %958 = vmatpush.msra.mxu0 %v703
    %959 = vmatpush.msra.mxu0 %v695
    %960 = vmatpush.msra.mxu0 %v687
    %961 = vmatpush.msra.mxu0 %v679
    %962 = vmatpush.msra.mxu0 %v671
    %963 = vmatpush.msra.mxu0 %v663
    %964 = vmatmul.f32.gmra.mxu0 %v277
    %v965 = vpop.f32.mrf.mxu0
    %v966 = vadd.f32 %v946, %v965
    %967 = vdwg.mxu0
    %968 = vmatpush.msra.mxu0 %v400
    %969 = vmatpush.msra.mxu0 %v392
    %970 = vmatpush.msra.mxu0 %v384
    %971 = vmatpush.msra.mxu0 %v376
    %972 = vmatpush.msra.mxu0 %v368
    %973 = vmatpush.msra.mxu0 %v360
    %974 = vmatpush.msra.mxu0 %v352
    %975 = vmatpush.msra.mxu0 %v344
    %976 = vmatpush.msra.mxu0 %v336
    %977 = vmatpush.msra.mxu0 %v328
    %978 = vmatpush.msra.mxu0 %v320
    %979 = vmatpush.msra.mxu0 %v312
    %980 = vmatpush.msra.mxu0 %v304
    %981 = vmatpush.msra.mxu0 %v296
    %982 = vmatpush.msra.mxu0 %v288
    %983 = vmatpush.msra.mxu0 %v280
    %984 = vmatmul.f32.gmra.mxu0 %v274
    %v985 = vpop.f32.mrf.mxu0
    %v986 = vadd.f32 %v794, %v985
    %987 = vdwg.mxu0
    %988 = vmatpush.msra.mxu0 %v528
    %989 = vmatpush.msra.mxu0 %v520
    %990 = vmatpush.msra.mxu0 %v512
    %991 = vmatpush.msra.mxu0 %v504
    %992 = vmatpush.msra.mxu0 %v496
    %993 = vmatpush.msra.mxu0 %v488
    %994 = vmatpush.msra.mxu0 %v480
    %995 = vmatpush.msra.mxu0 %v472
    %996 = vmatpush.msra.mxu0 %v464
    %997 = vmatpush.msra.mxu0 %v456
    %998 = vmatpush.msra.mxu0 %v448
    %999 = vmatpush.msra.mxu0 %v440
    %1000 = vmatpush.msra.mxu0 %v432
    %1001 = vmatpush.msra.mxu0 %v424
    %1002 = vmatpush.msra.mxu0 %v416
    %1003 = vmatpush.msra.mxu0 %v408
    %1004 = vmatmul.f32.gmra.mxu0 %v275
    %v1005 = vpop.f32.mrf.mxu0
    %v1006 = vadd.f32 %v986, %v1005
    %1007 = vdwg.mxu0
    %1008 = vmatpush.msra.mxu0 %v656
    %1009 = vmatpush.msra.mxu0 %v648
    %1010 = vmatpush.msra.mxu0 %v640
    %1011 = vmatpush.msra.mxu0 %v632
    %1012 = vmatpush.msra.mxu0 %v624
    %1013 = vmatpush.msra.mxu0 %v616
    %1014 = vmatpush.msra.mxu0 %v608
    %1015 = vmatpush.msra.mxu0 %v600
    %1016 = vmatpush.msra.mxu0 %v592
    %1017 = vmatpush.msra.mxu0 %v584
    %1018 = vmatpush.msra.mxu0 %v576
    %1019 = vmatpush.msra.mxu0 %v568
    %1020 = vmatpush.msra.mxu0 %v560
    %1021 = vmatpush.msra.mxu0 %v552
    %1022 = vmatpush.msra.mxu0 %v544
    %1023 = vmatpush.msra.mxu0 %v536
    %1024 = vmatmul.f32.gmra.mxu0 %v276
    %v1025 = vpop.f32.mrf.mxu0
    %v1026 = vadd.f32 %v1006, %v1025
    %1027 = vdwg.mxu0
    %1028 = vmatpush.msra.mxu0 %v784
    %1029 = vmatpush.msra.mxu0 %v776
    %1030 = vmatpush.msra.mxu0 %v768
    %1031 = vmatpush.msra.mxu0 %v760
    %1032 = vmatpush.msra.mxu0 %v752
    %1033 = vmatpush.msra.mxu0 %v744
    %1034 = vmatpush.msra.mxu0 %v736
    %1035 = vmatpush.msra.mxu0 %v728
    %1036 = vmatpush.msra.mxu0 %v720
    %1037 = vmatpush.msra.mxu0 %v712
    %1038 = vmatpush.msra.mxu0 %v704
    %1039 = vmatpush.msra.mxu0 %v696
    %1040 = vmatpush.msra.mxu0 %v688
    %1041 = vmatpush.msra.mxu0 %v680
    %1042 = vmatpush.msra.mxu0 %v672
    %1043 = vmatpush.msra.mxu0 %v664
    %1044 = vmatmul.f32.gmra.mxu0 %v277
    %v1045 = vpop.f32.mrf.mxu0
    %v1046 = vadd.f32 %v1026, %v1045
    %1047 = vdwg.mxu0
    %1048 = vmatpush.msra.mxu0 %v401
    %1049 = vmatpush.msra.mxu0 %v393
    %1050 = vmatpush.msra.mxu0 %v385
    %1051 = vmatpush.msra.mxu0 %v377
    %1052 = vmatpush.msra.mxu0 %v369
    %1053 = vmatpush.msra.mxu0 %v361
    %1054 = vmatpush.msra.mxu0 %v353
    %1055 = vmatpush.msra.mxu0 %v345
    %1056 = vmatpush.msra.mxu0 %v337
    %1057 = vmatpush.msra.mxu0 %v329
    %1058 = vmatpush.msra.mxu0 %v321
    %1059 = vmatpush.msra.mxu0 %v313
    %1060 = vmatpush.msra.mxu0 %v305
    %1061 = vmatpush.msra.mxu0 %v297
    %1062 = vmatpush.msra.mxu0 %v289
    %1063 = vmatpush.msra.mxu0 %v281
    %1064 = vmatmul.f32.gmra.mxu0 %v274
    %v1065 = vpop.f32.mrf.mxu0
    %v1066 = vadd.f32 %v795, %v1065
    %1067 = vdwg.mxu0
    %1068 = vmatpush.msra.mxu0 %v529
    %1069 = vmatpush.msra.mxu0 %v521
    %1070 = vmatpush.msra.mxu0 %v513
    %1071 = vmatpush.msra.mxu0 %v505
    %1072 = vmatpush.msra.mxu0 %v497
    %1073 = vmatpush.msra.mxu0 %v489
    %1074 = vmatpush.msra.mxu0 %v481
    %1075 = vmatpush.msra.mxu0 %v473
    %1076 = vmatpush.msra.mxu0 %v465
    %1077 = vmatpush.msra.mxu0 %v457
    %1078 = vmatpush.msra.mxu0 %v449
    %1079 = vmatpush.msra.mxu0 %v441
    %1080 = vmatpush.msra.mxu0 %v433
    %1081 = vmatpush.msra.mxu0 %v425
    %1082 = vmatpush.msra.mxu0 %v417
    %1083 = vmatpush.msra.mxu0 %v409
    %1084 = vmatmul.f32.gmra.mxu0 %v275
    %v1085 = vpop.f32.mrf.mxu0
    %v1086 = vadd.f32 %v1066, %v1085
    %1087 = vdwg.mxu0
    %1088 = vmatpush.msra.mxu0 %v657
    %1089 = vmatpush.msra.mxu0 %v649
    %1090 = vmatpush.msra.mxu0 %v641
    %1091 = vmatpush.msra.mxu0 %v633
    %1092 = vmatpush.msra.mxu0 %v625
    %1093 = vmatpush.msra.mxu0 %v617
    %1094 = vmatpush.msra.mxu0 %v609
    %1095 = vmatpush.msra.mxu0 %v601
    %1096 = vmatpush.msra.mxu0 %v593
    %1097 = vmatpush.msra.mxu0 %v585
    %1098 = vmatpush.msra.mxu0 %v577
    %1099 = vmatpush.msra.mxu0 %v569
    %1100 = vmatpush.msra.mxu0 %v561
    %1101 = vmatpush.msra.mxu0 %v553
    %1102 = vmatpush.msra.mxu0 %v545
    %1103 = vmatpush.msra.mxu0 %v537
    %1104 = vmatmul.f32.gmra.mxu0 %v276
    %v1105 = vpop.f32.mrf.mxu0
    %v1106 = vadd.f32 %v1086, %v1105
    %1107 = vdwg.mxu0
    %1108 = vmatpush.msra.mxu0 %v785
    %1109 = vmatpush.msra.mxu0 %v777
    %1110 = vmatpush.msra.mxu0 %v769
    %1111 = vmatpush.msra.mxu0 %v761
    %1112 = vmatpush.msra.mxu0 %v753
    %1113 = vmatpush.msra.mxu0 %v745
    %1114 = vmatpush.msra.mxu0 %v737
    %1115 = vmatpush.msra.mxu0 %v729
    %1116 = vmatpush.msra.mxu0 %v721
    %1117 = vmatpush.msra.mxu0 %v713
    %1118 = vmatpush.msra.mxu0 %v705
    %1119 = vmatpush.msra.mxu0 %v697
    %1120 = vmatpush.msra.mxu0 %v689
    %1121 = vmatpush.msra.mxu0 %v681
    %1122 = vmatpush.msra.mxu0 %v673
    %1123 = vmatpush.msra.mxu0 %v665
    %1124 = vmatmul.f32.gmra.mxu0 %v277
    %v1125 = vpop.f32.mrf.mxu0
    %v1126 = vadd.f32 %v1106, %v1125
    %1127 = vdwg.mxu0
    %1128 = vmatpush.msra.mxu0 %v402
    %1129 = vmatpush.msra.mxu0 %v394
    %1130 = vmatpush.msra.mxu0 %v386
    %1131 = vmatpush.msra.mxu0 %v378
    %1132 = vmatpush.msra.mxu0 %v370
    %1133 = vmatpush.msra.mxu0 %v362
    %1134 = vmatpush.msra.mxu0 %v354
    %1135 = vmatpush.msra.mxu0 %v346
    %1136 = vmatpush.msra.mxu0 %v338
    %1137 = vmatpush.msra.mxu0 %v330
    %1138 = vmatpush.msra.mxu0 %v322
    %1139 = vmatpush.msra.mxu0 %v314
    %1140 = vmatpush.msra.mxu0 %v306
    %1141 = vmatpush.msra.mxu0 %v298
    %1142 = vmatpush.msra.mxu0 %v290
    %1143 = vmatpush.msra.mxu0 %v282
    %1144 = vmatmul.f32.gmra.mxu0 %v274
    %v1145 = vpop.f32.mrf.mxu0
    %v1146 = vadd.f32 %v796, %v1145
    %1147 = vdwg.mxu0
    %1148 = vmatpush.msra.mxu0 %v530
    %1149 = vmatpush.msra.mxu0 %v522
    %1150 = vmatpush.msra.mxu0 %v514
    %1151 = vmatpush.msra.mxu0 %v506
    %1152 = vmatpush.msra.mxu0 %v498
    %1153 = vmatpush.msra.mxu0 %v490
    %1154 = vmatpush.msra.mxu0 %v482
    %1155 = vmatpush.msra.mxu0 %v474
    %1156 = vmatpush.msra.mxu0 %v466
    %1157 = vmatpush.msra.mxu0 %v458
    %1158 = vmatpush.msra.mxu0 %v450
    %1159 = vmatpush.msra.mxu0 %v442
    %1160 = vmatpush.msra.mxu0 %v434
    %1161 = vmatpush.msra.mxu0 %v426
    %1162 = vmatpush.msra.mxu0 %v418
    %1163 = vmatpush.msra.mxu0 %v410
    %1164 = vmatmul.f32.gmra.mxu0 %v275
    %v1165 = vpop.f32.mrf.mxu0
    %v1166 = vadd.f32 %v1146, %v1165
    %1167 = vdwg.mxu0
    %1168 = vmatpush.msra.mxu0 %v658
    %1169 = vmatpush.msra.mxu0 %v650
    %1170 = vmatpush.msra.mxu0 %v642
    %1171 = vmatpush.msra.mxu0 %v634
    %1172 = vmatpush.msra.mxu0 %v626
    %1173 = vmatpush.msra.mxu0 %v618
    %1174 = vmatpush.msra.mxu0 %v610
    %1175 = vmatpush.msra.mxu0 %v602
    %1176 = vmatpush.msra.mxu0 %v594
    %1177 = vmatpush.msra.mxu0 %v586
    %1178 = vmatpush.msra.mxu0 %v578
    %1179 = vmatpush.msra.mxu0 %v570
    %1180 = vmatpush.msra.mxu0 %v562
    %1181 = vmatpush.msra.mxu0 %v554
    %1182 = vmatpush.msra.mxu0 %v546
    %1183 = vmatpush.msra.mxu0 %v538
    %1184 = vmatmul.f32.gmra.mxu0 %v276
    %v1185 = vpop.f32.mrf.mxu0
    %v1186 = vadd.f32 %v1166, %v1185
    %1187 = vdwg.mxu0
    %1188 = vmatpush.msra.mxu0 %v786
    %1189 = vmatpush.msra.mxu0 %v778
    %1190 = vmatpush.msra.mxu0 %v770
    %1191 = vmatpush.msra.mxu0 %v762
    %1192 = vmatpush.msra.mxu0 %v754
    %1193 = vmatpush.msra.mxu0 %v746
    %1194 = vmatpush.msra.mxu0 %v738
    %1195 = vmatpush.msra.mxu0 %v730
    %1196 = vmatpush.msra.mxu0 %v722
    %1197 = vmatpush.msra.mxu0 %v714
    %1198 = vmatpush.msra.mxu0 %v706
    %1199 = vmatpush.msra.mxu0 %v698
    %1200 = vmatpush.msra.mxu0 %v690
    %1201 = vmatpush.msra.mxu0 %v682
    %1202 = vmatpush.msra.mxu0 %v674
    %1203 = vmatpush.msra.mxu0 %v666
    %1204 = vmatmul.f32.gmra.mxu0 %v277
    %v1205 = vpop.f32.mrf.mxu0
    %v1206 = vadd.f32 %v1186, %v1205
    %1207 = vdwg.mxu0
    %1208 = vmatpush.msra.mxu0 %v403
    %1209 = vmatpush.msra.mxu0 %v395
    %1210 = vmatpush.msra.mxu0 %v387
    %1211 = vmatpush.msra.mxu0 %v379
    %1212 = vmatpush.msra.mxu0 %v371
    %1213 = vmatpush.msra.mxu0 %v363
    %1214 = vmatpush.msra.mxu0 %v355
    %1215 = vmatpush.msra.mxu0 %v347
    %1216 = vmatpush.msra.mxu0 %v339
    %1217 = vmatpush.msra.mxu0 %v331
    %1218 = vmatpush.msra.mxu0 %v323
    %1219 = vmatpush.msra.mxu0 %v315
    %1220 = vmatpush.msra.mxu0 %v307
    %1221 = vmatpush.msra.mxu0 %v299
    %1222 = vmatpush.msra.mxu0 %v291
    %1223 = vmatpush.msra.mxu0 %v283
    %1224 = vmatmul.f32.gmra.mxu0 %v274
    %v1225 = vpop.f32.mrf.mxu0
    %v1226 = vadd.f32 %v797, %v1225
    %1227 = vdwg.mxu0
    %1228 = vmatpush.msra.mxu0 %v531
    %1229 = vmatpush.msra.mxu0 %v523
    %1230 = vmatpush.msra.mxu0 %v515
    %1231 = vmatpush.msra.mxu0 %v507
    %1232 = vmatpush.msra.mxu0 %v499
    %1233 = vmatpush.msra.mxu0 %v491
    %1234 = vmatpush.msra.mxu0 %v483
    %1235 = vmatpush.msra.mxu0 %v475
    %1236 = vmatpush.msra.mxu0 %v467
    %1237 = vmatpush.msra.mxu0 %v459
    %1238 = vmatpush.msra.mxu0 %v451
    %1239 = vmatpush.msra.mxu0 %v443
    %1240 = vmatpush.msra.mxu0 %v435
    %1241 = vmatpush.msra.mxu0 %v427
    %1242 = vmatpush.msra.mxu0 %v419
    %1243 = vmatpush.msra.mxu0 %v411
    %1244 = vmatmul.f32.gmra.mxu0 %v275
    %v1245 = vpop.f32.mrf.mxu0
    %v1246 = vadd.f32 %v1226, %v1245
    %1247 = vdwg.mxu0
    %1248 = vmatpush.msra.mxu0 %v659
    %1249 = vmatpush.msra.mxu0 %v651
    %1250 = vmatpush.msra.mxu0 %v643
    %1251 = vmatpush.msra.mxu0 %v635
    %1252 = vmatpush.msra.mxu0 %v627
    %1253 = vmatpush.msra.mxu0 %v619
    %1254 = vmatpush.msra.mxu0 %v611
    %1255 = vmatpush.msra.mxu0 %v603
    %1256 = vmatpush.msra.mxu0 %v595
    %1257 = vmatpush.msra.mxu0 %v587
    %1258 = vmatpush.msra.mxu0 %v579
    %1259 = vmatpush.msra.mxu0 %v571
    %1260 = vmatpush.msra.mxu0 %v563
    %1261 = vmatpush.msra.mxu0 %v555
    %1262 = vmatpush.msra.mxu0 %v547
    %1263 = vmatpush.msra.mxu0 %v539
    %1264 = vmatmul.f32.gmra.mxu0 %v276
    %v1265 = vpop.f32.mrf.mxu0
    %v1266 = vadd.f32 %v1246, %v1265
    %1267 = vdwg.mxu0
    %1268 = vmatpush.msra.mxu0 %v787
    %1269 = vmatpush.msra.mxu0 %v779
    %1270 = vmatpush.msra.mxu0 %v771
    %1271 = vmatpush.msra.mxu0 %v763
    %1272 = vmatpush.msra.mxu0 %v755
    %1273 = vmatpush.msra.mxu0 %v747
    %1274 = vmatpush.msra.mxu0 %v739
    %1275 = vmatpush.msra.mxu0 %v731
    %1276 = vmatpush.msra.mxu0 %v723
    %1277 = vmatpush.msra.mxu0 %v715
    %1278 = vmatpush.msra.mxu0 %v707
    %1279 = vmatpush.msra.mxu0 %v699
    %1280 = vmatpush.msra.mxu0 %v691
    %1281 = vmatpush.msra.mxu0 %v683
    %1282 = vmatpush.msra.mxu0 %v675
    %1283 = vmatpush.msra.mxu0 %v667
    %1284 = vmatmul.f32.gmra.mxu0 %v277
    %v1285 = vpop.f32.mrf.mxu0
    %v1286 = vadd.f32 %v1266, %v1285
    %1287 = vdwg.mxu0
    %1288 = vmatpush.msra.mxu0 %v404
    %1289 = vmatpush.msra.mxu0 %v396
    %1290 = vmatpush.msra.mxu0 %v388
    %1291 = vmatpush.msra.mxu0 %v380
    %1292 = vmatpush.msra.mxu0 %v372
    %1293 = vmatpush.msra.mxu0 %v364
    %1294 = vmatpush.msra.mxu0 %v356
    %1295 = vmatpush.msra.mxu0 %v348
    %1296 = vmatpush.msra.mxu0 %v340
    %1297 = vmatpush.msra.mxu0 %v332
    %1298 = vmatpush.msra.mxu0 %v324
    %1299 = vmatpush.msra.mxu0 %v316
    %1300 = vmatpush.msra.mxu0 %v308
    %1301 = vmatpush.msra.mxu0 %v300
    %1302 = vmatpush.msra.mxu0 %v292
    %1303 = vmatpush.msra.mxu0 %v284
    %1304 = vmatmul.f32.gmra.mxu0 %v274
    %v1305 = vpop.f32.mrf.mxu0
    %v1306 = vadd.f32 %v798, %v1305
    %1307 = vdwg.mxu0
    %1308 = vmatpush.msra.mxu0 %v532
    %1309 = vmatpush.msra.mxu0 %v524
    %1310 = vmatpush.msra.mxu0 %v516
    %1311 = vmatpush.msra.mxu0 %v508
    %1312 = vmatpush.msra.mxu0 %v500
    %1313 = vmatpush.msra.mxu0 %v492
    %1314 = vmatpush.msra.mxu0 %v484
    %1315 = vmatpush.msra.mxu0 %v476
    %1316 = vmatpush.msra.mxu0 %v468
    %1317 = vmatpush.msra.mxu0 %v460
    %1318 = vmatpush.msra.mxu0 %v452
    %1319 = vmatpush.msra.mxu0 %v444
    %1320 = vmatpush.msra.mxu0 %v436
    %1321 = vmatpush.msra.mxu0 %v428
    %1322 = vmatpush.msra.mxu0 %v420
    %1323 = vmatpush.msra.mxu0 %v412
    %1324 = vmatmul.f32.gmra.mxu0 %v275
    %v1325 = vpop.f32.mrf.mxu0
    %v1326 = vadd.f32 %v1306, %v1325
    %1327 = vdwg.mxu0
    %1328 = vmatpush.msra.mxu0 %v660
    %1329 = vmatpush.msra.mxu0 %v652
    %1330 = vmatpush.msra.mxu0 %v644
    %1331 = vmatpush.msra.mxu0 %v636
    %1332 = vmatpush.msra.mxu0 %v628
    %1333 = vmatpush.msra.mxu0 %v620
    %1334 = vmatpush.msra.mxu0 %v612
    %1335 = vmatpush.msra.mxu0 %v604
    %1336 = vmatpush.msra.mxu0 %v596
    %1337 = vmatpush.msra.mxu0 %v588
    %1338 = vmatpush.msra.mxu0 %v580
    %1339 = vmatpush.msra.mxu0 %v572
    %1340 = vmatpush.msra.mxu0 %v564
    %1341 = vmatpush.msra.mxu0 %v556
    %1342 = vmatpush.msra.mxu0 %v548
    %1343 = vmatpush.msra.mxu0 %v540
    %1344 = vmatmul.f32.gmra.mxu0 %v276
    %v1345 = vpop.f32.mrf.mxu0
    %v1346 = vadd.f32 %v1326, %v1345
    %1347 = vdwg.mxu0
    %1348 = vmatpush.msra.mxu0 %v788
    %1349 = vmatpush.msra.mxu0 %v780
    %1350 = vmatpush.msra.mxu0 %v772
    %1351 = vmatpush.msra.mxu0 %v764
    %1352 = vmatpush.msra.mxu0 %v756
    %1353 = vmatpush.msra.mxu0 %v748
    %1354 = vmatpush.msra.mxu0 %v740
    %1355 = vmatpush.msra.mxu0 %v732
    %1356 = vmatpush.msra.mxu0 %v724
    %1357 = vmatpush.msra.mxu0 %v716
    %1358 = vmatpush.msra.mxu0 %v708
    %1359 = vmatpush.msra.mxu0 %v700
    %1360 = vmatpush.msra.mxu0 %v692
    %1361 = vmatpush.msra.mxu0 %v684
    %1362 = vmatpush.msra.mxu0 %v676
    %1363 = vmatpush.msra.mxu0 %v668
    %1364 = vmatmul.f32.gmra.mxu0 %v277
    %v1365 = vpop.f32.mrf.mxu0
    %v1366 = vadd.f32 %v1346, %v1365
    %1367 = vdwg.mxu0
    %1368 = vmatpush.msra.mxu0 %v405
    %1369 = vmatpush.msra.mxu0 %v397
    %1370 = vmatpush.msra.mxu0 %v389
    %1371 = vmatpush.msra.mxu0 %v381
    %1372 = vmatpush.msra.mxu0 %v373
    %1373 = vmatpush.msra.mxu0 %v365
    %1374 = vmatpush.msra.mxu0 %v357
    %1375 = vmatpush.msra.mxu0 %v349
    %1376 = vmatpush.msra.mxu0 %v341
    %1377 = vmatpush.msra.mxu0 %v333
    %1378 = vmatpush.msra.mxu0 %v325
    %1379 = vmatpush.msra.mxu0 %v317
    %1380 = vmatpush.msra.mxu0 %v309
    %1381 = vmatpush.msra.mxu0 %v301
    %1382 = vmatpush.msra.mxu0 %v293
    %1383 = vmatpush.msra.mxu0 %v285
    %1384 = vmatmul.f32.gmra.mxu0 %v274
    %v1385 = vpop.f32.mrf.mxu0
    %v1386 = vadd.f32 %v799, %v1385
    %1387 = vdwg.mxu0
    %1388 = vmatpush.msra.mxu0 %v533
    %1389 = vmatpush.msra.mxu0 %v525
    %1390 = vmatpush.msra.mxu0 %v517
    %1391 = vmatpush.msra.mxu0 %v509
    %1392 = vmatpush.msra.mxu0 %v501
    %1393 = vmatpush.msra.mxu0 %v493
    %1394 = vmatpush.msra.mxu0 %v485
    %1395 = vmatpush.msra.mxu0 %v477
    %1396 = vmatpush.msra.mxu0 %v469
    %1397 = vmatpush.msra.mxu0 %v461
    %1398 = vmatpush.msra.mxu0 %v453
    %1399 = vmatpush.msra.mxu0 %v445
    %1400 = vmatpush.msra.mxu0 %v437
    %1401 = vmatpush.msra.mxu0 %v429
    %1402 = vmatpush.msra.mxu0 %v421
    %1403 = vmatpush.msra.mxu0 %v413
    %1404 = vmatmul.f32.gmra.mxu0 %v275
    %v1405 = vpop.f32.mrf.mxu0
    %v1406 = vadd.f32 %v1386, %v1405
    %1407 = vdwg.mxu0
    %1408 = vmatpush.msra.mxu0 %v661
    %1409 = vmatpush.msra.mxu0 %v653
    %1410 = vmatpush.msra.mxu0 %v645
    %1411 = vmatpush.msra.mxu0 %v637
    %1412 = vmatpush.msra.mxu0 %v629
    %1413 = vmatpush.msra.mxu0 %v621
    %1414 = vmatpush.msra.mxu0 %v613
    %1415 = vmatpush.msra.mxu0 %v605
    %1416 = vmatpush.msra.mxu0 %v597
    %1417 = vmatpush.msra.mxu0 %v589
    %1418 = vmatpush.msra.mxu0 %v581
    %1419 = vmatpush.msra.mxu0 %v573
    %1420 = vmatpush.msra.mxu0 %v565
    %1421 = vmatpush.msra.mxu0 %v557
    %1422 = vmatpush.msra.mxu0 %v549
    %1423 = vmatpush.msra.mxu0 %v541
    %1424 = vmatmul.f32.gmra.mxu0 %v276
    %v1425 = vpop.f32.mrf.mxu0
    %v1426 = vadd.f32 %v1406, %v1425
    %1427 = vdwg.mxu0
    %1428 = vmatpush.msra.mxu0 %v789
    %1429 = vmatpush.msra.mxu0 %v781
    %1430 = vmatpush.msra.mxu0 %v773
    %1431 = vmatpush.msra.mxu0 %v765
    %1432 = vmatpush.msra.mxu0 %v757
    %1433 = vmatpush.msra.mxu0 %v749
    %1434 = vmatpush.msra.mxu0 %v741
    %1435 = vmatpush.msra.mxu0 %v733
    %1436 = vmatpush.msra.mxu0 %v725
    %1437 = vmatpush.msra.mxu0 %v717
    %1438 = vmatpush.msra.mxu0 %v709
    %1439 = vmatpush.msra.mxu0 %v701
    %1440 = vmatpush.msra.mxu0 %v693
    %1441 = vmatpush.msra.mxu0 %v685
    %1442 = vmatpush.msra.mxu0 %v677
    %1443 = vmatpush.msra.mxu0 %v669
    %1444 = vmatmul.f32.gmra.mxu0 %v277
    %v1445 = vpop.f32.mrf.mxu0
    %v1446 = vadd.f32 %v1426, %v1445
    %1447 = vdwg.mxu0
    %v1448 = vmax.f32 %v886, 0.0
    %v1449 = vmax.f32 %v966, 0.0
    %v1450 = vmax.f32 %v1046, 0.0
    %v1451 = vmax.f32 %v1126, 0.0
    %v1452 = vmax.f32 %v1206, 0.0
    %v1453 = vmax.f32 %v1286, 0.0
    %v1454 = vmax.f32 %v1366, 0.0
    %v1455 = vmax.f32 %v1446, 0.0
    %v1456 = vld [vmem:[#allocation11] sm:$0xff]
    %v1457 = vld [vmem:[#allocation11 + $0x8] sm:$0xff]
    %v1458 = vld [vmem:[#allocation11 + $0x10] sm:$0xff]
    %v1459 = vld [vmem:[#allocation11 + $0x18] sm:$0xff]
    %v1460 = vld [vmem:[#allocation11 + $0x20] sm:$0xff]
    %v1461 = vld [vmem:[#allocation11 + $0x28] sm:$0xff]
    %v1462 = vld [vmem:[#allocation11 + $0x30] sm:$0xff]
    %v1463 = vld [vmem:[#allocation11 + $0x38] sm:$0xff]
    %v1464 = vld [vmem:[#allocation11 + $0x40] sm:$0xff]
    %v1465 = vld [vmem:[#allocation11 + $0x48] sm:$0xff]
    %v1466 = vld [vmem:[#allocation11 + $0x50] sm:$0xff]
    %v1467 = vld [vmem:[#allocation11 + $0x58] sm:$0xff]
    %v1468 = vld [vmem:[#allocation11 + $0x60] sm:$0xff]
    %v1469 = vld [vmem:[#allocation11 + $0x68] sm:$0xff]
    %v1470 = vld [vmem:[#allocation11 + $0x70] sm:$0xff]
    %v1471 = vld [vmem:[#allocation11 + $0x78] sm:$0xff]
    %v1472 = vld [vmem:[#allocation11 + $0x80] sm:$0xff]
    %v1473 = vld [vmem:[#allocation11 + $0x88] sm:$0xff]
    %v1474 = vld [vmem:[#allocation11 + $0x90] sm:$0xff]
    %v1475 = vld [vmem:[#allocation11 + $0x98] sm:$0xff]
    %v1476 = vld [vmem:[#allocation11 + $0xa0] sm:$0xff]
    %v1477 = vld [vmem:[#allocation11 + $0xa8] sm:$0xff]
    %v1478 = vld [vmem:[#allocation11 + $0xb0] sm:$0xff]
    %v1479 = vld [vmem:[#allocation11 + $0xb8] sm:$0xff]
    %v1480 = vld [vmem:[#allocation11 + $0xc0] sm:$0xff]
    %v1481 = vld [vmem:[#allocation11 + $0xc8] sm:$0xff]
    %v1482 = vld [vmem:[#allocation11 + $0xd0] sm:$0xff]
    %v1483 = vld [vmem:[#allocation11 + $0xd8] sm:$0xff]
    %v1484 = vld [vmem:[#allocation11 + $0xe0] sm:$0xff]
    %v1485 = vld [vmem:[#allocation11 + $0xe8] sm:$0xff]
    %v1486 = vld [vmem:[#allocation11 + $0xf0] sm:$0xff]
    %v1487 = vld [vmem:[#allocation11 + $0xf8] sm:$0xff]
    %v1488 = vld [vmem:[#allocation11 + $0x100] sm:$0xff]
    %v1489 = vld [vmem:[#allocation11 + $0x108] sm:$0xff]
    %v1490 = vld [vmem:[#allocation11 + $0x110] sm:$0xff]
    %v1491 = vld [vmem:[#allocation11 + $0x118] sm:$0xff]
    %v1492 = vld [vmem:[#allocation11 + $0x120] sm:$0xff]
    %v1493 = vld [vmem:[#allocation11 + $0x128] sm:$0xff]
    %v1494 = vld [vmem:[#allocation11 + $0x130] sm:$0xff]
    %v1495 = vld [vmem:[#allocation11 + $0x138] sm:$0xff]
    %v1496 = vld [vmem:[#allocation11 + $0x140] sm:$0xff]
    %v1497 = vld [vmem:[#allocation11 + $0x148] sm:$0xff]
    %v1498 = vld [vmem:[#allocation11 + $0x150] sm:$0xff]
    %v1499 = vld [vmem:[#allocation11 + $0x158] sm:$0xff]
    %v1500 = vld [vmem:[#allocation11 + $0x160] sm:$0xff]
    %v1501 = vld [vmem:[#allocation11 + $0x168] sm:$0xff]
    %v1502 = vld [vmem:[#allocation11 + $0x170] sm:$0xff]
    %v1503 = vld [vmem:[#allocation11 + $0x178] sm:$0xff]
    %v1504 = vld [vmem:[#allocation11 + $0x180] sm:$0xff]
    %v1505 = vld [vmem:[#allocation11 + $0x188] sm:$0xff]
    %v1506 = vld [vmem:[#allocation11 + $0x190] sm:$0xff]
    %v1507 = vld [vmem:[#allocation11 + $0x198] sm:$0xff]
    %v1508 = vld [vmem:[#allocation11 + $0x1a0] sm:$0xff]
    %v1509 = vld [vmem:[#allocation11 + $0x1a8] sm:$0xff]
    %v1510 = vld [vmem:[#allocation11 + $0x1b0] sm:$0xff]
    %v1511 = vld [vmem:[#allocation11 + $0x1b8] sm:$0xff]
    %v1512 = vld [vmem:[#allocation11 + $0x1c0] sm:$0xff]
    %v1513 = vld [vmem:[#allocation11 + $0x1c8] sm:$0xff]
    %v1514 = vld [vmem:[#allocation11 + $0x1d0] sm:$0xff]
    %v1515 = vld [vmem:[#allocation11 + $0x1d8] sm:$0xff]
    %v1516 = vld [vmem:[#allocation11 + $0x1e0] sm:$0xff]
    %v1517 = vld [vmem:[#allocation11 + $0x1e8] sm:$0xff]
    %v1518 = vld [vmem:[#allocation11 + $0x1f0] sm:$0xff]
    %v1519 = vld [vmem:[#allocation11 + $0x1f8] sm:$0xff]
    %v1520 = vld [vmem:[#allocation11 + $0x200] sm:$0xff]
    %v1521 = vld [vmem:[#allocation11 + $0x208] sm:$0xff]
    %v1522 = vld [vmem:[#allocation11 + $0x210] sm:$0xff]
    %v1523 = vld [vmem:[#allocation11 + $0x218] sm:$0xff]
    %v1524 = vld [vmem:[#allocation11 + $0x220] sm:$0xff]
    %v1525 = vld [vmem:[#allocation11 + $0x228] sm:$0xff]
    %v1526 = vld [vmem:[#allocation11 + $0x230] sm:$0xff]
    %v1527 = vld [vmem:[#allocation11 + $0x238] sm:$0xff]
    %v1528 = vld [vmem:[#allocation11 + $0x240] sm:$0xff]
    %v1529 = vld [vmem:[#allocation11 + $0x248] sm:$0xff]
    %v1530 = vld [vmem:[#allocation11 + $0x250] sm:$0xff]
    %v1531 = vld [vmem:[#allocation11 + $0x258] sm:$0xff]
    %v1532 = vld [vmem:[#allocation11 + $0x260] sm:$0xff]
    %v1533 = vld [vmem:[#allocation11 + $0x268] sm:$0xff]
    %v1534 = vld [vmem:[#allocation11 + $0x270] sm:$0xff]
    %v1535 = vld [vmem:[#allocation11 + $0x278] sm:$0xff]
    %v1536 = vld [vmem:[#allocation11 + $0x280] sm:$0xff]
    %v1537 = vld [vmem:[#allocation11 + $0x288] sm:$0xff]
    %v1538 = vld [vmem:[#allocation11 + $0x290] sm:$0xff]
    %v1539 = vld [vmem:[#allocation11 + $0x298] sm:$0xff]
    %v1540 = vld [vmem:[#allocation11 + $0x2a0] sm:$0xff]
    %v1541 = vld [vmem:[#allocation11 + $0x2a8] sm:$0xff]
    %v1542 = vld [vmem:[#allocation11 + $0x2b0] sm:$0xff]
    %v1543 = vld [vmem:[#allocation11 + $0x2b8] sm:$0xff]
    %v1544 = vld [vmem:[#allocation11 + $0x2c0] sm:$0xff]
    %v1545 = vld [vmem:[#allocation11 + $0x2c8] sm:$0xff]
    %v1546 = vld [vmem:[#allocation11 + $0x2d0] sm:$0xff]
    %v1547 = vld [vmem:[#allocation11 + $0x2d8] sm:$0xff]
    %v1548 = vld [vmem:[#allocation11 + $0x2e0] sm:$0xff]
    %v1549 = vld [vmem:[#allocation11 + $0x2e8] sm:$0xff]
    %v1550 = vld [vmem:[#allocation11 + $0x2f0] sm:$0xff]
    %v1551 = vld [vmem:[#allocation11 + $0x2f8] sm:$0xff]
    %v1552 = vld [vmem:[#allocation11 + $0x300] sm:$0xff]
    %v1553 = vld [vmem:[#allocation11 + $0x308] sm:$0xff]
    %v1554 = vld [vmem:[#allocation11 + $0x310] sm:$0xff]
    %v1555 = vld [vmem:[#allocation11 + $0x318] sm:$0xff]
    %v1556 = vld [vmem:[#allocation11 + $0x320] sm:$0xff]
    %v1557 = vld [vmem:[#allocation11 + $0x328] sm:$0xff]
    %v1558 = vld [vmem:[#allocation11 + $0x330] sm:$0xff]
    %v1559 = vld [vmem:[#allocation11 + $0x338] sm:$0xff]
    %v1560 = vld [vmem:[#allocation11 + $0x340] sm:$0xff]
    %v1561 = vld [vmem:[#allocation11 + $0x348] sm:$0xff]
    %v1562 = vld [vmem:[#allocation11 + $0x350] sm:$0xff]
    %v1563 = vld [vmem:[#allocation11 + $0x358] sm:$0xff]
    %v1564 = vld [vmem:[#allocation11 + $0x360] sm:$0xff]
    %v1565 = vld [vmem:[#allocation11 + $0x368] sm:$0xff]
    %v1566 = vld [vmem:[#allocation11 + $0x370] sm:$0xff]
    %v1567 = vld [vmem:[#allocation11 + $0x378] sm:$0xff]
    %v1568 = vld [vmem:[#allocation11 + $0x380] sm:$0xff]
    %v1569 = vld [vmem:[#allocation11 + $0x388] sm:$0xff]
    %v1570 = vld [vmem:[#allocation11 + $0x390] sm:$0xff]
    %v1571 = vld [vmem:[#allocation11 + $0x398] sm:$0xff]
    %v1572 = vld [vmem:[#allocation11 + $0x3a0] sm:$0xff]
    %v1573 = vld [vmem:[#allocation11 + $0x3a8] sm:$0xff]
    %v1574 = vld [vmem:[#allocation11 + $0x3b0] sm:$0xff]
    %v1575 = vld [vmem:[#allocation11 + $0x3b8] sm:$0xff]
    %v1576 = vld [vmem:[#allocation11 + $0x3c0] sm:$0xff]
    %v1577 = vld [vmem:[#allocation11 + $0x3c8] sm:$0xff]
    %v1578 = vld [vmem:[#allocation11 + $0x3d0] sm:$0xff]
    %v1579 = vld [vmem:[#allocation11 + $0x3d8] sm:$0xff]
    %v1580 = vld [vmem:[#allocation11 + $0x3e0] sm:$0xff]
    %v1581 = vld [vmem:[#allocation11 + $0x3e8] sm:$0xff]
    %v1582 = vld [vmem:[#allocation11 + $0x3f0] sm:$0xff]
    %v1583 = vld [vmem:[#allocation11 + $0x3f8] sm:$0xff]
    %v1584 = vld [vmem:[#allocation11 + $0x400] sm:$0xff]
    %v1585 = vld [vmem:[#allocation11 + $0x408] sm:$0xff]
    %v1586 = vld [vmem:[#allocation11 + $0x410] sm:$0xff]
    %v1587 = vld [vmem:[#allocation11 + $0x418] sm:$0xff]
    %v1588 = vld [vmem:[#allocation11 + $0x420] sm:$0xff]
    %v1589 = vld [vmem:[#allocation11 + $0x428] sm:$0xff]
    %v1590 = vld [vmem:[#allocation11 + $0x430] sm:$0xff]
    %v1591 = vld [vmem:[#allocation11 + $0x438] sm:$0xff]
    %v1592 = vld [vmem:[#allocation11 + $0x440] sm:$0xff]
    %v1593 = vld [vmem:[#allocation11 + $0x448] sm:$0xff]
    %v1594 = vld [vmem:[#allocation11 + $0x450] sm:$0xff]
    %v1595 = vld [vmem:[#allocation11 + $0x458] sm:$0xff]
    %v1596 = vld [vmem:[#allocation11 + $0x460] sm:$0xff]
    %v1597 = vld [vmem:[#allocation11 + $0x468] sm:$0xff]
    %v1598 = vld [vmem:[#allocation11 + $0x470] sm:$0xff]
    %v1599 = vld [vmem:[#allocation11 + $0x478] sm:$0xff]
    %v1600 = vld [vmem:[#allocation11 + $0x480] sm:$0xff]
    %v1601 = vld [vmem:[#allocation11 + $0x488] sm:$0xff]
    %v1602 = vld [vmem:[#allocation11 + $0x490] sm:$0xff]
    %v1603 = vld [vmem:[#allocation11 + $0x498] sm:$0xff]
    %v1604 = vld [vmem:[#allocation11 + $0x4a0] sm:$0xff]
    %v1605 = vld [vmem:[#allocation11 + $0x4a8] sm:$0xff]
    %v1606 = vld [vmem:[#allocation11 + $0x4b0] sm:$0xff]
    %v1607 = vld [vmem:[#allocation11 + $0x4b8] sm:$0xff]
    %v1608 = vld [vmem:[#allocation11 + $0x4c0] sm:$0xff]
    %v1609 = vld [vmem:[#allocation11 + $0x4c8] sm:$0xff]
    %v1610 = vld [vmem:[#allocation11 + $0x4d0] sm:$0xff]
    %v1611 = vld [vmem:[#allocation11 + $0x4d8] sm:$0xff]
    %v1612 = vld [vmem:[#allocation11 + $0x4e0] sm:$0xff]
    %v1613 = vld [vmem:[#allocation11 + $0x4e8] sm:$0xff]
    %v1614 = vld [vmem:[#allocation11 + $0x4f0] sm:$0xff]
    %v1615 = vld [vmem:[#allocation11 + $0x4f8] sm:$0xff]
    %v1616 = vld [vmem:[#allocation11 + $0x500] sm:$0xff]
    %v1617 = vld [vmem:[#allocation11 + $0x508] sm:$0xff]
    %v1618 = vld [vmem:[#allocation11 + $0x510] sm:$0xff]
    %v1619 = vld [vmem:[#allocation11 + $0x518] sm:$0xff]
    %v1620 = vld [vmem:[#allocation11 + $0x520] sm:$0xff]
    %v1621 = vld [vmem:[#allocation11 + $0x528] sm:$0xff]
    %v1622 = vld [vmem:[#allocation11 + $0x530] sm:$0xff]
    %v1623 = vld [vmem:[#allocation11 + $0x538] sm:$0xff]
    %v1624 = vld [vmem:[#allocation11 + $0x540] sm:$0xff]
    %v1625 = vld [vmem:[#allocation11 + $0x548] sm:$0xff]
    %v1626 = vld [vmem:[#allocation11 + $0x550] sm:$0xff]
    %v1627 = vld [vmem:[#allocation11 + $0x558] sm:$0xff]
    %v1628 = vld [vmem:[#allocation11 + $0x560] sm:$0xff]
    %v1629 = vld [vmem:[#allocation11 + $0x568] sm:$0xff]
    %v1630 = vld [vmem:[#allocation11 + $0x570] sm:$0xff]
    %v1631 = vld [vmem:[#allocation11 + $0x578] sm:$0xff]
    %v1632 = vld [vmem:[#allocation11 + $0x580] sm:$0xff]
    %v1633 = vld [vmem:[#allocation11 + $0x588] sm:$0xff]
    %v1634 = vld [vmem:[#allocation11 + $0x590] sm:$0xff]
    %v1635 = vld [vmem:[#allocation11 + $0x598] sm:$0xff]
    %v1636 = vld [vmem:[#allocation11 + $0x5a0] sm:$0xff]
    %v1637 = vld [vmem:[#allocation11 + $0x5a8] sm:$0xff]
    %v1638 = vld [vmem:[#allocation11 + $0x5b0] sm:$0xff]
    %v1639 = vld [vmem:[#allocation11 + $0x5b8] sm:$0xff]
    %v1640 = vld [vmem:[#allocation11 + $0x5c0] sm:$0xff]
    %v1641 = vld [vmem:[#allocation11 + $0x5c8] sm:$0xff]
    %v1642 = vld [vmem:[#allocation11 + $0x5d0] sm:$0xff]
    %v1643 = vld [vmem:[#allocation11 + $0x5d8] sm:$0xff]
    %v1644 = vld [vmem:[#allocation11 + $0x5e0] sm:$0xff]
    %v1645 = vld [vmem:[#allocation11 + $0x5e8] sm:$0xff]
    %v1646 = vld [vmem:[#allocation11 + $0x5f0] sm:$0xff]
    %v1647 = vld [vmem:[#allocation11 + $0x5f8] sm:$0xff]
    %v1648 = vld [vmem:[#allocation11 + $0x600] sm:$0xff]
    %v1649 = vld [vmem:[#allocation11 + $0x608] sm:$0xff]
    %v1650 = vld [vmem:[#allocation11 + $0x610] sm:$0xff]
    %v1651 = vld [vmem:[#allocation11 + $0x618] sm:$0xff]
    %v1652 = vld [vmem:[#allocation11 + $0x620] sm:$0xff]
    %v1653 = vld [vmem:[#allocation11 + $0x628] sm:$0xff]
    %v1654 = vld [vmem:[#allocation11 + $0x630] sm:$0xff]
    %v1655 = vld [vmem:[#allocation11 + $0x638] sm:$0xff]
    %v1656 = vld [vmem:[#allocation11 + $0x640] sm:$0xff]
    %v1657 = vld [vmem:[#allocation11 + $0x648] sm:$0xff]
    %v1658 = vld [vmem:[#allocation11 + $0x650] sm:$0xff]
    %v1659 = vld [vmem:[#allocation11 + $0x658] sm:$0xff]
    %v1660 = vld [vmem:[#allocation11 + $0x660] sm:$0xff]
    %v1661 = vld [vmem:[#allocation11 + $0x668] sm:$0xff]
    %v1662 = vld [vmem:[#allocation11 + $0x670] sm:$0xff]
    %v1663 = vld [vmem:[#allocation11 + $0x678] sm:$0xff]
    %v1664 = vld [vmem:[#allocation11 + $0x680] sm:$0xff]
    %v1665 = vld [vmem:[#allocation11 + $0x688] sm:$0xff]
    %v1666 = vld [vmem:[#allocation11 + $0x690] sm:$0xff]
    %v1667 = vld [vmem:[#allocation11 + $0x698] sm:$0xff]
    %v1668 = vld [vmem:[#allocation11 + $0x6a0] sm:$0xff]
    %v1669 = vld [vmem:[#allocation11 + $0x6a8] sm:$0xff]
    %v1670 = vld [vmem:[#allocation11 + $0x6b0] sm:$0xff]
    %v1671 = vld [vmem:[#allocation11 + $0x6b8] sm:$0xff]
    %v1672 = vld [vmem:[#allocation11 + $0x6c0] sm:$0xff]
    %v1673 = vld [vmem:[#allocation11 + $0x6c8] sm:$0xff]
    %v1674 = vld [vmem:[#allocation11 + $0x6d0] sm:$0xff]
    %v1675 = vld [vmem:[#allocation11 + $0x6d8] sm:$0xff]
    %v1676 = vld [vmem:[#allocation11 + $0x6e0] sm:$0xff]
    %v1677 = vld [vmem:[#allocation11 + $0x6e8] sm:$0xff]
    %v1678 = vld [vmem:[#allocation11 + $0x6f0] sm:$0xff]
    %v1679 = vld [vmem:[#allocation11 + $0x6f8] sm:$0xff]
    %v1680 = vld [vmem:[#allocation11 + $0x700] sm:$0xff]
    %v1681 = vld [vmem:[#allocation11 + $0x708] sm:$0xff]
    %v1682 = vld [vmem:[#allocation11 + $0x710] sm:$0xff]
    %v1683 = vld [vmem:[#allocation11 + $0x718] sm:$0xff]
    %v1684 = vld [vmem:[#allocation11 + $0x720] sm:$0xff]
    %v1685 = vld [vmem:[#allocation11 + $0x728] sm:$0xff]
    %v1686 = vld [vmem:[#allocation11 + $0x730] sm:$0xff]
    %v1687 = vld [vmem:[#allocation11 + $0x738] sm:$0xff]
    %v1688 = vld [vmem:[#allocation11 + $0x740] sm:$0xff]
    %v1689 = vld [vmem:[#allocation11 + $0x748] sm:$0xff]
    %v1690 = vld [vmem:[#allocation11 + $0x750] sm:$0xff]
    %v1691 = vld [vmem:[#allocation11 + $0x758] sm:$0xff]
    %v1692 = vld [vmem:[#allocation11 + $0x760] sm:$0xff]
    %v1693 = vld [vmem:[#allocation11 + $0x768] sm:$0xff]
    %v1694 = vld [vmem:[#allocation11 + $0x770] sm:$0xff]
    %v1695 = vld [vmem:[#allocation11 + $0x778] sm:$0xff]
    %v1696 = vld [vmem:[#allocation11 + $0x780] sm:$0xff]
    %v1697 = vld [vmem:[#allocation11 + $0x788] sm:$0xff]
    %v1698 = vld [vmem:[#allocation11 + $0x790] sm:$0xff]
    %v1699 = vld [vmem:[#allocation11 + $0x798] sm:$0xff]
    %v1700 = vld [vmem:[#allocation11 + $0x7a0] sm:$0xff]
    %v1701 = vld [vmem:[#allocation11 + $0x7a8] sm:$0xff]
    %v1702 = vld [vmem:[#allocation11 + $0x7b0] sm:$0xff]
    %v1703 = vld [vmem:[#allocation11 + $0x7b8] sm:$0xff]
    %v1704 = vld [vmem:[#allocation11 + $0x7c0] sm:$0xff]
    %v1705 = vld [vmem:[#allocation11 + $0x7c8] sm:$0xff]
    %v1706 = vld [vmem:[#allocation11 + $0x7d0] sm:$0xff]
    %v1707 = vld [vmem:[#allocation11 + $0x7d8] sm:$0xff]
    %v1708 = vld [vmem:[#allocation11 + $0x7e0] sm:$0xff]
    %v1709 = vld [vmem:[#allocation11 + $0x7e8] sm:$0xff]
    %v1710 = vld [vmem:[#allocation11 + $0x7f0] sm:$0xff]
    %v1711 = vld [vmem:[#allocation11 + $0x7f8] sm:$0xff]
    %v1712 = vld [vmem:[#allocation11 + $0x800] sm:$0xff]
    %v1713 = vld [vmem:[#allocation11 + $0x808] sm:$0xff]
    %v1714 = vld [vmem:[#allocation11 + $0x810] sm:$0xff]
    %v1715 = vld [vmem:[#allocation11 + $0x818] sm:$0xff]
    %v1716 = vld [vmem:[#allocation11 + $0x820] sm:$0xff]
    %v1717 = vld [vmem:[#allocation11 + $0x828] sm:$0xff]
    %v1718 = vld [vmem:[#allocation11 + $0x830] sm:$0xff]
    %v1719 = vld [vmem:[#allocation11 + $0x838] sm:$0xff]
    %v1720 = vld [vmem:[#allocation11 + $0x840] sm:$0xff]
    %v1721 = vld [vmem:[#allocation11 + $0x848] sm:$0xff]
    %v1722 = vld [vmem:[#allocation11 + $0x850] sm:$0xff]
    %v1723 = vld [vmem:[#allocation11 + $0x858] sm:$0xff]
    %v1724 = vld [vmem:[#allocation11 + $0x860] sm:$0xff]
    %v1725 = vld [vmem:[#allocation11 + $0x868] sm:$0xff]
    %v1726 = vld [vmem:[#allocation11 + $0x870] sm:$0xff]
    %v1727 = vld [vmem:[#allocation11 + $0x878] sm:$0xff]
    %v1728 = vld [vmem:[#allocation11 + $0x880] sm:$0xff]
    %v1729 = vld [vmem:[#allocation11 + $0x888] sm:$0xff]
    %v1730 = vld [vmem:[#allocation11 + $0x890] sm:$0xff]
    %v1731 = vld [vmem:[#allocation11 + $0x898] sm:$0xff]
    %v1732 = vld [vmem:[#allocation11 + $0x8a0] sm:$0xff]
    %v1733 = vld [vmem:[#allocation11 + $0x8a8] sm:$0xff]
    %v1734 = vld [vmem:[#allocation11 + $0x8b0] sm:$0xff]
    %v1735 = vld [vmem:[#allocation11 + $0x8b8] sm:$0xff]
    %v1736 = vld [vmem:[#allocation11 + $0x8c0] sm:$0xff]
    %v1737 = vld [vmem:[#allocation11 + $0x8c8] sm:$0xff]
    %v1738 = vld [vmem:[#allocation11 + $0x8d0] sm:$0xff]
    %v1739 = vld [vmem:[#allocation11 + $0x8d8] sm:$0xff]
    %v1740 = vld [vmem:[#allocation11 + $0x8e0] sm:$0xff]
    %v1741 = vld [vmem:[#allocation11 + $0x8e8] sm:$0xff]
    %v1742 = vld [vmem:[#allocation11 + $0x8f0] sm:$0xff]
    %v1743 = vld [vmem:[#allocation11 + $0x8f8] sm:$0xff]
    %v1744 = vld [vmem:[#allocation11 + $0x900] sm:$0xff]
    %v1745 = vld [vmem:[#allocation11 + $0x908] sm:$0xff]
    %v1746 = vld [vmem:[#allocation11 + $0x910] sm:$0xff]
    %v1747 = vld [vmem:[#allocation11 + $0x918] sm:$0xff]
    %v1748 = vld [vmem:[#allocation11 + $0x920] sm:$0xff]
    %v1749 = vld [vmem:[#allocation11 + $0x928] sm:$0xff]
    %v1750 = vld [vmem:[#allocation11 + $0x930] sm:$0xff]
    %v1751 = vld [vmem:[#allocation11 + $0x938] sm:$0xff]
    %v1752 = vld [vmem:[#allocation11 + $0x940] sm:$0xff]
    %v1753 = vld [vmem:[#allocation11 + $0x948] sm:$0xff]
    %v1754 = vld [vmem:[#allocation11 + $0x950] sm:$0xff]
    %v1755 = vld [vmem:[#allocation11 + $0x958] sm:$0xff]
    %v1756 = vld [vmem:[#allocation11 + $0x960] sm:$0xff]
    %v1757 = vld [vmem:[#allocation11 + $0x968] sm:$0xff]
    %v1758 = vld [vmem:[#allocation11 + $0x970] sm:$0xff]
    %v1759 = vld [vmem:[#allocation11 + $0x978] sm:$0xff]
    %v1760 = vld [vmem:[#allocation11 + $0x980] sm:$0xff]
    %v1761 = vld [vmem:[#allocation11 + $0x988] sm:$0xff]
    %v1762 = vld [vmem:[#allocation11 + $0x990] sm:$0xff]
    %v1763 = vld [vmem:[#allocation11 + $0x998] sm:$0xff]
    %v1764 = vld [vmem:[#allocation11 + $0x9a0] sm:$0xff]
    %v1765 = vld [vmem:[#allocation11 + $0x9a8] sm:$0xff]
    %v1766 = vld [vmem:[#allocation11 + $0x9b0] sm:$0xff]
    %v1767 = vld [vmem:[#allocation11 + $0x9b8] sm:$0xff]
    %v1768 = vld [vmem:[#allocation11 + $0x9c0] sm:$0xff]
    %v1769 = vld [vmem:[#allocation11 + $0x9c8] sm:$0xff]
    %v1770 = vld [vmem:[#allocation11 + $0x9d0] sm:$0xff]
    %v1771 = vld [vmem:[#allocation11 + $0x9d8] sm:$0xff]
    %v1772 = vld [vmem:[#allocation11 + $0x9e0] sm:$0xff]
    %v1773 = vld [vmem:[#allocation11 + $0x9e8] sm:$0xff]
    %v1774 = vld [vmem:[#allocation11 + $0x9f0] sm:$0xff]
    %v1775 = vld [vmem:[#allocation11 + $0x9f8] sm:$0xff]
    %v1776 = vld [vmem:[#allocation11 + $0xa00] sm:$0xff]
    %v1777 = vld [vmem:[#allocation11 + $0xa08] sm:$0xff]
    %v1778 = vld [vmem:[#allocation11 + $0xa10] sm:$0xff]
    %v1779 = vld [vmem:[#allocation11 + $0xa18] sm:$0xff]
    %v1780 = vld [vmem:[#allocation11 + $0xa20] sm:$0xff]
    %v1781 = vld [vmem:[#allocation11 + $0xa28] sm:$0xff]
    %v1782 = vld [vmem:[#allocation11 + $0xa30] sm:$0xff]
    %v1783 = vld [vmem:[#allocation11 + $0xa38] sm:$0xff]
    %v1784 = vld [vmem:[#allocation11 + $0xa40] sm:$0xff]
    %v1785 = vld [vmem:[#allocation11 + $0xa48] sm:$0xff]
    %v1786 = vld [vmem:[#allocation11 + $0xa50] sm:$0xff]
    %v1787 = vld [vmem:[#allocation11 + $0xa58] sm:$0xff]
    %v1788 = vld [vmem:[#allocation11 + $0xa60] sm:$0xff]
    %v1789 = vld [vmem:[#allocation11 + $0xa68] sm:$0xff]
    %v1790 = vld [vmem:[#allocation11 + $0xa70] sm:$0xff]
    %v1791 = vld [vmem:[#allocation11 + $0xa78] sm:$0xff]
    %v1792 = vld [vmem:[#allocation11 + $0xa80] sm:$0xff]
    %v1793 = vld [vmem:[#allocation11 + $0xa88] sm:$0xff]
    %v1794 = vld [vmem:[#allocation11 + $0xa90] sm:$0xff]
    %v1795 = vld [vmem:[#allocation11 + $0xa98] sm:$0xff]
    %v1796 = vld [vmem:[#allocation11 + $0xaa0] sm:$0xff]
    %v1797 = vld [vmem:[#allocation11 + $0xaa8] sm:$0xff]
    %v1798 = vld [vmem:[#allocation11 + $0xab0] sm:$0xff]
    %v1799 = vld [vmem:[#allocation11 + $0xab8] sm:$0xff]
    %v1800 = vld [vmem:[#allocation11 + $0xac0] sm:$0xff]
    %v1801 = vld [vmem:[#allocation11 + $0xac8] sm:$0xff]
    %v1802 = vld [vmem:[#allocation11 + $0xad0] sm:$0xff]
    %v1803 = vld [vmem:[#allocation11 + $0xad8] sm:$0xff]
    %v1804 = vld [vmem:[#allocation11 + $0xae0] sm:$0xff]
    %v1805 = vld [vmem:[#allocation11 + $0xae8] sm:$0xff]
    %v1806 = vld [vmem:[#allocation11 + $0xaf0] sm:$0xff]
    %v1807 = vld [vmem:[#allocation11 + $0xaf8] sm:$0xff]
    %v1808 = vld [vmem:[#allocation11 + $0xb00] sm:$0xff]
    %v1809 = vld [vmem:[#allocation11 + $0xb08] sm:$0xff]
    %v1810 = vld [vmem:[#allocation11 + $0xb10] sm:$0xff]
    %v1811 = vld [vmem:[#allocation11 + $0xb18] sm:$0xff]
    %v1812 = vld [vmem:[#allocation11 + $0xb20] sm:$0xff]
    %v1813 = vld [vmem:[#allocation11 + $0xb28] sm:$0xff]
    %v1814 = vld [vmem:[#allocation11 + $0xb30] sm:$0xff]
    %v1815 = vld [vmem:[#allocation11 + $0xb38] sm:$0xff]
    %v1816 = vld [vmem:[#allocation11 + $0xb40] sm:$0xff]
    %v1817 = vld [vmem:[#allocation11 + $0xb48] sm:$0xff]
    %v1818 = vld [vmem:[#allocation11 + $0xb50] sm:$0xff]
    %v1819 = vld [vmem:[#allocation11 + $0xb58] sm:$0xff]
    %v1820 = vld [vmem:[#allocation11 + $0xb60] sm:$0xff]
    %v1821 = vld [vmem:[#allocation11 + $0xb68] sm:$0xff]
    %v1822 = vld [vmem:[#allocation11 + $0xb70] sm:$0xff]
    %v1823 = vld [vmem:[#allocation11 + $0xb78] sm:$0xff]
    %v1824 = vld [vmem:[#allocation11 + $0xb80] sm:$0xff]
    %v1825 = vld [vmem:[#allocation11 + $0xb88] sm:$0xff]
    %v1826 = vld [vmem:[#allocation11 + $0xb90] sm:$0xff]
    %v1827 = vld [vmem:[#allocation11 + $0xb98] sm:$0xff]
    %v1828 = vld [vmem:[#allocation11 + $0xba0] sm:$0xff]
    %v1829 = vld [vmem:[#allocation11 + $0xba8] sm:$0xff]
    %v1830 = vld [vmem:[#allocation11 + $0xbb0] sm:$0xff]
    %v1831 = vld [vmem:[#allocation11 + $0xbb8] sm:$0xff]
    %v1832 = vld [vmem:[#allocation11 + $0xbc0] sm:$0xff]
    %v1833 = vld [vmem:[#allocation11 + $0xbc8] sm:$0xff]
    %v1834 = vld [vmem:[#allocation11 + $0xbd0] sm:$0xff]
    %v1835 = vld [vmem:[#allocation11 + $0xbd8] sm:$0xff]
    %v1836 = vld [vmem:[#allocation11 + $0xbe0] sm:$0xff]
    %v1837 = vld [vmem:[#allocation11 + $0xbe8] sm:$0xff]
    %v1838 = vld [vmem:[#allocation11 + $0xbf0] sm:$0xff]
    %v1839 = vld [vmem:[#allocation11 + $0xbf8] sm:$0xff]
    %v1840 = vld [vmem:[#allocation11 + $0xc00] sm:$0xff]
    %v1841 = vld [vmem:[#allocation11 + $0xc08] sm:$0xff]
    %v1842 = vld [vmem:[#allocation11 + $0xc10] sm:$0xff]
    %v1843 = vld [vmem:[#allocation11 + $0xc18] sm:$0xff]
    %v1844 = vld [vmem:[#allocation11 + $0xc20] sm:$0xff]
    %v1845 = vld [vmem:[#allocation11 + $0xc28] sm:$0xff]
    %v1846 = vld [vmem:[#allocation11 + $0xc30] sm:$0xff]
    %v1847 = vld [vmem:[#allocation11 + $0xc38] sm:$0xff]
    %v1848 = vld [vmem:[#allocation11 + $0xc40] sm:$0xff]
    %v1849 = vld [vmem:[#allocation11 + $0xc48] sm:$0xff]
    %v1850 = vld [vmem:[#allocation11 + $0xc50] sm:$0xff]
    %v1851 = vld [vmem:[#allocation11 + $0xc58] sm:$0xff]
    %v1852 = vld [vmem:[#allocation11 + $0xc60] sm:$0xff]
    %v1853 = vld [vmem:[#allocation11 + $0xc68] sm:$0xff]
    %v1854 = vld [vmem:[#allocation11 + $0xc70] sm:$0xff]
    %v1855 = vld [vmem:[#allocation11 + $0xc78] sm:$0xff]
    %v1856 = vld [vmem:[#allocation11 + $0xc80] sm:$0xff]
    %v1857 = vld [vmem:[#allocation11 + $0xc88] sm:$0xff]
    %v1858 = vld [vmem:[#allocation11 + $0xc90] sm:$0xff]
    %v1859 = vld [vmem:[#allocation11 + $0xc98] sm:$0xff]
    %v1860 = vld [vmem:[#allocation11 + $0xca0] sm:$0xff]
    %v1861 = vld [vmem:[#allocation11 + $0xca8] sm:$0xff]
    %v1862 = vld [vmem:[#allocation11 + $0xcb0] sm:$0xff]
    %v1863 = vld [vmem:[#allocation11 + $0xcb8] sm:$0xff]
    %v1864 = vld [vmem:[#allocation11 + $0xcc0] sm:$0xff]
    %v1865 = vld [vmem:[#allocation11 + $0xcc8] sm:$0xff]
    %v1866 = vld [vmem:[#allocation11 + $0xcd0] sm:$0xff]
    %v1867 = vld [vmem:[#allocation11 + $0xcd8] sm:$0xff]
    %v1868 = vld [vmem:[#allocation11 + $0xce0] sm:$0xff]
    %v1869 = vld [vmem:[#allocation11 + $0xce8] sm:$0xff]
    %v1870 = vld [vmem:[#allocation11 + $0xcf0] sm:$0xff]
    %v1871 = vld [vmem:[#allocation11 + $0xcf8] sm:$0xff]
    %v1872 = vld [vmem:[#allocation11 + $0xd00] sm:$0xff]
    %v1873 = vld [vmem:[#allocation11 + $0xd08] sm:$0xff]
    %v1874 = vld [vmem:[#allocation11 + $0xd10] sm:$0xff]
    %v1875 = vld [vmem:[#allocation11 + $0xd18] sm:$0xff]
    %v1876 = vld [vmem:[#allocation11 + $0xd20] sm:$0xff]
    %v1877 = vld [vmem:[#allocation11 + $0xd28] sm:$0xff]
    %v1878 = vld [vmem:[#allocation11 + $0xd30] sm:$0xff]
    %v1879 = vld [vmem:[#allocation11 + $0xd38] sm:$0xff]
    %v1880 = vld [vmem:[#allocation11 + $0xd40] sm:$0xff]
    %v1881 = vld [vmem:[#allocation11 + $0xd48] sm:$0xff]
    %v1882 = vld [vmem:[#allocation11 + $0xd50] sm:$0xff]
    %v1883 = vld [vmem:[#allocation11 + $0xd58] sm:$0xff]
    %v1884 = vld [vmem:[#allocation11 + $0xd60] sm:$0xff]
    %v1885 = vld [vmem:[#allocation11 + $0xd68] sm:$0xff]
    %v1886 = vld [vmem:[#allocation11 + $0xd70] sm:$0xff]
    %v1887 = vld [vmem:[#allocation11 + $0xd78] sm:$0xff]
    %v1888 = vld [vmem:[#allocation11 + $0xd80] sm:$0xff]
    %v1889 = vld [vmem:[#allocation11 + $0xd88] sm:$0xff]
    %v1890 = vld [vmem:[#allocation11 + $0xd90] sm:$0xff]
    %v1891 = vld [vmem:[#allocation11 + $0xd98] sm:$0xff]
    %v1892 = vld [vmem:[#allocation11 + $0xda0] sm:$0xff]
    %v1893 = vld [vmem:[#allocation11 + $0xda8] sm:$0xff]
    %v1894 = vld [vmem:[#allocation11 + $0xdb0] sm:$0xff]
    %v1895 = vld [vmem:[#allocation11 + $0xdb8] sm:$0xff]
    %v1896 = vld [vmem:[#allocation11 + $0xdc0] sm:$0xff]
    %v1897 = vld [vmem:[#allocation11 + $0xdc8] sm:$0xff]
    %v1898 = vld [vmem:[#allocation11 + $0xdd0] sm:$0xff]
    %v1899 = vld [vmem:[#allocation11 + $0xdd8] sm:$0xff]
    %v1900 = vld [vmem:[#allocation11 + $0xde0] sm:$0xff]
    %v1901 = vld [vmem:[#allocation11 + $0xde8] sm:$0xff]
    %v1902 = vld [vmem:[#allocation11 + $0xdf0] sm:$0xff]
    %v1903 = vld [vmem:[#allocation11 + $0xdf8] sm:$0xff]
    %v1904 = vld [vmem:[#allocation11 + $0xe00] sm:$0xff]
    %v1905 = vld [vmem:[#allocation11 + $0xe08] sm:$0xff]
    %v1906 = vld [vmem:[#allocation11 + $0xe10] sm:$0xff]
    %v1907 = vld [vmem:[#allocation11 + $0xe18] sm:$0xff]
    %v1908 = vld [vmem:[#allocation11 + $0xe20] sm:$0xff]
    %v1909 = vld [vmem:[#allocation11 + $0xe28] sm:$0xff]
    %v1910 = vld [vmem:[#allocation11 + $0xe30] sm:$0xff]
    %v1911 = vld [vmem:[#allocation11 + $0xe38] sm:$0xff]
    %v1912 = vld [vmem:[#allocation11 + $0xe40] sm:$0xff]
    %v1913 = vld [vmem:[#allocation11 + $0xe48] sm:$0xff]
    %v1914 = vld [vmem:[#allocation11 + $0xe50] sm:$0xff]
    %v1915 = vld [vmem:[#allocation11 + $0xe58] sm:$0xff]
    %v1916 = vld [vmem:[#allocation11 + $0xe60] sm:$0xff]
    %v1917 = vld [vmem:[#allocation11 + $0xe68] sm:$0xff]
    %v1918 = vld [vmem:[#allocation11 + $0xe70] sm:$0xff]
    %v1919 = vld [vmem:[#allocation11 + $0xe78] sm:$0xff]
    %v1920 = vld [vmem:[#allocation11 + $0xe80] sm:$0xff]
    %v1921 = vld [vmem:[#allocation11 + $0xe88] sm:$0xff]
    %v1922 = vld [vmem:[#allocation11 + $0xe90] sm:$0xff]
    %v1923 = vld [vmem:[#allocation11 + $0xe98] sm:$0xff]
    %v1924 = vld [vmem:[#allocation11 + $0xea0] sm:$0xff]
    %v1925 = vld [vmem:[#allocation11 + $0xea8] sm:$0xff]
    %v1926 = vld [vmem:[#allocation11 + $0xeb0] sm:$0xff]
    %v1927 = vld [vmem:[#allocation11 + $0xeb8] sm:$0xff]
    %v1928 = vld [vmem:[#allocation11 + $0xec0] sm:$0xff]
    %v1929 = vld [vmem:[#allocation11 + $0xec8] sm:$0xff]
    %v1930 = vld [vmem:[#allocation11 + $0xed0] sm:$0xff]
    %v1931 = vld [vmem:[#allocation11 + $0xed8] sm:$0xff]
    %v1932 = vld [vmem:[#allocation11 + $0xee0] sm:$0xff]
    %v1933 = vld [vmem:[#allocation11 + $0xee8] sm:$0xff]
    %v1934 = vld [vmem:[#allocation11 + $0xef0] sm:$0xff]
    %v1935 = vld [vmem:[#allocation11 + $0xef8] sm:$0xff]
    %v1936 = vld [vmem:[#allocation11 + $0xf00] sm:$0xff]
    %v1937 = vld [vmem:[#allocation11 + $0xf08] sm:$0xff]
    %v1938 = vld [vmem:[#allocation11 + $0xf10] sm:$0xff]
    %v1939 = vld [vmem:[#allocation11 + $0xf18] sm:$0xff]
    %v1940 = vld [vmem:[#allocation11 + $0xf20] sm:$0xff]
    %v1941 = vld [vmem:[#allocation11 + $0xf28] sm:$0xff]
    %v1942 = vld [vmem:[#allocation11 + $0xf30] sm:$0xff]
    %v1943 = vld [vmem:[#allocation11 + $0xf38] sm:$0xff]
    %v1944 = vld [vmem:[#allocation11 + $0xf40] sm:$0xff]
    %v1945 = vld [vmem:[#allocation11 + $0xf48] sm:$0xff]
    %v1946 = vld [vmem:[#allocation11 + $0xf50] sm:$0xff]
    %v1947 = vld [vmem:[#allocation11 + $0xf58] sm:$0xff]
    %v1948 = vld [vmem:[#allocation11 + $0xf60] sm:$0xff]
    %v1949 = vld [vmem:[#allocation11 + $0xf68] sm:$0xff]
    %v1950 = vld [vmem:[#allocation11 + $0xf70] sm:$0xff]
    %v1951 = vld [vmem:[#allocation11 + $0xf78] sm:$0xff]
    %v1952 = vld [vmem:[#allocation11 + $0xf80] sm:$0xff]
    %v1953 = vld [vmem:[#allocation11 + $0xf88] sm:$0xff]
    %v1954 = vld [vmem:[#allocation11 + $0xf90] sm:$0xff]
    %v1955 = vld [vmem:[#allocation11 + $0xf98] sm:$0xff]
    %v1956 = vld [vmem:[#allocation11 + $0xfa0] sm:$0xff]
    %v1957 = vld [vmem:[#allocation11 + $0xfa8] sm:$0xff]
    %v1958 = vld [vmem:[#allocation11 + $0xfb0] sm:$0xff]
    %v1959 = vld [vmem:[#allocation11 + $0xfb8] sm:$0xff]
    %v1960 = vld [vmem:[#allocation11 + $0xfc0] sm:$0xff]
    %v1961 = vld [vmem:[#allocation11 + $0xfc8] sm:$0xff]
    %v1962 = vld [vmem:[#allocation11 + $0xfd0] sm:$0xff]
    %v1963 = vld [vmem:[#allocation11 + $0xfd8] sm:$0xff]
    %v1964 = vld [vmem:[#allocation11 + $0xfe0] sm:$0xff]
    %v1965 = vld [vmem:[#allocation11 + $0xfe8] sm:$0xff]
    %v1966 = vld [vmem:[#allocation11 + $0xff0] sm:$0xff]
    %v1967 = vld [vmem:[#allocation11 + $0xff8] sm:$0xff]
    %v1968 = vld [vmem:[#allocation11 + $0x1000] sm:$0xff]
    %v1969 = vld [vmem:[#allocation11 + $0x1008] sm:$0xff]
    %v1970 = vld [vmem:[#allocation11 + $0x1010] sm:$0xff]
    %v1971 = vld [vmem:[#allocation11 + $0x1018] sm:$0xff]
    %v1972 = vld [vmem:[#allocation11 + $0x1020] sm:$0xff]
    %v1973 = vld [vmem:[#allocation11 + $0x1028] sm:$0xff]
    %v1974 = vld [vmem:[#allocation11 + $0x1030] sm:$0xff]
    %v1975 = vld [vmem:[#allocation11 + $0x1038] sm:$0xff]
    %v1976 = vld [vmem:[#allocation11 + $0x1040] sm:$0xff]
    %v1977 = vld [vmem:[#allocation11 + $0x1048] sm:$0xff]
    %v1978 = vld [vmem:[#allocation11 + $0x1050] sm:$0xff]
    %v1979 = vld [vmem:[#allocation11 + $0x1058] sm:$0xff]
    %v1980 = vld [vmem:[#allocation11 + $0x1060] sm:$0xff]
    %v1981 = vld [vmem:[#allocation11 + $0x1068] sm:$0xff]
    %v1982 = vld [vmem:[#allocation11 + $0x1070] sm:$0xff]
    %v1983 = vld [vmem:[#allocation11 + $0x1078] sm:$0xff]
    %v1984 = vld [vmem:[#allocation11 + $0x1080] sm:$0xff]
    %v1985 = vld [vmem:[#allocation11 + $0x1088] sm:$0xff]
    %v1986 = vld [vmem:[#allocation11 + $0x1090] sm:$0xff]
    %v1987 = vld [vmem:[#allocation11 + $0x1098] sm:$0xff]
    %v1988 = vld [vmem:[#allocation11 + $0x10a0] sm:$0xff]
    %v1989 = vld [vmem:[#allocation11 + $0x10a8] sm:$0xff]
    %v1990 = vld [vmem:[#allocation11 + $0x10b0] sm:$0xff]
    %v1991 = vld [vmem:[#allocation11 + $0x10b8] sm:$0xff]
    %v1992 = vld [vmem:[#allocation11 + $0x10c0] sm:$0xff]
    %v1993 = vld [vmem:[#allocation11 + $0x10c8] sm:$0xff]
    %v1994 = vld [vmem:[#allocation11 + $0x10d0] sm:$0xff]
    %v1995 = vld [vmem:[#allocation11 + $0x10d8] sm:$0xff]
    %v1996 = vld [vmem:[#allocation11 + $0x10e0] sm:$0xff]
    %v1997 = vld [vmem:[#allocation11 + $0x10e8] sm:$0xff]
    %v1998 = vld [vmem:[#allocation11 + $0x10f0] sm:$0xff]
    %v1999 = vld [vmem:[#allocation11 + $0x10f8] sm:$0xff]
    %v2000 = vld [vmem:[#allocation11 + $0x1100] sm:$0xff]
    %v2001 = vld [vmem:[#allocation11 + $0x1108] sm:$0xff]
    %v2002 = vld [vmem:[#allocation11 + $0x1110] sm:$0xff]
    %v2003 = vld [vmem:[#allocation11 + $0x1118] sm:$0xff]
    %v2004 = vld [vmem:[#allocation11 + $0x1120] sm:$0xff]
    %v2005 = vld [vmem:[#allocation11 + $0x1128] sm:$0xff]
    %v2006 = vld [vmem:[#allocation11 + $0x1130] sm:$0xff]
    %v2007 = vld [vmem:[#allocation11 + $0x1138] sm:$0xff]
    %v2008 = vld [vmem:[#allocation11 + $0x1140] sm:$0xff]
    %v2009 = vld [vmem:[#allocation11 + $0x1148] sm:$0xff]
    %v2010 = vld [vmem:[#allocation11 + $0x1150] sm:$0xff]
    %v2011 = vld [vmem:[#allocation11 + $0x1158] sm:$0xff]
    %v2012 = vld [vmem:[#allocation11 + $0x1160] sm:$0xff]
    %v2013 = vld [vmem:[#allocation11 + $0x1168] sm:$0xff]
    %v2014 = vld [vmem:[#allocation11 + $0x1170] sm:$0xff]
    %v2015 = vld [vmem:[#allocation11 + $0x1178] sm:$0xff]
    %v2016 = vld [vmem:[#allocation11 + $0x1180] sm:$0xff]
    %v2017 = vld [vmem:[#allocation11 + $0x1188] sm:$0xff]
    %v2018 = vld [vmem:[#allocation11 + $0x1190] sm:$0xff]
    %v2019 = vld [vmem:[#allocation11 + $0x1198] sm:$0xff]
    %v2020 = vld [vmem:[#allocation11 + $0x11a0] sm:$0xff]
    %v2021 = vld [vmem:[#allocation11 + $0x11a8] sm:$0xff]
    %v2022 = vld [vmem:[#allocation11 + $0x11b0] sm:$0xff]
    %v2023 = vld [vmem:[#allocation11 + $0x11b8] sm:$0xff]
    %v2024 = vld [vmem:[#allocation11 + $0x11c0] sm:$0xff]
    %v2025 = vld [vmem:[#allocation11 + $0x11c8] sm:$0xff]
    %v2026 = vld [vmem:[#allocation11 + $0x11d0] sm:$0xff]
    %v2027 = vld [vmem:[#allocation11 + $0x11d8] sm:$0xff]
    %v2028 = vld [vmem:[#allocation11 + $0x11e0] sm:$0xff]
    %v2029 = vld [vmem:[#allocation11 + $0x11e8] sm:$0xff]
    %v2030 = vld [vmem:[#allocation11 + $0x11f0] sm:$0xff]
    %v2031 = vld [vmem:[#allocation11 + $0x11f8] sm:$0xff]
    %v2032 = vld [vmem:[#allocation11 + $0x1200] sm:$0xff]
    %v2033 = vld [vmem:[#allocation11 + $0x1208] sm:$0xff]
    %v2034 = vld [vmem:[#allocation11 + $0x1210] sm:$0xff]
    %v2035 = vld [vmem:[#allocation11 + $0x1218] sm:$0xff]
    %v2036 = vld [vmem:[#allocation11 + $0x1220] sm:$0xff]
    %v2037 = vld [vmem:[#allocation11 + $0x1228] sm:$0xff]
    %v2038 = vld [vmem:[#allocation11 + $0x1230] sm:$0xff]
    %v2039 = vld [vmem:[#allocation11 + $0x1238] sm:$0xff]
    %v2040 = vld [vmem:[#allocation11 + $0x1240] sm:$0xff]
    %v2041 = vld [vmem:[#allocation11 + $0x1248] sm:$0xff]
    %v2042 = vld [vmem:[#allocation11 + $0x1250] sm:$0xff]
    %v2043 = vld [vmem:[#allocation11 + $0x1258] sm:$0xff]
    %v2044 = vld [vmem:[#allocation11 + $0x1260] sm:$0xff]
    %v2045 = vld [vmem:[#allocation11 + $0x1268] sm:$0xff]
    %v2046 = vld [vmem:[#allocation11 + $0x1270] sm:$0xff]
    %v2047 = vld [vmem:[#allocation11 + $0x1278] sm:$0xff]
    %v2048 = vld [vmem:[#allocation11 + $0x1280] sm:$0xff]
    %v2049 = vld [vmem:[#allocation11 + $0x1288] sm:$0xff]
    %v2050 = vld [vmem:[#allocation11 + $0x1290] sm:$0xff]
    %v2051 = vld [vmem:[#allocation11 + $0x1298] sm:$0xff]
    %v2052 = vld [vmem:[#allocation11 + $0x12a0] sm:$0xff]
    %v2053 = vld [vmem:[#allocation11 + $0x12a8] sm:$0xff]
    %v2054 = vld [vmem:[#allocation11 + $0x12b0] sm:$0xff]
    %v2055 = vld [vmem:[#allocation11 + $0x12b8] sm:$0xff]
    %v2056 = vld [vmem:[#allocation11 + $0x12c0] sm:$0xff]
    %v2057 = vld [vmem:[#allocation11 + $0x12c8] sm:$0xff]
    %v2058 = vld [vmem:[#allocation11 + $0x12d0] sm:$0xff]
    %v2059 = vld [vmem:[#allocation11 + $0x12d8] sm:$0xff]
    %v2060 = vld [vmem:[#allocation11 + $0x12e0] sm:$0xff]
    %v2061 = vld [vmem:[#allocation11 + $0x12e8] sm:$0xff]
    %v2062 = vld [vmem:[#allocation11 + $0x12f0] sm:$0xff]
    %v2063 = vld [vmem:[#allocation11 + $0x12f8] sm:$0xff]
    %v2064 = vld [vmem:[#allocation11 + $0x1300] sm:$0xff]
    %v2065 = vld [vmem:[#allocation11 + $0x1308] sm:$0xff]
    %v2066 = vld [vmem:[#allocation11 + $0x1310] sm:$0xff]
    %v2067 = vld [vmem:[#allocation11 + $0x1318] sm:$0xff]
    %v2068 = vld [vmem:[#allocation11 + $0x1320] sm:$0xff]
    %v2069 = vld [vmem:[#allocation11 + $0x1328] sm:$0xff]
    %v2070 = vld [vmem:[#allocation11 + $0x1330] sm:$0xff]
    %v2071 = vld [vmem:[#allocation11 + $0x1338] sm:$0xff]
    %v2072 = vld [vmem:[#allocation11 + $0x1340] sm:$0xff]
    %v2073 = vld [vmem:[#allocation11 + $0x1348] sm:$0xff]
    %v2074 = vld [vmem:[#allocation11 + $0x1350] sm:$0xff]
    %v2075 = vld [vmem:[#allocation11 + $0x1358] sm:$0xff]
    %v2076 = vld [vmem:[#allocation11 + $0x1360] sm:$0xff]
    %v2077 = vld [vmem:[#allocation11 + $0x1368] sm:$0xff]
    %v2078 = vld [vmem:[#allocation11 + $0x1370] sm:$0xff]
    %v2079 = vld [vmem:[#allocation11 + $0x1378] sm:$0xff]
    %v2080 = vld [vmem:[#allocation11 + $0x1380] sm:$0xff]
    %v2081 = vld [vmem:[#allocation11 + $0x1388] sm:$0xff]
    %v2082 = vld [vmem:[#allocation11 + $0x1390] sm:$0xff]
    %v2083 = vld [vmem:[#allocation11 + $0x1398] sm:$0xff]
    %v2084 = vld [vmem:[#allocation11 + $0x13a0] sm:$0xff]
    %v2085 = vld [vmem:[#allocation11 + $0x13a8] sm:$0xff]
    %v2086 = vld [vmem:[#allocation11 + $0x13b0] sm:$0xff]
    %v2087 = vld [vmem:[#allocation11 + $0x13b8] sm:$0xff]
    %v2088 = vld [vmem:[#allocation11 + $0x13c0] sm:$0xff]
    %v2089 = vld [vmem:[#allocation11 + $0x13c8] sm:$0xff]
    %v2090 = vld [vmem:[#allocation11 + $0x13d0] sm:$0xff]
    %v2091 = vld [vmem:[#allocation11 + $0x13d8] sm:$0xff]
    %v2092 = vld [vmem:[#allocation11 + $0x13e0] sm:$0xff]
    %v2093 = vld [vmem:[#allocation11 + $0x13e8] sm:$0xff]
    %v2094 = vld [vmem:[#allocation11 + $0x13f0] sm:$0xff]
    %v2095 = vld [vmem:[#allocation11 + $0x13f8] sm:$0xff]
    %v2096 = vld [vmem:[#allocation11 + $0x1400] sm:$0xff]
    %v2097 = vld [vmem:[#allocation11 + $0x1408] sm:$0xff]
    %v2098 = vld [vmem:[#allocation11 + $0x1410] sm:$0xff]
    %v2099 = vld [vmem:[#allocation11 + $0x1418] sm:$0xff]
    %v2100 = vld [vmem:[#allocation11 + $0x1420] sm:$0xff]
    %v2101 = vld [vmem:[#allocation11 + $0x1428] sm:$0xff]
    %v2102 = vld [vmem:[#allocation11 + $0x1430] sm:$0xff]
    %v2103 = vld [vmem:[#allocation11 + $0x1438] sm:$0xff]
    %v2104 = vld [vmem:[#allocation11 + $0x1440] sm:$0xff]
    %v2105 = vld [vmem:[#allocation11 + $0x1448] sm:$0xff]
    %v2106 = vld [vmem:[#allocation11 + $0x1450] sm:$0xff]
    %v2107 = vld [vmem:[#allocation11 + $0x1458] sm:$0xff]
    %v2108 = vld [vmem:[#allocation11 + $0x1460] sm:$0xff]
    %v2109 = vld [vmem:[#allocation11 + $0x1468] sm:$0xff]
    %v2110 = vld [vmem:[#allocation11 + $0x1470] sm:$0xff]
    %v2111 = vld [vmem:[#allocation11 + $0x1478] sm:$0xff]
    %v2112 = vld [vmem:[#allocation11 + $0x1480] sm:$0xff]
    %v2113 = vld [vmem:[#allocation11 + $0x1488] sm:$0xff]
    %v2114 = vld [vmem:[#allocation11 + $0x1490] sm:$0xff]
    %v2115 = vld [vmem:[#allocation11 + $0x1498] sm:$0xff]
    %v2116 = vld [vmem:[#allocation11 + $0x14a0] sm:$0xff]
    %v2117 = vld [vmem:[#allocation11 + $0x14a8] sm:$0xff]
    %v2118 = vld [vmem:[#allocation11 + $0x14b0] sm:$0xff]
    %v2119 = vld [vmem:[#allocation11 + $0x14b8] sm:$0xff]
    %v2120 = vld [vmem:[#allocation11 + $0x14c0] sm:$0xff]
    %v2121 = vld [vmem:[#allocation11 + $0x14c8] sm:$0xff]
    %v2122 = vld [vmem:[#allocation11 + $0x14d0] sm:$0xff]
    %v2123 = vld [vmem:[#allocation11 + $0x14d8] sm:$0xff]
    %v2124 = vld [vmem:[#allocation11 + $0x14e0] sm:$0xff]
    %v2125 = vld [vmem:[#allocation11 + $0x14e8] sm:$0xff]
    %v2126 = vld [vmem:[#allocation11 + $0x14f0] sm:$0xff]
    %v2127 = vld [vmem:[#allocation11 + $0x14f8] sm:$0xff]
    %v2128 = vld [vmem:[#allocation11 + $0x1500] sm:$0xff]
    %v2129 = vld [vmem:[#allocation11 + $0x1508] sm:$0xff]
    %v2130 = vld [vmem:[#allocation11 + $0x1510] sm:$0xff]
    %v2131 = vld [vmem:[#allocation11 + $0x1518] sm:$0xff]
    %v2132 = vld [vmem:[#allocation11 + $0x1520] sm:$0xff]
    %v2133 = vld [vmem:[#allocation11 + $0x1528] sm:$0xff]
    %v2134 = vld [vmem:[#allocation11 + $0x1530] sm:$0xff]
    %v2135 = vld [vmem:[#allocation11 + $0x1538] sm:$0xff]
    %v2136 = vld [vmem:[#allocation11 + $0x1540] sm:$0xff]
    %v2137 = vld [vmem:[#allocation11 + $0x1548] sm:$0xff]
    %v2138 = vld [vmem:[#allocation11 + $0x1550] sm:$0xff]
    %v2139 = vld [vmem:[#allocation11 + $0x1558] sm:$0xff]
    %v2140 = vld [vmem:[#allocation11 + $0x1560] sm:$0xff]
    %v2141 = vld [vmem:[#allocation11 + $0x1568] sm:$0xff]
    %v2142 = vld [vmem:[#allocation11 + $0x1570] sm:$0xff]
    %v2143 = vld [vmem:[#allocation11 + $0x1578] sm:$0xff]
    %v2144 = vld [vmem:[#allocation11 + $0x1580] sm:$0xff]
    %v2145 = vld [vmem:[#allocation11 + $0x1588] sm:$0xff]
    %v2146 = vld [vmem:[#allocation11 + $0x1590] sm:$0xff]
    %v2147 = vld [vmem:[#allocation11 + $0x1598] sm:$0xff]
    %v2148 = vld [vmem:[#allocation11 + $0x15a0] sm:$0xff]
    %v2149 = vld [vmem:[#allocation11 + $0x15a8] sm:$0xff]
    %v2150 = vld [vmem:[#allocation11 + $0x15b0] sm:$0xff]
    %v2151 = vld [vmem:[#allocation11 + $0x15b8] sm:$0xff]
    %v2152 = vld [vmem:[#allocation11 + $0x15c0] sm:$0xff]
    %v2153 = vld [vmem:[#allocation11 + $0x15c8] sm:$0xff]
    %v2154 = vld [vmem:[#allocation11 + $0x15d0] sm:$0xff]
    %v2155 = vld [vmem:[#allocation11 + $0x15d8] sm:$0xff]
    %v2156 = vld [vmem:[#allocation11 + $0x15e0] sm:$0xff]
    %v2157 = vld [vmem:[#allocation11 + $0x15e8] sm:$0xff]
    %v2158 = vld [vmem:[#allocation11 + $0x15f0] sm:$0xff]
    %v2159 = vld [vmem:[#allocation11 + $0x15f8] sm:$0xff]
    %v2160 = vld [vmem:[#allocation11 + $0x1600] sm:$0xff]
    %v2161 = vld [vmem:[#allocation11 + $0x1608] sm:$0xff]
    %v2162 = vld [vmem:[#allocation11 + $0x1610] sm:$0xff]
    %v2163 = vld [vmem:[#allocation11 + $0x1618] sm:$0xff]
    %v2164 = vld [vmem:[#allocation11 + $0x1620] sm:$0xff]
    %v2165 = vld [vmem:[#allocation11 + $0x1628] sm:$0xff]
    %v2166 = vld [vmem:[#allocation11 + $0x1630] sm:$0xff]
    %v2167 = vld [vmem:[#allocation11 + $0x1638] sm:$0xff]
    %v2168 = vld [vmem:[#allocation11 + $0x1640] sm:$0xff]
    %v2169 = vld [vmem:[#allocation11 + $0x1648] sm:$0xff]
    %v2170 = vld [vmem:[#allocation11 + $0x1650] sm:$0xff]
    %v2171 = vld [vmem:[#allocation11 + $0x1658] sm:$0xff]
    %v2172 = vld [vmem:[#allocation11 + $0x1660] sm:$0xff]
    %v2173 = vld [vmem:[#allocation11 + $0x1668] sm:$0xff]
    %v2174 = vld [vmem:[#allocation11 + $0x1670] sm:$0xff]
    %v2175 = vld [vmem:[#allocation11 + $0x1678] sm:$0xff]
    %v2176 = vld [vmem:[#allocation11 + $0x1680] sm:$0xff]
    %v2177 = vld [vmem:[#allocation11 + $0x1688] sm:$0xff]
    %v2178 = vld [vmem:[#allocation11 + $0x1690] sm:$0xff]
    %v2179 = vld [vmem:[#allocation11 + $0x1698] sm:$0xff]
    %v2180 = vld [vmem:[#allocation11 + $0x16a0] sm:$0xff]
    %v2181 = vld [vmem:[#allocation11 + $0x16a8] sm:$0xff]
    %v2182 = vld [vmem:[#allocation11 + $0x16b0] sm:$0xff]
    %v2183 = vld [vmem:[#allocation11 + $0x16b8] sm:$0xff]
    %v2184 = vld [vmem:[#allocation11 + $0x16c0] sm:$0xff]
    %v2185 = vld [vmem:[#allocation11 + $0x16c8] sm:$0xff]
    %v2186 = vld [vmem:[#allocation11 + $0x16d0] sm:$0xff]
    %v2187 = vld [vmem:[#allocation11 + $0x16d8] sm:$0xff]
    %v2188 = vld [vmem:[#allocation11 + $0x16e0] sm:$0xff]
    %v2189 = vld [vmem:[#allocation11 + $0x16e8] sm:$0xff]
    %v2190 = vld [vmem:[#allocation11 + $0x16f0] sm:$0xff]
    %v2191 = vld [vmem:[#allocation11 + $0x16f8] sm:$0xff]
    %v2192 = vld [vmem:[#allocation11 + $0x1700] sm:$0xff]
    %v2193 = vld [vmem:[#allocation11 + $0x1708] sm:$0xff]
    %v2194 = vld [vmem:[#allocation11 + $0x1710] sm:$0xff]
    %v2195 = vld [vmem:[#allocation11 + $0x1718] sm:$0xff]
    %v2196 = vld [vmem:[#allocation11 + $0x1720] sm:$0xff]
    %v2197 = vld [vmem:[#allocation11 + $0x1728] sm:$0xff]
    %v2198 = vld [vmem:[#allocation11 + $0x1730] sm:$0xff]
    %v2199 = vld [vmem:[#allocation11 + $0x1738] sm:$0xff]
    %v2200 = vld [vmem:[#allocation11 + $0x1740] sm:$0xff]
    %v2201 = vld [vmem:[#allocation11 + $0x1748] sm:$0xff]
    %v2202 = vld [vmem:[#allocation11 + $0x1750] sm:$0xff]
    %v2203 = vld [vmem:[#allocation11 + $0x1758] sm:$0xff]
    %v2204 = vld [vmem:[#allocation11 + $0x1760] sm:$0xff]
    %v2205 = vld [vmem:[#allocation11 + $0x1768] sm:$0xff]
    %v2206 = vld [vmem:[#allocation11 + $0x1770] sm:$0xff]
    %v2207 = vld [vmem:[#allocation11 + $0x1778] sm:$0xff]
    %v2208 = vld [vmem:[#allocation11 + $0x1780] sm:$0xff]
    %v2209 = vld [vmem:[#allocation11 + $0x1788] sm:$0xff]
    %v2210 = vld [vmem:[#allocation11 + $0x1790] sm:$0xff]
    %v2211 = vld [vmem:[#allocation11 + $0x1798] sm:$0xff]
    %v2212 = vld [vmem:[#allocation11 + $0x17a0] sm:$0xff]
    %v2213 = vld [vmem:[#allocation11 + $0x17a8] sm:$0xff]
    %v2214 = vld [vmem:[#allocation11 + $0x17b0] sm:$0xff]
    %v2215 = vld [vmem:[#allocation11 + $0x17b8] sm:$0xff]
    %v2216 = vld [vmem:[#allocation11 + $0x17c0] sm:$0xff]
    %v2217 = vld [vmem:[#allocation11 + $0x17c8] sm:$0xff]
    %v2218 = vld [vmem:[#allocation11 + $0x17d0] sm:$0xff]
    %v2219 = vld [vmem:[#allocation11 + $0x17d8] sm:$0xff]
    %v2220 = vld [vmem:[#allocation11 + $0x17e0] sm:$0xff]
    %v2221 = vld [vmem:[#allocation11 + $0x17e8] sm:$0xff]
    %v2222 = vld [vmem:[#allocation11 + $0x17f0] sm:$0xff]
    %v2223 = vld [vmem:[#allocation11 + $0x17f8] sm:$0xff]
    %v2224 = vld [vmem:[#allocation11 + $0x1800] sm:$0xff]
    %v2225 = vld [vmem:[#allocation11 + $0x1808] sm:$0xff]
    %v2226 = vld [vmem:[#allocation11 + $0x1810] sm:$0xff]
    %v2227 = vld [vmem:[#allocation11 + $0x1818] sm:$0xff]
    %v2228 = vld [vmem:[#allocation11 + $0x1820] sm:$0xff]
    %v2229 = vld [vmem:[#allocation11 + $0x1828] sm:$0xff]
    %v2230 = vld [vmem:[#allocation11 + $0x1830] sm:$0xff]
    %v2231 = vld [vmem:[#allocation11 + $0x1838] sm:$0xff]
    %v2232 = vld [vmem:[#allocation11 + $0x1840] sm:$0xff]
    %v2233 = vld [vmem:[#allocation11 + $0x1848] sm:$0xff]
    %v2234 = vld [vmem:[#allocation11 + $0x1850] sm:$0xff]
    %v2235 = vld [vmem:[#allocation11 + $0x1858] sm:$0xff]
    %v2236 = vld [vmem:[#allocation11 + $0x1860] sm:$0xff]
    %v2237 = vld [vmem:[#allocation11 + $0x1868] sm:$0xff]
    %v2238 = vld [vmem:[#allocation11 + $0x1870] sm:$0xff]
    %v2239 = vld [vmem:[#allocation11 + $0x1878] sm:$0xff]
    %v2240 = vld [vmem:[#allocation11 + $0x1880] sm:$0xff]
    %v2241 = vld [vmem:[#allocation11 + $0x1888] sm:$0xff]
    %v2242 = vld [vmem:[#allocation11 + $0x1890] sm:$0xff]
    %v2243 = vld [vmem:[#allocation11 + $0x1898] sm:$0xff]
    %v2244 = vld [vmem:[#allocation11 + $0x18a0] sm:$0xff]
    %v2245 = vld [vmem:[#allocation11 + $0x18a8] sm:$0xff]
    %v2246 = vld [vmem:[#allocation11 + $0x18b0] sm:$0xff]
    %v2247 = vld [vmem:[#allocation11 + $0x18b8] sm:$0xff]
    %v2248 = vld [vmem:[#allocation11 + $0x18c0] sm:$0xff]
    %v2249 = vld [vmem:[#allocation11 + $0x18c8] sm:$0xff]
    %v2250 = vld [vmem:[#allocation11 + $0x18d0] sm:$0xff]
    %v2251 = vld [vmem:[#allocation11 + $0x18d8] sm:$0xff]
    %v2252 = vld [vmem:[#allocation11 + $0x18e0] sm:$0xff]
    %v2253 = vld [vmem:[#allocation11 + $0x18e8] sm:$0xff]
    %v2254 = vld [vmem:[#allocation11 + $0x18f0] sm:$0xff]
    %v2255 = vld [vmem:[#allocation11 + $0x18f8] sm:$0xff]
    %v2256 = vld [vmem:[#allocation11 + $0x1900] sm:$0xff]
    %v2257 = vld [vmem:[#allocation11 + $0x1908] sm:$0xff]
    %v2258 = vld [vmem:[#allocation11 + $0x1910] sm:$0xff]
    %v2259 = vld [vmem:[#allocation11 + $0x1918] sm:$0xff]
    %v2260 = vld [vmem:[#allocation11 + $0x1920] sm:$0xff]
    %v2261 = vld [vmem:[#allocation11 + $0x1928] sm:$0xff]
    %v2262 = vld [vmem:[#allocation11 + $0x1930] sm:$0xff]
    %v2263 = vld [vmem:[#allocation11 + $0x1938] sm:$0xff]
    %v2264 = vld [vmem:[#allocation11 + $0x1940] sm:$0xff]
    %v2265 = vld [vmem:[#allocation11 + $0x1948] sm:$0xff]
    %v2266 = vld [vmem:[#allocation11 + $0x1950] sm:$0xff]
    %v2267 = vld [vmem:[#allocation11 + $0x1958] sm:$0xff]
    %v2268 = vld [vmem:[#allocation11 + $0x1960] sm:$0xff]
    %v2269 = vld [vmem:[#allocation11 + $0x1968] sm:$0xff]
    %v2270 = vld [vmem:[#allocation11 + $0x1970] sm:$0xff]
    %v2271 = vld [vmem:[#allocation11 + $0x1978] sm:$0xff]
    %v2272 = vld [vmem:[#allocation11 + $0x1980] sm:$0xff]
    %v2273 = vld [vmem:[#allocation11 + $0x1988] sm:$0xff]
    %v2274 = vld [vmem:[#allocation11 + $0x1990] sm:$0xff]
    %v2275 = vld [vmem:[#allocation11 + $0x1998] sm:$0xff]
    %v2276 = vld [vmem:[#allocation11 + $0x19a0] sm:$0xff]
    %v2277 = vld [vmem:[#allocation11 + $0x19a8] sm:$0xff]
    %v2278 = vld [vmem:[#allocation11 + $0x19b0] sm:$0xff]
    %v2279 = vld [vmem:[#allocation11 + $0x19b8] sm:$0xff]
    %v2280 = vld [vmem:[#allocation11 + $0x19c0] sm:$0xff]
    %v2281 = vld [vmem:[#allocation11 + $0x19c8] sm:$0xff]
    %v2282 = vld [vmem:[#allocation11 + $0x19d0] sm:$0xff]
    %v2283 = vld [vmem:[#allocation11 + $0x19d8] sm:$0xff]
    %v2284 = vld [vmem:[#allocation11 + $0x19e0] sm:$0xff]
    %v2285 = vld [vmem:[#allocation11 + $0x19e8] sm:$0xff]
    %v2286 = vld [vmem:[#allocation11 + $0x19f0] sm:$0xff]
    %v2287 = vld [vmem:[#allocation11 + $0x19f8] sm:$0xff]
    %v2288 = vld [vmem:[#allocation11 + $0x1a00] sm:$0xff]
    %v2289 = vld [vmem:[#allocation11 + $0x1a08] sm:$0xff]
    %v2290 = vld [vmem:[#allocation11 + $0x1a10] sm:$0xff]
    %v2291 = vld [vmem:[#allocation11 + $0x1a18] sm:$0xff]
    %v2292 = vld [vmem:[#allocation11 + $0x1a20] sm:$0xff]
    %v2293 = vld [vmem:[#allocation11 + $0x1a28] sm:$0xff]
    %v2294 = vld [vmem:[#allocation11 + $0x1a30] sm:$0xff]
    %v2295 = vld [vmem:[#allocation11 + $0x1a38] sm:$0xff]
    %v2296 = vld [vmem:[#allocation11 + $0x1a40] sm:$0xff]
    %v2297 = vld [vmem:[#allocation11 + $0x1a48] sm:$0xff]
    %v2298 = vld [vmem:[#allocation11 + $0x1a50] sm:$0xff]
    %v2299 = vld [vmem:[#allocation11 + $0x1a58] sm:$0xff]
    %v2300 = vld [vmem:[#allocation11 + $0x1a60] sm:$0xff]
    %v2301 = vld [vmem:[#allocation11 + $0x1a68] sm:$0xff]
    %v2302 = vld [vmem:[#allocation11 + $0x1a70] sm:$0xff]
    %v2303 = vld [vmem:[#allocation11 + $0x1a78] sm:$0xff]
    %v2304 = vld [vmem:[#allocation11 + $0x1a80] sm:$0xff]
    %v2305 = vld [vmem:[#allocation11 + $0x1a88] sm:$0xff]
    %v2306 = vld [vmem:[#allocation11 + $0x1a90] sm:$0xff]
    %v2307 = vld [vmem:[#allocation11 + $0x1a98] sm:$0xff]
    %v2308 = vld [vmem:[#allocation11 + $0x1aa0] sm:$0xff]
    %v2309 = vld [vmem:[#allocation11 + $0x1aa8] sm:$0xff]
    %v2310 = vld [vmem:[#allocation11 + $0x1ab0] sm:$0xff]
    %v2311 = vld [vmem:[#allocation11 + $0x1ab8] sm:$0xff]
    %v2312 = vld [vmem:[#allocation11 + $0x1ac0] sm:$0xff]
    %v2313 = vld [vmem:[#allocation11 + $0x1ac8] sm:$0xff]
    %v2314 = vld [vmem:[#allocation11 + $0x1ad0] sm:$0xff]
    %v2315 = vld [vmem:[#allocation11 + $0x1ad8] sm:$0xff]
    %v2316 = vld [vmem:[#allocation11 + $0x1ae0] sm:$0xff]
    %v2317 = vld [vmem:[#allocation11 + $0x1ae8] sm:$0xff]
    %v2318 = vld [vmem:[#allocation11 + $0x1af0] sm:$0xff]
    %v2319 = vld [vmem:[#allocation11 + $0x1af8] sm:$0xff]
    %v2320 = vld [vmem:[#allocation11 + $0x1b00] sm:$0xff]
    %v2321 = vld [vmem:[#allocation11 + $0x1b08] sm:$0xff]
    %v2322 = vld [vmem:[#allocation11 + $0x1b10] sm:$0xff]
    %v2323 = vld [vmem:[#allocation11 + $0x1b18] sm:$0xff]
    %v2324 = vld [vmem:[#allocation11 + $0x1b20] sm:$0xff]
    %v2325 = vld [vmem:[#allocation11 + $0x1b28] sm:$0xff]
    %v2326 = vld [vmem:[#allocation11 + $0x1b30] sm:$0xff]
    %v2327 = vld [vmem:[#allocation11 + $0x1b38] sm:$0xff]
    %v2328 = vld [vmem:[#allocation11 + $0x1b40] sm:$0xff]
    %v2329 = vld [vmem:[#allocation11 + $0x1b48] sm:$0xff]
    %v2330 = vld [vmem:[#allocation11 + $0x1b50] sm:$0xff]
    %v2331 = vld [vmem:[#allocation11 + $0x1b58] sm:$0xff]
    %v2332 = vld [vmem:[#allocation11 + $0x1b60] sm:$0xff]
    %v2333 = vld [vmem:[#allocation11 + $0x1b68] sm:$0xff]
    %v2334 = vld [vmem:[#allocation11 + $0x1b70] sm:$0xff]
    %v2335 = vld [vmem:[#allocation11 + $0x1b78] sm:$0xff]
    %v2336 = vld [vmem:[#allocation11 + $0x1b80] sm:$0xff]
    %v2337 = vld [vmem:[#allocation11 + $0x1b88] sm:$0xff]
    %v2338 = vld [vmem:[#allocation11 + $0x1b90] sm:$0xff]
    %v2339 = vld [vmem:[#allocation11 + $0x1b98] sm:$0xff]
    %v2340 = vld [vmem:[#allocation11 + $0x1ba0] sm:$0xff]
    %v2341 = vld [vmem:[#allocation11 + $0x1ba8] sm:$0xff]
    %v2342 = vld [vmem:[#allocation11 + $0x1bb0] sm:$0xff]
    %v2343 = vld [vmem:[#allocation11 + $0x1bb8] sm:$0xff]
    %v2344 = vld [vmem:[#allocation11 + $0x1bc0] sm:$0xff]
    %v2345 = vld [vmem:[#allocation11 + $0x1bc8] sm:$0xff]
    %v2346 = vld [vmem:[#allocation11 + $0x1bd0] sm:$0xff]
    %v2347 = vld [vmem:[#allocation11 + $0x1bd8] sm:$0xff]
    %v2348 = vld [vmem:[#allocation11 + $0x1be0] sm:$0xff]
    %v2349 = vld [vmem:[#allocation11 + $0x1be8] sm:$0xff]
    %v2350 = vld [vmem:[#allocation11 + $0x1bf0] sm:$0xff]
    %v2351 = vld [vmem:[#allocation11 + $0x1bf8] sm:$0xff]
    %v2352 = vld [vmem:[#allocation11 + $0x1c00] sm:$0xff]
    %v2353 = vld [vmem:[#allocation11 + $0x1c08] sm:$0xff]
    %v2354 = vld [vmem:[#allocation11 + $0x1c10] sm:$0xff]
    %v2355 = vld [vmem:[#allocation11 + $0x1c18] sm:$0xff]
    %v2356 = vld [vmem:[#allocation11 + $0x1c20] sm:$0xff]
    %v2357 = vld [vmem:[#allocation11 + $0x1c28] sm:$0xff]
    %v2358 = vld [vmem:[#allocation11 + $0x1c30] sm:$0xff]
    %v2359 = vld [vmem:[#allocation11 + $0x1c38] sm:$0xff]
    %v2360 = vld [vmem:[#allocation11 + $0x1c40] sm:$0xff]
    %v2361 = vld [vmem:[#allocation11 + $0x1c48] sm:$0xff]
    %v2362 = vld [vmem:[#allocation11 + $0x1c50] sm:$0xff]
    %v2363 = vld [vmem:[#allocation11 + $0x1c58] sm:$0xff]
    %v2364 = vld [vmem:[#allocation11 + $0x1c60] sm:$0xff]
    %v2365 = vld [vmem:[#allocation11 + $0x1c68] sm:$0xff]
    %v2366 = vld [vmem:[#allocation11 + $0x1c70] sm:$0xff]
    %v2367 = vld [vmem:[#allocation11 + $0x1c78] sm:$0xff]
    %v2368 = vld [vmem:[#allocation11 + $0x1c80] sm:$0xff]
    %v2369 = vld [vmem:[#allocation11 + $0x1c88] sm:$0xff]
    %v2370 = vld [vmem:[#allocation11 + $0x1c90] sm:$0xff]
    %v2371 = vld [vmem:[#allocation11 + $0x1c98] sm:$0xff]
    %v2372 = vld [vmem:[#allocation11 + $0x1ca0] sm:$0xff]
    %v2373 = vld [vmem:[#allocation11 + $0x1ca8] sm:$0xff]
    %v2374 = vld [vmem:[#allocation11 + $0x1cb0] sm:$0xff]
    %v2375 = vld [vmem:[#allocation11 + $0x1cb8] sm:$0xff]
    %v2376 = vld [vmem:[#allocation11 + $0x1cc0] sm:$0xff]
    %v2377 = vld [vmem:[#allocation11 + $0x1cc8] sm:$0xff]
    %v2378 = vld [vmem:[#allocation11 + $0x1cd0] sm:$0xff]
    %v2379 = vld [vmem:[#allocation11 + $0x1cd8] sm:$0xff]
    %v2380 = vld [vmem:[#allocation11 + $0x1ce0] sm:$0xff]
    %v2381 = vld [vmem:[#allocation11 + $0x1ce8] sm:$0xff]
    %v2382 = vld [vmem:[#allocation11 + $0x1cf0] sm:$0xff]
    %v2383 = vld [vmem:[#allocation11 + $0x1cf8] sm:$0xff]
    %v2384 = vld [vmem:[#allocation11 + $0x1d00] sm:$0xff]
    %v2385 = vld [vmem:[#allocation11 + $0x1d08] sm:$0xff]
    %v2386 = vld [vmem:[#allocation11 + $0x1d10] sm:$0xff]
    %v2387 = vld [vmem:[#allocation11 + $0x1d18] sm:$0xff]
    %v2388 = vld [vmem:[#allocation11 + $0x1d20] sm:$0xff]
    %v2389 = vld [vmem:[#allocation11 + $0x1d28] sm:$0xff]
    %v2390 = vld [vmem:[#allocation11 + $0x1d30] sm:$0xff]
    %v2391 = vld [vmem:[#allocation11 + $0x1d38] sm:$0xff]
    %v2392 = vld [vmem:[#allocation11 + $0x1d40] sm:$0xff]
    %v2393 = vld [vmem:[#allocation11 + $0x1d48] sm:$0xff]
    %v2394 = vld [vmem:[#allocation11 + $0x1d50] sm:$0xff]
    %v2395 = vld [vmem:[#allocation11 + $0x1d58] sm:$0xff]
    %v2396 = vld [vmem:[#allocation11 + $0x1d60] sm:$0xff]
    %v2397 = vld [vmem:[#allocation11 + $0x1d68] sm:$0xff]
    %v2398 = vld [vmem:[#allocation11 + $0x1d70] sm:$0xff]
    %v2399 = vld [vmem:[#allocation11 + $0x1d78] sm:$0xff]
    %v2400 = vld [vmem:[#allocation11 + $0x1d80] sm:$0xff]
    %v2401 = vld [vmem:[#allocation11 + $0x1d88] sm:$0xff]
    %v2402 = vld [vmem:[#allocation11 + $0x1d90] sm:$0xff]
    %v2403 = vld [vmem:[#allocation11 + $0x1d98] sm:$0xff]
    %v2404 = vld [vmem:[#allocation11 + $0x1da0] sm:$0xff]
    %v2405 = vld [vmem:[#allocation11 + $0x1da8] sm:$0xff]
    %v2406 = vld [vmem:[#allocation11 + $0x1db0] sm:$0xff]
    %v2407 = vld [vmem:[#allocation11 + $0x1db8] sm:$0xff]
    %v2408 = vld [vmem:[#allocation11 + $0x1dc0] sm:$0xff]
    %v2409 = vld [vmem:[#allocation11 + $0x1dc8] sm:$0xff]
    %v2410 = vld [vmem:[#allocation11 + $0x1dd0] sm:$0xff]
    %v2411 = vld [vmem:[#allocation11 + $0x1dd8] sm:$0xff]
    %v2412 = vld [vmem:[#allocation11 + $0x1de0] sm:$0xff]
    %v2413 = vld [vmem:[#allocation11 + $0x1de8] sm:$0xff]
    %v2414 = vld [vmem:[#allocation11 + $0x1df0] sm:$0xff]
    %v2415 = vld [vmem:[#allocation11 + $0x1df8] sm:$0xff]
    %v2416 = vld [vmem:[#allocation11 + $0x1e00] sm:$0xff]
    %v2417 = vld [vmem:[#allocation11 + $0x1e08] sm:$0xff]
    %v2418 = vld [vmem:[#allocation11 + $0x1e10] sm:$0xff]
    %v2419 = vld [vmem:[#allocation11 + $0x1e18] sm:$0xff]
    %v2420 = vld [vmem:[#allocation11 + $0x1e20] sm:$0xff]
    %v2421 = vld [vmem:[#allocation11 + $0x1e28] sm:$0xff]
    %v2422 = vld [vmem:[#allocation11 + $0x1e30] sm:$0xff]
    %v2423 = vld [vmem:[#allocation11 + $0x1e38] sm:$0xff]
    %v2424 = vld [vmem:[#allocation11 + $0x1e40] sm:$0xff]
    %v2425 = vld [vmem:[#allocation11 + $0x1e48] sm:$0xff]
    %v2426 = vld [vmem:[#allocation11 + $0x1e50] sm:$0xff]
    %v2427 = vld [vmem:[#allocation11 + $0x1e58] sm:$0xff]
    %v2428 = vld [vmem:[#allocation11 + $0x1e60] sm:$0xff]
    %v2429 = vld [vmem:[#allocation11 + $0x1e68] sm:$0xff]
    %v2430 = vld [vmem:[#allocation11 + $0x1e70] sm:$0xff]
    %v2431 = vld [vmem:[#allocation11 + $0x1e78] sm:$0xff]
    %v2432 = vld [vmem:[#allocation11 + $0x1e80] sm:$0xff]
    %v2433 = vld [vmem:[#allocation11 + $0x1e88] sm:$0xff]
    %v2434 = vld [vmem:[#allocation11 + $0x1e90] sm:$0xff]
    %v2435 = vld [vmem:[#allocation11 + $0x1e98] sm:$0xff]
    %v2436 = vld [vmem:[#allocation11 + $0x1ea0] sm:$0xff]
    %v2437 = vld [vmem:[#allocation11 + $0x1ea8] sm:$0xff]
    %v2438 = vld [vmem:[#allocation11 + $0x1eb0] sm:$0xff]
    %v2439 = vld [vmem:[#allocation11 + $0x1eb8] sm:$0xff]
    %v2440 = vld [vmem:[#allocation11 + $0x1ec0] sm:$0xff]
    %v2441 = vld [vmem:[#allocation11 + $0x1ec8] sm:$0xff]
    %v2442 = vld [vmem:[#allocation11 + $0x1ed0] sm:$0xff]
    %v2443 = vld [vmem:[#allocation11 + $0x1ed8] sm:$0xff]
    %v2444 = vld [vmem:[#allocation11 + $0x1ee0] sm:$0xff]
    %v2445 = vld [vmem:[#allocation11 + $0x1ee8] sm:$0xff]
    %v2446 = vld [vmem:[#allocation11 + $0x1ef0] sm:$0xff]
    %v2447 = vld [vmem:[#allocation11 + $0x1ef8] sm:$0xff]
    %v2448 = vld [vmem:[#allocation11 + $0x1f00] sm:$0xff]
    %v2449 = vld [vmem:[#allocation11 + $0x1f08] sm:$0xff]
    %v2450 = vld [vmem:[#allocation11 + $0x1f10] sm:$0xff]
    %v2451 = vld [vmem:[#allocation11 + $0x1f18] sm:$0xff]
    %v2452 = vld [vmem:[#allocation11 + $0x1f20] sm:$0xff]
    %v2453 = vld [vmem:[#allocation11 + $0x1f28] sm:$0xff]
    %v2454 = vld [vmem:[#allocation11 + $0x1f30] sm:$0xff]
    %v2455 = vld [vmem:[#allocation11 + $0x1f38] sm:$0xff]
    %v2456 = vld [vmem:[#allocation11 + $0x1f40] sm:$0xff]
    %v2457 = vld [vmem:[#allocation11 + $0x1f48] sm:$0xff]
    %v2458 = vld [vmem:[#allocation11 + $0x1f50] sm:$0xff]
    %v2459 = vld [vmem:[#allocation11 + $0x1f58] sm:$0xff]
    %v2460 = vld [vmem:[#allocation11 + $0x1f60] sm:$0xff]
    %v2461 = vld [vmem:[#allocation11 + $0x1f68] sm:$0xff]
    %v2462 = vld [vmem:[#allocation11 + $0x1f70] sm:$0xff]
    %v2463 = vld [vmem:[#allocation11 + $0x1f78] sm:$0xff]
    %v2464 = vld [vmem:[#allocation11 + $0x1f80] sm:$0xff]
    %v2465 = vld [vmem:[#allocation11 + $0x1f88] sm:$0xff]
    %v2466 = vld [vmem:[#allocation11 + $0x1f90] sm:$0xff]
    %v2467 = vld [vmem:[#allocation11 + $0x1f98] sm:$0xff]
    %v2468 = vld [vmem:[#allocation11 + $0x1fa0] sm:$0xff]
    %v2469 = vld [vmem:[#allocation11 + $0x1fa8] sm:$0xff]
    %v2470 = vld [vmem:[#allocation11 + $0x1fb0] sm:$0xff]
    %v2471 = vld [vmem:[#allocation11 + $0x1fb8] sm:$0xff]
    %v2472 = vld [vmem:[#allocation11 + $0x1fc0] sm:$0xff]
    %v2473 = vld [vmem:[#allocation11 + $0x1fc8] sm:$0xff]
    %v2474 = vld [vmem:[#allocation11 + $0x1fd0] sm:$0xff]
    %v2475 = vld [vmem:[#allocation11 + $0x1fd8] sm:$0xff]
    %v2476 = vld [vmem:[#allocation11 + $0x1fe0] sm:$0xff]
    %v2477 = vld [vmem:[#allocation11 + $0x1fe8] sm:$0xff]
    %v2478 = vld [vmem:[#allocation11 + $0x1ff0] sm:$0xff]
    %v2479 = vld [vmem:[#allocation11 + $0x1ff8] sm:$0xff]
    %v2480 = vld [vmem:[#allocation11 + $0x2000] sm:$0xff]
    %v2481 = vld [vmem:[#allocation11 + $0x2008] sm:$0xff]
    %v2482 = vld [vmem:[#allocation11 + $0x2010] sm:$0xff]
    %v2483 = vld [vmem:[#allocation11 + $0x2018] sm:$0xff]
    %v2484 = vld [vmem:[#allocation11 + $0x2020] sm:$0xff]
    %v2485 = vld [vmem:[#allocation11 + $0x2028] sm:$0xff]
    %v2486 = vld [vmem:[#allocation11 + $0x2030] sm:$0xff]
    %v2487 = vld [vmem:[#allocation11 + $0x2038] sm:$0xff]
    %v2488 = vld [vmem:[#allocation11 + $0x2040] sm:$0xff]
    %v2489 = vld [vmem:[#allocation11 + $0x2048] sm:$0xff]
    %v2490 = vld [vmem:[#allocation11 + $0x2050] sm:$0xff]
    %v2491 = vld [vmem:[#allocation11 + $0x2058] sm:$0xff]
    %v2492 = vld [vmem:[#allocation11 + $0x2060] sm:$0xff]
    %v2493 = vld [vmem:[#allocation11 + $0x2068] sm:$0xff]
    %v2494 = vld [vmem:[#allocation11 + $0x2070] sm:$0xff]
    %v2495 = vld [vmem:[#allocation11 + $0x2078] sm:$0xff]
    %v2496 = vld [vmem:[#allocation11 + $0x2080] sm:$0xff]
    %v2497 = vld [vmem:[#allocation11 + $0x2088] sm:$0xff]
    %v2498 = vld [vmem:[#allocation11 + $0x2090] sm:$0xff]
    %v2499 = vld [vmem:[#allocation11 + $0x2098] sm:$0xff]
    %v2500 = vld [vmem:[#allocation11 + $0x20a0] sm:$0xff]
    %v2501 = vld [vmem:[#allocation11 + $0x20a8] sm:$0xff]
    %v2502 = vld [vmem:[#allocation11 + $0x20b0] sm:$0xff]
    %v2503 = vld [vmem:[#allocation11 + $0x20b8] sm:$0xff]
    %v2504 = vld [vmem:[#allocation11 + $0x20c0] sm:$0xff]
    %v2505 = vld [vmem:[#allocation11 + $0x20c8] sm:$0xff]
    %v2506 = vld [vmem:[#allocation11 + $0x20d0] sm:$0xff]
    %v2507 = vld [vmem:[#allocation11 + $0x20d8] sm:$0xff]
    %v2508 = vld [vmem:[#allocation11 + $0x20e0] sm:$0xff]
    %v2509 = vld [vmem:[#allocation11 + $0x20e8] sm:$0xff]
    %v2510 = vld [vmem:[#allocation11 + $0x20f0] sm:$0xff]
    %v2511 = vld [vmem:[#allocation11 + $0x20f8] sm:$0xff]
    %v2512 = vld [vmem:[#allocation11 + $0x2100] sm:$0xff]
    %v2513 = vld [vmem:[#allocation11 + $0x2108] sm:$0xff]
    %v2514 = vld [vmem:[#allocation11 + $0x2110] sm:$0xff]
    %v2515 = vld [vmem:[#allocation11 + $0x2118] sm:$0xff]
    %v2516 = vld [vmem:[#allocation11 + $0x2120] sm:$0xff]
    %v2517 = vld [vmem:[#allocation11 + $0x2128] sm:$0xff]
    %v2518 = vld [vmem:[#allocation11 + $0x2130] sm:$0xff]
    %v2519 = vld [vmem:[#allocation11 + $0x2138] sm:$0xff]
    %v2520 = vld [vmem:[#allocation11 + $0x2140] sm:$0xff]
    %v2521 = vld [vmem:[#allocation11 + $0x2148] sm:$0xff]
    %v2522 = vld [vmem:[#allocation11 + $0x2150] sm:$0xff]
    %v2523 = vld [vmem:[#allocation11 + $0x2158] sm:$0xff]
    %v2524 = vld [vmem:[#allocation11 + $0x2160] sm:$0xff]
    %v2525 = vld [vmem:[#allocation11 + $0x2168] sm:$0xff]
    %v2526 = vld [vmem:[#allocation11 + $0x2170] sm:$0xff]
    %v2527 = vld [vmem:[#allocation11 + $0x2178] sm:$0xff]
    %v2528 = vld [vmem:[#allocation11 + $0x2180] sm:$0xff]
    %v2529 = vld [vmem:[#allocation11 + $0x2188] sm:$0xff]
    %v2530 = vld [vmem:[#allocation11 + $0x2190] sm:$0xff]
    %v2531 = vld [vmem:[#allocation11 + $0x2198] sm:$0xff]
    %v2532 = vld [vmem:[#allocation11 + $0x21a0] sm:$0xff]
    %v2533 = vld [vmem:[#allocation11 + $0x21a8] sm:$0xff]
    %v2534 = vld [vmem:[#allocation11 + $0x21b0] sm:$0xff]
    %v2535 = vld [vmem:[#allocation11 + $0x21b8] sm:$0xff]
    %v2536 = vld [vmem:[#allocation11 + $0x21c0] sm:$0xff]
    %v2537 = vld [vmem:[#allocation11 + $0x21c8] sm:$0xff]
    %v2538 = vld [vmem:[#allocation11 + $0x21d0] sm:$0xff]
    %v2539 = vld [vmem:[#allocation11 + $0x21d8] sm:$0xff]
    %v2540 = vld [vmem:[#allocation11 + $0x21e0] sm:$0xff]
    %v2541 = vld [vmem:[#allocation11 + $0x21e8] sm:$0xff]
    %v2542 = vld [vmem:[#allocation11 + $0x21f0] sm:$0xff]
    %v2543 = vld [vmem:[#allocation11 + $0x21f8] sm:$0xff]
    %v2544 = vld [vmem:[#allocation11 + $0x2200] sm:$0xff]
    %v2545 = vld [vmem:[#allocation11 + $0x2208] sm:$0xff]
    %v2546 = vld [vmem:[#allocation11 + $0x2210] sm:$0xff]
    %v2547 = vld [vmem:[#allocation11 + $0x2218] sm:$0xff]
    %v2548 = vld [vmem:[#allocation11 + $0x2220] sm:$0xff]
    %v2549 = vld [vmem:[#allocation11 + $0x2228] sm:$0xff]
    %v2550 = vld [vmem:[#allocation11 + $0x2230] sm:$0xff]
    %v2551 = vld [vmem:[#allocation11 + $0x2238] sm:$0xff]
    %v2552 = vld [vmem:[#allocation11 + $0x2240] sm:$0xff]
    %v2553 = vld [vmem:[#allocation11 + $0x2248] sm:$0xff]
    %v2554 = vld [vmem:[#allocation11 + $0x2250] sm:$0xff]
    %v2555 = vld [vmem:[#allocation11 + $0x2258] sm:$0xff]
    %v2556 = vld [vmem:[#allocation11 + $0x2260] sm:$0xff]
    %v2557 = vld [vmem:[#allocation11 + $0x2268] sm:$0xff]
    %v2558 = vld [vmem:[#allocation11 + $0x2270] sm:$0xff]
    %v2559 = vld [vmem:[#allocation11 + $0x2278] sm:$0xff]
    %v2560 = vld [vmem:[#allocation11 + $0x2280] sm:$0xff]
    %v2561 = vld [vmem:[#allocation11 + $0x2288] sm:$0xff]
    %v2562 = vld [vmem:[#allocation11 + $0x2290] sm:$0xff]
    %v2563 = vld [vmem:[#allocation11 + $0x2298] sm:$0xff]
    %v2564 = vld [vmem:[#allocation11 + $0x22a0] sm:$0xff]
    %v2565 = vld [vmem:[#allocation11 + $0x22a8] sm:$0xff]
    %v2566 = vld [vmem:[#allocation11 + $0x22b0] sm:$0xff]
    %v2567 = vld [vmem:[#allocation11 + $0x22b8] sm:$0xff]
    %v2568 = vld [vmem:[#allocation11 + $0x22c0] sm:$0xff]
    %v2569 = vld [vmem:[#allocation11 + $0x22c8] sm:$0xff]
    %v2570 = vld [vmem:[#allocation11 + $0x22d0] sm:$0xff]
    %v2571 = vld [vmem:[#allocation11 + $0x22d8] sm:$0xff]
    %v2572 = vld [vmem:[#allocation11 + $0x22e0] sm:$0xff]
    %v2573 = vld [vmem:[#allocation11 + $0x22e8] sm:$0xff]
    %v2574 = vld [vmem:[#allocation11 + $0x22f0] sm:$0xff]
    %v2575 = vld [vmem:[#allocation11 + $0x22f8] sm:$0xff]
    %v2576 = vld [vmem:[#allocation11 + $0x2300] sm:$0xff]
    %v2577 = vld [vmem:[#allocation11 + $0x2308] sm:$0xff]
    %v2578 = vld [vmem:[#allocation11 + $0x2310] sm:$0xff]
    %v2579 = vld [vmem:[#allocation11 + $0x2318] sm:$0xff]
    %v2580 = vld [vmem:[#allocation11 + $0x2320] sm:$0xff]
    %v2581 = vld [vmem:[#allocation11 + $0x2328] sm:$0xff]
    %v2582 = vld [vmem:[#allocation11 + $0x2330] sm:$0xff]
    %v2583 = vld [vmem:[#allocation11 + $0x2338] sm:$0xff]
    %v2584 = vld [vmem:[#allocation11 + $0x2340] sm:$0xff]
    %v2585 = vld [vmem:[#allocation11 + $0x2348] sm:$0xff]
    %v2586 = vld [vmem:[#allocation11 + $0x2350] sm:$0xff]
    %v2587 = vld [vmem:[#allocation11 + $0x2358] sm:$0xff]
    %v2588 = vld [vmem:[#allocation11 + $0x2360] sm:$0xff]
    %v2589 = vld [vmem:[#allocation11 + $0x2368] sm:$0xff]
    %v2590 = vld [vmem:[#allocation11 + $0x2370] sm:$0xff]
    %v2591 = vld [vmem:[#allocation11 + $0x2378] sm:$0xff]
    %v2592 = vld [vmem:[#allocation11 + $0x2380] sm:$0xff]
    %v2593 = vld [vmem:[#allocation11 + $0x2388] sm:$0xff]
    %v2594 = vld [vmem:[#allocation11 + $0x2390] sm:$0xff]
    %v2595 = vld [vmem:[#allocation11 + $0x2398] sm:$0xff]
    %v2596 = vld [vmem:[#allocation11 + $0x23a0] sm:$0xff]
    %v2597 = vld [vmem:[#allocation11 + $0x23a8] sm:$0xff]
    %v2598 = vld [vmem:[#allocation11 + $0x23b0] sm:$0xff]
    %v2599 = vld [vmem:[#allocation11 + $0x23b8] sm:$0xff]
    %v2600 = vld [vmem:[#allocation11 + $0x23c0] sm:$0xff]
    %v2601 = vld [vmem:[#allocation11 + $0x23c8] sm:$0xff]
    %v2602 = vld [vmem:[#allocation11 + $0x23d0] sm:$0xff]
    %v2603 = vld [vmem:[#allocation11 + $0x23d8] sm:$0xff]
    %v2604 = vld [vmem:[#allocation11 + $0x23e0] sm:$0xff]
    %v2605 = vld [vmem:[#allocation11 + $0x23e8] sm:$0xff]
    %v2606 = vld [vmem:[#allocation11 + $0x23f0] sm:$0xff]
    %v2607 = vld [vmem:[#allocation11 + $0x23f8] sm:$0xff]
    %v2608 = vld [vmem:[#allocation11 + $0x2400] sm:$0xff]
    %v2609 = vld [vmem:[#allocation11 + $0x2408] sm:$0xff]
    %v2610 = vld [vmem:[#allocation11 + $0x2410] sm:$0xff]
    %v2611 = vld [vmem:[#allocation11 + $0x2418] sm:$0xff]
    %v2612 = vld [vmem:[#allocation11 + $0x2420] sm:$0xff]
    %v2613 = vld [vmem:[#allocation11 + $0x2428] sm:$0xff]
    %v2614 = vld [vmem:[#allocation11 + $0x2430] sm:$0xff]
    %v2615 = vld [vmem:[#allocation11 + $0x2438] sm:$0xff]
    %v2616 = vld [vmem:[#allocation11 + $0x2440] sm:$0xff]
    %v2617 = vld [vmem:[#allocation11 + $0x2448] sm:$0xff]
    %v2618 = vld [vmem:[#allocation11 + $0x2450] sm:$0xff]
    %v2619 = vld [vmem:[#allocation11 + $0x2458] sm:$0xff]
    %v2620 = vld [vmem:[#allocation11 + $0x2460] sm:$0xff]
    %v2621 = vld [vmem:[#allocation11 + $0x2468] sm:$0xff]
    %v2622 = vld [vmem:[#allocation11 + $0x2470] sm:$0xff]
    %v2623 = vld [vmem:[#allocation11 + $0x2478] sm:$0xff]
    %v2624 = vld [vmem:[#allocation11 + $0x2480] sm:$0xff]
    %v2625 = vld [vmem:[#allocation11 + $0x2488] sm:$0xff]
    %v2626 = vld [vmem:[#allocation11 + $0x2490] sm:$0xff]
    %v2627 = vld [vmem:[#allocation11 + $0x2498] sm:$0xff]
    %v2628 = vld [vmem:[#allocation11 + $0x24a0] sm:$0xff]
    %v2629 = vld [vmem:[#allocation11 + $0x24a8] sm:$0xff]
    %v2630 = vld [vmem:[#allocation11 + $0x24b0] sm:$0xff]
    %v2631 = vld [vmem:[#allocation11 + $0x24b8] sm:$0xff]
    %v2632 = vld [vmem:[#allocation11 + $0x24c0] sm:$0xff]
    %v2633 = vld [vmem:[#allocation11 + $0x24c8] sm:$0xff]
    %v2634 = vld [vmem:[#allocation11 + $0x24d0] sm:$0xff]
    %v2635 = vld [vmem:[#allocation11 + $0x24d8] sm:$0xff]
    %v2636 = vld [vmem:[#allocation11 + $0x24e0] sm:$0xff]
    %v2637 = vld [vmem:[#allocation11 + $0x24e8] sm:$0xff]
    %v2638 = vld [vmem:[#allocation11 + $0x24f0] sm:$0xff]
    %v2639 = vld [vmem:[#allocation11 + $0x24f8] sm:$0xff]
    %v2640 = vld [vmem:[#allocation11 + $0x2500] sm:$0xff]
    %v2641 = vld [vmem:[#allocation11 + $0x2508] sm:$0xff]
    %v2642 = vld [vmem:[#allocation11 + $0x2510] sm:$0xff]
    %v2643 = vld [vmem:[#allocation11 + $0x2518] sm:$0xff]
    %v2644 = vld [vmem:[#allocation11 + $0x2520] sm:$0xff]
    %v2645 = vld [vmem:[#allocation11 + $0x2528] sm:$0xff]
    %v2646 = vld [vmem:[#allocation11 + $0x2530] sm:$0xff]
    %v2647 = vld [vmem:[#allocation11 + $0x2538] sm:$0xff]
    %v2648 = vld [vmem:[#allocation11 + $0x2540] sm:$0xff]
    %v2649 = vld [vmem:[#allocation11 + $0x2548] sm:$0xff]
    %v2650 = vld [vmem:[#allocation11 + $0x2550] sm:$0xff]
    %v2651 = vld [vmem:[#allocation11 + $0x2558] sm:$0xff]
    %v2652 = vld [vmem:[#allocation11 + $0x2560] sm:$0xff]
    %v2653 = vld [vmem:[#allocation11 + $0x2568] sm:$0xff]
    %v2654 = vld [vmem:[#allocation11 + $0x2570] sm:$0xff]
    %v2655 = vld [vmem:[#allocation11 + $0x2578] sm:$0xff]
    %v2656 = vld [vmem:[#allocation11 + $0x2580] sm:$0xff]
    %v2657 = vld [vmem:[#allocation11 + $0x2588] sm:$0xff]
    %v2658 = vld [vmem:[#allocation11 + $0x2590] sm:$0xff]
    %v2659 = vld [vmem:[#allocation11 + $0x2598] sm:$0xff]
    %v2660 = vld [vmem:[#allocation11 + $0x25a0] sm:$0xff]
    %v2661 = vld [vmem:[#allocation11 + $0x25a8] sm:$0xff]
    %v2662 = vld [vmem:[#allocation11 + $0x25b0] sm:$0xff]
    %v2663 = vld [vmem:[#allocation11 + $0x25b8] sm:$0xff]
    %v2664 = vld [vmem:[#allocation11 + $0x25c0] sm:$0xff]
    %v2665 = vld [vmem:[#allocation11 + $0x25c8] sm:$0xff]
    %v2666 = vld [vmem:[#allocation11 + $0x25d0] sm:$0xff]
    %v2667 = vld [vmem:[#allocation11 + $0x25d8] sm:$0xff]
    %v2668 = vld [vmem:[#allocation11 + $0x25e0] sm:$0xff]
    %v2669 = vld [vmem:[#allocation11 + $0x25e8] sm:$0xff]
    %v2670 = vld [vmem:[#allocation11 + $0x25f0] sm:$0xff]
    %v2671 = vld [vmem:[#allocation11 + $0x25f8] sm:$0xff]
    %v2672 = vld [vmem:[#allocation11 + $0x2600] sm:$0xff]
    %v2673 = vld [vmem:[#allocation11 + $0x2608] sm:$0xff]
    %v2674 = vld [vmem:[#allocation11 + $0x2610] sm:$0xff]
    %v2675 = vld [vmem:[#allocation11 + $0x2618] sm:$0xff]
    %v2676 = vld [vmem:[#allocation11 + $0x2620] sm:$0xff]
    %v2677 = vld [vmem:[#allocation11 + $0x2628] sm:$0xff]
    %v2678 = vld [vmem:[#allocation11 + $0x2630] sm:$0xff]
    %v2679 = vld [vmem:[#allocation11 + $0x2638] sm:$0xff]
    %v2680 = vld [vmem:[#allocation11 + $0x2640] sm:$0xff]
    %v2681 = vld [vmem:[#allocation11 + $0x2648] sm:$0xff]
    %v2682 = vld [vmem:[#allocation11 + $0x2650] sm:$0xff]
    %v2683 = vld [vmem:[#allocation11 + $0x2658] sm:$0xff]
    %v2684 = vld [vmem:[#allocation11 + $0x2660] sm:$0xff]
    %v2685 = vld [vmem:[#allocation11 + $0x2668] sm:$0xff]
    %v2686 = vld [vmem:[#allocation11 + $0x2670] sm:$0xff]
    %v2687 = vld [vmem:[#allocation11 + $0x2678] sm:$0xff]
    %v2688 = vld [vmem:[#allocation11 + $0x2680] sm:$0xff]
    %v2689 = vld [vmem:[#allocation11 + $0x2688] sm:$0xff]
    %v2690 = vld [vmem:[#allocation11 + $0x2690] sm:$0xff]
    %v2691 = vld [vmem:[#allocation11 + $0x2698] sm:$0xff]
    %v2692 = vld [vmem:[#allocation11 + $0x26a0] sm:$0xff]
    %v2693 = vld [vmem:[#allocation11 + $0x26a8] sm:$0xff]
    %v2694 = vld [vmem:[#allocation11 + $0x26b0] sm:$0xff]
    %v2695 = vld [vmem:[#allocation11 + $0x26b8] sm:$0xff]
    %v2696 = vld [vmem:[#allocation11 + $0x26c0] sm:$0xff]
    %v2697 = vld [vmem:[#allocation11 + $0x26c8] sm:$0xff]
    %v2698 = vld [vmem:[#allocation11 + $0x26d0] sm:$0xff]
    %v2699 = vld [vmem:[#allocation11 + $0x26d8] sm:$0xff]
    %v2700 = vld [vmem:[#allocation11 + $0x26e0] sm:$0xff]
    %v2701 = vld [vmem:[#allocation11 + $0x26e8] sm:$0xff]
    %v2702 = vld [vmem:[#allocation11 + $0x26f0] sm:$0xff]
    %v2703 = vld [vmem:[#allocation11 + $0x26f8] sm:$0xff]
    %v2704 = vld [vmem:[#allocation11 + $0x2700] sm:$0xff]
    %v2705 = vld [vmem:[#allocation11 + $0x2708] sm:$0xff]
    %v2706 = vld [vmem:[#allocation11 + $0x2710] sm:$0xff]
    %v2707 = vld [vmem:[#allocation11 + $0x2718] sm:$0xff]
    %v2708 = vld [vmem:[#allocation11 + $0x2720] sm:$0xff]
    %v2709 = vld [vmem:[#allocation11 + $0x2728] sm:$0xff]
    %v2710 = vld [vmem:[#allocation11 + $0x2730] sm:$0xff]
    %v2711 = vld [vmem:[#allocation11 + $0x2738] sm:$0xff]
    %v2712 = vld [vmem:[#allocation11 + $0x2740] sm:$0xff]
    %v2713 = vld [vmem:[#allocation11 + $0x2748] sm:$0xff]
    %v2714 = vld [vmem:[#allocation11 + $0x2750] sm:$0xff]
    %v2715 = vld [vmem:[#allocation11 + $0x2758] sm:$0xff]
    %v2716 = vld [vmem:[#allocation11 + $0x2760] sm:$0xff]
    %v2717 = vld [vmem:[#allocation11 + $0x2768] sm:$0xff]
    %v2718 = vld [vmem:[#allocation11 + $0x2770] sm:$0xff]
    %v2719 = vld [vmem:[#allocation11 + $0x2778] sm:$0xff]
    %v2720 = vld [vmem:[#allocation11 + $0x2780] sm:$0xff]
    %v2721 = vld [vmem:[#allocation11 + $0x2788] sm:$0xff]
    %v2722 = vld [vmem:[#allocation11 + $0x2790] sm:$0xff]
    %v2723 = vld [vmem:[#allocation11 + $0x2798] sm:$0xff]
    %v2724 = vld [vmem:[#allocation11 + $0x27a0] sm:$0xff]
    %v2725 = vld [vmem:[#allocation11 + $0x27a8] sm:$0xff]
    %v2726 = vld [vmem:[#allocation11 + $0x27b0] sm:$0xff]
    %v2727 = vld [vmem:[#allocation11 + $0x27b8] sm:$0xff]
    %v2728 = vld [vmem:[#allocation11 + $0x27c0] sm:$0xff]
    %v2729 = vld [vmem:[#allocation11 + $0x27c8] sm:$0xff]
    %v2730 = vld [vmem:[#allocation11 + $0x27d0] sm:$0xff]
    %v2731 = vld [vmem:[#allocation11 + $0x27d8] sm:$0xff]
    %v2732 = vld [vmem:[#allocation11 + $0x27e0] sm:$0xff]
    %v2733 = vld [vmem:[#allocation11 + $0x27e8] sm:$0xff]
    %v2734 = vld [vmem:[#allocation11 + $0x27f0] sm:$0xff]
    %v2735 = vld [vmem:[#allocation11 + $0x27f8] sm:$0xff]
    %v2736 = vld [vmem:[#allocation11 + $0x2800] sm:$0xff]
    %v2737 = vld [vmem:[#allocation11 + $0x2808] sm:$0xff]
    %v2738 = vld [vmem:[#allocation11 + $0x2810] sm:$0xff]
    %v2739 = vld [vmem:[#allocation11 + $0x2818] sm:$0xff]
    %v2740 = vld [vmem:[#allocation11 + $0x2820] sm:$0xff]
    %v2741 = vld [vmem:[#allocation11 + $0x2828] sm:$0xff]
    %v2742 = vld [vmem:[#allocation11 + $0x2830] sm:$0xff]
    %v2743 = vld [vmem:[#allocation11 + $0x2838] sm:$0xff]
    %v2744 = vld [vmem:[#allocation11 + $0x2840] sm:$0xff]
    %v2745 = vld [vmem:[#allocation11 + $0x2848] sm:$0xff]
    %v2746 = vld [vmem:[#allocation11 + $0x2850] sm:$0xff]
    %v2747 = vld [vmem:[#allocation11 + $0x2858] sm:$0xff]
    %v2748 = vld [vmem:[#allocation11 + $0x2860] sm:$0xff]
    %v2749 = vld [vmem:[#allocation11 + $0x2868] sm:$0xff]
    %v2750 = vld [vmem:[#allocation11 + $0x2870] sm:$0xff]
    %v2751 = vld [vmem:[#allocation11 + $0x2878] sm:$0xff]
    %v2752 = vld [vmem:[#allocation11 + $0x2880] sm:$0xff]
    %v2753 = vld [vmem:[#allocation11 + $0x2888] sm:$0xff]
    %v2754 = vld [vmem:[#allocation11 + $0x2890] sm:$0xff]
    %v2755 = vld [vmem:[#allocation11 + $0x2898] sm:$0xff]
    %v2756 = vld [vmem:[#allocation11 + $0x28a0] sm:$0xff]
    %v2757 = vld [vmem:[#allocation11 + $0x28a8] sm:$0xff]
    %v2758 = vld [vmem:[#allocation11 + $0x28b0] sm:$0xff]
    %v2759 = vld [vmem:[#allocation11 + $0x28b8] sm:$0xff]
    %v2760 = vld [vmem:[#allocation11 + $0x28c0] sm:$0xff]
    %v2761 = vld [vmem:[#allocation11 + $0x28c8] sm:$0xff]
    %v2762 = vld [vmem:[#allocation11 + $0x28d0] sm:$0xff]
    %v2763 = vld [vmem:[#allocation11 + $0x28d8] sm:$0xff]
    %v2764 = vld [vmem:[#allocation11 + $0x28e0] sm:$0xff]
    %v2765 = vld [vmem:[#allocation11 + $0x28e8] sm:$0xff]
    %v2766 = vld [vmem:[#allocation11 + $0x28f0] sm:$0xff]
    %v2767 = vld [vmem:[#allocation11 + $0x28f8] sm:$0xff]
    %v2768 = vld [vmem:[#allocation11 + $0x2900] sm:$0xff]
    %v2769 = vld [vmem:[#allocation11 + $0x2908] sm:$0xff]
    %v2770 = vld [vmem:[#allocation11 + $0x2910] sm:$0xff]
    %v2771 = vld [vmem:[#allocation11 + $0x2918] sm:$0xff]
    %v2772 = vld [vmem:[#allocation11 + $0x2920] sm:$0xff]
    %v2773 = vld [vmem:[#allocation11 + $0x2928] sm:$0xff]
    %v2774 = vld [vmem:[#allocation11 + $0x2930] sm:$0xff]
    %v2775 = vld [vmem:[#allocation11 + $0x2938] sm:$0xff]
    %v2776 = vld [vmem:[#allocation11 + $0x2940] sm:$0xff]
    %v2777 = vld [vmem:[#allocation11 + $0x2948] sm:$0xff]
    %v2778 = vld [vmem:[#allocation11 + $0x2950] sm:$0xff]
    %v2779 = vld [vmem:[#allocation11 + $0x2958] sm:$0xff]
    %v2780 = vld [vmem:[#allocation11 + $0x2960] sm:$0xff]
    %v2781 = vld [vmem:[#allocation11 + $0x2968] sm:$0xff]
    %v2782 = vld [vmem:[#allocation11 + $0x2970] sm:$0xff]
    %v2783 = vld [vmem:[#allocation11 + $0x2978] sm:$0xff]
    %v2784 = vld [vmem:[#allocation11 + $0x2980] sm:$0xff]
    %v2785 = vld [vmem:[#allocation11 + $0x2988] sm:$0xff]
    %v2786 = vld [vmem:[#allocation11 + $0x2990] sm:$0xff]
    %v2787 = vld [vmem:[#allocation11 + $0x2998] sm:$0xff]
    %v2788 = vld [vmem:[#allocation11 + $0x29a0] sm:$0xff]
    %v2789 = vld [vmem:[#allocation11 + $0x29a8] sm:$0xff]
    %v2790 = vld [vmem:[#allocation11 + $0x29b0] sm:$0xff]
    %v2791 = vld [vmem:[#allocation11 + $0x29b8] sm:$0xff]
    %v2792 = vld [vmem:[#allocation11 + $0x29c0] sm:$0xff]
    %v2793 = vld [vmem:[#allocation11 + $0x29c8] sm:$0xff]
    %v2794 = vld [vmem:[#allocation11 + $0x29d0] sm:$0xff]
    %v2795 = vld [vmem:[#allocation11 + $0x29d8] sm:$0xff]
    %v2796 = vld [vmem:[#allocation11 + $0x29e0] sm:$0xff]
    %v2797 = vld [vmem:[#allocation11 + $0x29e8] sm:$0xff]
    %v2798 = vld [vmem:[#allocation11 + $0x29f0] sm:$0xff]
    %v2799 = vld [vmem:[#allocation11 + $0x29f8] sm:$0xff]
    %v2800 = vld [vmem:[#allocation11 + $0x2a00] sm:$0xff]
    %v2801 = vld [vmem:[#allocation11 + $0x2a08] sm:$0xff]
    %v2802 = vld [vmem:[#allocation11 + $0x2a10] sm:$0xff]
    %v2803 = vld [vmem:[#allocation11 + $0x2a18] sm:$0xff]
    %v2804 = vld [vmem:[#allocation11 + $0x2a20] sm:$0xff]
    %v2805 = vld [vmem:[#allocation11 + $0x2a28] sm:$0xff]
    %v2806 = vld [vmem:[#allocation11 + $0x2a30] sm:$0xff]
    %v2807 = vld [vmem:[#allocation11 + $0x2a38] sm:$0xff]
    %v2808 = vld [vmem:[#allocation11 + $0x2a40] sm:$0xff]
    %v2809 = vld [vmem:[#allocation11 + $0x2a48] sm:$0xff]
    %v2810 = vld [vmem:[#allocation11 + $0x2a50] sm:$0xff]
    %v2811 = vld [vmem:[#allocation11 + $0x2a58] sm:$0xff]
    %v2812 = vld [vmem:[#allocation11 + $0x2a60] sm:$0xff]
    %v2813 = vld [vmem:[#allocation11 + $0x2a68] sm:$0xff]
    %v2814 = vld [vmem:[#allocation11 + $0x2a70] sm:$0xff]
    %v2815 = vld [vmem:[#allocation11 + $0x2a78] sm:$0xff]
    %v2816 = vld [vmem:[#allocation11 + $0x2a80] sm:$0xff]
    %v2817 = vld [vmem:[#allocation11 + $0x2a88] sm:$0xff]
    %v2818 = vld [vmem:[#allocation11 + $0x2a90] sm:$0xff]
    %v2819 = vld [vmem:[#allocation11 + $0x2a98] sm:$0xff]
    %v2820 = vld [vmem:[#allocation11 + $0x2aa0] sm:$0xff]
    %v2821 = vld [vmem:[#allocation11 + $0x2aa8] sm:$0xff]
    %v2822 = vld [vmem:[#allocation11 + $0x2ab0] sm:$0xff]
    %v2823 = vld [vmem:[#allocation11 + $0x2ab8] sm:$0xff]
    %v2824 = vld [vmem:[#allocation11 + $0x2ac0] sm:$0xff]
    %v2825 = vld [vmem:[#allocation11 + $0x2ac8] sm:$0xff]
    %v2826 = vld [vmem:[#allocation11 + $0x2ad0] sm:$0xff]
    %v2827 = vld [vmem:[#allocation11 + $0x2ad8] sm:$0xff]
    %v2828 = vld [vmem:[#allocation11 + $0x2ae0] sm:$0xff]
    %v2829 = vld [vmem:[#allocation11 + $0x2ae8] sm:$0xff]
    %v2830 = vld [vmem:[#allocation11 + $0x2af0] sm:$0xff]
    %v2831 = vld [vmem:[#allocation11 + $0x2af8] sm:$0xff]
    %v2832 = vld [vmem:[#allocation11 + $0x2b00] sm:$0xff]
    %v2833 = vld [vmem:[#allocation11 + $0x2b08] sm:$0xff]
    %v2834 = vld [vmem:[#allocation11 + $0x2b10] sm:$0xff]
    %v2835 = vld [vmem:[#allocation11 + $0x2b18] sm:$0xff]
    %v2836 = vld [vmem:[#allocation11 + $0x2b20] sm:$0xff]
    %v2837 = vld [vmem:[#allocation11 + $0x2b28] sm:$0xff]
    %v2838 = vld [vmem:[#allocation11 + $0x2b30] sm:$0xff]
    %v2839 = vld [vmem:[#allocation11 + $0x2b38] sm:$0xff]
    %v2840 = vld [vmem:[#allocation11 + $0x2b40] sm:$0xff]
    %v2841 = vld [vmem:[#allocation11 + $0x2b48] sm:$0xff]
    %v2842 = vld [vmem:[#allocation11 + $0x2b50] sm:$0xff]
    %v2843 = vld [vmem:[#allocation11 + $0x2b58] sm:$0xff]
    %v2844 = vld [vmem:[#allocation11 + $0x2b60] sm:$0xff]
    %v2845 = vld [vmem:[#allocation11 + $0x2b68] sm:$0xff]
    %v2846 = vld [vmem:[#allocation11 + $0x2b70] sm:$0xff]
    %v2847 = vld [vmem:[#allocation11 + $0x2b78] sm:$0xff]
    %v2848 = vld [vmem:[#allocation11 + $0x2b80] sm:$0xff]
    %v2849 = vld [vmem:[#allocation11 + $0x2b88] sm:$0xff]
    %v2850 = vld [vmem:[#allocation11 + $0x2b90] sm:$0xff]
    %v2851 = vld [vmem:[#allocation11 + $0x2b98] sm:$0xff]
    %v2852 = vld [vmem:[#allocation11 + $0x2ba0] sm:$0xff]
    %v2853 = vld [vmem:[#allocation11 + $0x2ba8] sm:$0xff]
    %v2854 = vld [vmem:[#allocation11 + $0x2bb0] sm:$0xff]
    %v2855 = vld [vmem:[#allocation11 + $0x2bb8] sm:$0xff]
    %v2856 = vld [vmem:[#allocation11 + $0x2bc0] sm:$0xff]
    %v2857 = vld [vmem:[#allocation11 + $0x2bc8] sm:$0xff]
    %v2858 = vld [vmem:[#allocation11 + $0x2bd0] sm:$0xff]
    %v2859 = vld [vmem:[#allocation11 + $0x2bd8] sm:$0xff]
    %v2860 = vld [vmem:[#allocation11 + $0x2be0] sm:$0xff]
    %v2861 = vld [vmem:[#allocation11 + $0x2be8] sm:$0xff]
    %v2862 = vld [vmem:[#allocation11 + $0x2bf0] sm:$0xff]
    %v2863 = vld [vmem:[#allocation11 + $0x2bf8] sm:$0xff]
    %v2864 = vld [vmem:[#allocation11 + $0x2c00] sm:$0xff]
    %v2865 = vld [vmem:[#allocation11 + $0x2c08] sm:$0xff]
    %v2866 = vld [vmem:[#allocation11 + $0x2c10] sm:$0xff]
    %v2867 = vld [vmem:[#allocation11 + $0x2c18] sm:$0xff]
    %v2868 = vld [vmem:[#allocation11 + $0x2c20] sm:$0xff]
    %v2869 = vld [vmem:[#allocation11 + $0x2c28] sm:$0xff]
    %v2870 = vld [vmem:[#allocation11 + $0x2c30] sm:$0xff]
    %v2871 = vld [vmem:[#allocation11 + $0x2c38] sm:$0xff]
    %v2872 = vld [vmem:[#allocation11 + $0x2c40] sm:$0xff]
    %v2873 = vld [vmem:[#allocation11 + $0x2c48] sm:$0xff]
    %v2874 = vld [vmem:[#allocation11 + $0x2c50] sm:$0xff]
    %v2875 = vld [vmem:[#allocation11 + $0x2c58] sm:$0xff]
    %v2876 = vld [vmem:[#allocation11 + $0x2c60] sm:$0xff]
    %v2877 = vld [vmem:[#allocation11 + $0x2c68] sm:$0xff]
    %v2878 = vld [vmem:[#allocation11 + $0x2c70] sm:$0xff]
    %v2879 = vld [vmem:[#allocation11 + $0x2c78] sm:$0xff]
    %v2880 = vld [vmem:[#allocation11 + $0x2c80] sm:$0xff]
    %v2881 = vld [vmem:[#allocation11 + $0x2c88] sm:$0xff]
    %v2882 = vld [vmem:[#allocation11 + $0x2c90] sm:$0xff]
    %v2883 = vld [vmem:[#allocation11 + $0x2c98] sm:$0xff]
    %v2884 = vld [vmem:[#allocation11 + $0x2ca0] sm:$0xff]
    %v2885 = vld [vmem:[#allocation11 + $0x2ca8] sm:$0xff]
    %v2886 = vld [vmem:[#allocation11 + $0x2cb0] sm:$0xff]
    %v2887 = vld [vmem:[#allocation11 + $0x2cb8] sm:$0xff]
    %v2888 = vld [vmem:[#allocation11 + $0x2cc0] sm:$0xff]
    %v2889 = vld [vmem:[#allocation11 + $0x2cc8] sm:$0xff]
    %v2890 = vld [vmem:[#allocation11 + $0x2cd0] sm:$0xff]
    %v2891 = vld [vmem:[#allocation11 + $0x2cd8] sm:$0xff]
    %v2892 = vld [vmem:[#allocation11 + $0x2ce0] sm:$0xff]
    %v2893 = vld [vmem:[#allocation11 + $0x2ce8] sm:$0xff]
    %v2894 = vld [vmem:[#allocation11 + $0x2cf0] sm:$0xff]
    %v2895 = vld [vmem:[#allocation11 + $0x2cf8] sm:$0xff]
    %v2896 = vld [vmem:[#allocation11 + $0x2d00] sm:$0xff]
    %v2897 = vld [vmem:[#allocation11 + $0x2d08] sm:$0xff]
    %v2898 = vld [vmem:[#allocation11 + $0x2d10] sm:$0xff]
    %v2899 = vld [vmem:[#allocation11 + $0x2d18] sm:$0xff]
    %v2900 = vld [vmem:[#allocation11 + $0x2d20] sm:$0xff]
    %v2901 = vld [vmem:[#allocation11 + $0x2d28] sm:$0xff]
    %v2902 = vld [vmem:[#allocation11 + $0x2d30] sm:$0xff]
    %v2903 = vld [vmem:[#allocation11 + $0x2d38] sm:$0xff]
    %v2904 = vld [vmem:[#allocation11 + $0x2d40] sm:$0xff]
    %v2905 = vld [vmem:[#allocation11 + $0x2d48] sm:$0xff]
    %v2906 = vld [vmem:[#allocation11 + $0x2d50] sm:$0xff]
    %v2907 = vld [vmem:[#allocation11 + $0x2d58] sm:$0xff]
    %v2908 = vld [vmem:[#allocation11 + $0x2d60] sm:$0xff]
    %v2909 = vld [vmem:[#allocation11 + $0x2d68] sm:$0xff]
    %v2910 = vld [vmem:[#allocation11 + $0x2d70] sm:$0xff]
    %v2911 = vld [vmem:[#allocation11 + $0x2d78] sm:$0xff]
    %v2912 = vld [vmem:[#allocation11 + $0x2d80] sm:$0xff]
    %v2913 = vld [vmem:[#allocation11 + $0x2d88] sm:$0xff]
    %v2914 = vld [vmem:[#allocation11 + $0x2d90] sm:$0xff]
    %v2915 = vld [vmem:[#allocation11 + $0x2d98] sm:$0xff]
    %v2916 = vld [vmem:[#allocation11 + $0x2da0] sm:$0xff]
    %v2917 = vld [vmem:[#allocation11 + $0x2da8] sm:$0xff]
    %v2918 = vld [vmem:[#allocation11 + $0x2db0] sm:$0xff]
    %v2919 = vld [vmem:[#allocation11 + $0x2db8] sm:$0xff]
    %v2920 = vld [vmem:[#allocation11 + $0x2dc0] sm:$0xff]
    %v2921 = vld [vmem:[#allocation11 + $0x2dc8] sm:$0xff]
    %v2922 = vld [vmem:[#allocation11 + $0x2dd0] sm:$0xff]
    %v2923 = vld [vmem:[#allocation11 + $0x2dd8] sm:$0xff]
    %v2924 = vld [vmem:[#allocation11 + $0x2de0] sm:$0xff]
    %v2925 = vld [vmem:[#allocation11 + $0x2de8] sm:$0xff]
    %v2926 = vld [vmem:[#allocation11 + $0x2df0] sm:$0xff]
    %v2927 = vld [vmem:[#allocation11 + $0x2df8] sm:$0xff]
    %v2928 = vld [vmem:[#allocation11 + $0x2e00] sm:$0xff]
    %v2929 = vld [vmem:[#allocation11 + $0x2e08] sm:$0xff]
    %v2930 = vld [vmem:[#allocation11 + $0x2e10] sm:$0xff]
    %v2931 = vld [vmem:[#allocation11 + $0x2e18] sm:$0xff]
    %v2932 = vld [vmem:[#allocation11 + $0x2e20] sm:$0xff]
    %v2933 = vld [vmem:[#allocation11 + $0x2e28] sm:$0xff]
    %v2934 = vld [vmem:[#allocation11 + $0x2e30] sm:$0xff]
    %v2935 = vld [vmem:[#allocation11 + $0x2e38] sm:$0xff]
    %v2936 = vld [vmem:[#allocation11 + $0x2e40] sm:$0xff]
    %v2937 = vld [vmem:[#allocation11 + $0x2e48] sm:$0xff]
    %v2938 = vld [vmem:[#allocation11 + $0x2e50] sm:$0xff]
    %v2939 = vld [vmem:[#allocation11 + $0x2e58] sm:$0xff]
    %v2940 = vld [vmem:[#allocation11 + $0x2e60] sm:$0xff]
    %v2941 = vld [vmem:[#allocation11 + $0x2e68] sm:$0xff]
    %v2942 = vld [vmem:[#allocation11 + $0x2e70] sm:$0xff]
    %v2943 = vld [vmem:[#allocation11 + $0x2e78] sm:$0xff]
    %v2944 = vld [vmem:[#allocation11 + $0x2e80] sm:$0xff]
    %v2945 = vld [vmem:[#allocation11 + $0x2e88] sm:$0xff]
    %v2946 = vld [vmem:[#allocation11 + $0x2e90] sm:$0xff]
    %v2947 = vld [vmem:[#allocation11 + $0x2e98] sm:$0xff]
    %v2948 = vld [vmem:[#allocation11 + $0x2ea0] sm:$0xff]
    %v2949 = vld [vmem:[#allocation11 + $0x2ea8] sm:$0xff]
    %v2950 = vld [vmem:[#allocation11 + $0x2eb0] sm:$0xff]
    %v2951 = vld [vmem:[#allocation11 + $0x2eb8] sm:$0xff]
    %v2952 = vld [vmem:[#allocation11 + $0x2ec0] sm:$0xff]
    %v2953 = vld [vmem:[#allocation11 + $0x2ec8] sm:$0xff]
    %v2954 = vld [vmem:[#allocation11 + $0x2ed0] sm:$0xff]
    %v2955 = vld [vmem:[#allocation11 + $0x2ed8] sm:$0xff]
    %v2956 = vld [vmem:[#allocation11 + $0x2ee0] sm:$0xff]
    %v2957 = vld [vmem:[#allocation11 + $0x2ee8] sm:$0xff]
    %v2958 = vld [vmem:[#allocation11 + $0x2ef0] sm:$0xff]
    %v2959 = vld [vmem:[#allocation11 + $0x2ef8] sm:$0xff]
    %v2960 = vld [vmem:[#allocation11 + $0x2f00] sm:$0xff]
    %v2961 = vld [vmem:[#allocation11 + $0x2f08] sm:$0xff]
    %v2962 = vld [vmem:[#allocation11 + $0x2f10] sm:$0xff]
    %v2963 = vld [vmem:[#allocation11 + $0x2f18] sm:$0xff]
    %v2964 = vld [vmem:[#allocation11 + $0x2f20] sm:$0xff]
    %v2965 = vld [vmem:[#allocation11 + $0x2f28] sm:$0xff]
    %v2966 = vld [vmem:[#allocation11 + $0x2f30] sm:$0xff]
    %v2967 = vld [vmem:[#allocation11 + $0x2f38] sm:$0xff]
    %v2968 = vld [vmem:[#allocation11 + $0x2f40] sm:$0xff]
    %v2969 = vld [vmem:[#allocation11 + $0x2f48] sm:$0xff]
    %v2970 = vld [vmem:[#allocation11 + $0x2f50] sm:$0xff]
    %v2971 = vld [vmem:[#allocation11 + $0x2f58] sm:$0xff]
    %v2972 = vld [vmem:[#allocation11 + $0x2f60] sm:$0xff]
    %v2973 = vld [vmem:[#allocation11 + $0x2f68] sm:$0xff]
    %v2974 = vld [vmem:[#allocation11 + $0x2f70] sm:$0xff]
    %v2975 = vld [vmem:[#allocation11 + $0x2f78] sm:$0xff]
    %v2976 = vld [vmem:[#allocation11 + $0x2f80] sm:$0xff]
    %v2977 = vld [vmem:[#allocation11 + $0x2f88] sm:$0xff]
    %v2978 = vld [vmem:[#allocation11 + $0x2f90] sm:$0xff]
    %v2979 = vld [vmem:[#allocation11 + $0x2f98] sm:$0xff]
    %v2980 = vld [vmem:[#allocation11 + $0x2fa0] sm:$0xff]
    %v2981 = vld [vmem:[#allocation11 + $0x2fa8] sm:$0xff]
    %v2982 = vld [vmem:[#allocation11 + $0x2fb0] sm:$0xff]
    %v2983 = vld [vmem:[#allocation11 + $0x2fb8] sm:$0xff]
    %v2984 = vld [vmem:[#allocation11 + $0x2fc0] sm:$0xff]
    %v2985 = vld [vmem:[#allocation11 + $0x2fc8] sm:$0xff]
    %v2986 = vld [vmem:[#allocation11 + $0x2fd0] sm:$0xff]
    %v2987 = vld [vmem:[#allocation11 + $0x2fd8] sm:$0xff]
    %v2988 = vld [vmem:[#allocation11 + $0x2fe0] sm:$0xff]
    %v2989 = vld [vmem:[#allocation11 + $0x2fe8] sm:$0xff]
    %v2990 = vld [vmem:[#allocation11 + $0x2ff0] sm:$0xff]
    %v2991 = vld [vmem:[#allocation11 + $0x2ff8] sm:$0xff]
    %v2992 = vld [vmem:[#allocation11 + $0x3000] sm:$0xff]
    %v2993 = vld [vmem:[#allocation11 + $0x3008] sm:$0xff]
    %v2994 = vld [vmem:[#allocation11 + $0x3010] sm:$0xff]
    %v2995 = vld [vmem:[#allocation11 + $0x3018] sm:$0xff]
    %v2996 = vld [vmem:[#allocation11 + $0x3020] sm:$0xff]
    %v2997 = vld [vmem:[#allocation11 + $0x3028] sm:$0xff]
    %v2998 = vld [vmem:[#allocation11 + $0x3030] sm:$0xff]
    %v2999 = vld [vmem:[#allocation11 + $0x3038] sm:$0xff]
    %v3000 = vld [vmem:[#allocation11 + $0x3040] sm:$0xff]
    %v3001 = vld [vmem:[#allocation11 + $0x3048] sm:$0xff]
    %v3002 = vld [vmem:[#allocation11 + $0x3050] sm:$0xff]
    %v3003 = vld [vmem:[#allocation11 + $0x3058] sm:$0xff]
    %v3004 = vld [vmem:[#allocation11 + $0x3060] sm:$0xff]
    %v3005 = vld [vmem:[#allocation11 + $0x3068] sm:$0xff]
    %v3006 = vld [vmem:[#allocation11 + $0x3070] sm:$0xff]
    %v3007 = vld [vmem:[#allocation11 + $0x3078] sm:$0xff]
    %v3008 = vld [vmem:[#allocation11 + $0x3080] sm:$0xff]
    %v3009 = vld [vmem:[#allocation11 + $0x3088] sm:$0xff]
    %v3010 = vld [vmem:[#allocation11 + $0x3090] sm:$0xff]
    %v3011 = vld [vmem:[#allocation11 + $0x3098] sm:$0xff]
    %v3012 = vld [vmem:[#allocation11 + $0x30a0] sm:$0xff]
    %v3013 = vld [vmem:[#allocation11 + $0x30a8] sm:$0xff]
    %v3014 = vld [vmem:[#allocation11 + $0x30b0] sm:$0xff]
    %v3015 = vld [vmem:[#allocation11 + $0x30b8] sm:$0xff]
    %v3016 = vld [vmem:[#allocation11 + $0x30c0] sm:$0xff]
    %v3017 = vld [vmem:[#allocation11 + $0x30c8] sm:$0xff]
    %v3018 = vld [vmem:[#allocation11 + $0x30d0] sm:$0xff]
    %v3019 = vld [vmem:[#allocation11 + $0x30d8] sm:$0xff]
    %v3020 = vld [vmem:[#allocation11 + $0x30e0] sm:$0xff]
    %v3021 = vld [vmem:[#allocation11 + $0x30e8] sm:$0xff]
    %v3022 = vld [vmem:[#allocation11 + $0x30f0] sm:$0xff]
    %v3023 = vld [vmem:[#allocation11 + $0x30f8] sm:$0xff]
    %v3024 = vld [vmem:[#allocation11 + $0x3100] sm:$0xff]
    %v3025 = vld [vmem:[#allocation11 + $0x3108] sm:$0xff]
    %v3026 = vld [vmem:[#allocation11 + $0x3110] sm:$0xff]
    %v3027 = vld [vmem:[#allocation11 + $0x3118] sm:$0xff]
    %v3028 = vld [vmem:[#allocation11 + $0x3120] sm:$0xff]
    %v3029 = vld [vmem:[#allocation11 + $0x3128] sm:$0xff]
    %v3030 = vld [vmem:[#allocation11 + $0x3130] sm:$0xff]
    %v3031 = vld [vmem:[#allocation11 + $0x3138] sm:$0xff]
    %v3032 = vld [vmem:[#allocation11 + $0x3140] sm:$0xff]
    %v3033 = vld [vmem:[#allocation11 + $0x3148] sm:$0xff]
    %v3034 = vld [vmem:[#allocation11 + $0x3150] sm:$0xff]
    %v3035 = vld [vmem:[#allocation11 + $0x3158] sm:$0xff]
    %v3036 = vld [vmem:[#allocation11 + $0x3160] sm:$0xff]
    %v3037 = vld [vmem:[#allocation11 + $0x3168] sm:$0xff]
    %v3038 = vld [vmem:[#allocation11 + $0x3170] sm:$0xff]
    %v3039 = vld [vmem:[#allocation11 + $0x3178] sm:$0xff]
    %v3040 = vld [vmem:[#allocation11 + $0x3180] sm:$0xff]
    %v3041 = vld [vmem:[#allocation11 + $0x3188] sm:$0xff]
    %v3042 = vld [vmem:[#allocation11 + $0x3190] sm:$0xff]
    %v3043 = vld [vmem:[#allocation11 + $0x3198] sm:$0xff]
    %v3044 = vld [vmem:[#allocation11 + $0x31a0] sm:$0xff]
    %v3045 = vld [vmem:[#allocation11 + $0x31a8] sm:$0xff]
    %v3046 = vld [vmem:[#allocation11 + $0x31b0] sm:$0xff]
    %v3047 = vld [vmem:[#allocation11 + $0x31b8] sm:$0xff]
    %v3048 = vld [vmem:[#allocation11 + $0x31c0] sm:$0xff]
    %v3049 = vld [vmem:[#allocation11 + $0x31c8] sm:$0xff]
    %v3050 = vld [vmem:[#allocation11 + $0x31d0] sm:$0xff]
    %v3051 = vld [vmem:[#allocation11 + $0x31d8] sm:$0xff]
    %v3052 = vld [vmem:[#allocation11 + $0x31e0] sm:$0xff]
    %v3053 = vld [vmem:[#allocation11 + $0x31e8] sm:$0xff]
    %v3054 = vld [vmem:[#allocation11 + $0x31f0] sm:$0xff]
    %v3055 = vld [vmem:[#allocation11 + $0x31f8] sm:$0xff]
    %v3056 = vld [vmem:[#allocation11 + $0x3200] sm:$0xff]
    %v3057 = vld [vmem:[#allocation11 + $0x3208] sm:$0xff]
    %v3058 = vld [vmem:[#allocation11 + $0x3210] sm:$0xff]
    %v3059 = vld [vmem:[#allocation11 + $0x3218] sm:$0xff]
    %v3060 = vld [vmem:[#allocation11 + $0x3220] sm:$0xff]
    %v3061 = vld [vmem:[#allocation11 + $0x3228] sm:$0xff]
    %v3062 = vld [vmem:[#allocation11 + $0x3230] sm:$0xff]
    %v3063 = vld [vmem:[#allocation11 + $0x3238] sm:$0xff]
    %v3064 = vld [vmem:[#allocation11 + $0x3240] sm:$0xff]
    %v3065 = vld [vmem:[#allocation11 + $0x3248] sm:$0xff]
    %v3066 = vld [vmem:[#allocation11 + $0x3250] sm:$0xff]
    %v3067 = vld [vmem:[#allocation11 + $0x3258] sm:$0xff]
    %v3068 = vld [vmem:[#allocation11 + $0x3260] sm:$0xff]
    %v3069 = vld [vmem:[#allocation11 + $0x3268] sm:$0xff]
    %v3070 = vld [vmem:[#allocation11 + $0x3270] sm:$0xff]
    %v3071 = vld [vmem:[#allocation11 + $0x3278] sm:$0xff]
    %v3072 = vld [vmem:[#allocation11 + $0x3280] sm:$0xff]
    %v3073 = vld [vmem:[#allocation11 + $0x3288] sm:$0xff]
    %v3074 = vld [vmem:[#allocation11 + $0x3290] sm:$0xff]
    %v3075 = vld [vmem:[#allocation11 + $0x3298] sm:$0xff]
    %v3076 = vld [vmem:[#allocation11 + $0x32a0] sm:$0xff]
    %v3077 = vld [vmem:[#allocation11 + $0x32a8] sm:$0xff]
    %v3078 = vld [vmem:[#allocation11 + $0x32b0] sm:$0xff]
    %v3079 = vld [vmem:[#allocation11 + $0x32b8] sm:$0xff]
    %v3080 = vld [vmem:[#allocation11 + $0x32c0] sm:$0xff]
    %v3081 = vld [vmem:[#allocation11 + $0x32c8] sm:$0xff]
    %v3082 = vld [vmem:[#allocation11 + $0x32d0] sm:$0xff]
    %v3083 = vld [vmem:[#allocation11 + $0x32d8] sm:$0xff]
    %v3084 = vld [vmem:[#allocation11 + $0x32e0] sm:$0xff]
    %v3085 = vld [vmem:[#allocation11 + $0x32e8] sm:$0xff]
    %v3086 = vld [vmem:[#allocation11 + $0x32f0] sm:$0xff]
    %v3087 = vld [vmem:[#allocation11 + $0x32f8] sm:$0xff]
    %v3088 = vld [vmem:[#allocation11 + $0x3300] sm:$0xff]
    %v3089 = vld [vmem:[#allocation11 + $0x3308] sm:$0xff]
    %v3090 = vld [vmem:[#allocation11 + $0x3310] sm:$0xff]
    %v3091 = vld [vmem:[#allocation11 + $0x3318] sm:$0xff]
    %v3092 = vld [vmem:[#allocation11 + $0x3320] sm:$0xff]
    %v3093 = vld [vmem:[#allocation11 + $0x3328] sm:$0xff]
    %v3094 = vld [vmem:[#allocation11 + $0x3330] sm:$0xff]
    %v3095 = vld [vmem:[#allocation11 + $0x3338] sm:$0xff]
    %v3096 = vld [vmem:[#allocation11 + $0x3340] sm:$0xff]
    %v3097 = vld [vmem:[#allocation11 + $0x3348] sm:$0xff]
    %v3098 = vld [vmem:[#allocation11 + $0x3350] sm:$0xff]
    %v3099 = vld [vmem:[#allocation11 + $0x3358] sm:$0xff]
    %v3100 = vld [vmem:[#allocation11 + $0x3360] sm:$0xff]
    %v3101 = vld [vmem:[#allocation11 + $0x3368] sm:$0xff]
    %v3102 = vld [vmem:[#allocation11 + $0x3370] sm:$0xff]
    %v3103 = vld [vmem:[#allocation11 + $0x3378] sm:$0xff]
    %v3104 = vld [vmem:[#allocation11 + $0x3380] sm:$0xff]
    %v3105 = vld [vmem:[#allocation11 + $0x3388] sm:$0xff]
    %v3106 = vld [vmem:[#allocation11 + $0x3390] sm:$0xff]
    %v3107 = vld [vmem:[#allocation11 + $0x3398] sm:$0xff]
    %v3108 = vld [vmem:[#allocation11 + $0x33a0] sm:$0xff]
    %v3109 = vld [vmem:[#allocation11 + $0x33a8] sm:$0xff]
    %v3110 = vld [vmem:[#allocation11 + $0x33b0] sm:$0xff]
    %v3111 = vld [vmem:[#allocation11 + $0x33b8] sm:$0xff]
    %v3112 = vld [vmem:[#allocation11 + $0x33c0] sm:$0xff]
    %v3113 = vld [vmem:[#allocation11 + $0x33c8] sm:$0xff]
    %v3114 = vld [vmem:[#allocation11 + $0x33d0] sm:$0xff]
    %v3115 = vld [vmem:[#allocation11 + $0x33d8] sm:$0xff]
    %v3116 = vld [vmem:[#allocation11 + $0x33e0] sm:$0xff]
    %v3117 = vld [vmem:[#allocation11 + $0x33e8] sm:$0xff]
    %v3118 = vld [vmem:[#allocation11 + $0x33f0] sm:$0xff]
    %v3119 = vld [vmem:[#allocation11 + $0x33f8] sm:$0xff]
    %v3120 = vld [vmem:[#allocation11 + $0x3400] sm:$0xff]
    %v3121 = vld [vmem:[#allocation11 + $0x3408] sm:$0xff]
    %v3122 = vld [vmem:[#allocation11 + $0x3410] sm:$0xff]
    %v3123 = vld [vmem:[#allocation11 + $0x3418] sm:$0xff]
    %v3124 = vld [vmem:[#allocation11 + $0x3420] sm:$0xff]
    %v3125 = vld [vmem:[#allocation11 + $0x3428] sm:$0xff]
    %v3126 = vld [vmem:[#allocation11 + $0x3430] sm:$0xff]
    %v3127 = vld [vmem:[#allocation11 + $0x3438] sm:$0xff]
    %v3128 = vld [vmem:[#allocation11 + $0x3440] sm:$0xff]
    %v3129 = vld [vmem:[#allocation11 + $0x3448] sm:$0xff]
    %v3130 = vld [vmem:[#allocation11 + $0x3450] sm:$0xff]
    %v3131 = vld [vmem:[#allocation11 + $0x3458] sm:$0xff]
    %v3132 = vld [vmem:[#allocation11 + $0x3460] sm:$0xff]
    %v3133 = vld [vmem:[#allocation11 + $0x3468] sm:$0xff]
    %v3134 = vld [vmem:[#allocation11 + $0x3470] sm:$0xff]
    %v3135 = vld [vmem:[#allocation11 + $0x3478] sm:$0xff]
    %v3136 = vld [vmem:[#allocation11 + $0x3480] sm:$0xff]
    %v3137 = vld [vmem:[#allocation11 + $0x3488] sm:$0xff]
    %v3138 = vld [vmem:[#allocation11 + $0x3490] sm:$0xff]
    %v3139 = vld [vmem:[#allocation11 + $0x3498] sm:$0xff]
    %v3140 = vld [vmem:[#allocation11 + $0x34a0] sm:$0xff]
    %v3141 = vld [vmem:[#allocation11 + $0x34a8] sm:$0xff]
    %v3142 = vld [vmem:[#allocation11 + $0x34b0] sm:$0xff]
    %v3143 = vld [vmem:[#allocation11 + $0x34b8] sm:$0xff]
    %v3144 = vld [vmem:[#allocation11 + $0x34c0] sm:$0xff]
    %v3145 = vld [vmem:[#allocation11 + $0x34c8] sm:$0xff]
    %v3146 = vld [vmem:[#allocation11 + $0x34d0] sm:$0xff]
    %v3147 = vld [vmem:[#allocation11 + $0x34d8] sm:$0xff]
    %v3148 = vld [vmem:[#allocation11 + $0x34e0] sm:$0xff]
    %v3149 = vld [vmem:[#allocation11 + $0x34e8] sm:$0xff]
    %v3150 = vld [vmem:[#allocation11 + $0x34f0] sm:$0xff]
    %v3151 = vld [vmem:[#allocation11 + $0x34f8] sm:$0xff]
    %v3152 = vld [vmem:[#allocation11 + $0x3500] sm:$0xff]
    %v3153 = vld [vmem:[#allocation11 + $0x3508] sm:$0xff]
    %v3154 = vld [vmem:[#allocation11 + $0x3510] sm:$0xff]
    %v3155 = vld [vmem:[#allocation11 + $0x3518] sm:$0xff]
    %v3156 = vld [vmem:[#allocation11 + $0x3520] sm:$0xff]
    %v3157 = vld [vmem:[#allocation11 + $0x3528] sm:$0xff]
    %v3158 = vld [vmem:[#allocation11 + $0x3530] sm:$0xff]
    %v3159 = vld [vmem:[#allocation11 + $0x3538] sm:$0xff]
    %v3160 = vld [vmem:[#allocation11 + $0x3540] sm:$0xff]
    %v3161 = vld [vmem:[#allocation11 + $0x3548] sm:$0xff]
    %v3162 = vld [vmem:[#allocation11 + $0x3550] sm:$0xff]
    %v3163 = vld [vmem:[#allocation11 + $0x3558] sm:$0xff]
    %v3164 = vld [vmem:[#allocation11 + $0x3560] sm:$0xff]
    %v3165 = vld [vmem:[#allocation11 + $0x3568] sm:$0xff]
    %v3166 = vld [vmem:[#allocation11 + $0x3570] sm:$0xff]
    %v3167 = vld [vmem:[#allocation11 + $0x3578] sm:$0xff]
    %v3168 = vld [vmem:[#allocation11 + $0x3580] sm:$0xff]
    %v3169 = vld [vmem:[#allocation11 + $0x3588] sm:$0xff]
    %v3170 = vld [vmem:[#allocation11 + $0x3590] sm:$0xff]
    %v3171 = vld [vmem:[#allocation11 + $0x3598] sm:$0xff]
    %v3172 = vld [vmem:[#allocation11 + $0x35a0] sm:$0xff]
    %v3173 = vld [vmem:[#allocation11 + $0x35a8] sm:$0xff]
    %v3174 = vld [vmem:[#allocation11 + $0x35b0] sm:$0xff]
    %v3175 = vld [vmem:[#allocation11 + $0x35b8] sm:$0xff]
    %v3176 = vld [vmem:[#allocation11 + $0x35c0] sm:$0xff]
    %v3177 = vld [vmem:[#allocation11 + $0x35c8] sm:$0xff]
    %v3178 = vld [vmem:[#allocation11 + $0x35d0] sm:$0xff]
    %v3179 = vld [vmem:[#allocation11 + $0x35d8] sm:$0xff]
    %v3180 = vld [vmem:[#allocation11 + $0x35e0] sm:$0xff]
    %v3181 = vld [vmem:[#allocation11 + $0x35e8] sm:$0xff]
    %v3182 = vld [vmem:[#allocation11 + $0x35f0] sm:$0xff]
    %v3183 = vld [vmem:[#allocation11 + $0x35f8] sm:$0xff]
    %v3184 = vld [vmem:[#allocation11 + $0x3600] sm:$0xff]
    %v3185 = vld [vmem:[#allocation11 + $0x3608] sm:$0xff]
    %v3186 = vld [vmem:[#allocation11 + $0x3610] sm:$0xff]
    %v3187 = vld [vmem:[#allocation11 + $0x3618] sm:$0xff]
    %v3188 = vld [vmem:[#allocation11 + $0x3620] sm:$0xff]
    %v3189 = vld [vmem:[#allocation11 + $0x3628] sm:$0xff]
    %v3190 = vld [vmem:[#allocation11 + $0x3630] sm:$0xff]
    %v3191 = vld [vmem:[#allocation11 + $0x3638] sm:$0xff]
    %v3192 = vld [vmem:[#allocation11 + $0x3640] sm:$0xff]
    %v3193 = vld [vmem:[#allocation11 + $0x3648] sm:$0xff]
    %v3194 = vld [vmem:[#allocation11 + $0x3650] sm:$0xff]
    %v3195 = vld [vmem:[#allocation11 + $0x3658] sm:$0xff]
    %v3196 = vld [vmem:[#allocation11 + $0x3660] sm:$0xff]
    %v3197 = vld [vmem:[#allocation11 + $0x3668] sm:$0xff]
    %v3198 = vld [vmem:[#allocation11 + $0x3670] sm:$0xff]
    %v3199 = vld [vmem:[#allocation11 + $0x3678] sm:$0xff]
    %v3200 = vld [vmem:[#allocation11 + $0x3680] sm:$0xff]
    %v3201 = vld [vmem:[#allocation11 + $0x3688] sm:$0xff]
    %v3202 = vld [vmem:[#allocation11 + $0x3690] sm:$0xff]
    %v3203 = vld [vmem:[#allocation11 + $0x3698] sm:$0xff]
    %v3204 = vld [vmem:[#allocation11 + $0x36a0] sm:$0xff]
    %v3205 = vld [vmem:[#allocation11 + $0x36a8] sm:$0xff]
    %v3206 = vld [vmem:[#allocation11 + $0x36b0] sm:$0xff]
    %v3207 = vld [vmem:[#allocation11 + $0x36b8] sm:$0xff]
    %v3208 = vld [vmem:[#allocation11 + $0x36c0] sm:$0xff]
    %v3209 = vld [vmem:[#allocation11 + $0x36c8] sm:$0xff]
    %v3210 = vld [vmem:[#allocation11 + $0x36d0] sm:$0xff]
    %v3211 = vld [vmem:[#allocation11 + $0x36d8] sm:$0xff]
    %v3212 = vld [vmem:[#allocation11 + $0x36e0] sm:$0xff]
    %v3213 = vld [vmem:[#allocation11 + $0x36e8] sm:$0xff]
    %v3214 = vld [vmem:[#allocation11 + $0x36f0] sm:$0xff]
    %v3215 = vld [vmem:[#allocation11 + $0x36f8] sm:$0xff]
    %v3216 = vld [vmem:[#allocation11 + $0x3700] sm:$0xff]
    %v3217 = vld [vmem:[#allocation11 + $0x3708] sm:$0xff]
    %v3218 = vld [vmem:[#allocation11 + $0x3710] sm:$0xff]
    %v3219 = vld [vmem:[#allocation11 + $0x3718] sm:$0xff]
    %v3220 = vld [vmem:[#allocation11 + $0x3720] sm:$0xff]
    %v3221 = vld [vmem:[#allocation11 + $0x3728] sm:$0xff]
    %v3222 = vld [vmem:[#allocation11 + $0x3730] sm:$0xff]
    %v3223 = vld [vmem:[#allocation11 + $0x3738] sm:$0xff]
    %v3224 = vld [vmem:[#allocation11 + $0x3740] sm:$0xff]
    %v3225 = vld [vmem:[#allocation11 + $0x3748] sm:$0xff]
    %v3226 = vld [vmem:[#allocation11 + $0x3750] sm:$0xff]
    %v3227 = vld [vmem:[#allocation11 + $0x3758] sm:$0xff]
    %v3228 = vld [vmem:[#allocation11 + $0x3760] sm:$0xff]
    %v3229 = vld [vmem:[#allocation11 + $0x3768] sm:$0xff]
    %v3230 = vld [vmem:[#allocation11 + $0x3770] sm:$0xff]
    %v3231 = vld [vmem:[#allocation11 + $0x3778] sm:$0xff]
    %v3232 = vld [vmem:[#allocation11 + $0x3780] sm:$0xff]
    %v3233 = vld [vmem:[#allocation11 + $0x3788] sm:$0xff]
    %v3234 = vld [vmem:[#allocation11 + $0x3790] sm:$0xff]
    %v3235 = vld [vmem:[#allocation11 + $0x3798] sm:$0xff]
    %v3236 = vld [vmem:[#allocation11 + $0x37a0] sm:$0xff]
    %v3237 = vld [vmem:[#allocation11 + $0x37a8] sm:$0xff]
    %v3238 = vld [vmem:[#allocation11 + $0x37b0] sm:$0xff]
    %v3239 = vld [vmem:[#allocation11 + $0x37b8] sm:$0xff]
    %v3240 = vld [vmem:[#allocation11 + $0x37c0] sm:$0xff]
    %v3241 = vld [vmem:[#allocation11 + $0x37c8] sm:$0xff]
    %v3242 = vld [vmem:[#allocation11 + $0x37d0] sm:$0xff]
    %v3243 = vld [vmem:[#allocation11 + $0x37d8] sm:$0xff]
    %v3244 = vld [vmem:[#allocation11 + $0x37e0] sm:$0xff]
    %v3245 = vld [vmem:[#allocation11 + $0x37e8] sm:$0xff]
    %v3246 = vld [vmem:[#allocation11 + $0x37f0] sm:$0xff]
    %v3247 = vld [vmem:[#allocation11 + $0x37f8] sm:$0xff]
    %v3248 = vld [vmem:[#allocation11 + $0x3800] sm:$0xff]
    %v3249 = vld [vmem:[#allocation11 + $0x3808] sm:$0xff]
    %v3250 = vld [vmem:[#allocation11 + $0x3810] sm:$0xff]
    %v3251 = vld [vmem:[#allocation11 + $0x3818] sm:$0xff]
    %v3252 = vld [vmem:[#allocation11 + $0x3820] sm:$0xff]
    %v3253 = vld [vmem:[#allocation11 + $0x3828] sm:$0xff]
    %v3254 = vld [vmem:[#allocation11 + $0x3830] sm:$0xff]
    %v3255 = vld [vmem:[#allocation11 + $0x3838] sm:$0xff]
    %v3256 = vld [vmem:[#allocation11 + $0x3840] sm:$0xff]
    %v3257 = vld [vmem:[#allocation11 + $0x3848] sm:$0xff]
    %v3258 = vld [vmem:[#allocation11 + $0x3850] sm:$0xff]
    %v3259 = vld [vmem:[#allocation11 + $0x3858] sm:$0xff]
    %v3260 = vld [vmem:[#allocation11 + $0x3860] sm:$0xff]
    %v3261 = vld [vmem:[#allocation11 + $0x3868] sm:$0xff]
    %v3262 = vld [vmem:[#allocation11 + $0x3870] sm:$0xff]
    %v3263 = vld [vmem:[#allocation11 + $0x3878] sm:$0xff]
    %v3264 = vld [vmem:[#allocation11 + $0x3880] sm:$0xff]
    %v3265 = vld [vmem:[#allocation11 + $0x3888] sm:$0xff]
    %v3266 = vld [vmem:[#allocation11 + $0x3890] sm:$0xff]
    %v3267 = vld [vmem:[#allocation11 + $0x3898] sm:$0xff]
    %v3268 = vld [vmem:[#allocation11 + $0x38a0] sm:$0xff]
    %v3269 = vld [vmem:[#allocation11 + $0x38a8] sm:$0xff]
    %v3270 = vld [vmem:[#allocation11 + $0x38b0] sm:$0xff]
    %v3271 = vld [vmem:[#allocation11 + $0x38b8] sm:$0xff]
    %v3272 = vld [vmem:[#allocation11 + $0x38c0] sm:$0xff]
    %v3273 = vld [vmem:[#allocation11 + $0x38c8] sm:$0xff]
    %v3274 = vld [vmem:[#allocation11 + $0x38d0] sm:$0xff]
    %v3275 = vld [vmem:[#allocation11 + $0x38d8] sm:$0xff]
    %v3276 = vld [vmem:[#allocation11 + $0x38e0] sm:$0xff]
    %v3277 = vld [vmem:[#allocation11 + $0x38e8] sm:$0xff]
    %v3278 = vld [vmem:[#allocation11 + $0x38f0] sm:$0xff]
    %v3279 = vld [vmem:[#allocation11 + $0x38f8] sm:$0xff]
    %v3280 = vld [vmem:[#allocation11 + $0x3900] sm:$0xff]
    %v3281 = vld [vmem:[#allocation11 + $0x3908] sm:$0xff]
    %v3282 = vld [vmem:[#allocation11 + $0x3910] sm:$0xff]
    %v3283 = vld [vmem:[#allocation11 + $0x3918] sm:$0xff]
    %v3284 = vld [vmem:[#allocation11 + $0x3920] sm:$0xff]
    %v3285 = vld [vmem:[#allocation11 + $0x3928] sm:$0xff]
    %v3286 = vld [vmem:[#allocation11 + $0x3930] sm:$0xff]
    %v3287 = vld [vmem:[#allocation11 + $0x3938] sm:$0xff]
    %v3288 = vld [vmem:[#allocation11 + $0x3940] sm:$0xff]
    %v3289 = vld [vmem:[#allocation11 + $0x3948] sm:$0xff]
    %v3290 = vld [vmem:[#allocation11 + $0x3950] sm:$0xff]
    %v3291 = vld [vmem:[#allocation11 + $0x3958] sm:$0xff]
    %v3292 = vld [vmem:[#allocation11 + $0x3960] sm:$0xff]
    %v3293 = vld [vmem:[#allocation11 + $0x3968] sm:$0xff]
    %v3294 = vld [vmem:[#allocation11 + $0x3970] sm:$0xff]
    %v3295 = vld [vmem:[#allocation11 + $0x3978] sm:$0xff]
    %v3296 = vld [vmem:[#allocation11 + $0x3980] sm:$0xff]
    %v3297 = vld [vmem:[#allocation11 + $0x3988] sm:$0xff]
    %v3298 = vld [vmem:[#allocation11 + $0x3990] sm:$0xff]
    %v3299 = vld [vmem:[#allocation11 + $0x3998] sm:$0xff]
    %v3300 = vld [vmem:[#allocation11 + $0x39a0] sm:$0xff]
    %v3301 = vld [vmem:[#allocation11 + $0x39a8] sm:$0xff]
    %v3302 = vld [vmem:[#allocation11 + $0x39b0] sm:$0xff]
    %v3303 = vld [vmem:[#allocation11 + $0x39b8] sm:$0xff]
    %v3304 = vld [vmem:[#allocation11 + $0x39c0] sm:$0xff]
    %v3305 = vld [vmem:[#allocation11 + $0x39c8] sm:$0xff]
    %v3306 = vld [vmem:[#allocation11 + $0x39d0] sm:$0xff]
    %v3307 = vld [vmem:[#allocation11 + $0x39d8] sm:$0xff]
    %v3308 = vld [vmem:[#allocation11 + $0x39e0] sm:$0xff]
    %v3309 = vld [vmem:[#allocation11 + $0x39e8] sm:$0xff]
    %v3310 = vld [vmem:[#allocation11 + $0x39f0] sm:$0xff]
    %v3311 = vld [vmem:[#allocation11 + $0x39f8] sm:$0xff]
    %v3312 = vld [vmem:[#allocation11 + $0x3a00] sm:$0xff]
    %v3313 = vld [vmem:[#allocation11 + $0x3a08] sm:$0xff]
    %v3314 = vld [vmem:[#allocation11 + $0x3a10] sm:$0xff]
    %v3315 = vld [vmem:[#allocation11 + $0x3a18] sm:$0xff]
    %v3316 = vld [vmem:[#allocation11 + $0x3a20] sm:$0xff]
    %v3317 = vld [vmem:[#allocation11 + $0x3a28] sm:$0xff]
    %v3318 = vld [vmem:[#allocation11 + $0x3a30] sm:$0xff]
    %v3319 = vld [vmem:[#allocation11 + $0x3a38] sm:$0xff]
    %v3320 = vld [vmem:[#allocation11 + $0x3a40] sm:$0xff]
    %v3321 = vld [vmem:[#allocation11 + $0x3a48] sm:$0xff]
    %v3322 = vld [vmem:[#allocation11 + $0x3a50] sm:$0xff]
    %v3323 = vld [vmem:[#allocation11 + $0x3a58] sm:$0xff]
    %v3324 = vld [vmem:[#allocation11 + $0x3a60] sm:$0xff]
    %v3325 = vld [vmem:[#allocation11 + $0x3a68] sm:$0xff]
    %v3326 = vld [vmem:[#allocation11 + $0x3a70] sm:$0xff]
    %v3327 = vld [vmem:[#allocation11 + $0x3a78] sm:$0xff]
    %v3328 = vld [vmem:[#allocation11 + $0x3a80] sm:$0xff]
    %v3329 = vld [vmem:[#allocation11 + $0x3a88] sm:$0xff]
    %v3330 = vld [vmem:[#allocation11 + $0x3a90] sm:$0xff]
    %v3331 = vld [vmem:[#allocation11 + $0x3a98] sm:$0xff]
    %v3332 = vld [vmem:[#allocation11 + $0x3aa0] sm:$0xff]
    %v3333 = vld [vmem:[#allocation11 + $0x3aa8] sm:$0xff]
    %v3334 = vld [vmem:[#allocation11 + $0x3ab0] sm:$0xff]
    %v3335 = vld [vmem:[#allocation11 + $0x3ab8] sm:$0xff]
    %v3336 = vld [vmem:[#allocation11 + $0x3ac0] sm:$0xff]
    %v3337 = vld [vmem:[#allocation11 + $0x3ac8] sm:$0xff]
    %v3338 = vld [vmem:[#allocation11 + $0x3ad0] sm:$0xff]
    %v3339 = vld [vmem:[#allocation11 + $0x3ad8] sm:$0xff]
    %v3340 = vld [vmem:[#allocation11 + $0x3ae0] sm:$0xff]
    %v3341 = vld [vmem:[#allocation11 + $0x3ae8] sm:$0xff]
    %v3342 = vld [vmem:[#allocation11 + $0x3af0] sm:$0xff]
    %v3343 = vld [vmem:[#allocation11 + $0x3af8] sm:$0xff]
    %v3344 = vld [vmem:[#allocation11 + $0x3b00] sm:$0xff]
    %v3345 = vld [vmem:[#allocation11 + $0x3b08] sm:$0xff]
    %v3346 = vld [vmem:[#allocation11 + $0x3b10] sm:$0xff]
    %v3347 = vld [vmem:[#allocation11 + $0x3b18] sm:$0xff]
    %v3348 = vld [vmem:[#allocation11 + $0x3b20] sm:$0xff]
    %v3349 = vld [vmem:[#allocation11 + $0x3b28] sm:$0xff]
    %v3350 = vld [vmem:[#allocation11 + $0x3b30] sm:$0xff]
    %v3351 = vld [vmem:[#allocation11 + $0x3b38] sm:$0xff]
    %v3352 = vld [vmem:[#allocation11 + $0x3b40] sm:$0xff]
    %v3353 = vld [vmem:[#allocation11 + $0x3b48] sm:$0xff]
    %v3354 = vld [vmem:[#allocation11 + $0x3b50] sm:$0xff]
    %v3355 = vld [vmem:[#allocation11 + $0x3b58] sm:$0xff]
    %v3356 = vld [vmem:[#allocation11 + $0x3b60] sm:$0xff]
    %v3357 = vld [vmem:[#allocation11 + $0x3b68] sm:$0xff]
    %v3358 = vld [vmem:[#allocation11 + $0x3b70] sm:$0xff]
    %v3359 = vld [vmem:[#allocation11 + $0x3b78] sm:$0xff]
    %v3360 = vld [vmem:[#allocation11 + $0x3b80] sm:$0xff]
    %v3361 = vld [vmem:[#allocation11 + $0x3b88] sm:$0xff]
    %v3362 = vld [vmem:[#allocation11 + $0x3b90] sm:$0xff]
    %v3363 = vld [vmem:[#allocation11 + $0x3b98] sm:$0xff]
    %v3364 = vld [vmem:[#allocation11 + $0x3ba0] sm:$0xff]
    %v3365 = vld [vmem:[#allocation11 + $0x3ba8] sm:$0xff]
    %v3366 = vld [vmem:[#allocation11 + $0x3bb0] sm:$0xff]
    %v3367 = vld [vmem:[#allocation11 + $0x3bb8] sm:$0xff]
    %v3368 = vld [vmem:[#allocation11 + $0x3bc0] sm:$0xff]
    %v3369 = vld [vmem:[#allocation11 + $0x3bc8] sm:$0xff]
    %v3370 = vld [vmem:[#allocation11 + $0x3bd0] sm:$0xff]
    %v3371 = vld [vmem:[#allocation11 + $0x3bd8] sm:$0xff]
    %v3372 = vld [vmem:[#allocation11 + $0x3be0] sm:$0xff]
    %v3373 = vld [vmem:[#allocation11 + $0x3be8] sm:$0xff]
    %v3374 = vld [vmem:[#allocation11 + $0x3bf0] sm:$0xff]
    %v3375 = vld [vmem:[#allocation11 + $0x3bf8] sm:$0xff]
    %v3376 = vld [vmem:[#allocation11 + $0x3c00] sm:$0xff]
    %v3377 = vld [vmem:[#allocation11 + $0x3c08] sm:$0xff]
    %v3378 = vld [vmem:[#allocation11 + $0x3c10] sm:$0xff]
    %v3379 = vld [vmem:[#allocation11 + $0x3c18] sm:$0xff]
    %v3380 = vld [vmem:[#allocation11 + $0x3c20] sm:$0xff]
    %v3381 = vld [vmem:[#allocation11 + $0x3c28] sm:$0xff]
    %v3382 = vld [vmem:[#allocation11 + $0x3c30] sm:$0xff]
    %v3383 = vld [vmem:[#allocation11 + $0x3c38] sm:$0xff]
    %v3384 = vld [vmem:[#allocation11 + $0x3c40] sm:$0xff]
    %v3385 = vld [vmem:[#allocation11 + $0x3c48] sm:$0xff]
    %v3386 = vld [vmem:[#allocation11 + $0x3c50] sm:$0xff]
    %v3387 = vld [vmem:[#allocation11 + $0x3c58] sm:$0xff]
    %v3388 = vld [vmem:[#allocation11 + $0x3c60] sm:$0xff]
    %v3389 = vld [vmem:[#allocation11 + $0x3c68] sm:$0xff]
    %v3390 = vld [vmem:[#allocation11 + $0x3c70] sm:$0xff]
    %v3391 = vld [vmem:[#allocation11 + $0x3c78] sm:$0xff]
    %v3392 = vld [vmem:[#allocation11 + $0x3c80] sm:$0xff]
    %v3393 = vld [vmem:[#allocation11 + $0x3c88] sm:$0xff]
    %v3394 = vld [vmem:[#allocation11 + $0x3c90] sm:$0xff]
    %v3395 = vld [vmem:[#allocation11 + $0x3c98] sm:$0xff]
    %v3396 = vld [vmem:[#allocation11 + $0x3ca0] sm:$0xff]
    %v3397 = vld [vmem:[#allocation11 + $0x3ca8] sm:$0xff]
    %v3398 = vld [vmem:[#allocation11 + $0x3cb0] sm:$0xff]
    %v3399 = vld [vmem:[#allocation11 + $0x3cb8] sm:$0xff]
    %v3400 = vld [vmem:[#allocation11 + $0x3cc0] sm:$0xff]
    %v3401 = vld [vmem:[#allocation11 + $0x3cc8] sm:$0xff]
    %v3402 = vld [vmem:[#allocation11 + $0x3cd0] sm:$0xff]
    %v3403 = vld [vmem:[#allocation11 + $0x3cd8] sm:$0xff]
    %v3404 = vld [vmem:[#allocation11 + $0x3ce0] sm:$0xff]
    %v3405 = vld [vmem:[#allocation11 + $0x3ce8] sm:$0xff]
    %v3406 = vld [vmem:[#allocation11 + $0x3cf0] sm:$0xff]
    %v3407 = vld [vmem:[#allocation11 + $0x3cf8] sm:$0xff]
    %v3408 = vld [vmem:[#allocation11 + $0x3d00] sm:$0xff]
    %v3409 = vld [vmem:[#allocation11 + $0x3d08] sm:$0xff]
    %v3410 = vld [vmem:[#allocation11 + $0x3d10] sm:$0xff]
    %v3411 = vld [vmem:[#allocation11 + $0x3d18] sm:$0xff]
    %v3412 = vld [vmem:[#allocation11 + $0x3d20] sm:$0xff]
    %v3413 = vld [vmem:[#allocation11 + $0x3d28] sm:$0xff]
    %v3414 = vld [vmem:[#allocation11 + $0x3d30] sm:$0xff]
    %v3415 = vld [vmem:[#allocation11 + $0x3d38] sm:$0xff]
    %v3416 = vld [vmem:[#allocation11 + $0x3d40] sm:$0xff]
    %v3417 = vld [vmem:[#allocation11 + $0x3d48] sm:$0xff]
    %v3418 = vld [vmem:[#allocation11 + $0x3d50] sm:$0xff]
    %v3419 = vld [vmem:[#allocation11 + $0x3d58] sm:$0xff]
    %v3420 = vld [vmem:[#allocation11 + $0x3d60] sm:$0xff]
    %v3421 = vld [vmem:[#allocation11 + $0x3d68] sm:$0xff]
    %v3422 = vld [vmem:[#allocation11 + $0x3d70] sm:$0xff]
    %v3423 = vld [vmem:[#allocation11 + $0x3d78] sm:$0xff]
    %v3424 = vld [vmem:[#allocation11 + $0x3d80] sm:$0xff]
    %v3425 = vld [vmem:[#allocation11 + $0x3d88] sm:$0xff]
    %v3426 = vld [vmem:[#allocation11 + $0x3d90] sm:$0xff]
    %v3427 = vld [vmem:[#allocation11 + $0x3d98] sm:$0xff]
    %v3428 = vld [vmem:[#allocation11 + $0x3da0] sm:$0xff]
    %v3429 = vld [vmem:[#allocation11 + $0x3da8] sm:$0xff]
    %v3430 = vld [vmem:[#allocation11 + $0x3db0] sm:$0xff]
    %v3431 = vld [vmem:[#allocation11 + $0x3db8] sm:$0xff]
    %v3432 = vld [vmem:[#allocation11 + $0x3dc0] sm:$0xff]
    %v3433 = vld [vmem:[#allocation11 + $0x3dc8] sm:$0xff]
    %v3434 = vld [vmem:[#allocation11 + $0x3dd0] sm:$0xff]
    %v3435 = vld [vmem:[#allocation11 + $0x3dd8] sm:$0xff]
    %v3436 = vld [vmem:[#allocation11 + $0x3de0] sm:$0xff]
    %v3437 = vld [vmem:[#allocation11 + $0x3de8] sm:$0xff]
    %v3438 = vld [vmem:[#allocation11 + $0x3df0] sm:$0xff]
    %v3439 = vld [vmem:[#allocation11 + $0x3df8] sm:$0xff]
    %v3440 = vld [vmem:[#allocation11 + $0x3e00] sm:$0xff]
    %v3441 = vld [vmem:[#allocation11 + $0x3e08] sm:$0xff]
    %v3442 = vld [vmem:[#allocation11 + $0x3e10] sm:$0xff]
    %v3443 = vld [vmem:[#allocation11 + $0x3e18] sm:$0xff]
    %v3444 = vld [vmem:[#allocation11 + $0x3e20] sm:$0xff]
    %v3445 = vld [vmem:[#allocation11 + $0x3e28] sm:$0xff]
    %v3446 = vld [vmem:[#allocation11 + $0x3e30] sm:$0xff]
    %v3447 = vld [vmem:[#allocation11 + $0x3e38] sm:$0xff]
    %v3448 = vld [vmem:[#allocation11 + $0x3e40] sm:$0xff]
    %v3449 = vld [vmem:[#allocation11 + $0x3e48] sm:$0xff]
    %v3450 = vld [vmem:[#allocation11 + $0x3e50] sm:$0xff]
    %v3451 = vld [vmem:[#allocation11 + $0x3e58] sm:$0xff]
    %v3452 = vld [vmem:[#allocation11 + $0x3e60] sm:$0xff]
    %v3453 = vld [vmem:[#allocation11 + $0x3e68] sm:$0xff]
    %v3454 = vld [vmem:[#allocation11 + $0x3e70] sm:$0xff]
    %v3455 = vld [vmem:[#allocation11 + $0x3e78] sm:$0xff]
    %v3456 = vld [vmem:[#allocation11 + $0x3e80] sm:$0xff]
    %v3457 = vld [vmem:[#allocation11 + $0x3e88] sm:$0xff]
    %v3458 = vld [vmem:[#allocation11 + $0x3e90] sm:$0xff]
    %v3459 = vld [vmem:[#allocation11 + $0x3e98] sm:$0xff]
    %v3460 = vld [vmem:[#allocation11 + $0x3ea0] sm:$0xff]
    %v3461 = vld [vmem:[#allocation11 + $0x3ea8] sm:$0xff]
    %v3462 = vld [vmem:[#allocation11 + $0x3eb0] sm:$0xff]
    %v3463 = vld [vmem:[#allocation11 + $0x3eb8] sm:$0xff]
    %v3464 = vld [vmem:[#allocation11 + $0x3ec0] sm:$0xff]
    %v3465 = vld [vmem:[#allocation11 + $0x3ec8] sm:$0xff]
    %v3466 = vld [vmem:[#allocation11 + $0x3ed0] sm:$0xff]
    %v3467 = vld [vmem:[#allocation11 + $0x3ed8] sm:$0xff]
    %v3468 = vld [vmem:[#allocation11 + $0x3ee0] sm:$0xff]
    %v3469 = vld [vmem:[#allocation11 + $0x3ee8] sm:$0xff]
    %v3470 = vld [vmem:[#allocation11 + $0x3ef0] sm:$0xff]
    %v3471 = vld [vmem:[#allocation11 + $0x3ef8] sm:$0xff]
    %v3472 = vld [vmem:[#allocation11 + $0x3f00] sm:$0xff]
    %v3473 = vld [vmem:[#allocation11 + $0x3f08] sm:$0xff]
    %v3474 = vld [vmem:[#allocation11 + $0x3f10] sm:$0xff]
    %v3475 = vld [vmem:[#allocation11 + $0x3f18] sm:$0xff]
    %v3476 = vld [vmem:[#allocation11 + $0x3f20] sm:$0xff]
    %v3477 = vld [vmem:[#allocation11 + $0x3f28] sm:$0xff]
    %v3478 = vld [vmem:[#allocation11 + $0x3f30] sm:$0xff]
    %v3479 = vld [vmem:[#allocation11 + $0x3f38] sm:$0xff]
    %v3480 = vld [vmem:[#allocation11 + $0x3f40] sm:$0xff]
    %v3481 = vld [vmem:[#allocation11 + $0x3f48] sm:$0xff]
    %v3482 = vld [vmem:[#allocation11 + $0x3f50] sm:$0xff]
    %v3483 = vld [vmem:[#allocation11 + $0x3f58] sm:$0xff]
    %v3484 = vld [vmem:[#allocation11 + $0x3f60] sm:$0xff]
    %v3485 = vld [vmem:[#allocation11 + $0x3f68] sm:$0xff]
    %v3486 = vld [vmem:[#allocation11 + $0x3f70] sm:$0xff]
    %v3487 = vld [vmem:[#allocation11 + $0x3f78] sm:$0xff]
    %v3488 = vld [vmem:[#allocation11 + $0x3f80] sm:$0xff]
    %v3489 = vld [vmem:[#allocation11 + $0x3f88] sm:$0xff]
    %v3490 = vld [vmem:[#allocation11 + $0x3f90] sm:$0xff]
    %v3491 = vld [vmem:[#allocation11 + $0x3f98] sm:$0xff]
    %v3492 = vld [vmem:[#allocation11 + $0x3fa0] sm:$0xff]
    %v3493 = vld [vmem:[#allocation11 + $0x3fa8] sm:$0xff]
    %v3494 = vld [vmem:[#allocation11 + $0x3fb0] sm:$0xff]
    %v3495 = vld [vmem:[#allocation11 + $0x3fb8] sm:$0xff]
    %v3496 = vld [vmem:[#allocation11 + $0x3fc0] sm:$0xff]
    %v3497 = vld [vmem:[#allocation11 + $0x3fc8] sm:$0xff]
    %v3498 = vld [vmem:[#allocation11 + $0x3fd0] sm:$0xff]
    %v3499 = vld [vmem:[#allocation11 + $0x3fd8] sm:$0xff]
    %v3500 = vld [vmem:[#allocation11 + $0x3fe0] sm:$0xff]
    %v3501 = vld [vmem:[#allocation11 + $0x3fe8] sm:$0xff]
    %v3502 = vld [vmem:[#allocation11 + $0x3ff0] sm:$0xff]
    %v3503 = vld [vmem:[#allocation11 + $0x3ff8] sm:$0xff]
    %v3504 = vld [vmem:[#allocation13] sm:$0xff]
    %v3505 = vld [vmem:[#allocation13 + $0x8] sm:$0xff]
    %v3508 = vperm.slane %v3504, 0
    %v3509 = vperm.slane %v3504, 1
    %v3510 = vperm.slane %v3504, 2
    %v3511 = vperm.slane %v3504, 3
    %v3512 = vperm.slane %v3504, 4
    %v3513 = vperm.slane %v3504, 5
    %v3514 = vperm.slane %v3504, 6
    %v3515 = vperm.slane %v3504, 7
    %v3516 = vperm.slane %v3505, 0
    %v3517 = vperm.slane %v3505, 1
    %v3518 = vperm.slane %v3505, 2
    %v3519 = vperm.slane %v3505, 3
    %v3520 = vperm.slane %v3505, 4
    %v3521 = vperm.slane %v3505, 5
    %v3522 = vperm.slane %v3505, 6
    %v3523 = vperm.slane %v3505, 7
    %3540 = vmatpush.msra.mxu0 %v1696
    %3541 = vmatpush.msra.mxu0 %v1680
    %3542 = vmatpush.msra.mxu0 %v1664
    %3543 = vmatpush.msra.mxu0 %v1648
    %3544 = vmatpush.msra.mxu0 %v1632
    %3545 = vmatpush.msra.mxu0 %v1616
    %3546 = vmatpush.msra.mxu0 %v1600
    %3547 = vmatpush.msra.mxu0 %v1584
    %3548 = vmatpush.msra.mxu0 %v1568
    %3549 = vmatpush.msra.mxu0 %v1552
    %3550 = vmatpush.msra.mxu0 %v1536
    %3551 = vmatpush.msra.mxu0 %v1520
    %3552 = vmatpush.msra.mxu0 %v1504
    %3553 = vmatpush.msra.mxu0 %v1488
    %3554 = vmatpush.msra.mxu0 %v1472
    %3555 = vmatpush.msra.mxu0 %v1456
    %3556 = vmatmul.f32.gmra.mxu0 %v1448
    %v3557 = vpop.f32.mrf.mxu0
    %v3558 = vadd.f32 %v3508, %v3557
    %3559 = vdwg.mxu0
    %3560 = vmatpush.msra.mxu0 %v1952
    %3561 = vmatpush.msra.mxu0 %v1936
    %3562 = vmatpush.msra.mxu0 %v1920
    %3563 = vmatpush.msra.mxu0 %v1904
    %3564 = vmatpush.msra.mxu0 %v1888
    %3565 = vmatpush.msra.mxu0 %v1872
    %3566 = vmatpush.msra.mxu0 %v1856
    %3567 = vmatpush.msra.mxu0 %v1840
    %3568 = vmatpush.msra.mxu0 %v1824
    %3569 = vmatpush.msra.mxu0 %v1808
    %3570 = vmatpush.msra.mxu0 %v1792
    %3571 = vmatpush.msra.mxu0 %v1776
    %3572 = vmatpush.msra.mxu0 %v1760
    %3573 = vmatpush.msra.mxu0 %v1744
    %3574 = vmatpush.msra.mxu0 %v1728
    %3575 = vmatpush.msra.mxu0 %v1712
    %3576 = vmatmul.f32.gmra.mxu0 %v1449
    %v3577 = vpop.f32.mrf.mxu0
    %v3578 = vadd.f32 %v3558, %v3577
    %3579 = vdwg.mxu0
    %3580 = vmatpush.msra.mxu0 %v2208
    %3581 = vmatpush.msra.mxu0 %v2192
    %3582 = vmatpush.msra.mxu0 %v2176
    %3583 = vmatpush.msra.mxu0 %v2160
    %3584 = vmatpush.msra.mxu0 %v2144
    %3585 = vmatpush.msra.mxu0 %v2128
    %3586 = vmatpush.msra.mxu0 %v2112
    %3587 = vmatpush.msra.mxu0 %v2096
    %3588 = vmatpush.msra.mxu0 %v2080
    %3589 = vmatpush.msra.mxu0 %v2064
    %3590 = vmatpush.msra.mxu0 %v2048
    %3591 = vmatpush.msra.mxu0 %v2032
    %3592 = vmatpush.msra.mxu0 %v2016
    %3593 = vmatpush.msra.mxu0 %v2000
    %3594 = vmatpush.msra.mxu0 %v1984
    %3595 = vmatpush.msra.mxu0 %v1968
    %3596 = vmatmul.f32.gmra.mxu0 %v1450
    %v3597 = vpop.f32.mrf.mxu0
    %v3598 = vadd.f32 %v3578, %v3597
    %3599 = vdwg.mxu0
    %3600 = vmatpush.msra.mxu0 %v2464
    %3601 = vmatpush.msra.mxu0 %v2448
    %3602 = vmatpush.msra.mxu0 %v2432
    %3603 = vmatpush.msra.mxu0 %v2416
    %3604 = vmatpush.msra.mxu0 %v2400
    %3605 = vmatpush.msra.mxu0 %v2384
    %3606 = vmatpush.msra.mxu0 %v2368
    %3607 = vmatpush.msra.mxu0 %v2352
    %3608 = vmatpush.msra.mxu0 %v2336
    %3609 = vmatpush.msra.mxu0 %v2320
    %3610 = vmatpush.msra.mxu0 %v2304
    %3611 = vmatpush.msra.mxu0 %v2288
    %3612 = vmatpush.msra.mxu0 %v2272
    %3613 = vmatpush.msra.mxu0 %v2256
    %3614 = vmatpush.msra.mxu0 %v2240
    %3615 = vmatpush.msra.mxu0 %v2224
    %3616 = vmatmul.f32.gmra.mxu0 %v1451
    %v3617 = vpop.f32.mrf.mxu0
    %v3618 = vadd.f32 %v3598, %v3617
    %3619 = vdwg.mxu0
    %3620 = vmatpush.msra.mxu0 %v2720
    %3621 = vmatpush.msra.mxu0 %v2704
    %3622 = vmatpush.msra.mxu0 %v2688
    %3623 = vmatpush.msra.mxu0 %v2672
    %3624 = vmatpush.msra.mxu0 %v2656
    %3625 = vmatpush.msra.mxu0 %v2640
    %3626 = vmatpush.msra.mxu0 %v2624
    %3627 = vmatpush.msra.mxu0 %v2608
    %3628 = vmatpush.msra.mxu0 %v2592
    %3629 = vmatpush.msra.mxu0 %v2576
    %3630 = vmatpush.msra.mxu0 %v2560
    %3631 = vmatpush.msra.mxu0 %v2544
    %3632 = vmatpush.msra.mxu0 %v2528
    %3633 = vmatpush.msra.mxu0 %v2512
    %3634 = vmatpush.msra.mxu0 %v2496
    %3635 = vmatpush.msra.mxu0 %v2480
    %3636 = vmatmul.f32.gmra.mxu0 %v1452
    %v3637 = vpop.f32.mrf.mxu0
    %v3638 = vadd.f32 %v3618, %v3637
    %3639 = vdwg.mxu0
    %3640 = vmatpush.msra.mxu0 %v2976
    %3641 = vmatpush.msra.mxu0 %v2960
    %3642 = vmatpush.msra.mxu0 %v2944
    %3643 = vmatpush.msra.mxu0 %v2928
    %3644 = vmatpush.msra.mxu0 %v2912
    %3645 = vmatpush.msra.mxu0 %v2896
    %3646 = vmatpush.msra.mxu0 %v2880
    %3647 = vmatpush.msra.mxu0 %v2864
    %3648 = vmatpush.msra.mxu0 %v2848
    %3649 = vmatpush.msra.mxu0 %v2832
    %3650 = vmatpush.msra.mxu0 %v2816
    %3651 = vmatpush.msra.mxu0 %v2800
    %3652 = vmatpush.msra.mxu0 %v2784
    %3653 = vmatpush.msra.mxu0 %v2768
    %3654 = vmatpush.msra.mxu0 %v2752
    %3655 = vmatpush.msra.mxu0 %v2736
    %3656 = vmatmul.f32.gmra.mxu0 %v1453
    %v3657 = vpop.f32.mrf.mxu0
    %v3658 = vadd.f32 %v3638, %v3657
    %3659 = vdwg.mxu0
    %3660 = vmatpush.msra.mxu0 %v3232
    %3661 = vmatpush.msra.mxu0 %v3216
    %3662 = vmatpush.msra.mxu0 %v3200
    %3663 = vmatpush.msra.mxu0 %v3184
    %3664 = vmatpush.msra.mxu0 %v3168
    %3665 = vmatpush.msra.mxu0 %v3152
    %3666 = vmatpush.msra.mxu0 %v3136
    %3667 = vmatpush.msra.mxu0 %v3120
    %3668 = vmatpush.msra.mxu0 %v3104
    %3669 = vmatpush.msra.mxu0 %v3088
    %3670 = vmatpush.msra.mxu0 %v3072
    %3671 = vmatpush.msra.mxu0 %v3056
    %3672 = vmatpush.msra.mxu0 %v3040
    %3673 = vmatpush.msra.mxu0 %v3024
    %3674 = vmatpush.msra.mxu0 %v3008
    %3675 = vmatpush.msra.mxu0 %v2992
    %3676 = vmatmul.f32.gmra.mxu0 %v1454
    %v3677 = vpop.f32.mrf.mxu0
    %v3678 = vadd.f32 %v3658, %v3677
    %3679 = vdwg.mxu0
    %3680 = vmatpush.msra.mxu0 %v3488
    %3681 = vmatpush.msra.mxu0 %v3472
    %3682 = vmatpush.msra.mxu0 %v3456
    %3683 = vmatpush.msra.mxu0 %v3440
    %3684 = vmatpush.msra.mxu0 %v3424
    %3685 = vmatpush.msra.mxu0 %v3408
    %3686 = vmatpush.msra.mxu0 %v3392
    %3687 = vmatpush.msra.mxu0 %v3376
    %3688 = vmatpush.msra.mxu0 %v3360
    %3689 = vmatpush.msra.mxu0 %v3344
    %3690 = vmatpush.msra.mxu0 %v3328
    %3691 = vmatpush.msra.mxu0 %v3312
    %3692 = vmatpush.msra.mxu0 %v3296
    %3693 = vmatpush.msra.mxu0 %v3280
    %3694 = vmatpush.msra.mxu0 %v3264
    %3695 = vmatpush.msra.mxu0 %v3248
    %3696 = vmatmul.f32.gmra.mxu0 %v1455
    %v3697 = vpop.f32.mrf.mxu0
    %v3698 = vadd.f32 %v3678, %v3697
    %3699 = vdwg.mxu0
    %3700 = vmatpush.msra.mxu0 %v1697
    %3701 = vmatpush.msra.mxu0 %v1681
    %3702 = vmatpush.msra.mxu0 %v1665
    %3703 = vmatpush.msra.mxu0 %v1649
    %3704 = vmatpush.msra.mxu0 %v1633
    %3705 = vmatpush.msra.mxu0 %v1617
    %3706 = vmatpush.msra.mxu0 %v1601
    %3707 = vmatpush.msra.mxu0 %v1585
    %3708 = vmatpush.msra.mxu0 %v1569
    %3709 = vmatpush.msra.mxu0 %v1553
    %3710 = vmatpush.msra.mxu0 %v1537
    %3711 = vmatpush.msra.mxu0 %v1521
    %3712 = vmatpush.msra.mxu0 %v1505
    %3713 = vmatpush.msra.mxu0 %v1489
    %3714 = vmatpush.msra.mxu0 %v1473
    %3715 = vmatpush.msra.mxu0 %v1457
    %3716 = vmatmul.f32.gmra.mxu0 %v1448
    %v3717 = vpop.f32.mrf.mxu0
    %v3718 = vadd.f32 %v3509, %v3717
    %3719 = vdwg.mxu0
    %3720 = vmatpush.msra.mxu0 %v1953
    %3721 = vmatpush.msra.mxu0 %v1937
    %3722 = vmatpush.msra.mxu0 %v1921
    %3723 = vmatpush.msra.mxu0 %v1905
    %3724 = vmatpush.msra.mxu0 %v1889
    %3725 = vmatpush.msra.mxu0 %v1873
    %3726 = vmatpush.msra.mxu0 %v1857
    %3727 = vmatpush.msra.mxu0 %v1841
    %3728 = vmatpush.msra.mxu0 %v1825
    %3729 = vmatpush.msra.mxu0 %v1809
    %3730 = vmatpush.msra.mxu0 %v1793
    %3731 = vmatpush.msra.mxu0 %v1777
    %3732 = vmatpush.msra.mxu0 %v1761
    %3733 = vmatpush.msra.mxu0 %v1745
    %3734 = vmatpush.msra.mxu0 %v1729
    %3735 = vmatpush.msra.mxu0 %v1713
    %3736 = vmatmul.f32.gmra.mxu0 %v1449
    %v3737 = vpop.f32.mrf.mxu0
    %v3738 = vadd.f32 %v3718, %v3737
    %3739 = vdwg.mxu0
    %3740 = vmatpush.msra.mxu0 %v2209
    %3741 = vmatpush.msra.mxu0 %v2193
    %3742 = vmatpush.msra.mxu0 %v2177
    %3743 = vmatpush.msra.mxu0 %v2161
    %3744 = vmatpush.msra.mxu0 %v2145
    %3745 = vmatpush.msra.mxu0 %v2129
    %3746 = vmatpush.msra.mxu0 %v2113
    %3747 = vmatpush.msra.mxu0 %v2097
    %3748 = vmatpush.msra.mxu0 %v2081
    %3749 = vmatpush.msra.mxu0 %v2065
    %3750 = vmatpush.msra.mxu0 %v2049
    %3751 = vmatpush.msra.mxu0 %v2033
    %3752 = vmatpush.msra.mxu0 %v2017
    %3753 = vmatpush.msra.mxu0 %v2001
    %3754 = vmatpush.msra.mxu0 %v1985
    %3755 = vmatpush.msra.mxu0 %v1969
    %3756 = vmatmul.f32.gmra.mxu0 %v1450
    %v3757 = vpop.f32.mrf.mxu0
    %v3758 = vadd.f32 %v3738, %v3757
    %3759 = vdwg.mxu0
    %3760 = vmatpush.msra.mxu0 %v2465
    %3761 = vmatpush.msra.mxu0 %v2449
    %3762 = vmatpush.msra.mxu0 %v2433
    %3763 = vmatpush.msra.mxu0 %v2417
    %3764 = vmatpush.msra.mxu0 %v2401
    %3765 = vmatpush.msra.mxu0 %v2385
    %3766 = vmatpush.msra.mxu0 %v2369
    %3767 = vmatpush.msra.mxu0 %v2353
    %3768 = vmatpush.msra.mxu0 %v2337
    %3769 = vmatpush.msra.mxu0 %v2321
    %3770 = vmatpush.msra.mxu0 %v2305
    %3771 = vmatpush.msra.mxu0 %v2289
    %3772 = vmatpush.msra.mxu0 %v2273
    %3773 = vmatpush.msra.mxu0 %v2257
    %3774 = vmatpush.msra.mxu0 %v2241
    %3775 = vmatpush.msra.mxu0 %v2225
    %3776 = vmatmul.f32.gmra.mxu0 %v1451
    %v3777 = vpop.f32.mrf.mxu0
    %v3778 = vadd.f32 %v3758, %v3777
    %3779 = vdwg.mxu0
    %3780 = vmatpush.msra.mxu0 %v2721
    %3781 = vmatpush.msra.mxu0 %v2705
    %3782 = vmatpush.msra.mxu0 %v2689
    %3783 = vmatpush.msra.mxu0 %v2673
    %3784 = vmatpush.msra.mxu0 %v2657
    %3785 = vmatpush.msra.mxu0 %v2641
    %3786 = vmatpush.msra.mxu0 %v2625
    %3787 = vmatpush.msra.mxu0 %v2609
    %3788 = vmatpush.msra.mxu0 %v2593
    %3789 = vmatpush.msra.mxu0 %v2577
    %3790 = vmatpush.msra.mxu0 %v2561
    %3791 = vmatpush.msra.mxu0 %v2545
    %3792 = vmatpush.msra.mxu0 %v2529
    %3793 = vmatpush.msra.mxu0 %v2513
    %3794 = vmatpush.msra.mxu0 %v2497
    %3795 = vmatpush.msra.mxu0 %v2481
    %3796 = vmatmul.f32.gmra.mxu0 %v1452
    %v3797 = vpop.f32.mrf.mxu0
    %v3798 = vadd.f32 %v3778, %v3797
    %3799 = vdwg.mxu0
    %3800 = vmatpush.msra.mxu0 %v2977
    %3801 = vmatpush.msra.mxu0 %v2961
    %3802 = vmatpush.msra.mxu0 %v2945
    %3803 = vmatpush.msra.mxu0 %v2929
    %3804 = vmatpush.msra.mxu0 %v2913
    %3805 = vmatpush.msra.mxu0 %v2897
    %3806 = vmatpush.msra.mxu0 %v2881
    %3807 = vmatpush.msra.mxu0 %v2865
    %3808 = vmatpush.msra.mxu0 %v2849
    %3809 = vmatpush.msra.mxu0 %v2833
    %3810 = vmatpush.msra.mxu0 %v2817
    %3811 = vmatpush.msra.mxu0 %v2801
    %3812 = vmatpush.msra.mxu0 %v2785
    %3813 = vmatpush.msra.mxu0 %v2769
    %3814 = vmatpush.msra.mxu0 %v2753
    %3815 = vmatpush.msra.mxu0 %v2737
    %3816 = vmatmul.f32.gmra.mxu0 %v1453
    %v3817 = vpop.f32.mrf.mxu0
    %v3818 = vadd.f32 %v3798, %v3817
    %3819 = vdwg.mxu0
    %3820 = vmatpush.msra.mxu0 %v3233
    %3821 = vmatpush.msra.mxu0 %v3217
    %3822 = vmatpush.msra.mxu0 %v3201
    %3823 = vmatpush.msra.mxu0 %v3185
    %3824 = vmatpush.msra.mxu0 %v3169
    %3825 = vmatpush.msra.mxu0 %v3153
    %3826 = vmatpush.msra.mxu0 %v3137
    %3827 = vmatpush.msra.mxu0 %v3121
    %3828 = vmatpush.msra.mxu0 %v3105
    %3829 = vmatpush.msra.mxu0 %v3089
    %3830 = vmatpush.msra.mxu0 %v3073
    %3831 = vmatpush.msra.mxu0 %v3057
    %3832 = vmatpush.msra.mxu0 %v3041
    %3833 = vmatpush.msra.mxu0 %v3025
    %3834 = vmatpush.msra.mxu0 %v3009
    %3835 = vmatpush.msra.mxu0 %v2993
    %3836 = vmatmul.f32.gmra.mxu0 %v1454
    %v3837 = vpop.f32.mrf.mxu0
    %v3838 = vadd.f32 %v3818, %v3837
    %3839 = vdwg.mxu0
    %3840 = vmatpush.msra.mxu0 %v3489
    %3841 = vmatpush.msra.mxu0 %v3473
    %3842 = vmatpush.msra.mxu0 %v3457
    %3843 = vmatpush.msra.mxu0 %v3441
    %3844 = vmatpush.msra.mxu0 %v3425
    %3845 = vmatpush.msra.mxu0 %v3409
    %3846 = vmatpush.msra.mxu0 %v3393
    %3847 = vmatpush.msra.mxu0 %v3377
    %3848 = vmatpush.msra.mxu0 %v3361
    %3849 = vmatpush.msra.mxu0 %v3345
    %3850 = vmatpush.msra.mxu0 %v3329
    %3851 = vmatpush.msra.mxu0 %v3313
    %3852 = vmatpush.msra.mxu0 %v3297
    %3853 = vmatpush.msra.mxu0 %v3281
    %3854 = vmatpush.msra.mxu0 %v3265
    %3855 = vmatpush.msra.mxu0 %v3249
    %3856 = vmatmul.f32.gmra.mxu0 %v1455
    %v3857 = vpop.f32.mrf.mxu0
    %v3858 = vadd.f32 %v3838, %v3857
    %3859 = vdwg.mxu0
    %3860 = vmatpush.msra.mxu0 %v1698
    %3861 = vmatpush.msra.mxu0 %v1682
    %3862 = vmatpush.msra.mxu0 %v1666
    %3863 = vmatpush.msra.mxu0 %v1650
    %3864 = vmatpush.msra.mxu0 %v1634
    %3865 = vmatpush.msra.mxu0 %v1618
    %3866 = vmatpush.msra.mxu0 %v1602
    %3867 = vmatpush.msra.mxu0 %v1586
    %3868 = vmatpush.msra.mxu0 %v1570
    %3869 = vmatpush.msra.mxu0 %v1554
    %3870 = vmatpush.msra.mxu0 %v1538
    %3871 = vmatpush.msra.mxu0 %v1522
    %3872 = vmatpush.msra.mxu0 %v1506
    %3873 = vmatpush.msra.mxu0 %v1490
    %3874 = vmatpush.msra.mxu0 %v1474
    %3875 = vmatpush.msra.mxu0 %v1458
    %3876 = vmatmul.f32.gmra.mxu0 %v1448
    %v3877 = vpop.f32.mrf.mxu0
    %v3878 = vadd.f32 %v3510, %v3877
    %3879 = vdwg.mxu0
    %3880 = vmatpush.msra.mxu0 %v1954
    %3881 = vmatpush.msra.mxu0 %v1938
    %3882 = vmatpush.msra.mxu0 %v1922
    %3883 = vmatpush.msra.mxu0 %v1906
    %3884 = vmatpush.msra.mxu0 %v1890
    %3885 = vmatpush.msra.mxu0 %v1874
    %3886 = vmatpush.msra.mxu0 %v1858
    %3887 = vmatpush.msra.mxu0 %v1842
    %3888 = vmatpush.msra.mxu0 %v1826
    %3889 = vmatpush.msra.mxu0 %v1810
    %3890 = vmatpush.msra.mxu0 %v1794
    %3891 = vmatpush.msra.mxu0 %v1778
    %3892 = vmatpush.msra.mxu0 %v1762
    %3893 = vmatpush.msra.mxu0 %v1746
    %3894 = vmatpush.msra.mxu0 %v1730
    %3895 = vmatpush.msra.mxu0 %v1714
    %3896 = vmatmul.f32.gmra.mxu0 %v1449
    %v3897 = vpop.f32.mrf.mxu0
    %v3898 = vadd.f32 %v3878, %v3897
    %3899 = vdwg.mxu0
    %3900 = vmatpush.msra.mxu0 %v2210
    %3901 = vmatpush.msra.mxu0 %v2194
    %3902 = vmatpush.msra.mxu0 %v2178
    %3903 = vmatpush.msra.mxu0 %v2162
    %3904 = vmatpush.msra.mxu0 %v2146
    %3905 = vmatpush.msra.mxu0 %v2130
    %3906 = vmatpush.msra.mxu0 %v2114
    %3907 = vmatpush.msra.mxu0 %v2098
    %3908 = vmatpush.msra.mxu0 %v2082
    %3909 = vmatpush.msra.mxu0 %v2066
    %3910 = vmatpush.msra.mxu0 %v2050
    %3911 = vmatpush.msra.mxu0 %v2034
    %3912 = vmatpush.msra.mxu0 %v2018
    %3913 = vmatpush.msra.mxu0 %v2002
    %3914 = vmatpush.msra.mxu0 %v1986
    %3915 = vmatpush.msra.mxu0 %v1970
    %3916 = vmatmul.f32.gmra.mxu0 %v1450
    %v3917 = vpop.f32.mrf.mxu0
    %v3918 = vadd.f32 %v3898, %v3917
    %3919 = vdwg.mxu0
    %3920 = vmatpush.msra.mxu0 %v2466
    %3921 = vmatpush.msra.mxu0 %v2450
    %3922 = vmatpush.msra.mxu0 %v2434
    %3923 = vmatpush.msra.mxu0 %v2418
    %3924 = vmatpush.msra.mxu0 %v2402
    %3925 = vmatpush.msra.mxu0 %v2386
    %3926 = vmatpush.msra.mxu0 %v2370
    %3927 = vmatpush.msra.mxu0 %v2354
    %3928 = vmatpush.msra.mxu0 %v2338
    %3929 = vmatpush.msra.mxu0 %v2322
    %3930 = vmatpush.msra.mxu0 %v2306
    %3931 = vmatpush.msra.mxu0 %v2290
    %3932 = vmatpush.msra.mxu0 %v2274
    %3933 = vmatpush.msra.mxu0 %v2258
    %3934 = vmatpush.msra.mxu0 %v2242
    %3935 = vmatpush.msra.mxu0 %v2226
    %3936 = vmatmul.f32.gmra.mxu0 %v1451
    %v3937 = vpop.f32.mrf.mxu0
    %v3938 = vadd.f32 %v3918, %v3937
    %3939 = vdwg.mxu0
    %3940 = vmatpush.msra.mxu0 %v2722
    %3941 = vmatpush.msra.mxu0 %v2706
    %3942 = vmatpush.msra.mxu0 %v2690
    %3943 = vmatpush.msra.mxu0 %v2674
    %3944 = vmatpush.msra.mxu0 %v2658
    %3945 = vmatpush.msra.mxu0 %v2642
    %3946 = vmatpush.msra.mxu0 %v2626
    %3947 = vmatpush.msra.mxu0 %v2610
    %3948 = vmatpush.msra.mxu0 %v2594
    %3949 = vmatpush.msra.mxu0 %v2578
    %3950 = vmatpush.msra.mxu0 %v2562
    %3951 = vmatpush.msra.mxu0 %v2546
    %3952 = vmatpush.msra.mxu0 %v2530
    %3953 = vmatpush.msra.mxu0 %v2514
    %3954 = vmatpush.msra.mxu0 %v2498
    %3955 = vmatpush.msra.mxu0 %v2482
    %3956 = vmatmul.f32.gmra.mxu0 %v1452
    %v3957 = vpop.f32.mrf.mxu0
    %v3958 = vadd.f32 %v3938, %v3957
    %3959 = vdwg.mxu0
    %3960 = vmatpush.msra.mxu0 %v2978
    %3961 = vmatpush.msra.mxu0 %v2962
    %3962 = vmatpush.msra.mxu0 %v2946
    %3963 = vmatpush.msra.mxu0 %v2930
    %3964 = vmatpush.msra.mxu0 %v2914
    %3965 = vmatpush.msra.mxu0 %v2898
    %3966 = vmatpush.msra.mxu0 %v2882
    %3967 = vmatpush.msra.mxu0 %v2866
    %3968 = vmatpush.msra.mxu0 %v2850
    %3969 = vmatpush.msra.mxu0 %v2834
    %3970 = vmatpush.msra.mxu0 %v2818
    %3971 = vmatpush.msra.mxu0 %v2802
    %3972 = vmatpush.msra.mxu0 %v2786
    %3973 = vmatpush.msra.mxu0 %v2770
    %3974 = vmatpush.msra.mxu0 %v2754
    %3975 = vmatpush.msra.mxu0 %v2738
    %3976 = vmatmul.f32.gmra.mxu0 %v1453
    %v3977 = vpop.f32.mrf.mxu0
    %v3978 = vadd.f32 %v3958, %v3977
    %3979 = vdwg.mxu0
    %3980 = vmatpush.msra.mxu0 %v3234
    %3981 = vmatpush.msra.mxu0 %v3218
    %3982 = vmatpush.msra.mxu0 %v3202
    %3983 = vmatpush.msra.mxu0 %v3186
    %3984 = vmatpush.msra.mxu0 %v3170
    %3985 = vmatpush.msra.mxu0 %v3154
    %3986 = vmatpush.msra.mxu0 %v3138
    %3987 = vmatpush.msra.mxu0 %v3122
    %3988 = vmatpush.msra.mxu0 %v3106
    %3989 = vmatpush.msra.mxu0 %v3090
    %3990 = vmatpush.msra.mxu0 %v3074
    %3991 = vmatpush.msra.mxu0 %v3058
    %3992 = vmatpush.msra.mxu0 %v3042
    %3993 = vmatpush.msra.mxu0 %v3026
    %3994 = vmatpush.msra.mxu0 %v3010
    %3995 = vmatpush.msra.mxu0 %v2994
    %3996 = vmatmul.f32.gmra.mxu0 %v1454
    %v3997 = vpop.f32.mrf.mxu0
    %v3998 = vadd.f32 %v3978, %v3997
    %3999 = vdwg.mxu0
    %4000 = vmatpush.msra.mxu0 %v3490
    %4001 = vmatpush.msra.mxu0 %v3474
    %4002 = vmatpush.msra.mxu0 %v3458
    %4003 = vmatpush.msra.mxu0 %v3442
    %4004 = vmatpush.msra.mxu0 %v3426
    %4005 = vmatpush.msra.mxu0 %v3410
    %4006 = vmatpush.msra.mxu0 %v3394
    %4007 = vmatpush.msra.mxu0 %v3378
    %4008 = vmatpush.msra.mxu0 %v3362
    %4009 = vmatpush.msra.mxu0 %v3346
    %4010 = vmatpush.msra.mxu0 %v3330
    %4011 = vmatpush.msra.mxu0 %v3314
    %4012 = vmatpush.msra.mxu0 %v3298
    %4013 = vmatpush.msra.mxu0 %v3282
    %4014 = vmatpush.msra.mxu0 %v3266
    %4015 = vmatpush.msra.mxu0 %v3250
    %4016 = vmatmul.f32.gmra.mxu0 %v1455
    %v4017 = vpop.f32.mrf.mxu0
    %v4018 = vadd.f32 %v3998, %v4017
    %4019 = vdwg.mxu0
    %4020 = vmatpush.msra.mxu0 %v1699
    %4021 = vmatpush.msra.mxu0 %v1683
    %4022 = vmatpush.msra.mxu0 %v1667
    %4023 = vmatpush.msra.mxu0 %v1651
    %4024 = vmatpush.msra.mxu0 %v1635
    %4025 = vmatpush.msra.mxu0 %v1619
    %4026 = vmatpush.msra.mxu0 %v1603
    %4027 = vmatpush.msra.mxu0 %v1587
    %4028 = vmatpush.msra.mxu0 %v1571
    %4029 = vmatpush.msra.mxu0 %v1555
    %4030 = vmatpush.msra.mxu0 %v1539
    %4031 = vmatpush.msra.mxu0 %v1523
    %4032 = vmatpush.msra.mxu0 %v1507
    %4033 = vmatpush.msra.mxu0 %v1491
    %4034 = vmatpush.msra.mxu0 %v1475
    %4035 = vmatpush.msra.mxu0 %v1459
    %4036 = vmatmul.f32.gmra.mxu0 %v1448
    %v4037 = vpop.f32.mrf.mxu0
    %v4038 = vadd.f32 %v3511, %v4037
    %4039 = vdwg.mxu0
    %4040 = vmatpush.msra.mxu0 %v1955
    %4041 = vmatpush.msra.mxu0 %v1939
    %4042 = vmatpush.msra.mxu0 %v1923
    %4043 = vmatpush.msra.mxu0 %v1907
    %4044 = vmatpush.msra.mxu0 %v1891
    %4045 = vmatpush.msra.mxu0 %v1875
    %4046 = vmatpush.msra.mxu0 %v1859
    %4047 = vmatpush.msra.mxu0 %v1843
    %4048 = vmatpush.msra.mxu0 %v1827
    %4049 = vmatpush.msra.mxu0 %v1811
    %4050 = vmatpush.msra.mxu0 %v1795
    %4051 = vmatpush.msra.mxu0 %v1779
    %4052 = vmatpush.msra.mxu0 %v1763
    %4053 = vmatpush.msra.mxu0 %v1747
    %4054 = vmatpush.msra.mxu0 %v1731
    %4055 = vmatpush.msra.mxu0 %v1715
    %4056 = vmatmul.f32.gmra.mxu0 %v1449
    %v4057 = vpop.f32.mrf.mxu0
    %v4058 = vadd.f32 %v4038, %v4057
    %4059 = vdwg.mxu0
    %4060 = vmatpush.msra.mxu0 %v2211
    %4061 = vmatpush.msra.mxu0 %v2195
    %4062 = vmatpush.msra.mxu0 %v2179
    %4063 = vmatpush.msra.mxu0 %v2163
    %4064 = vmatpush.msra.mxu0 %v2147
    %4065 = vmatpush.msra.mxu0 %v2131
    %4066 = vmatpush.msra.mxu0 %v2115
    %4067 = vmatpush.msra.mxu0 %v2099
    %4068 = vmatpush.msra.mxu0 %v2083
    %4069 = vmatpush.msra.mxu0 %v2067
    %4070 = vmatpush.msra.mxu0 %v2051
    %4071 = vmatpush.msra.mxu0 %v2035
    %4072 = vmatpush.msra.mxu0 %v2019
    %4073 = vmatpush.msra.mxu0 %v2003
    %4074 = vmatpush.msra.mxu0 %v1987
    %4075 = vmatpush.msra.mxu0 %v1971
    %4076 = vmatmul.f32.gmra.mxu0 %v1450
    %v4077 = vpop.f32.mrf.mxu0
    %v4078 = vadd.f32 %v4058, %v4077
    %4079 = vdwg.mxu0
    %4080 = vmatpush.msra.mxu0 %v2467
    %4081 = vmatpush.msra.mxu0 %v2451
    %4082 = vmatpush.msra.mxu0 %v2435
    %4083 = vmatpush.msra.mxu0 %v2419
    %4084 = vmatpush.msra.mxu0 %v2403
    %4085 = vmatpush.msra.mxu0 %v2387
    %4086 = vmatpush.msra.mxu0 %v2371
    %4087 = vmatpush.msra.mxu0 %v2355
    %4088 = vmatpush.msra.mxu0 %v2339
    %4089 = vmatpush.msra.mxu0 %v2323
    %4090 = vmatpush.msra.mxu0 %v2307
    %4091 = vmatpush.msra.mxu0 %v2291
    %4092 = vmatpush.msra.mxu0 %v2275
    %4093 = vmatpush.msra.mxu0 %v2259
    %4094 = vmatpush.msra.mxu0 %v2243
    %4095 = vmatpush.msra.mxu0 %v2227
    %4096 = vmatmul.f32.gmra.mxu0 %v1451
    %v4097 = vpop.f32.mrf.mxu0
    %v4098 = vadd.f32 %v4078, %v4097
    %4099 = vdwg.mxu0
    %4100 = vmatpush.msra.mxu0 %v2723
    %4101 = vmatpush.msra.mxu0 %v2707
    %4102 = vmatpush.msra.mxu0 %v2691
    %4103 = vmatpush.msra.mxu0 %v2675
    %4104 = vmatpush.msra.mxu0 %v2659
    %4105 = vmatpush.msra.mxu0 %v2643
    %4106 = vmatpush.msra.mxu0 %v2627
    %4107 = vmatpush.msra.mxu0 %v2611
    %4108 = vmatpush.msra.mxu0 %v2595
    %4109 = vmatpush.msra.mxu0 %v2579
    %4110 = vmatpush.msra.mxu0 %v2563
    %4111 = vmatpush.msra.mxu0 %v2547
    %4112 = vmatpush.msra.mxu0 %v2531
    %4113 = vmatpush.msra.mxu0 %v2515
    %4114 = vmatpush.msra.mxu0 %v2499
    %4115 = vmatpush.msra.mxu0 %v2483
    %4116 = vmatmul.f32.gmra.mxu0 %v1452
    %v4117 = vpop.f32.mrf.mxu0
    %v4118 = vadd.f32 %v4098, %v4117
    %4119 = vdwg.mxu0
    %4120 = vmatpush.msra.mxu0 %v2979
    %4121 = vmatpush.msra.mxu0 %v2963
    %4122 = vmatpush.msra.mxu0 %v2947
    %4123 = vmatpush.msra.mxu0 %v2931
    %4124 = vmatpush.msra.mxu0 %v2915
    %4125 = vmatpush.msra.mxu0 %v2899
    %4126 = vmatpush.msra.mxu0 %v2883
    %4127 = vmatpush.msra.mxu0 %v2867
    %4128 = vmatpush.msra.mxu0 %v2851
    %4129 = vmatpush.msra.mxu0 %v2835
    %4130 = vmatpush.msra.mxu0 %v2819
    %4131 = vmatpush.msra.mxu0 %v2803
    %4132 = vmatpush.msra.mxu0 %v2787
    %4133 = vmatpush.msra.mxu0 %v2771
    %4134 = vmatpush.msra.mxu0 %v2755
    %4135 = vmatpush.msra.mxu0 %v2739
    %4136 = vmatmul.f32.gmra.mxu0 %v1453
    %v4137 = vpop.f32.mrf.mxu0
    %v4138 = vadd.f32 %v4118, %v4137
    %4139 = vdwg.mxu0
    %4140 = vmatpush.msra.mxu0 %v3235
    %4141 = vmatpush.msra.mxu0 %v3219
    %4142 = vmatpush.msra.mxu0 %v3203
    %4143 = vmatpush.msra.mxu0 %v3187
    %4144 = vmatpush.msra.mxu0 %v3171
    %4145 = vmatpush.msra.mxu0 %v3155
    %4146 = vmatpush.msra.mxu0 %v3139
    %4147 = vmatpush.msra.mxu0 %v3123
    %4148 = vmatpush.msra.mxu0 %v3107
    %4149 = vmatpush.msra.mxu0 %v3091
    %4150 = vmatpush.msra.mxu0 %v3075
    %4151 = vmatpush.msra.mxu0 %v3059
    %4152 = vmatpush.msra.mxu0 %v3043
    %4153 = vmatpush.msra.mxu0 %v3027
    %4154 = vmatpush.msra.mxu0 %v3011
    %4155 = vmatpush.msra.mxu0 %v2995
    %4156 = vmatmul.f32.gmra.mxu0 %v1454
    %v4157 = vpop.f32.mrf.mxu0
    %v4158 = vadd.f32 %v4138, %v4157
    %4159 = vdwg.mxu0
    %4160 = vmatpush.msra.mxu0 %v3491
    %4161 = vmatpush.msra.mxu0 %v3475
    %4162 = vmatpush.msra.mxu0 %v3459
    %4163 = vmatpush.msra.mxu0 %v3443
    %4164 = vmatpush.msra.mxu0 %v3427
    %4165 = vmatpush.msra.mxu0 %v3411
    %4166 = vmatpush.msra.mxu0 %v3395
    %4167 = vmatpush.msra.mxu0 %v3379
    %4168 = vmatpush.msra.mxu0 %v3363
    %4169 = vmatpush.msra.mxu0 %v3347
    %4170 = vmatpush.msra.mxu0 %v3331
    %4171 = vmatpush.msra.mxu0 %v3315
    %4172 = vmatpush.msra.mxu0 %v3299
    %4173 = vmatpush.msra.mxu0 %v3283
    %4174 = vmatpush.msra.mxu0 %v3267
    %4175 = vmatpush.msra.mxu0 %v3251
    %4176 = vmatmul.f32.gmra.mxu0 %v1455
    %v4177 = vpop.f32.mrf.mxu0
    %v4178 = vadd.f32 %v4158, %v4177
    %4179 = vdwg.mxu0
    %4180 = vmatpush.msra.mxu0 %v1700
    %4181 = vmatpush.msra.mxu0 %v1684
    %4182 = vmatpush.msra.mxu0 %v1668
    %4183 = vmatpush.msra.mxu0 %v1652
    %4184 = vmatpush.msra.mxu0 %v1636
    %4185 = vmatpush.msra.mxu0 %v1620
    %4186 = vmatpush.msra.mxu0 %v1604
    %4187 = vmatpush.msra.mxu0 %v1588
    %4188 = vmatpush.msra.mxu0 %v1572
    %4189 = vmatpush.msra.mxu0 %v1556
    %4190 = vmatpush.msra.mxu0 %v1540
    %4191 = vmatpush.msra.mxu0 %v1524
    %4192 = vmatpush.msra.mxu0 %v1508
    %4193 = vmatpush.msra.mxu0 %v1492
    %4194 = vmatpush.msra.mxu0 %v1476
    %4195 = vmatpush.msra.mxu0 %v1460
    %4196 = vmatmul.f32.gmra.mxu0 %v1448
    %v4197 = vpop.f32.mrf.mxu0
    %v4198 = vadd.f32 %v3512, %v4197
    %4199 = vdwg.mxu0
    %4200 = vmatpush.msra.mxu0 %v1956
    %4201 = vmatpush.msra.mxu0 %v1940
    %4202 = vmatpush.msra.mxu0 %v1924
    %4203 = vmatpush.msra.mxu0 %v1908
    %4204 = vmatpush.msra.mxu0 %v1892
    %4205 = vmatpush.msra.mxu0 %v1876
    %4206 = vmatpush.msra.mxu0 %v1860
    %4207 = vmatpush.msra.mxu0 %v1844
    %4208 = vmatpush.msra.mxu0 %v1828
    %4209 = vmatpush.msra.mxu0 %v1812
    %4210 = vmatpush.msra.mxu0 %v1796
    %4211 = vmatpush.msra.mxu0 %v1780
    %4212 = vmatpush.msra.mxu0 %v1764
    %4213 = vmatpush.msra.mxu0 %v1748
    %4214 = vmatpush.msra.mxu0 %v1732
    %4215 = vmatpush.msra.mxu0 %v1716
    %4216 = vmatmul.f32.gmra.mxu0 %v1449
    %v4217 = vpop.f32.mrf.mxu0
    %v4218 = vadd.f32 %v4198, %v4217
    %4219 = vdwg.mxu0
    %4220 = vmatpush.msra.mxu0 %v2212
    %4221 = vmatpush.msra.mxu0 %v2196
    %4222 = vmatpush.msra.mxu0 %v2180
    %4223 = vmatpush.msra.mxu0 %v2164
    %4224 = vmatpush.msra.mxu0 %v2148
    %4225 = vmatpush.msra.mxu0 %v2132
    %4226 = vmatpush.msra.mxu0 %v2116
    %4227 = vmatpush.msra.mxu0 %v2100
    %4228 = vmatpush.msra.mxu0 %v2084
    %4229 = vmatpush.msra.mxu0 %v2068
    %4230 = vmatpush.msra.mxu0 %v2052
    %4231 = vmatpush.msra.mxu0 %v2036
    %4232 = vmatpush.msra.mxu0 %v2020
    %4233 = vmatpush.msra.mxu0 %v2004
    %4234 = vmatpush.msra.mxu0 %v1988
    %4235 = vmatpush.msra.mxu0 %v1972
    %4236 = vmatmul.f32.gmra.mxu0 %v1450
    %v4237 = vpop.f32.mrf.mxu0
    %v4238 = vadd.f32 %v4218, %v4237
    %4239 = vdwg.mxu0
    %4240 = vmatpush.msra.mxu0 %v2468
    %4241 = vmatpush.msra.mxu0 %v2452
    %4242 = vmatpush.msra.mxu0 %v2436
    %4243 = vmatpush.msra.mxu0 %v2420
    %4244 = vmatpush.msra.mxu0 %v2404
    %4245 = vmatpush.msra.mxu0 %v2388
    %4246 = vmatpush.msra.mxu0 %v2372
    %4247 = vmatpush.msra.mxu0 %v2356
    %4248 = vmatpush.msra.mxu0 %v2340
    %4249 = vmatpush.msra.mxu0 %v2324
    %4250 = vmatpush.msra.mxu0 %v2308
    %4251 = vmatpush.msra.mxu0 %v2292
    %4252 = vmatpush.msra.mxu0 %v2276
    %4253 = vmatpush.msra.mxu0 %v2260
    %4254 = vmatpush.msra.mxu0 %v2244
    %4255 = vmatpush.msra.mxu0 %v2228
    %4256 = vmatmul.f32.gmra.mxu0 %v1451
    %v4257 = vpop.f32.mrf.mxu0
    %v4258 = vadd.f32 %v4238, %v4257
    %4259 = vdwg.mxu0
    %4260 = vmatpush.msra.mxu0 %v2724
    %4261 = vmatpush.msra.mxu0 %v2708
    %4262 = vmatpush.msra.mxu0 %v2692
    %4263 = vmatpush.msra.mxu0 %v2676
    %4264 = vmatpush.msra.mxu0 %v2660
    %4265 = vmatpush.msra.mxu0 %v2644
    %4266 = vmatpush.msra.mxu0 %v2628
    %4267 = vmatpush.msra.mxu0 %v2612
    %4268 = vmatpush.msra.mxu0 %v2596
    %4269 = vmatpush.msra.mxu0 %v2580
    %4270 = vmatpush.msra.mxu0 %v2564
    %4271 = vmatpush.msra.mxu0 %v2548
    %4272 = vmatpush.msra.mxu0 %v2532
    %4273 = vmatpush.msra.mxu0 %v2516
    %4274 = vmatpush.msra.mxu0 %v2500
    %4275 = vmatpush.msra.mxu0 %v2484
    %4276 = vmatmul.f32.gmra.mxu0 %v1452
    %v4277 = vpop.f32.mrf.mxu0
    %v4278 = vadd.f32 %v4258, %v4277
    %4279 = vdwg.mxu0
    %4280 = vmatpush.msra.mxu0 %v2980
    %4281 = vmatpush.msra.mxu0 %v2964
    %4282 = vmatpush.msra.mxu0 %v2948
    %4283 = vmatpush.msra.mxu0 %v2932
    %4284 = vmatpush.msra.mxu0 %v2916
    %4285 = vmatpush.msra.mxu0 %v2900
    %4286 = vmatpush.msra.mxu0 %v2884
    %4287 = vmatpush.msra.mxu0 %v2868
    %4288 = vmatpush.msra.mxu0 %v2852
    %4289 = vmatpush.msra.mxu0 %v2836
    %4290 = vmatpush.msra.mxu0 %v2820
    %4291 = vmatpush.msra.mxu0 %v2804
    %4292 = vmatpush.msra.mxu0 %v2788
    %4293 = vmatpush.msra.mxu0 %v2772
    %4294 = vmatpush.msra.mxu0 %v2756
    %4295 = vmatpush.msra.mxu0 %v2740
    %4296 = vmatmul.f32.gmra.mxu0 %v1453
    %v4297 = vpop.f32.mrf.mxu0
    %v4298 = vadd.f32 %v4278, %v4297
    %4299 = vdwg.mxu0
    %4300 = vmatpush.msra.mxu0 %v3236
    %4301 = vmatpush.msra.mxu0 %v3220
    %4302 = vmatpush.msra.mxu0 %v3204
    %4303 = vmatpush.msra.mxu0 %v3188
    %4304 = vmatpush.msra.mxu0 %v3172
    %4305 = vmatpush.msra.mxu0 %v3156
    %4306 = vmatpush.msra.mxu0 %v3140
    %4307 = vmatpush.msra.mxu0 %v3124
    %4308 = vmatpush.msra.mxu0 %v3108
    %4309 = vmatpush.msra.mxu0 %v3092
    %4310 = vmatpush.msra.mxu0 %v3076
    %4311 = vmatpush.msra.mxu0 %v3060
    %4312 = vmatpush.msra.mxu0 %v3044
    %4313 = vmatpush.msra.mxu0 %v3028
    %4314 = vmatpush.msra.mxu0 %v3012
    %4315 = vmatpush.msra.mxu0 %v2996
    %4316 = vmatmul.f32.gmra.mxu0 %v1454
    %v4317 = vpop.f32.mrf.mxu0
    %v4318 = vadd.f32 %v4298, %v4317
    %4319 = vdwg.mxu0
    %4320 = vmatpush.msra.mxu0 %v3492
    %4321 = vmatpush.msra.mxu0 %v3476
    %4322 = vmatpush.msra.mxu0 %v3460
    %4323 = vmatpush.msra.mxu0 %v3444
    %4324 = vmatpush.msra.mxu0 %v3428
    %4325 = vmatpush.msra.mxu0 %v3412
    %4326 = vmatpush.msra.mxu0 %v3396
    %4327 = vmatpush.msra.mxu0 %v3380
    %4328 = vmatpush.msra.mxu0 %v3364
    %4329 = vmatpush.msra.mxu0 %v3348
    %4330 = vmatpush.msra.mxu0 %v3332
    %4331 = vmatpush.msra.mxu0 %v3316
    %4332 = vmatpush.msra.mxu0 %v3300
    %4333 = vmatpush.msra.mxu0 %v3284
    %4334 = vmatpush.msra.mxu0 %v3268
    %4335 = vmatpush.msra.mxu0 %v3252
    %4336 = vmatmul.f32.gmra.mxu0 %v1455
    %v4337 = vpop.f32.mrf.mxu0
    %v4338 = vadd.f32 %v4318, %v4337
    %4339 = vdwg.mxu0
    %4340 = vmatpush.msra.mxu0 %v1701
    %4341 = vmatpush.msra.mxu0 %v1685
    %4342 = vmatpush.msra.mxu0 %v1669
    %4343 = vmatpush.msra.mxu0 %v1653
    %4344 = vmatpush.msra.mxu0 %v1637
    %4345 = vmatpush.msra.mxu0 %v1621
    %4346 = vmatpush.msra.mxu0 %v1605
    %4347 = vmatpush.msra.mxu0 %v1589
    %4348 = vmatpush.msra.mxu0 %v1573
    %4349 = vmatpush.msra.mxu0 %v1557
    %4350 = vmatpush.msra.mxu0 %v1541
    %4351 = vmatpush.msra.mxu0 %v1525
    %4352 = vmatpush.msra.mxu0 %v1509
    %4353 = vmatpush.msra.mxu0 %v1493
    %4354 = vmatpush.msra.mxu0 %v1477
    %4355 = vmatpush.msra.mxu0 %v1461
    %4356 = vmatmul.f32.gmra.mxu0 %v1448
    %v4357 = vpop.f32.mrf.mxu0
    %v4358 = vadd.f32 %v3513, %v4357
    %4359 = vdwg.mxu0
    %4360 = vmatpush.msra.mxu0 %v1957
    %4361 = vmatpush.msra.mxu0 %v1941
    %4362 = vmatpush.msra.mxu0 %v1925
    %4363 = vmatpush.msra.mxu0 %v1909
    %4364 = vmatpush.msra.mxu0 %v1893
    %4365 = vmatpush.msra.mxu0 %v1877
    %4366 = vmatpush.msra.mxu0 %v1861
    %4367 = vmatpush.msra.mxu0 %v1845
    %4368 = vmatpush.msra.mxu0 %v1829
    %4369 = vmatpush.msra.mxu0 %v1813
    %4370 = vmatpush.msra.mxu0 %v1797
    %4371 = vmatpush.msra.mxu0 %v1781
    %4372 = vmatpush.msra.mxu0 %v1765
    %4373 = vmatpush.msra.mxu0 %v1749
    %4374 = vmatpush.msra.mxu0 %v1733
    %4375 = vmatpush.msra.mxu0 %v1717
    %4376 = vmatmul.f32.gmra.mxu0 %v1449
    %v4377 = vpop.f32.mrf.mxu0
    %v4378 = vadd.f32 %v4358, %v4377
    %4379 = vdwg.mxu0
    %4380 = vmatpush.msra.mxu0 %v2213
    %4381 = vmatpush.msra.mxu0 %v2197
    %4382 = vmatpush.msra.mxu0 %v2181
    %4383 = vmatpush.msra.mxu0 %v2165
    %4384 = vmatpush.msra.mxu0 %v2149
    %4385 = vmatpush.msra.mxu0 %v2133
    %4386 = vmatpush.msra.mxu0 %v2117
    %4387 = vmatpush.msra.mxu0 %v2101
    %4388 = vmatpush.msra.mxu0 %v2085
    %4389 = vmatpush.msra.mxu0 %v2069
    %4390 = vmatpush.msra.mxu0 %v2053
    %4391 = vmatpush.msra.mxu0 %v2037
    %4392 = vmatpush.msra.mxu0 %v2021
    %4393 = vmatpush.msra.mxu0 %v2005
    %4394 = vmatpush.msra.mxu0 %v1989
    %4395 = vmatpush.msra.mxu0 %v1973
    %4396 = vmatmul.f32.gmra.mxu0 %v1450
    %v4397 = vpop.f32.mrf.mxu0
    %v4398 = vadd.f32 %v4378, %v4397
    %4399 = vdwg.mxu0
    %4400 = vmatpush.msra.mxu0 %v2469
    %4401 = vmatpush.msra.mxu0 %v2453
    %4402 = vmatpush.msra.mxu0 %v2437
    %4403 = vmatpush.msra.mxu0 %v2421
    %4404 = vmatpush.msra.mxu0 %v2405
    %4405 = vmatpush.msra.mxu0 %v2389
    %4406 = vmatpush.msra.mxu0 %v2373
    %4407 = vmatpush.msra.mxu0 %v2357
    %4408 = vmatpush.msra.mxu0 %v2341
    %4409 = vmatpush.msra.mxu0 %v2325
    %4410 = vmatpush.msra.mxu0 %v2309
    %4411 = vmatpush.msra.mxu0 %v2293
    %4412 = vmatpush.msra.mxu0 %v2277
    %4413 = vmatpush.msra.mxu0 %v2261
    %4414 = vmatpush.msra.mxu0 %v2245
    %4415 = vmatpush.msra.mxu0 %v2229
    %4416 = vmatmul.f32.gmra.mxu0 %v1451
    %v4417 = vpop.f32.mrf.mxu0
    %v4418 = vadd.f32 %v4398, %v4417
    %4419 = vdwg.mxu0
    %4420 = vmatpush.msra.mxu0 %v2725
    %4421 = vmatpush.msra.mxu0 %v2709
    %4422 = vmatpush.msra.mxu0 %v2693
    %4423 = vmatpush.msra.mxu0 %v2677
    %4424 = vmatpush.msra.mxu0 %v2661
    %4425 = vmatpush.msra.mxu0 %v2645
    %4426 = vmatpush.msra.mxu0 %v2629
    %4427 = vmatpush.msra.mxu0 %v2613
    %4428 = vmatpush.msra.mxu0 %v2597
    %4429 = vmatpush.msra.mxu0 %v2581
    %4430 = vmatpush.msra.mxu0 %v2565
    %4431 = vmatpush.msra.mxu0 %v2549
    %4432 = vmatpush.msra.mxu0 %v2533
    %4433 = vmatpush.msra.mxu0 %v2517
    %4434 = vmatpush.msra.mxu0 %v2501
    %4435 = vmatpush.msra.mxu0 %v2485
    %4436 = vmatmul.f32.gmra.mxu0 %v1452
    %v4437 = vpop.f32.mrf.mxu0
    %v4438 = vadd.f32 %v4418, %v4437
    %4439 = vdwg.mxu0
    %4440 = vmatpush.msra.mxu0 %v2981
    %4441 = vmatpush.msra.mxu0 %v2965
    %4442 = vmatpush.msra.mxu0 %v2949
    %4443 = vmatpush.msra.mxu0 %v2933
    %4444 = vmatpush.msra.mxu0 %v2917
    %4445 = vmatpush.msra.mxu0 %v2901
    %4446 = vmatpush.msra.mxu0 %v2885
    %4447 = vmatpush.msra.mxu0 %v2869
    %4448 = vmatpush.msra.mxu0 %v2853
    %4449 = vmatpush.msra.mxu0 %v2837
    %4450 = vmatpush.msra.mxu0 %v2821
    %4451 = vmatpush.msra.mxu0 %v2805
    %4452 = vmatpush.msra.mxu0 %v2789
    %4453 = vmatpush.msra.mxu0 %v2773
    %4454 = vmatpush.msra.mxu0 %v2757
    %4455 = vmatpush.msra.mxu0 %v2741
    %4456 = vmatmul.f32.gmra.mxu0 %v1453
    %v4457 = vpop.f32.mrf.mxu0
    %v4458 = vadd.f32 %v4438, %v4457
    %4459 = vdwg.mxu0
    %4460 = vmatpush.msra.mxu0 %v3237
    %4461 = vmatpush.msra.mxu0 %v3221
    %4462 = vmatpush.msra.mxu0 %v3205
    %4463 = vmatpush.msra.mxu0 %v3189
    %4464 = vmatpush.msra.mxu0 %v3173
    %4465 = vmatpush.msra.mxu0 %v3157
    %4466 = vmatpush.msra.mxu0 %v3141
    %4467 = vmatpush.msra.mxu0 %v3125
    %4468 = vmatpush.msra.mxu0 %v3109
    %4469 = vmatpush.msra.mxu0 %v3093
    %4470 = vmatpush.msra.mxu0 %v3077
    %4471 = vmatpush.msra.mxu0 %v3061
    %4472 = vmatpush.msra.mxu0 %v3045
    %4473 = vmatpush.msra.mxu0 %v3029
    %4474 = vmatpush.msra.mxu0 %v3013
    %4475 = vmatpush.msra.mxu0 %v2997
    %4476 = vmatmul.f32.gmra.mxu0 %v1454
    %v4477 = vpop.f32.mrf.mxu0
    %v4478 = vadd.f32 %v4458, %v4477
    %4479 = vdwg.mxu0
    %4480 = vmatpush.msra.mxu0 %v3493
    %4481 = vmatpush.msra.mxu0 %v3477
    %4482 = vmatpush.msra.mxu0 %v3461
    %4483 = vmatpush.msra.mxu0 %v3445
    %4484 = vmatpush.msra.mxu0 %v3429
    %4485 = vmatpush.msra.mxu0 %v3413
    %4486 = vmatpush.msra.mxu0 %v3397
    %4487 = vmatpush.msra.mxu0 %v3381
    %4488 = vmatpush.msra.mxu0 %v3365
    %4489 = vmatpush.msra.mxu0 %v3349
    %4490 = vmatpush.msra.mxu0 %v3333
    %4491 = vmatpush.msra.mxu0 %v3317
    %4492 = vmatpush.msra.mxu0 %v3301
    %4493 = vmatpush.msra.mxu0 %v3285
    %4494 = vmatpush.msra.mxu0 %v3269
    %4495 = vmatpush.msra.mxu0 %v3253
    %4496 = vmatmul.f32.gmra.mxu0 %v1455
    %v4497 = vpop.f32.mrf.mxu0
    %v4498 = vadd.f32 %v4478, %v4497
    %4499 = vdwg.mxu0
    %4500 = vmatpush.msra.mxu0 %v1702
    %4501 = vmatpush.msra.mxu0 %v1686
    %4502 = vmatpush.msra.mxu0 %v1670
    %4503 = vmatpush.msra.mxu0 %v1654
    %4504 = vmatpush.msra.mxu0 %v1638
    %4505 = vmatpush.msra.mxu0 %v1622
    %4506 = vmatpush.msra.mxu0 %v1606
    %4507 = vmatpush.msra.mxu0 %v1590
    %4508 = vmatpush.msra.mxu0 %v1574
    %4509 = vmatpush.msra.mxu0 %v1558
    %4510 = vmatpush.msra.mxu0 %v1542
    %4511 = vmatpush.msra.mxu0 %v1526
    %4512 = vmatpush.msra.mxu0 %v1510
    %4513 = vmatpush.msra.mxu0 %v1494
    %4514 = vmatpush.msra.mxu0 %v1478
    %4515 = vmatpush.msra.mxu0 %v1462
    %4516 = vmatmul.f32.gmra.mxu0 %v1448
    %v4517 = vpop.f32.mrf.mxu0
    %v4518 = vadd.f32 %v3514, %v4517
    %4519 = vdwg.mxu0
    %4520 = vmatpush.msra.mxu0 %v1958
    %4521 = vmatpush.msra.mxu0 %v1942
    %4522 = vmatpush.msra.mxu0 %v1926
    %4523 = vmatpush.msra.mxu0 %v1910
    %4524 = vmatpush.msra.mxu0 %v1894
    %4525 = vmatpush.msra.mxu0 %v1878
    %4526 = vmatpush.msra.mxu0 %v1862
    %4527 = vmatpush.msra.mxu0 %v1846
    %4528 = vmatpush.msra.mxu0 %v1830
    %4529 = vmatpush.msra.mxu0 %v1814
    %4530 = vmatpush.msra.mxu0 %v1798
    %4531 = vmatpush.msra.mxu0 %v1782
    %4532 = vmatpush.msra.mxu0 %v1766
    %4533 = vmatpush.msra.mxu0 %v1750
    %4534 = vmatpush.msra.mxu0 %v1734
    %4535 = vmatpush.msra.mxu0 %v1718
    %4536 = vmatmul.f32.gmra.mxu0 %v1449
    %v4537 = vpop.f32.mrf.mxu0
    %v4538 = vadd.f32 %v4518, %v4537
    %4539 = vdwg.mxu0
    %4540 = vmatpush.msra.mxu0 %v2214
    %4541 = vmatpush.msra.mxu0 %v2198
    %4542 = vmatpush.msra.mxu0 %v2182
    %4543 = vmatpush.msra.mxu0 %v2166
    %4544 = vmatpush.msra.mxu0 %v2150
    %4545 = vmatpush.msra.mxu0 %v2134
    %4546 = vmatpush.msra.mxu0 %v2118
    %4547 = vmatpush.msra.mxu0 %v2102
    %4548 = vmatpush.msra.mxu0 %v2086
    %4549 = vmatpush.msra.mxu0 %v2070
    %4550 = vmatpush.msra.mxu0 %v2054
    %4551 = vmatpush.msra.mxu0 %v2038
    %4552 = vmatpush.msra.mxu0 %v2022
    %4553 = vmatpush.msra.mxu0 %v2006
    %4554 = vmatpush.msra.mxu0 %v1990
    %4555 = vmatpush.msra.mxu0 %v1974
    %4556 = vmatmul.f32.gmra.mxu0 %v1450
    %v4557 = vpop.f32.mrf.mxu0
    %v4558 = vadd.f32 %v4538, %v4557
    %4559 = vdwg.mxu0
    %4560 = vmatpush.msra.mxu0 %v2470
    %4561 = vmatpush.msra.mxu0 %v2454
    %4562 = vmatpush.msra.mxu0 %v2438
    %4563 = vmatpush.msra.mxu0 %v2422
    %4564 = vmatpush.msra.mxu0 %v2406
    %4565 = vmatpush.msra.mxu0 %v2390
    %4566 = vmatpush.msra.mxu0 %v2374
    %4567 = vmatpush.msra.mxu0 %v2358
    %4568 = vmatpush.msra.mxu0 %v2342
    %4569 = vmatpush.msra.mxu0 %v2326
    %4570 = vmatpush.msra.mxu0 %v2310
    %4571 = vmatpush.msra.mxu0 %v2294
    %4572 = vmatpush.msra.mxu0 %v2278
    %4573 = vmatpush.msra.mxu0 %v2262
    %4574 = vmatpush.msra.mxu0 %v2246
    %4575 = vmatpush.msra.mxu0 %v2230
    %4576 = vmatmul.f32.gmra.mxu0 %v1451
    %v4577 = vpop.f32.mrf.mxu0
    %v4578 = vadd.f32 %v4558, %v4577
    %4579 = vdwg.mxu0
    %4580 = vmatpush.msra.mxu0 %v2726
    %4581 = vmatpush.msra.mxu0 %v2710
    %4582 = vmatpush.msra.mxu0 %v2694
    %4583 = vmatpush.msra.mxu0 %v2678
    %4584 = vmatpush.msra.mxu0 %v2662
    %4585 = vmatpush.msra.mxu0 %v2646
    %4586 = vmatpush.msra.mxu0 %v2630
    %4587 = vmatpush.msra.mxu0 %v2614
    %4588 = vmatpush.msra.mxu0 %v2598
    %4589 = vmatpush.msra.mxu0 %v2582
    %4590 = vmatpush.msra.mxu0 %v2566
    %4591 = vmatpush.msra.mxu0 %v2550
    %4592 = vmatpush.msra.mxu0 %v2534
    %4593 = vmatpush.msra.mxu0 %v2518
    %4594 = vmatpush.msra.mxu0 %v2502
    %4595 = vmatpush.msra.mxu0 %v2486
    %4596 = vmatmul.f32.gmra.mxu0 %v1452
    %v4597 = vpop.f32.mrf.mxu0
    %v4598 = vadd.f32 %v4578, %v4597
    %4599 = vdwg.mxu0
    %4600 = vmatpush.msra.mxu0 %v2982
    %4601 = vmatpush.msra.mxu0 %v2966
    %4602 = vmatpush.msra.mxu0 %v2950
    %4603 = vmatpush.msra.mxu0 %v2934
    %4604 = vmatpush.msra.mxu0 %v2918
    %4605 = vmatpush.msra.mxu0 %v2902
    %4606 = vmatpush.msra.mxu0 %v2886
    %4607 = vmatpush.msra.mxu0 %v2870
    %4608 = vmatpush.msra.mxu0 %v2854
    %4609 = vmatpush.msra.mxu0 %v2838
    %4610 = vmatpush.msra.mxu0 %v2822
    %4611 = vmatpush.msra.mxu0 %v2806
    %4612 = vmatpush.msra.mxu0 %v2790
    %4613 = vmatpush.msra.mxu0 %v2774
    %4614 = vmatpush.msra.mxu0 %v2758
    %4615 = vmatpush.msra.mxu0 %v2742
    %4616 = vmatmul.f32.gmra.mxu0 %v1453
    %v4617 = vpop.f32.mrf.mxu0
    %v4618 = vadd.f32 %v4598, %v4617
    %4619 = vdwg.mxu0
    %4620 = vmatpush.msra.mxu0 %v3238
    %4621 = vmatpush.msra.mxu0 %v3222
    %4622 = vmatpush.msra.mxu0 %v3206
    %4623 = vmatpush.msra.mxu0 %v3190
    %4624 = vmatpush.msra.mxu0 %v3174
    %4625 = vmatpush.msra.mxu0 %v3158
    %4626 = vmatpush.msra.mxu0 %v3142
    %4627 = vmatpush.msra.mxu0 %v3126
    %4628 = vmatpush.msra.mxu0 %v3110
    %4629 = vmatpush.msra.mxu0 %v3094
    %4630 = vmatpush.msra.mxu0 %v3078
    %4631 = vmatpush.msra.mxu0 %v3062
    %4632 = vmatpush.msra.mxu0 %v3046
    %4633 = vmatpush.msra.mxu0 %v3030
    %4634 = vmatpush.msra.mxu0 %v3014
    %4635 = vmatpush.msra.mxu0 %v2998
    %4636 = vmatmul.f32.gmra.mxu0 %v1454
    %v4637 = vpop.f32.mrf.mxu0
    %v4638 = vadd.f32 %v4618, %v4637
    %4639 = vdwg.mxu0
    %4640 = vmatpush.msra.mxu0 %v3494
    %4641 = vmatpush.msra.mxu0 %v3478
    %4642 = vmatpush.msra.mxu0 %v3462
    %4643 = vmatpush.msra.mxu0 %v3446
    %4644 = vmatpush.msra.mxu0 %v3430
    %4645 = vmatpush.msra.mxu0 %v3414
    %4646 = vmatpush.msra.mxu0 %v3398
    %4647 = vmatpush.msra.mxu0 %v3382
    %4648 = vmatpush.msra.mxu0 %v3366
    %4649 = vmatpush.msra.mxu0 %v3350
    %4650 = vmatpush.msra.mxu0 %v3334
    %4651 = vmatpush.msra.mxu0 %v3318
    %4652 = vmatpush.msra.mxu0 %v3302
    %4653 = vmatpush.msra.mxu0 %v3286
    %4654 = vmatpush.msra.mxu0 %v3270
    %4655 = vmatpush.msra.mxu0 %v3254
    %4656 = vmatmul.f32.gmra.mxu0 %v1455
    %v4657 = vpop.f32.mrf.mxu0
    %v4658 = vadd.f32 %v4638, %v4657
    %4659 = vdwg.mxu0
    %4660 = vmatpush.msra.mxu0 %v1703
    %4661 = vmatpush.msra.mxu0 %v1687
    %4662 = vmatpush.msra.mxu0 %v1671
    %4663 = vmatpush.msra.mxu0 %v1655
    %4664 = vmatpush.msra.mxu0 %v1639
    %4665 = vmatpush.msra.mxu0 %v1623
    %4666 = vmatpush.msra.mxu0 %v1607
    %4667 = vmatpush.msra.mxu0 %v1591
    %4668 = vmatpush.msra.mxu0 %v1575
    %4669 = vmatpush.msra.mxu0 %v1559
    %4670 = vmatpush.msra.mxu0 %v1543
    %4671 = vmatpush.msra.mxu0 %v1527
    %4672 = vmatpush.msra.mxu0 %v1511
    %4673 = vmatpush.msra.mxu0 %v1495
    %4674 = vmatpush.msra.mxu0 %v1479
    %4675 = vmatpush.msra.mxu0 %v1463
    %4676 = vmatmul.f32.gmra.mxu0 %v1448
    %v4677 = vpop.f32.mrf.mxu0
    %v4678 = vadd.f32 %v3515, %v4677
    %4679 = vdwg.mxu0
    %4680 = vmatpush.msra.mxu0 %v1959
    %4681 = vmatpush.msra.mxu0 %v1943
    %4682 = vmatpush.msra.mxu0 %v1927
    %4683 = vmatpush.msra.mxu0 %v1911
    %4684 = vmatpush.msra.mxu0 %v1895
    %4685 = vmatpush.msra.mxu0 %v1879
    %4686 = vmatpush.msra.mxu0 %v1863
    %4687 = vmatpush.msra.mxu0 %v1847
    %4688 = vmatpush.msra.mxu0 %v1831
    %4689 = vmatpush.msra.mxu0 %v1815
    %4690 = vmatpush.msra.mxu0 %v1799
    %4691 = vmatpush.msra.mxu0 %v1783
    %4692 = vmatpush.msra.mxu0 %v1767
    %4693 = vmatpush.msra.mxu0 %v1751
    %4694 = vmatpush.msra.mxu0 %v1735
    %4695 = vmatpush.msra.mxu0 %v1719
    %4696 = vmatmul.f32.gmra.mxu0 %v1449
    %v4697 = vpop.f32.mrf.mxu0
    %v4698 = vadd.f32 %v4678, %v4697
    %4699 = vdwg.mxu0
    %4700 = vmatpush.msra.mxu0 %v2215
    %4701 = vmatpush.msra.mxu0 %v2199
    %4702 = vmatpush.msra.mxu0 %v2183
    %4703 = vmatpush.msra.mxu0 %v2167
    %4704 = vmatpush.msra.mxu0 %v2151
    %4705 = vmatpush.msra.mxu0 %v2135
    %4706 = vmatpush.msra.mxu0 %v2119
    %4707 = vmatpush.msra.mxu0 %v2103
    %4708 = vmatpush.msra.mxu0 %v2087
    %4709 = vmatpush.msra.mxu0 %v2071
    %4710 = vmatpush.msra.mxu0 %v2055
    %4711 = vmatpush.msra.mxu0 %v2039
    %4712 = vmatpush.msra.mxu0 %v2023
    %4713 = vmatpush.msra.mxu0 %v2007
    %4714 = vmatpush.msra.mxu0 %v1991
    %4715 = vmatpush.msra.mxu0 %v1975
    %4716 = vmatmul.f32.gmra.mxu0 %v1450
    %v4717 = vpop.f32.mrf.mxu0
    %v4718 = vadd.f32 %v4698, %v4717
    %4719 = vdwg.mxu0
    %4720 = vmatpush.msra.mxu0 %v2471
    %4721 = vmatpush.msra.mxu0 %v2455
    %4722 = vmatpush.msra.mxu0 %v2439
    %4723 = vmatpush.msra.mxu0 %v2423
    %4724 = vmatpush.msra.mxu0 %v2407
    %4725 = vmatpush.msra.mxu0 %v2391
    %4726 = vmatpush.msra.mxu0 %v2375
    %4727 = vmatpush.msra.mxu0 %v2359
    %4728 = vmatpush.msra.mxu0 %v2343
    %4729 = vmatpush.msra.mxu0 %v2327
    %4730 = vmatpush.msra.mxu0 %v2311
    %4731 = vmatpush.msra.mxu0 %v2295
    %4732 = vmatpush.msra.mxu0 %v2279
    %4733 = vmatpush.msra.mxu0 %v2263
    %4734 = vmatpush.msra.mxu0 %v2247
    %4735 = vmatpush.msra.mxu0 %v2231
    %4736 = vmatmul.f32.gmra.mxu0 %v1451
    %v4737 = vpop.f32.mrf.mxu0
    %v4738 = vadd.f32 %v4718, %v4737
    %4739 = vdwg.mxu0
    %4740 = vmatpush.msra.mxu0 %v2727
    %4741 = vmatpush.msra.mxu0 %v2711
    %4742 = vmatpush.msra.mxu0 %v2695
    %4743 = vmatpush.msra.mxu0 %v2679
    %4744 = vmatpush.msra.mxu0 %v2663
    %4745 = vmatpush.msra.mxu0 %v2647
    %4746 = vmatpush.msra.mxu0 %v2631
    %4747 = vmatpush.msra.mxu0 %v2615
    %4748 = vmatpush.msra.mxu0 %v2599
    %4749 = vmatpush.msra.mxu0 %v2583
    %4750 = vmatpush.msra.mxu0 %v2567
    %4751 = vmatpush.msra.mxu0 %v2551
    %4752 = vmatpush.msra.mxu0 %v2535
    %4753 = vmatpush.msra.mxu0 %v2519
    %4754 = vmatpush.msra.mxu0 %v2503
    %4755 = vmatpush.msra.mxu0 %v2487
    %4756 = vmatmul.f32.gmra.mxu0 %v1452
    %v4757 = vpop.f32.mrf.mxu0
    %v4758 = vadd.f32 %v4738, %v4757
    %4759 = vdwg.mxu0
    %4760 = vmatpush.msra.mxu0 %v2983
    %4761 = vmatpush.msra.mxu0 %v2967
    %4762 = vmatpush.msra.mxu0 %v2951
    %4763 = vmatpush.msra.mxu0 %v2935
    %4764 = vmatpush.msra.mxu0 %v2919
    %4765 = vmatpush.msra.mxu0 %v2903
    %4766 = vmatpush.msra.mxu0 %v2887
    %4767 = vmatpush.msra.mxu0 %v2871
    %4768 = vmatpush.msra.mxu0 %v2855
    %4769 = vmatpush.msra.mxu0 %v2839
    %4770 = vmatpush.msra.mxu0 %v2823
    %4771 = vmatpush.msra.mxu0 %v2807
    %4772 = vmatpush.msra.mxu0 %v2791
    %4773 = vmatpush.msra.mxu0 %v2775
    %4774 = vmatpush.msra.mxu0 %v2759
    %4775 = vmatpush.msra.mxu0 %v2743
    %4776 = vmatmul.f32.gmra.mxu0 %v1453
    %v4777 = vpop.f32.mrf.mxu0
    %v4778 = vadd.f32 %v4758, %v4777
    %4779 = vdwg.mxu0
    %4780 = vmatpush.msra.mxu0 %v3239
    %4781 = vmatpush.msra.mxu0 %v3223
    %4782 = vmatpush.msra.mxu0 %v3207
    %4783 = vmatpush.msra.mxu0 %v3191
    %4784 = vmatpush.msra.mxu0 %v3175
    %4785 = vmatpush.msra.mxu0 %v3159
    %4786 = vmatpush.msra.mxu0 %v3143
    %4787 = vmatpush.msra.mxu0 %v3127
    %4788 = vmatpush.msra.mxu0 %v3111
    %4789 = vmatpush.msra.mxu0 %v3095
    %4790 = vmatpush.msra.mxu0 %v3079
    %4791 = vmatpush.msra.mxu0 %v3063
    %4792 = vmatpush.msra.mxu0 %v3047
    %4793 = vmatpush.msra.mxu0 %v3031
    %4794 = vmatpush.msra.mxu0 %v3015
    %4795 = vmatpush.msra.mxu0 %v2999
    %4796 = vmatmul.f32.gmra.mxu0 %v1454
    %v4797 = vpop.f32.mrf.mxu0
    %v4798 = vadd.f32 %v4778, %v4797
    %4799 = vdwg.mxu0
    %4800 = vmatpush.msra.mxu0 %v3495
    %4801 = vmatpush.msra.mxu0 %v3479
    %4802 = vmatpush.msra.mxu0 %v3463
    %4803 = vmatpush.msra.mxu0 %v3447
    %4804 = vmatpush.msra.mxu0 %v3431
    %4805 = vmatpush.msra.mxu0 %v3415
    %4806 = vmatpush.msra.mxu0 %v3399
    %4807 = vmatpush.msra.mxu0 %v3383
    %4808 = vmatpush.msra.mxu0 %v3367
    %4809 = vmatpush.msra.mxu0 %v3351
    %4810 = vmatpush.msra.mxu0 %v3335
    %4811 = vmatpush.msra.mxu0 %v3319
    %4812 = vmatpush.msra.mxu0 %v3303
    %4813 = vmatpush.msra.mxu0 %v3287
    %4814 = vmatpush.msra.mxu0 %v3271
    %4815 = vmatpush.msra.mxu0 %v3255
    %4816 = vmatmul.f32.gmra.mxu0 %v1455
    %v4817 = vpop.f32.mrf.mxu0
    %v4818 = vadd.f32 %v4798, %v4817
    %4819 = vdwg.mxu0
    %4820 = vmatpush.msra.mxu0 %v1704
    %4821 = vmatpush.msra.mxu0 %v1688
    %4822 = vmatpush.msra.mxu0 %v1672
    %4823 = vmatpush.msra.mxu0 %v1656
    %4824 = vmatpush.msra.mxu0 %v1640
    %4825 = vmatpush.msra.mxu0 %v1624
    %4826 = vmatpush.msra.mxu0 %v1608
    %4827 = vmatpush.msra.mxu0 %v1592
    %4828 = vmatpush.msra.mxu0 %v1576
    %4829 = vmatpush.msra.mxu0 %v1560
    %4830 = vmatpush.msra.mxu0 %v1544
    %4831 = vmatpush.msra.mxu0 %v1528
    %4832 = vmatpush.msra.mxu0 %v1512
    %4833 = vmatpush.msra.mxu0 %v1496
    %4834 = vmatpush.msra.mxu0 %v1480
    %4835 = vmatpush.msra.mxu0 %v1464
    %4836 = vmatmul.f32.gmra.mxu0 %v1448
    %v4837 = vpop.f32.mrf.mxu0
    %v4838 = vadd.f32 %v3516, %v4837
    %4839 = vdwg.mxu0
    %4840 = vmatpush.msra.mxu0 %v1960
    %4841 = vmatpush.msra.mxu0 %v1944
    %4842 = vmatpush.msra.mxu0 %v1928
    %4843 = vmatpush.msra.mxu0 %v1912
    %4844 = vmatpush.msra.mxu0 %v1896
    %4845 = vmatpush.msra.mxu0 %v1880
    %4846 = vmatpush.msra.mxu0 %v1864
    %4847 = vmatpush.msra.mxu0 %v1848
    %4848 = vmatpush.msra.mxu0 %v1832
    %4849 = vmatpush.msra.mxu0 %v1816
    %4850 = vmatpush.msra.mxu0 %v1800
    %4851 = vmatpush.msra.mxu0 %v1784
    %4852 = vmatpush.msra.mxu0 %v1768
    %4853 = vmatpush.msra.mxu0 %v1752
    %4854 = vmatpush.msra.mxu0 %v1736
    %4855 = vmatpush.msra.mxu0 %v1720
    %4856 = vmatmul.f32.gmra.mxu0 %v1449
    %v4857 = vpop.f32.mrf.mxu0
    %v4858 = vadd.f32 %v4838, %v4857
    %4859 = vdwg.mxu0
    %4860 = vmatpush.msra.mxu0 %v2216
    %4861 = vmatpush.msra.mxu0 %v2200
    %4862 = vmatpush.msra.mxu0 %v2184
    %4863 = vmatpush.msra.mxu0 %v2168
    %4864 = vmatpush.msra.mxu0 %v2152
    %4865 = vmatpush.msra.mxu0 %v2136
    %4866 = vmatpush.msra.mxu0 %v2120
    %4867 = vmatpush.msra.mxu0 %v2104
    %4868 = vmatpush.msra.mxu0 %v2088
    %4869 = vmatpush.msra.mxu0 %v2072
    %4870 = vmatpush.msra.mxu0 %v2056
    %4871 = vmatpush.msra.mxu0 %v2040
    %4872 = vmatpush.msra.mxu0 %v2024
    %4873 = vmatpush.msra.mxu0 %v2008
    %4874 = vmatpush.msra.mxu0 %v1992
    %4875 = vmatpush.msra.mxu0 %v1976
    %4876 = vmatmul.f32.gmra.mxu0 %v1450
    %v4877 = vpop.f32.mrf.mxu0
    %v4878 = vadd.f32 %v4858, %v4877
    %4879 = vdwg.mxu0
    %4880 = vmatpush.msra.mxu0 %v2472
    %4881 = vmatpush.msra.mxu0 %v2456
    %4882 = vmatpush.msra.mxu0 %v2440
    %4883 = vmatpush.msra.mxu0 %v2424
    %4884 = vmatpush.msra.mxu0 %v2408
    %4885 = vmatpush.msra.mxu0 %v2392
    %4886 = vmatpush.msra.mxu0 %v2376
    %4887 = vmatpush.msra.mxu0 %v2360
    %4888 = vmatpush.msra.mxu0 %v2344
    %4889 = vmatpush.msra.mxu0 %v2328
    %4890 = vmatpush.msra.mxu0 %v2312
    %4891 = vmatpush.msra.mxu0 %v2296
    %4892 = vmatpush.msra.mxu0 %v2280
    %4893 = vmatpush.msra.mxu0 %v2264
    %4894 = vmatpush.msra.mxu0 %v2248
    %4895 = vmatpush.msra.mxu0 %v2232
    %4896 = vmatmul.f32.gmra.mxu0 %v1451
    %v4897 = vpop.f32.mrf.mxu0
    %v4898 = vadd.f32 %v4878, %v4897
    %4899 = vdwg.mxu0
    %4900 = vmatpush.msra.mxu0 %v2728
    %4901 = vmatpush.msra.mxu0 %v2712
    %4902 = vmatpush.msra.mxu0 %v2696
    %4903 = vmatpush.msra.mxu0 %v2680
    %4904 = vmatpush.msra.mxu0 %v2664
    %4905 = vmatpush.msra.mxu0 %v2648
    %4906 = vmatpush.msra.mxu0 %v2632
    %4907 = vmatpush.msra.mxu0 %v2616
    %4908 = vmatpush.msra.mxu0 %v2600
    %4909 = vmatpush.msra.mxu0 %v2584
    %4910 = vmatpush.msra.mxu0 %v2568
    %4911 = vmatpush.msra.mxu0 %v2552
    %4912 = vmatpush.msra.mxu0 %v2536
    %4913 = vmatpush.msra.mxu0 %v2520
    %4914 = vmatpush.msra.mxu0 %v2504
    %4915 = vmatpush.msra.mxu0 %v2488
    %4916 = vmatmul.f32.gmra.mxu0 %v1452
    %v4917 = vpop.f32.mrf.mxu0
    %v4918 = vadd.f32 %v4898, %v4917
    %4919 = vdwg.mxu0
    %4920 = vmatpush.msra.mxu0 %v2984
    %4921 = vmatpush.msra.mxu0 %v2968
    %4922 = vmatpush.msra.mxu0 %v2952
    %4923 = vmatpush.msra.mxu0 %v2936
    %4924 = vmatpush.msra.mxu0 %v2920
    %4925 = vmatpush.msra.mxu0 %v2904
    %4926 = vmatpush.msra.mxu0 %v2888
    %4927 = vmatpush.msra.mxu0 %v2872
    %4928 = vmatpush.msra.mxu0 %v2856
    %4929 = vmatpush.msra.mxu0 %v2840
    %4930 = vmatpush.msra.mxu0 %v2824
    %4931 = vmatpush.msra.mxu0 %v2808
    %4932 = vmatpush.msra.mxu0 %v2792
    %4933 = vmatpush.msra.mxu0 %v2776
    %4934 = vmatpush.msra.mxu0 %v2760
    %4935 = vmatpush.msra.mxu0 %v2744
    %4936 = vmatmul.f32.gmra.mxu0 %v1453
    %v4937 = vpop.f32.mrf.mxu0
    %v4938 = vadd.f32 %v4918, %v4937
    %4939 = vdwg.mxu0
    %4940 = vmatpush.msra.mxu0 %v3240
    %4941 = vmatpush.msra.mxu0 %v3224
    %4942 = vmatpush.msra.mxu0 %v3208
    %4943 = vmatpush.msra.mxu0 %v3192
    %4944 = vmatpush.msra.mxu0 %v3176
    %4945 = vmatpush.msra.mxu0 %v3160
    %4946 = vmatpush.msra.mxu0 %v3144
    %4947 = vmatpush.msra.mxu0 %v3128
    %4948 = vmatpush.msra.mxu0 %v3112
    %4949 = vmatpush.msra.mxu0 %v3096
    %4950 = vmatpush.msra.mxu0 %v3080
    %4951 = vmatpush.msra.mxu0 %v3064
    %4952 = vmatpush.msra.mxu0 %v3048
    %4953 = vmatpush.msra.mxu0 %v3032
    %4954 = vmatpush.msra.mxu0 %v3016
    %4955 = vmatpush.msra.mxu0 %v3000
    %4956 = vmatmul.f32.gmra.mxu0 %v1454
    %v4957 = vpop.f32.mrf.mxu0
    %v4958 = vadd.f32 %v4938, %v4957
    %4959 = vdwg.mxu0
    %4960 = vmatpush.msra.mxu0 %v3496
    %4961 = vmatpush.msra.mxu0 %v3480
    %4962 = vmatpush.msra.mxu0 %v3464
    %4963 = vmatpush.msra.mxu0 %v3448
    %4964 = vmatpush.msra.mxu0 %v3432
    %4965 = vmatpush.msra.mxu0 %v3416
    %4966 = vmatpush.msra.mxu0 %v3400
    %4967 = vmatpush.msra.mxu0 %v3384
    %4968 = vmatpush.msra.mxu0 %v3368
    %4969 = vmatpush.msra.mxu0 %v3352
    %4970 = vmatpush.msra.mxu0 %v3336
    %4971 = vmatpush.msra.mxu0 %v3320
    %4972 = vmatpush.msra.mxu0 %v3304
    %4973 = vmatpush.msra.mxu0 %v3288
    %4974 = vmatpush.msra.mxu0 %v3272
    %4975 = vmatpush.msra.mxu0 %v3256
    %4976 = vmatmul.f32.gmra.mxu0 %v1455
    %v4977 = vpop.f32.mrf.mxu0
    %v4978 = vadd.f32 %v4958, %v4977
    %4979 = vdwg.mxu0
    %4980 = vmatpush.msra.mxu0 %v1705
    %4981 = vmatpush.msra.mxu0 %v1689
    %4982 = vmatpush.msra.mxu0 %v1673
    %4983 = vmatpush.msra.mxu0 %v1657
    %4984 = vmatpush.msra.mxu0 %v1641
    %4985 = vmatpush.msra.mxu0 %v1625
    %4986 = vmatpush.msra.mxu0 %v1609
    %4987 = vmatpush.msra.mxu0 %v1593
    %4988 = vmatpush.msra.mxu0 %v1577
    %4989 = vmatpush.msra.mxu0 %v1561
    %4990 = vmatpush.msra.mxu0 %v1545
    %4991 = vmatpush.msra.mxu0 %v1529
    %4992 = vmatpush.msra.mxu0 %v1513
    %4993 = vmatpush.msra.mxu0 %v1497
    %4994 = vmatpush.msra.mxu0 %v1481
    %4995 = vmatpush.msra.mxu0 %v1465
    %4996 = vmatmul.f32.gmra.mxu0 %v1448
    %v4997 = vpop.f32.mrf.mxu0
    %v4998 = vadd.f32 %v3517, %v4997
    %4999 = vdwg.mxu0
    %5000 = vmatpush.msra.mxu0 %v1961
    %5001 = vmatpush.msra.mxu0 %v1945
    %5002 = vmatpush.msra.mxu0 %v1929
    %5003 = vmatpush.msra.mxu0 %v1913
    %5004 = vmatpush.msra.mxu0 %v1897
    %5005 = vmatpush.msra.mxu0 %v1881
    %5006 = vmatpush.msra.mxu0 %v1865
    %5007 = vmatpush.msra.mxu0 %v1849
    %5008 = vmatpush.msra.mxu0 %v1833
    %5009 = vmatpush.msra.mxu0 %v1817
    %5010 = vmatpush.msra.mxu0 %v1801
    %5011 = vmatpush.msra.mxu0 %v1785
    %5012 = vmatpush.msra.mxu0 %v1769
    %5013 = vmatpush.msra.mxu0 %v1753
    %5014 = vmatpush.msra.mxu0 %v1737
    %5015 = vmatpush.msra.mxu0 %v1721
    %5016 = vmatmul.f32.gmra.mxu0 %v1449
    %v5017 = vpop.f32.mrf.mxu0
    %v5018 = vadd.f32 %v4998, %v5017
    %5019 = vdwg.mxu0
    %5020 = vmatpush.msra.mxu0 %v2217
    %5021 = vmatpush.msra.mxu0 %v2201
    %5022 = vmatpush.msra.mxu0 %v2185
    %5023 = vmatpush.msra.mxu0 %v2169
    %5024 = vmatpush.msra.mxu0 %v2153
    %5025 = vmatpush.msra.mxu0 %v2137
    %5026 = vmatpush.msra.mxu0 %v2121
    %5027 = vmatpush.msra.mxu0 %v2105
    %5028 = vmatpush.msra.mxu0 %v2089
    %5029 = vmatpush.msra.mxu0 %v2073
    %5030 = vmatpush.msra.mxu0 %v2057
    %5031 = vmatpush.msra.mxu0 %v2041
    %5032 = vmatpush.msra.mxu0 %v2025
    %5033 = vmatpush.msra.mxu0 %v2009
    %5034 = vmatpush.msra.mxu0 %v1993
    %5035 = vmatpush.msra.mxu0 %v1977
    %5036 = vmatmul.f32.gmra.mxu0 %v1450
    %v5037 = vpop.f32.mrf.mxu0
    %v5038 = vadd.f32 %v5018, %v5037
    %5039 = vdwg.mxu0
    %5040 = vmatpush.msra.mxu0 %v2473
    %5041 = vmatpush.msra.mxu0 %v2457
    %5042 = vmatpush.msra.mxu0 %v2441
    %5043 = vmatpush.msra.mxu0 %v2425
    %5044 = vmatpush.msra.mxu0 %v2409
    %5045 = vmatpush.msra.mxu0 %v2393
    %5046 = vmatpush.msra.mxu0 %v2377
    %5047 = vmatpush.msra.mxu0 %v2361
    %5048 = vmatpush.msra.mxu0 %v2345
    %5049 = vmatpush.msra.mxu0 %v2329
    %5050 = vmatpush.msra.mxu0 %v2313
    %5051 = vmatpush.msra.mxu0 %v2297
    %5052 = vmatpush.msra.mxu0 %v2281
    %5053 = vmatpush.msra.mxu0 %v2265
    %5054 = vmatpush.msra.mxu0 %v2249
    %5055 = vmatpush.msra.mxu0 %v2233
    %5056 = vmatmul.f32.gmra.mxu0 %v1451
    %v5057 = vpop.f32.mrf.mxu0
    %v5058 = vadd.f32 %v5038, %v5057
    %5059 = vdwg.mxu0
    %5060 = vmatpush.msra.mxu0 %v2729
    %5061 = vmatpush.msra.mxu0 %v2713
    %5062 = vmatpush.msra.mxu0 %v2697
    %5063 = vmatpush.msra.mxu0 %v2681
    %5064 = vmatpush.msra.mxu0 %v2665
    %5065 = vmatpush.msra.mxu0 %v2649
    %5066 = vmatpush.msra.mxu0 %v2633
    %5067 = vmatpush.msra.mxu0 %v2617
    %5068 = vmatpush.msra.mxu0 %v2601
    %5069 = vmatpush.msra.mxu0 %v2585
    %5070 = vmatpush.msra.mxu0 %v2569
    %5071 = vmatpush.msra.mxu0 %v2553
    %5072 = vmatpush.msra.mxu0 %v2537
    %5073 = vmatpush.msra.mxu0 %v2521
    %5074 = vmatpush.msra.mxu0 %v2505
    %5075 = vmatpush.msra.mxu0 %v2489
    %5076 = vmatmul.f32.gmra.mxu0 %v1452
    %v5077 = vpop.f32.mrf.mxu0
    %v5078 = vadd.f32 %v5058, %v5077
    %5079 = vdwg.mxu0
    %5080 = vmatpush.msra.mxu0 %v2985
    %5081 = vmatpush.msra.mxu0 %v2969
    %5082 = vmatpush.msra.mxu0 %v2953
    %5083 = vmatpush.msra.mxu0 %v2937
    %5084 = vmatpush.msra.mxu0 %v2921
    %5085 = vmatpush.msra.mxu0 %v2905
    %5086 = vmatpush.msra.mxu0 %v2889
    %5087 = vmatpush.msra.mxu0 %v2873
    %5088 = vmatpush.msra.mxu0 %v2857
    %5089 = vmatpush.msra.mxu0 %v2841
    %5090 = vmatpush.msra.mxu0 %v2825
    %5091 = vmatpush.msra.mxu0 %v2809
    %5092 = vmatpush.msra.mxu0 %v2793
    %5093 = vmatpush.msra.mxu0 %v2777
    %5094 = vmatpush.msra.mxu0 %v2761
    %5095 = vmatpush.msra.mxu0 %v2745
    %5096 = vmatmul.f32.gmra.mxu0 %v1453
    %v5097 = vpop.f32.mrf.mxu0
    %v5098 = vadd.f32 %v5078, %v5097
    %5099 = vdwg.mxu0
    %5100 = vmatpush.msra.mxu0 %v3241
    %5101 = vmatpush.msra.mxu0 %v3225
    %5102 = vmatpush.msra.mxu0 %v3209
    %5103 = vmatpush.msra.mxu0 %v3193
    %5104 = vmatpush.msra.mxu0 %v3177
    %5105 = vmatpush.msra.mxu0 %v3161
    %5106 = vmatpush.msra.mxu0 %v3145
    %5107 = vmatpush.msra.mxu0 %v3129
    %5108 = vmatpush.msra.mxu0 %v3113
    %5109 = vmatpush.msra.mxu0 %v3097
    %5110 = vmatpush.msra.mxu0 %v3081
    %5111 = vmatpush.msra.mxu0 %v3065
    %5112 = vmatpush.msra.mxu0 %v3049
    %5113 = vmatpush.msra.mxu0 %v3033
    %5114 = vmatpush.msra.mxu0 %v3017
    %5115 = vmatpush.msra.mxu0 %v3001
    %5116 = vmatmul.f32.gmra.mxu0 %v1454
    %v5117 = vpop.f32.mrf.mxu0
    %v5118 = vadd.f32 %v5098, %v5117
    %5119 = vdwg.mxu0
    %5120 = vmatpush.msra.mxu0 %v3497
    %5121 = vmatpush.msra.mxu0 %v3481
    %5122 = vmatpush.msra.mxu0 %v3465
    %5123 = vmatpush.msra.mxu0 %v3449
    %5124 = vmatpush.msra.mxu0 %v3433
    %5125 = vmatpush.msra.mxu0 %v3417
    %5126 = vmatpush.msra.mxu0 %v3401
    %5127 = vmatpush.msra.mxu0 %v3385
    %5128 = vmatpush.msra.mxu0 %v3369
    %5129 = vmatpush.msra.mxu0 %v3353
    %5130 = vmatpush.msra.mxu0 %v3337
    %5131 = vmatpush.msra.mxu0 %v3321
    %5132 = vmatpush.msra.mxu0 %v3305
    %5133 = vmatpush.msra.mxu0 %v3289
    %5134 = vmatpush.msra.mxu0 %v3273
    %5135 = vmatpush.msra.mxu0 %v3257
    %5136 = vmatmul.f32.gmra.mxu0 %v1455
    %v5137 = vpop.f32.mrf.mxu0
    %v5138 = vadd.f32 %v5118, %v5137
    %5139 = vdwg.mxu0
    %5140 = vmatpush.msra.mxu0 %v1706
    %5141 = vmatpush.msra.mxu0 %v1690
    %5142 = vmatpush.msra.mxu0 %v1674
    %5143 = vmatpush.msra.mxu0 %v1658
    %5144 = vmatpush.msra.mxu0 %v1642
    %5145 = vmatpush.msra.mxu0 %v1626
    %5146 = vmatpush.msra.mxu0 %v1610
    %5147 = vmatpush.msra.mxu0 %v1594
    %5148 = vmatpush.msra.mxu0 %v1578
    %5149 = vmatpush.msra.mxu0 %v1562
    %5150 = vmatpush.msra.mxu0 %v1546
    %5151 = vmatpush.msra.mxu0 %v1530
    %5152 = vmatpush.msra.mxu0 %v1514
    %5153 = vmatpush.msra.mxu0 %v1498
    %5154 = vmatpush.msra.mxu0 %v1482
    %5155 = vmatpush.msra.mxu0 %v1466
    %5156 = vmatmul.f32.gmra.mxu0 %v1448
    %v5157 = vpop.f32.mrf.mxu0
    %v5158 = vadd.f32 %v3518, %v5157
    %5159 = vdwg.mxu0
    %5160 = vmatpush.msra.mxu0 %v1962
    %5161 = vmatpush.msra.mxu0 %v1946
    %5162 = vmatpush.msra.mxu0 %v1930
    %5163 = vmatpush.msra.mxu0 %v1914
    %5164 = vmatpush.msra.mxu0 %v1898
    %5165 = vmatpush.msra.mxu0 %v1882
    %5166 = vmatpush.msra.mxu0 %v1866
    %5167 = vmatpush.msra.mxu0 %v1850
    %5168 = vmatpush.msra.mxu0 %v1834
    %5169 = vmatpush.msra.mxu0 %v1818
    %5170 = vmatpush.msra.mxu0 %v1802
    %5171 = vmatpush.msra.mxu0 %v1786
    %5172 = vmatpush.msra.mxu0 %v1770
    %5173 = vmatpush.msra.mxu0 %v1754
    %5174 = vmatpush.msra.mxu0 %v1738
    %5175 = vmatpush.msra.mxu0 %v1722
    %5176 = vmatmul.f32.gmra.mxu0 %v1449
    %v5177 = vpop.f32.mrf.mxu0
    %v5178 = vadd.f32 %v5158, %v5177
    %5179 = vdwg.mxu0
    %5180 = vmatpush.msra.mxu0 %v2218
    %5181 = vmatpush.msra.mxu0 %v2202
    %5182 = vmatpush.msra.mxu0 %v2186
    %5183 = vmatpush.msra.mxu0 %v2170
    %5184 = vmatpush.msra.mxu0 %v2154
    %5185 = vmatpush.msra.mxu0 %v2138
    %5186 = vmatpush.msra.mxu0 %v2122
    %5187 = vmatpush.msra.mxu0 %v2106
    %5188 = vmatpush.msra.mxu0 %v2090
    %5189 = vmatpush.msra.mxu0 %v2074
    %5190 = vmatpush.msra.mxu0 %v2058
    %5191 = vmatpush.msra.mxu0 %v2042
    %5192 = vmatpush.msra.mxu0 %v2026
    %5193 = vmatpush.msra.mxu0 %v2010
    %5194 = vmatpush.msra.mxu0 %v1994
    %5195 = vmatpush.msra.mxu0 %v1978
    %5196 = vmatmul.f32.gmra.mxu0 %v1450
    %v5197 = vpop.f32.mrf.mxu0
    %v5198 = vadd.f32 %v5178, %v5197
    %5199 = vdwg.mxu0
    %5200 = vmatpush.msra.mxu0 %v2474
    %5201 = vmatpush.msra.mxu0 %v2458
    %5202 = vmatpush.msra.mxu0 %v2442
    %5203 = vmatpush.msra.mxu0 %v2426
    %5204 = vmatpush.msra.mxu0 %v2410
    %5205 = vmatpush.msra.mxu0 %v2394
    %5206 = vmatpush.msra.mxu0 %v2378
    %5207 = vmatpush.msra.mxu0 %v2362
    %5208 = vmatpush.msra.mxu0 %v2346
    %5209 = vmatpush.msra.mxu0 %v2330
    %5210 = vmatpush.msra.mxu0 %v2314
    %5211 = vmatpush.msra.mxu0 %v2298
    %5212 = vmatpush.msra.mxu0 %v2282
    %5213 = vmatpush.msra.mxu0 %v2266
    %5214 = vmatpush.msra.mxu0 %v2250
    %5215 = vmatpush.msra.mxu0 %v2234
    %5216 = vmatmul.f32.gmra.mxu0 %v1451
    %v5217 = vpop.f32.mrf.mxu0
    %v5218 = vadd.f32 %v5198, %v5217
    %5219 = vdwg.mxu0
    %5220 = vmatpush.msra.mxu0 %v2730
    %5221 = vmatpush.msra.mxu0 %v2714
    %5222 = vmatpush.msra.mxu0 %v2698
    %5223 = vmatpush.msra.mxu0 %v2682
    %5224 = vmatpush.msra.mxu0 %v2666
    %5225 = vmatpush.msra.mxu0 %v2650
    %5226 = vmatpush.msra.mxu0 %v2634
    %5227 = vmatpush.msra.mxu0 %v2618
    %5228 = vmatpush.msra.mxu0 %v2602
    %5229 = vmatpush.msra.mxu0 %v2586
    %5230 = vmatpush.msra.mxu0 %v2570
    %5231 = vmatpush.msra.mxu0 %v2554
    %5232 = vmatpush.msra.mxu0 %v2538
    %5233 = vmatpush.msra.mxu0 %v2522
    %5234 = vmatpush.msra.mxu0 %v2506
    %5235 = vmatpush.msra.mxu0 %v2490
    %5236 = vmatmul.f32.gmra.mxu0 %v1452
    %v5237 = vpop.f32.mrf.mxu0
    %v5238 = vadd.f32 %v5218, %v5237
    %5239 = vdwg.mxu0
    %5240 = vmatpush.msra.mxu0 %v2986
    %5241 = vmatpush.msra.mxu0 %v2970
    %5242 = vmatpush.msra.mxu0 %v2954
    %5243 = vmatpush.msra.mxu0 %v2938
    %5244 = vmatpush.msra.mxu0 %v2922
    %5245 = vmatpush.msra.mxu0 %v2906
    %5246 = vmatpush.msra.mxu0 %v2890
    %5247 = vmatpush.msra.mxu0 %v2874
    %5248 = vmatpush.msra.mxu0 %v2858
    %5249 = vmatpush.msra.mxu0 %v2842
    %5250 = vmatpush.msra.mxu0 %v2826
    %5251 = vmatpush.msra.mxu0 %v2810
    %5252 = vmatpush.msra.mxu0 %v2794
    %5253 = vmatpush.msra.mxu0 %v2778
    %5254 = vmatpush.msra.mxu0 %v2762
    %5255 = vmatpush.msra.mxu0 %v2746
    %5256 = vmatmul.f32.gmra.mxu0 %v1453
    %v5257 = vpop.f32.mrf.mxu0
    %v5258 = vadd.f32 %v5238, %v5257
    %5259 = vdwg.mxu0
    %5260 = vmatpush.msra.mxu0 %v3242
    %5261 = vmatpush.msra.mxu0 %v3226
    %5262 = vmatpush.msra.mxu0 %v3210
    %5263 = vmatpush.msra.mxu0 %v3194
    %5264 = vmatpush.msra.mxu0 %v3178
    %5265 = vmatpush.msra.mxu0 %v3162
    %5266 = vmatpush.msra.mxu0 %v3146
    %5267 = vmatpush.msra.mxu0 %v3130
    %5268 = vmatpush.msra.mxu0 %v3114
    %5269 = vmatpush.msra.mxu0 %v3098
    %5270 = vmatpush.msra.mxu0 %v3082
    %5271 = vmatpush.msra.mxu0 %v3066
    %5272 = vmatpush.msra.mxu0 %v3050
    %5273 = vmatpush.msra.mxu0 %v3034
    %5274 = vmatpush.msra.mxu0 %v3018
    %5275 = vmatpush.msra.mxu0 %v3002
    %5276 = vmatmul.f32.gmra.mxu0 %v1454
    %v5277 = vpop.f32.mrf.mxu0
    %v5278 = vadd.f32 %v5258, %v5277
    %5279 = vdwg.mxu0
    %5280 = vmatpush.msra.mxu0 %v3498
    %5281 = vmatpush.msra.mxu0 %v3482
    %5282 = vmatpush.msra.mxu0 %v3466
    %5283 = vmatpush.msra.mxu0 %v3450
    %5284 = vmatpush.msra.mxu0 %v3434
    %5285 = vmatpush.msra.mxu0 %v3418
    %5286 = vmatpush.msra.mxu0 %v3402
    %5287 = vmatpush.msra.mxu0 %v3386
    %5288 = vmatpush.msra.mxu0 %v3370
    %5289 = vmatpush.msra.mxu0 %v3354
    %5290 = vmatpush.msra.mxu0 %v3338
    %5291 = vmatpush.msra.mxu0 %v3322
    %5292 = vmatpush.msra.mxu0 %v3306
    %5293 = vmatpush.msra.mxu0 %v3290
    %5294 = vmatpush.msra.mxu0 %v3274
    %5295 = vmatpush.msra.mxu0 %v3258
    %5296 = vmatmul.f32.gmra.mxu0 %v1455
    %v5297 = vpop.f32.mrf.mxu0
    %v5298 = vadd.f32 %v5278, %v5297
    %5299 = vdwg.mxu0
    %5300 = vmatpush.msra.mxu0 %v1707
    %5301 = vmatpush.msra.mxu0 %v1691
    %5302 = vmatpush.msra.mxu0 %v1675
    %5303 = vmatpush.msra.mxu0 %v1659
    %5304 = vmatpush.msra.mxu0 %v1643
    %5305 = vmatpush.msra.mxu0 %v1627
    %5306 = vmatpush.msra.mxu0 %v1611
    %5307 = vmatpush.msra.mxu0 %v1595
    %5308 = vmatpush.msra.mxu0 %v1579
    %5309 = vmatpush.msra.mxu0 %v1563
    %5310 = vmatpush.msra.mxu0 %v1547
    %5311 = vmatpush.msra.mxu0 %v1531
    %5312 = vmatpush.msra.mxu0 %v1515
    %5313 = vmatpush.msra.mxu0 %v1499
    %5314 = vmatpush.msra.mxu0 %v1483
    %5315 = vmatpush.msra.mxu0 %v1467
    %5316 = vmatmul.f32.gmra.mxu0 %v1448
    %v5317 = vpop.f32.mrf.mxu0
    %v5318 = vadd.f32 %v3519, %v5317
    %5319 = vdwg.mxu0
    %5320 = vmatpush.msra.mxu0 %v1963
    %5321 = vmatpush.msra.mxu0 %v1947
    %5322 = vmatpush.msra.mxu0 %v1931
    %5323 = vmatpush.msra.mxu0 %v1915
    %5324 = vmatpush.msra.mxu0 %v1899
    %5325 = vmatpush.msra.mxu0 %v1883
    %5326 = vmatpush.msra.mxu0 %v1867
    %5327 = vmatpush.msra.mxu0 %v1851
    %5328 = vmatpush.msra.mxu0 %v1835
    %5329 = vmatpush.msra.mxu0 %v1819
    %5330 = vmatpush.msra.mxu0 %v1803
    %5331 = vmatpush.msra.mxu0 %v1787
    %5332 = vmatpush.msra.mxu0 %v1771
    %5333 = vmatpush.msra.mxu0 %v1755
    %5334 = vmatpush.msra.mxu0 %v1739
    %5335 = vmatpush.msra.mxu0 %v1723
    %5336 = vmatmul.f32.gmra.mxu0 %v1449
    %v5337 = vpop.f32.mrf.mxu0
    %v5338 = vadd.f32 %v5318, %v5337
    %5339 = vdwg.mxu0
    %5340 = vmatpush.msra.mxu0 %v2219
    %5341 = vmatpush.msra.mxu0 %v2203
    %5342 = vmatpush.msra.mxu0 %v2187
    %5343 = vmatpush.msra.mxu0 %v2171
    %5344 = vmatpush.msra.mxu0 %v2155
    %5345 = vmatpush.msra.mxu0 %v2139
    %5346 = vmatpush.msra.mxu0 %v2123
    %5347 = vmatpush.msra.mxu0 %v2107
    %5348 = vmatpush.msra.mxu0 %v2091
    %5349 = vmatpush.msra.mxu0 %v2075
    %5350 = vmatpush.msra.mxu0 %v2059
    %5351 = vmatpush.msra.mxu0 %v2043
    %5352 = vmatpush.msra.mxu0 %v2027
    %5353 = vmatpush.msra.mxu0 %v2011
    %5354 = vmatpush.msra.mxu0 %v1995
    %5355 = vmatpush.msra.mxu0 %v1979
    %5356 = vmatmul.f32.gmra.mxu0 %v1450
    %v5357 = vpop.f32.mrf.mxu0
    %v5358 = vadd.f32 %v5338, %v5357
    %5359 = vdwg.mxu0
    %5360 = vmatpush.msra.mxu0 %v2475
    %5361 = vmatpush.msra.mxu0 %v2459
    %5362 = vmatpush.msra.mxu0 %v2443
    %5363 = vmatpush.msra.mxu0 %v2427
    %5364 = vmatpush.msra.mxu0 %v2411
    %5365 = vmatpush.msra.mxu0 %v2395
    %5366 = vmatpush.msra.mxu0 %v2379
    %5367 = vmatpush.msra.mxu0 %v2363
    %5368 = vmatpush.msra.mxu0 %v2347
    %5369 = vmatpush.msra.mxu0 %v2331
    %5370 = vmatpush.msra.mxu0 %v2315
    %5371 = vmatpush.msra.mxu0 %v2299
    %5372 = vmatpush.msra.mxu0 %v2283
    %5373 = vmatpush.msra.mxu0 %v2267
    %5374 = vmatpush.msra.mxu0 %v2251
    %5375 = vmatpush.msra.mxu0 %v2235
    %5376 = vmatmul.f32.gmra.mxu0 %v1451
    %v5377 = vpop.f32.mrf.mxu0
    %v5378 = vadd.f32 %v5358, %v5377
    %5379 = vdwg.mxu0
    %5380 = vmatpush.msra.mxu0 %v2731
    %5381 = vmatpush.msra.mxu0 %v2715
    %5382 = vmatpush.msra.mxu0 %v2699
    %5383 = vmatpush.msra.mxu0 %v2683
    %5384 = vmatpush.msra.mxu0 %v2667
    %5385 = vmatpush.msra.mxu0 %v2651
    %5386 = vmatpush.msra.mxu0 %v2635
    %5387 = vmatpush.msra.mxu0 %v2619
    %5388 = vmatpush.msra.mxu0 %v2603
    %5389 = vmatpush.msra.mxu0 %v2587
    %5390 = vmatpush.msra.mxu0 %v2571
    %5391 = vmatpush.msra.mxu0 %v2555
    %5392 = vmatpush.msra.mxu0 %v2539
    %5393 = vmatpush.msra.mxu0 %v2523
    %5394 = vmatpush.msra.mxu0 %v2507
    %5395 = vmatpush.msra.mxu0 %v2491
    %5396 = vmatmul.f32.gmra.mxu0 %v1452
    %v5397 = vpop.f32.mrf.mxu0
    %v5398 = vadd.f32 %v5378, %v5397
    %5399 = vdwg.mxu0
    %5400 = vmatpush.msra.mxu0 %v2987
    %5401 = vmatpush.msra.mxu0 %v2971
    %5402 = vmatpush.msra.mxu0 %v2955
    %5403 = vmatpush.msra.mxu0 %v2939
    %5404 = vmatpush.msra.mxu0 %v2923
    %5405 = vmatpush.msra.mxu0 %v2907
    %5406 = vmatpush.msra.mxu0 %v2891
    %5407 = vmatpush.msra.mxu0 %v2875
    %5408 = vmatpush.msra.mxu0 %v2859
    %5409 = vmatpush.msra.mxu0 %v2843
    %5410 = vmatpush.msra.mxu0 %v2827
    %5411 = vmatpush.msra.mxu0 %v2811
    %5412 = vmatpush.msra.mxu0 %v2795
    %5413 = vmatpush.msra.mxu0 %v2779
    %5414 = vmatpush.msra.mxu0 %v2763
    %5415 = vmatpush.msra.mxu0 %v2747
    %5416 = vmatmul.f32.gmra.mxu0 %v1453
    %v5417 = vpop.f32.mrf.mxu0
    %v5418 = vadd.f32 %v5398, %v5417
    %5419 = vdwg.mxu0
    %5420 = vmatpush.msra.mxu0 %v3243
    %5421 = vmatpush.msra.mxu0 %v3227
    %5422 = vmatpush.msra.mxu0 %v3211
    %5423 = vmatpush.msra.mxu0 %v3195
    %5424 = vmatpush.msra.mxu0 %v3179
    %5425 = vmatpush.msra.mxu0 %v3163
    %5426 = vmatpush.msra.mxu0 %v3147
    %5427 = vmatpush.msra.mxu0 %v3131
    %5428 = vmatpush.msra.mxu0 %v3115
    %5429 = vmatpush.msra.mxu0 %v3099
    %5430 = vmatpush.msra.mxu0 %v3083
    %5431 = vmatpush.msra.mxu0 %v3067
    %5432 = vmatpush.msra.mxu0 %v3051
    %5433 = vmatpush.msra.mxu0 %v3035
    %5434 = vmatpush.msra.mxu0 %v3019
    %5435 = vmatpush.msra.mxu0 %v3003
    %5436 = vmatmul.f32.gmra.mxu0 %v1454
    %v5437 = vpop.f32.mrf.mxu0
    %v5438 = vadd.f32 %v5418, %v5437
    %5439 = vdwg.mxu0
    %5440 = vmatpush.msra.mxu0 %v3499
    %5441 = vmatpush.msra.mxu0 %v3483
    %5442 = vmatpush.msra.mxu0 %v3467
    %5443 = vmatpush.msra.mxu0 %v3451
    %5444 = vmatpush.msra.mxu0 %v3435
    %5445 = vmatpush.msra.mxu0 %v3419
    %5446 = vmatpush.msra.mxu0 %v3403
    %5447 = vmatpush.msra.mxu0 %v3387
    %5448 = vmatpush.msra.mxu0 %v3371
    %5449 = vmatpush.msra.mxu0 %v3355
    %5450 = vmatpush.msra.mxu0 %v3339
    %5451 = vmatpush.msra.mxu0 %v3323
    %5452 = vmatpush.msra.mxu0 %v3307
    %5453 = vmatpush.msra.mxu0 %v3291
    %5454 = vmatpush.msra.mxu0 %v3275
    %5455 = vmatpush.msra.mxu0 %v3259
    %5456 = vmatmul.f32.gmra.mxu0 %v1455
    %v5457 = vpop.f32.mrf.mxu0
    %v5458 = vadd.f32 %v5438, %v5457
    %5459 = vdwg.mxu0
    %5460 = vmatpush.msra.mxu0 %v1708
    %5461 = vmatpush.msra.mxu0 %v1692
    %5462 = vmatpush.msra.mxu0 %v1676
    %5463 = vmatpush.msra.mxu0 %v1660
    %5464 = vmatpush.msra.mxu0 %v1644
    %5465 = vmatpush.msra.mxu0 %v1628
    %5466 = vmatpush.msra.mxu0 %v1612
    %5467 = vmatpush.msra.mxu0 %v1596
    %5468 = vmatpush.msra.mxu0 %v1580
    %5469 = vmatpush.msra.mxu0 %v1564
    %5470 = vmatpush.msra.mxu0 %v1548
    %5471 = vmatpush.msra.mxu0 %v1532
    %5472 = vmatpush.msra.mxu0 %v1516
    %5473 = vmatpush.msra.mxu0 %v1500
    %5474 = vmatpush.msra.mxu0 %v1484
    %5475 = vmatpush.msra.mxu0 %v1468
    %5476 = vmatmul.f32.gmra.mxu0 %v1448
    %v5477 = vpop.f32.mrf.mxu0
    %v5478 = vadd.f32 %v3520, %v5477
    %5479 = vdwg.mxu0
    %5480 = vmatpush.msra.mxu0 %v1964
    %5481 = vmatpush.msra.mxu0 %v1948
    %5482 = vmatpush.msra.mxu0 %v1932
    %5483 = vmatpush.msra.mxu0 %v1916
    %5484 = vmatpush.msra.mxu0 %v1900
    %5485 = vmatpush.msra.mxu0 %v1884
    %5486 = vmatpush.msra.mxu0 %v1868
    %5487 = vmatpush.msra.mxu0 %v1852
    %5488 = vmatpush.msra.mxu0 %v1836
    %5489 = vmatpush.msra.mxu0 %v1820
    %5490 = vmatpush.msra.mxu0 %v1804
    %5491 = vmatpush.msra.mxu0 %v1788
    %5492 = vmatpush.msra.mxu0 %v1772
    %5493 = vmatpush.msra.mxu0 %v1756
    %5494 = vmatpush.msra.mxu0 %v1740
    %5495 = vmatpush.msra.mxu0 %v1724
    %5496 = vmatmul.f32.gmra.mxu0 %v1449
    %v5497 = vpop.f32.mrf.mxu0
    %v5498 = vadd.f32 %v5478, %v5497
    %5499 = vdwg.mxu0
    %5500 = vmatpush.msra.mxu0 %v2220
    %5501 = vmatpush.msra.mxu0 %v2204
    %5502 = vmatpush.msra.mxu0 %v2188
    %5503 = vmatpush.msra.mxu0 %v2172
    %5504 = vmatpush.msra.mxu0 %v2156
    %5505 = vmatpush.msra.mxu0 %v2140
    %5506 = vmatpush.msra.mxu0 %v2124
    %5507 = vmatpush.msra.mxu0 %v2108
    %5508 = vmatpush.msra.mxu0 %v2092
    %5509 = vmatpush.msra.mxu0 %v2076
    %5510 = vmatpush.msra.mxu0 %v2060
    %5511 = vmatpush.msra.mxu0 %v2044
    %5512 = vmatpush.msra.mxu0 %v2028
    %5513 = vmatpush.msra.mxu0 %v2012
    %5514 = vmatpush.msra.mxu0 %v1996
    %5515 = vmatpush.msra.mxu0 %v1980
    %5516 = vmatmul.f32.gmra.mxu0 %v1450
    %v5517 = vpop.f32.mrf.mxu0
    %v5518 = vadd.f32 %v5498, %v5517
    %5519 = vdwg.mxu0
    %5520 = vmatpush.msra.mxu0 %v2476
    %5521 = vmatpush.msra.mxu0 %v2460
    %5522 = vmatpush.msra.mxu0 %v2444
    %5523 = vmatpush.msra.mxu0 %v2428
    %5524 = vmatpush.msra.mxu0 %v2412
    %5525 = vmatpush.msra.mxu0 %v2396
    %5526 = vmatpush.msra.mxu0 %v2380
    %5527 = vmatpush.msra.mxu0 %v2364
    %5528 = vmatpush.msra.mxu0 %v2348
    %5529 = vmatpush.msra.mxu0 %v2332
    %5530 = vmatpush.msra.mxu0 %v2316
    %5531 = vmatpush.msra.mxu0 %v2300
    %5532 = vmatpush.msra.mxu0 %v2284
    %5533 = vmatpush.msra.mxu0 %v2268
    %5534 = vmatpush.msra.mxu0 %v2252
    %5535 = vmatpush.msra.mxu0 %v2236
    %5536 = vmatmul.f32.gmra.mxu0 %v1451
    %v5537 = vpop.f32.mrf.mxu0
    %v5538 = vadd.f32 %v5518, %v5537
    %5539 = vdwg.mxu0
    %5540 = vmatpush.msra.mxu0 %v2732
    %5541 = vmatpush.msra.mxu0 %v2716
    %5542 = vmatpush.msra.mxu0 %v2700
    %5543 = vmatpush.msra.mxu0 %v2684
    %5544 = vmatpush.msra.mxu0 %v2668
    %5545 = vmatpush.msra.mxu0 %v2652
    %5546 = vmatpush.msra.mxu0 %v2636
    %5547 = vmatpush.msra.mxu0 %v2620
    %5548 = vmatpush.msra.mxu0 %v2604
    %5549 = vmatpush.msra.mxu0 %v2588
    %5550 = vmatpush.msra.mxu0 %v2572
    %5551 = vmatpush.msra.mxu0 %v2556
    %5552 = vmatpush.msra.mxu0 %v2540
    %5553 = vmatpush.msra.mxu0 %v2524
    %5554 = vmatpush.msra.mxu0 %v2508
    %5555 = vmatpush.msra.mxu0 %v2492
    %5556 = vmatmul.f32.gmra.mxu0 %v1452
    %v5557 = vpop.f32.mrf.mxu0
    %v5558 = vadd.f32 %v5538, %v5557
    %5559 = vdwg.mxu0
    %5560 = vmatpush.msra.mxu0 %v2988
    %5561 = vmatpush.msra.mxu0 %v2972
    %5562 = vmatpush.msra.mxu0 %v2956
    %5563 = vmatpush.msra.mxu0 %v2940
    %5564 = vmatpush.msra.mxu0 %v2924
    %5565 = vmatpush.msra.mxu0 %v2908
    %5566 = vmatpush.msra.mxu0 %v2892
    %5567 = vmatpush.msra.mxu0 %v2876
    %5568 = vmatpush.msra.mxu0 %v2860
    %5569 = vmatpush.msra.mxu0 %v2844
    %5570 = vmatpush.msra.mxu0 %v2828
    %5571 = vmatpush.msra.mxu0 %v2812
    %5572 = vmatpush.msra.mxu0 %v2796
    %5573 = vmatpush.msra.mxu0 %v2780
    %5574 = vmatpush.msra.mxu0 %v2764
    %5575 = vmatpush.msra.mxu0 %v2748
    %5576 = vmatmul.f32.gmra.mxu0 %v1453
    %v5577 = vpop.f32.mrf.mxu0
    %v5578 = vadd.f32 %v5558, %v5577
    %5579 = vdwg.mxu0
    %5580 = vmatpush.msra.mxu0 %v3244
    %5581 = vmatpush.msra.mxu0 %v3228
    %5582 = vmatpush.msra.mxu0 %v3212
    %5583 = vmatpush.msra.mxu0 %v3196
    %5584 = vmatpush.msra.mxu0 %v3180
    %5585 = vmatpush.msra.mxu0 %v3164
    %5586 = vmatpush.msra.mxu0 %v3148
    %5587 = vmatpush.msra.mxu0 %v3132
    %5588 = vmatpush.msra.mxu0 %v3116
    %5589 = vmatpush.msra.mxu0 %v3100
    %5590 = vmatpush.msra.mxu0 %v3084
    %5591 = vmatpush.msra.mxu0 %v3068
    %5592 = vmatpush.msra.mxu0 %v3052
    %5593 = vmatpush.msra.mxu0 %v3036
    %5594 = vmatpush.msra.mxu0 %v3020
    %5595 = vmatpush.msra.mxu0 %v3004
    %5596 = vmatmul.f32.gmra.mxu0 %v1454
    %v5597 = vpop.f32.mrf.mxu0
    %v5598 = vadd.f32 %v5578, %v5597
    %5599 = vdwg.mxu0
    %5600 = vmatpush.msra.mxu0 %v3500
    %5601 = vmatpush.msra.mxu0 %v3484
    %5602 = vmatpush.msra.mxu0 %v3468
    %5603 = vmatpush.msra.mxu0 %v3452
    %5604 = vmatpush.msra.mxu0 %v3436
    %5605 = vmatpush.msra.mxu0 %v3420
    %5606 = vmatpush.msra.mxu0 %v3404
    %5607 = vmatpush.msra.mxu0 %v3388
    %5608 = vmatpush.msra.mxu0 %v3372
    %5609 = vmatpush.msra.mxu0 %v3356
    %5610 = vmatpush.msra.mxu0 %v3340
    %5611 = vmatpush.msra.mxu0 %v3324
    %5612 = vmatpush.msra.mxu0 %v3308
    %5613 = vmatpush.msra.mxu0 %v3292
    %5614 = vmatpush.msra.mxu0 %v3276
    %5615 = vmatpush.msra.mxu0 %v3260
    %5616 = vmatmul.f32.gmra.mxu0 %v1455
    %v5617 = vpop.f32.mrf.mxu0
    %v5618 = vadd.f32 %v5598, %v5617
    %5619 = vdwg.mxu0
    %5620 = vmatpush.msra.mxu0 %v1709
    %5621 = vmatpush.msra.mxu0 %v1693
    %5622 = vmatpush.msra.mxu0 %v1677
    %5623 = vmatpush.msra.mxu0 %v1661
    %5624 = vmatpush.msra.mxu0 %v1645
    %5625 = vmatpush.msra.mxu0 %v1629
    %5626 = vmatpush.msra.mxu0 %v1613
    %5627 = vmatpush.msra.mxu0 %v1597
    %5628 = vmatpush.msra.mxu0 %v1581
    %5629 = vmatpush.msra.mxu0 %v1565
    %5630 = vmatpush.msra.mxu0 %v1549
    %5631 = vmatpush.msra.mxu0 %v1533
    %5632 = vmatpush.msra.mxu0 %v1517
    %5633 = vmatpush.msra.mxu0 %v1501
    %5634 = vmatpush.msra.mxu0 %v1485
    %5635 = vmatpush.msra.mxu0 %v1469
    %5636 = vmatmul.f32.gmra.mxu0 %v1448
    %v5637 = vpop.f32.mrf.mxu0
    %v5638 = vadd.f32 %v3521, %v5637
    %5639 = vdwg.mxu0
    %5640 = vmatpush.msra.mxu0 %v1965
    %5641 = vmatpush.msra.mxu0 %v1949
    %5642 = vmatpush.msra.mxu0 %v1933
    %5643 = vmatpush.msra.mxu0 %v1917
    %5644 = vmatpush.msra.mxu0 %v1901
    %5645 = vmatpush.msra.mxu0 %v1885
    %5646 = vmatpush.msra.mxu0 %v1869
    %5647 = vmatpush.msra.mxu0 %v1853
    %5648 = vmatpush.msra.mxu0 %v1837
    %5649 = vmatpush.msra.mxu0 %v1821
    %5650 = vmatpush.msra.mxu0 %v1805
    %5651 = vmatpush.msra.mxu0 %v1789
    %5652 = vmatpush.msra.mxu0 %v1773
    %5653 = vmatpush.msra.mxu0 %v1757
    %5654 = vmatpush.msra.mxu0 %v1741
    %5655 = vmatpush.msra.mxu0 %v1725
    %5656 = vmatmul.f32.gmra.mxu0 %v1449
    %v5657 = vpop.f32.mrf.mxu0
    %v5658 = vadd.f32 %v5638, %v5657
    %5659 = vdwg.mxu0
    %5660 = vmatpush.msra.mxu0 %v2221
    %5661 = vmatpush.msra.mxu0 %v2205
    %5662 = vmatpush.msra.mxu0 %v2189
    %5663 = vmatpush.msra.mxu0 %v2173
    %5664 = vmatpush.msra.mxu0 %v2157
    %5665 = vmatpush.msra.mxu0 %v2141
    %5666 = vmatpush.msra.mxu0 %v2125
    %5667 = vmatpush.msra.mxu0 %v2109
    %5668 = vmatpush.msra.mxu0 %v2093
    %5669 = vmatpush.msra.mxu0 %v2077
    %5670 = vmatpush.msra.mxu0 %v2061
    %5671 = vmatpush.msra.mxu0 %v2045
    %5672 = vmatpush.msra.mxu0 %v2029
    %5673 = vmatpush.msra.mxu0 %v2013
    %5674 = vmatpush.msra.mxu0 %v1997
    %5675 = vmatpush.msra.mxu0 %v1981
    %5676 = vmatmul.f32.gmra.mxu0 %v1450
    %v5677 = vpop.f32.mrf.mxu0
    %v5678 = vadd.f32 %v5658, %v5677
    %5679 = vdwg.mxu0
    %5680 = vmatpush.msra.mxu0 %v2477
    %5681 = vmatpush.msra.mxu0 %v2461
    %5682 = vmatpush.msra.mxu0 %v2445
    %5683 = vmatpush.msra.mxu0 %v2429
    %5684 = vmatpush.msra.mxu0 %v2413
    %5685 = vmatpush.msra.mxu0 %v2397
    %5686 = vmatpush.msra.mxu0 %v2381
    %5687 = vmatpush.msra.mxu0 %v2365
    %5688 = vmatpush.msra.mxu0 %v2349
    %5689 = vmatpush.msra.mxu0 %v2333
    %5690 = vmatpush.msra.mxu0 %v2317
    %5691 = vmatpush.msra.mxu0 %v2301
    %5692 = vmatpush.msra.mxu0 %v2285
    %5693 = vmatpush.msra.mxu0 %v2269
    %5694 = vmatpush.msra.mxu0 %v2253
    %5695 = vmatpush.msra.mxu0 %v2237
    %5696 = vmatmul.f32.gmra.mxu0 %v1451
    %v5697 = vpop.f32.mrf.mxu0
    %v5698 = vadd.f32 %v5678, %v5697
    %5699 = vdwg.mxu0
    %5700 = vmatpush.msra.mxu0 %v2733
    %5701 = vmatpush.msra.mxu0 %v2717
    %5702 = vmatpush.msra.mxu0 %v2701
    %5703 = vmatpush.msra.mxu0 %v2685
    %5704 = vmatpush.msra.mxu0 %v2669
    %5705 = vmatpush.msra.mxu0 %v2653
    %5706 = vmatpush.msra.mxu0 %v2637
    %5707 = vmatpush.msra.mxu0 %v2621
    %5708 = vmatpush.msra.mxu0 %v2605
    %5709 = vmatpush.msra.mxu0 %v2589
    %5710 = vmatpush.msra.mxu0 %v2573
    %5711 = vmatpush.msra.mxu0 %v2557
    %5712 = vmatpush.msra.mxu0 %v2541
    %5713 = vmatpush.msra.mxu0 %v2525
    %5714 = vmatpush.msra.mxu0 %v2509
    %5715 = vmatpush.msra.mxu0 %v2493
    %5716 = vmatmul.f32.gmra.mxu0 %v1452
    %v5717 = vpop.f32.mrf.mxu0
    %v5718 = vadd.f32 %v5698, %v5717
    %5719 = vdwg.mxu0
    %5720 = vmatpush.msra.mxu0 %v2989
    %5721 = vmatpush.msra.mxu0 %v2973
    %5722 = vmatpush.msra.mxu0 %v2957
    %5723 = vmatpush.msra.mxu0 %v2941
    %5724 = vmatpush.msra.mxu0 %v2925
    %5725 = vmatpush.msra.mxu0 %v2909
    %5726 = vmatpush.msra.mxu0 %v2893
    %5727 = vmatpush.msra.mxu0 %v2877
    %5728 = vmatpush.msra.mxu0 %v2861
    %5729 = vmatpush.msra.mxu0 %v2845
    %5730 = vmatpush.msra.mxu0 %v2829
    %5731 = vmatpush.msra.mxu0 %v2813
    %5732 = vmatpush.msra.mxu0 %v2797
    %5733 = vmatpush.msra.mxu0 %v2781
    %5734 = vmatpush.msra.mxu0 %v2765
    %5735 = vmatpush.msra.mxu0 %v2749
    %5736 = vmatmul.f32.gmra.mxu0 %v1453
    %v5737 = vpop.f32.mrf.mxu0
    %v5738 = vadd.f32 %v5718, %v5737
    %5739 = vdwg.mxu0
    %5740 = vmatpush.msra.mxu0 %v3245
    %5741 = vmatpush.msra.mxu0 %v3229
    %5742 = vmatpush.msra.mxu0 %v3213
    %5743 = vmatpush.msra.mxu0 %v3197
    %5744 = vmatpush.msra.mxu0 %v3181
    %5745 = vmatpush.msra.mxu0 %v3165
    %5746 = vmatpush.msra.mxu0 %v3149
    %5747 = vmatpush.msra.mxu0 %v3133
    %5748 = vmatpush.msra.mxu0 %v3117
    %5749 = vmatpush.msra.mxu0 %v3101
    %5750 = vmatpush.msra.mxu0 %v3085
    %5751 = vmatpush.msra.mxu0 %v3069
    %5752 = vmatpush.msra.mxu0 %v3053
    %5753 = vmatpush.msra.mxu0 %v3037
    %5754 = vmatpush.msra.mxu0 %v3021
    %5755 = vmatpush.msra.mxu0 %v3005
    %5756 = vmatmul.f32.gmra.mxu0 %v1454
    %v5757 = vpop.f32.mrf.mxu0
    %v5758 = vadd.f32 %v5738, %v5757
    %5759 = vdwg.mxu0
    %5760 = vmatpush.msra.mxu0 %v3501
    %5761 = vmatpush.msra.mxu0 %v3485
    %5762 = vmatpush.msra.mxu0 %v3469
    %5763 = vmatpush.msra.mxu0 %v3453
    %5764 = vmatpush.msra.mxu0 %v3437
    %5765 = vmatpush.msra.mxu0 %v3421
    %5766 = vmatpush.msra.mxu0 %v3405
    %5767 = vmatpush.msra.mxu0 %v3389
    %5768 = vmatpush.msra.mxu0 %v3373
    %5769 = vmatpush.msra.mxu0 %v3357
    %5770 = vmatpush.msra.mxu0 %v3341
    %5771 = vmatpush.msra.mxu0 %v3325
    %5772 = vmatpush.msra.mxu0 %v3309
    %5773 = vmatpush.msra.mxu0 %v3293
    %5774 = vmatpush.msra.mxu0 %v3277
    %5775 = vmatpush.msra.mxu0 %v3261
    %5776 = vmatmul.f32.gmra.mxu0 %v1455
    %v5777 = vpop.f32.mrf.mxu0
    %v5778 = vadd.f32 %v5758, %v5777
    %5779 = vdwg.mxu0
    %5780 = vmatpush.msra.mxu0 %v1710
    %5781 = vmatpush.msra.mxu0 %v1694
    %5782 = vmatpush.msra.mxu0 %v1678
    %5783 = vmatpush.msra.mxu0 %v1662
    %5784 = vmatpush.msra.mxu0 %v1646
    %5785 = vmatpush.msra.mxu0 %v1630
    %5786 = vmatpush.msra.mxu0 %v1614
    %5787 = vmatpush.msra.mxu0 %v1598
    %5788 = vmatpush.msra.mxu0 %v1582
    %5789 = vmatpush.msra.mxu0 %v1566
    %5790 = vmatpush.msra.mxu0 %v1550
    %5791 = vmatpush.msra.mxu0 %v1534
    %5792 = vmatpush.msra.mxu0 %v1518
    %5793 = vmatpush.msra.mxu0 %v1502
    %5794 = vmatpush.msra.mxu0 %v1486
    %5795 = vmatpush.msra.mxu0 %v1470
    %5796 = vmatmul.f32.gmra.mxu0 %v1448
    %v5797 = vpop.f32.mrf.mxu0
    %v5798 = vadd.f32 %v3522, %v5797
    %5799 = vdwg.mxu0
    %5800 = vmatpush.msra.mxu0 %v1966
    %5801 = vmatpush.msra.mxu0 %v1950
    %5802 = vmatpush.msra.mxu0 %v1934
    %5803 = vmatpush.msra.mxu0 %v1918
    %5804 = vmatpush.msra.mxu0 %v1902
    %5805 = vmatpush.msra.mxu0 %v1886
    %5806 = vmatpush.msra.mxu0 %v1870
    %5807 = vmatpush.msra.mxu0 %v1854
    %5808 = vmatpush.msra.mxu0 %v1838
    %5809 = vmatpush.msra.mxu0 %v1822
    %5810 = vmatpush.msra.mxu0 %v1806
    %5811 = vmatpush.msra.mxu0 %v1790
    %5812 = vmatpush.msra.mxu0 %v1774
    %5813 = vmatpush.msra.mxu0 %v1758
    %5814 = vmatpush.msra.mxu0 %v1742
    %5815 = vmatpush.msra.mxu0 %v1726
    %5816 = vmatmul.f32.gmra.mxu0 %v1449
    %v5817 = vpop.f32.mrf.mxu0
    %v5818 = vadd.f32 %v5798, %v5817
    %5819 = vdwg.mxu0
    %5820 = vmatpush.msra.mxu0 %v2222
    %5821 = vmatpush.msra.mxu0 %v2206
    %5822 = vmatpush.msra.mxu0 %v2190
    %5823 = vmatpush.msra.mxu0 %v2174
    %5824 = vmatpush.msra.mxu0 %v2158
    %5825 = vmatpush.msra.mxu0 %v2142
    %5826 = vmatpush.msra.mxu0 %v2126
    %5827 = vmatpush.msra.mxu0 %v2110
    %5828 = vmatpush.msra.mxu0 %v2094
    %5829 = vmatpush.msra.mxu0 %v2078
    %5830 = vmatpush.msra.mxu0 %v2062
    %5831 = vmatpush.msra.mxu0 %v2046
    %5832 = vmatpush.msra.mxu0 %v2030
    %5833 = vmatpush.msra.mxu0 %v2014
    %5834 = vmatpush.msra.mxu0 %v1998
    %5835 = vmatpush.msra.mxu0 %v1982
    %5836 = vmatmul.f32.gmra.mxu0 %v1450
    %v5837 = vpop.f32.mrf.mxu0
    %v5838 = vadd.f32 %v5818, %v5837
    %5839 = vdwg.mxu0
    %5840 = vmatpush.msra.mxu0 %v2478
    %5841 = vmatpush.msra.mxu0 %v2462
    %5842 = vmatpush.msra.mxu0 %v2446
    %5843 = vmatpush.msra.mxu0 %v2430
    %5844 = vmatpush.msra.mxu0 %v2414
    %5845 = vmatpush.msra.mxu0 %v2398
    %5846 = vmatpush.msra.mxu0 %v2382
    %5847 = vmatpush.msra.mxu0 %v2366
    %5848 = vmatpush.msra.mxu0 %v2350
    %5849 = vmatpush.msra.mxu0 %v2334
    %5850 = vmatpush.msra.mxu0 %v2318
    %5851 = vmatpush.msra.mxu0 %v2302
    %5852 = vmatpush.msra.mxu0 %v2286
    %5853 = vmatpush.msra.mxu0 %v2270
    %5854 = vmatpush.msra.mxu0 %v2254
    %5855 = vmatpush.msra.mxu0 %v2238
    %5856 = vmatmul.f32.gmra.mxu0 %v1451
    %v5857 = vpop.f32.mrf.mxu0
    %v5858 = vadd.f32 %v5838, %v5857
    %5859 = vdwg.mxu0
    %5860 = vmatpush.msra.mxu0 %v2734
    %5861 = vmatpush.msra.mxu0 %v2718
    %5862 = vmatpush.msra.mxu0 %v2702
    %5863 = vmatpush.msra.mxu0 %v2686
    %5864 = vmatpush.msra.mxu0 %v2670
    %5865 = vmatpush.msra.mxu0 %v2654
    %5866 = vmatpush.msra.mxu0 %v2638
    %5867 = vmatpush.msra.mxu0 %v2622
    %5868 = vmatpush.msra.mxu0 %v2606
    %5869 = vmatpush.msra.mxu0 %v2590
    %5870 = vmatpush.msra.mxu0 %v2574
    %5871 = vmatpush.msra.mxu0 %v2558
    %5872 = vmatpush.msra.mxu0 %v2542
    %5873 = vmatpush.msra.mxu0 %v2526
    %5874 = vmatpush.msra.mxu0 %v2510
    %5875 = vmatpush.msra.mxu0 %v2494
    %5876 = vmatmul.f32.gmra.mxu0 %v1452
    %v5877 = vpop.f32.mrf.mxu0
    %v5878 = vadd.f32 %v5858, %v5877
    %5879 = vdwg.mxu0
    %5880 = vmatpush.msra.mxu0 %v2990
    %5881 = vmatpush.msra.mxu0 %v2974
    %5882 = vmatpush.msra.mxu0 %v2958
    %5883 = vmatpush.msra.mxu0 %v2942
    %5884 = vmatpush.msra.mxu0 %v2926
    %5885 = vmatpush.msra.mxu0 %v2910
    %5886 = vmatpush.msra.mxu0 %v2894
    %5887 = vmatpush.msra.mxu0 %v2878
    %5888 = vmatpush.msra.mxu0 %v2862
    %5889 = vmatpush.msra.mxu0 %v2846
    %5890 = vmatpush.msra.mxu0 %v2830
    %5891 = vmatpush.msra.mxu0 %v2814
    %5892 = vmatpush.msra.mxu0 %v2798
    %5893 = vmatpush.msra.mxu0 %v2782
    %5894 = vmatpush.msra.mxu0 %v2766
    %5895 = vmatpush.msra.mxu0 %v2750
    %5896 = vmatmul.f32.gmra.mxu0 %v1453
    %v5897 = vpop.f32.mrf.mxu0
    %v5898 = vadd.f32 %v5878, %v5897
    %5899 = vdwg.mxu0
    %5900 = vmatpush.msra.mxu0 %v3246
    %5901 = vmatpush.msra.mxu0 %v3230
    %5902 = vmatpush.msra.mxu0 %v3214
    %5903 = vmatpush.msra.mxu0 %v3198
    %5904 = vmatpush.msra.mxu0 %v3182
    %5905 = vmatpush.msra.mxu0 %v3166
    %5906 = vmatpush.msra.mxu0 %v3150
    %5907 = vmatpush.msra.mxu0 %v3134
    %5908 = vmatpush.msra.mxu0 %v3118
    %5909 = vmatpush.msra.mxu0 %v3102
    %5910 = vmatpush.msra.mxu0 %v3086
    %5911 = vmatpush.msra.mxu0 %v3070
    %5912 = vmatpush.msra.mxu0 %v3054
    %5913 = vmatpush.msra.mxu0 %v3038
    %5914 = vmatpush.msra.mxu0 %v3022
    %5915 = vmatpush.msra.mxu0 %v3006
    %5916 = vmatmul.f32.gmra.mxu0 %v1454
    %v5917 = vpop.f32.mrf.mxu0
    %v5918 = vadd.f32 %v5898, %v5917
    %5919 = vdwg.mxu0
    %5920 = vmatpush.msra.mxu0 %v3502
    %5921 = vmatpush.msra.mxu0 %v3486
    %5922 = vmatpush.msra.mxu0 %v3470
    %5923 = vmatpush.msra.mxu0 %v3454
    %5924 = vmatpush.msra.mxu0 %v3438
    %5925 = vmatpush.msra.mxu0 %v3422
    %5926 = vmatpush.msra.mxu0 %v3406
    %5927 = vmatpush.msra.mxu0 %v3390
    %5928 = vmatpush.msra.mxu0 %v3374
    %5929 = vmatpush.msra.mxu0 %v3358
    %5930 = vmatpush.msra.mxu0 %v3342
    %5931 = vmatpush.msra.mxu0 %v3326
    %5932 = vmatpush.msra.mxu0 %v3310
    %5933 = vmatpush.msra.mxu0 %v3294
    %5934 = vmatpush.msra.mxu0 %v3278
    %5935 = vmatpush.msra.mxu0 %v3262
    %5936 = vmatmul.f32.gmra.mxu0 %v1455
    %v5937 = vpop.f32.mrf.mxu0
    %v5938 = vadd.f32 %v5918, %v5937
    %5939 = vdwg.mxu0
    %5940 = vmatpush.msra.mxu0 %v1711
    %5941 = vmatpush.msra.mxu0 %v1695
    %5942 = vmatpush.msra.mxu0 %v1679
    %5943 = vmatpush.msra.mxu0 %v1663
    %5944 = vmatpush.msra.mxu0 %v1647
    %5945 = vmatpush.msra.mxu0 %v1631
    %5946 = vmatpush.msra.mxu0 %v1615
    %5947 = vmatpush.msra.mxu0 %v1599
    %5948 = vmatpush.msra.mxu0 %v1583
    %5949 = vmatpush.msra.mxu0 %v1567
    %5950 = vmatpush.msra.mxu0 %v1551
    %5951 = vmatpush.msra.mxu0 %v1535
    %5952 = vmatpush.msra.mxu0 %v1519
    %5953 = vmatpush.msra.mxu0 %v1503
    %5954 = vmatpush.msra.mxu0 %v1487
    %5955 = vmatpush.msra.mxu0 %v1471
    %5956 = vmatmul.f32.gmra.mxu0 %v1448
    %v5957 = vpop.f32.mrf.mxu0
    %v5958 = vadd.f32 %v3523, %v5957
    %5959 = vdwg.mxu0
    %5960 = vmatpush.msra.mxu0 %v1967
    %5961 = vmatpush.msra.mxu0 %v1951
    %5962 = vmatpush.msra.mxu0 %v1935
    %5963 = vmatpush.msra.mxu0 %v1919
    %5964 = vmatpush.msra.mxu0 %v1903
    %5965 = vmatpush.msra.mxu0 %v1887
    %5966 = vmatpush.msra.mxu0 %v1871
    %5967 = vmatpush.msra.mxu0 %v1855
    %5968 = vmatpush.msra.mxu0 %v1839
    %5969 = vmatpush.msra.mxu0 %v1823
    %5970 = vmatpush.msra.mxu0 %v1807
    %5971 = vmatpush.msra.mxu0 %v1791
    %5972 = vmatpush.msra.mxu0 %v1775
    %5973 = vmatpush.msra.mxu0 %v1759
    %5974 = vmatpush.msra.mxu0 %v1743
    %5975 = vmatpush.msra.mxu0 %v1727
    %5976 = vmatmul.f32.gmra.mxu0 %v1449
    %v5977 = vpop.f32.mrf.mxu0
    %v5978 = vadd.f32 %v5958, %v5977
    %5979 = vdwg.mxu0
    %5980 = vmatpush.msra.mxu0 %v2223
    %5981 = vmatpush.msra.mxu0 %v2207
    %5982 = vmatpush.msra.mxu0 %v2191
    %5983 = vmatpush.msra.mxu0 %v2175
    %5984 = vmatpush.msra.mxu0 %v2159
    %5985 = vmatpush.msra.mxu0 %v2143
    %5986 = vmatpush.msra.mxu0 %v2127
    %5987 = vmatpush.msra.mxu0 %v2111
    %5988 = vmatpush.msra.mxu0 %v2095
    %5989 = vmatpush.msra.mxu0 %v2079
    %5990 = vmatpush.msra.mxu0 %v2063
    %5991 = vmatpush.msra.mxu0 %v2047
    %5992 = vmatpush.msra.mxu0 %v2031
    %5993 = vmatpush.msra.mxu0 %v2015
    %5994 = vmatpush.msra.mxu0 %v1999
    %5995 = vmatpush.msra.mxu0 %v1983
    %5996 = vmatmul.f32.gmra.mxu0 %v1450
    %v5997 = vpop.f32.mrf.mxu0
    %v5998 = vadd.f32 %v5978, %v5997
    %5999 = vdwg.mxu0
    %6000 = vmatpush.msra.mxu0 %v2479
    %6001 = vmatpush.msra.mxu0 %v2463
    %6002 = vmatpush.msra.mxu0 %v2447
    %6003 = vmatpush.msra.mxu0 %v2431
    %6004 = vmatpush.msra.mxu0 %v2415
    %6005 = vmatpush.msra.mxu0 %v2399
    %6006 = vmatpush.msra.mxu0 %v2383
    %6007 = vmatpush.msra.mxu0 %v2367
    %6008 = vmatpush.msra.mxu0 %v2351
    %6009 = vmatpush.msra.mxu0 %v2335
    %6010 = vmatpush.msra.mxu0 %v2319
    %6011 = vmatpush.msra.mxu0 %v2303
    %6012 = vmatpush.msra.mxu0 %v2287
    %6013 = vmatpush.msra.mxu0 %v2271
    %6014 = vmatpush.msra.mxu0 %v2255
    %6015 = vmatpush.msra.mxu0 %v2239
    %6016 = vmatmul.f32.gmra.mxu0 %v1451
    %v6017 = vpop.f32.mrf.mxu0
    %v6018 = vadd.f32 %v5998, %v6017
    %6019 = vdwg.mxu0
    %6020 = vmatpush.msra.mxu0 %v2735
    %6021 = vmatpush.msra.mxu0 %v2719
    %6022 = vmatpush.msra.mxu0 %v2703
    %6023 = vmatpush.msra.mxu0 %v2687
    %6024 = vmatpush.msra.mxu0 %v2671
    %6025 = vmatpush.msra.mxu0 %v2655
    %6026 = vmatpush.msra.mxu0 %v2639
    %6027 = vmatpush.msra.mxu0 %v2623
    %6028 = vmatpush.msra.mxu0 %v2607
    %6029 = vmatpush.msra.mxu0 %v2591
    %6030 = vmatpush.msra.mxu0 %v2575
    %6031 = vmatpush.msra.mxu0 %v2559
    %6032 = vmatpush.msra.mxu0 %v2543
    %6033 = vmatpush.msra.mxu0 %v2527
    %6034 = vmatpush.msra.mxu0 %v2511
    %6035 = vmatpush.msra.mxu0 %v2495
    %6036 = vmatmul.f32.gmra.mxu0 %v1452
    %v6037 = vpop.f32.mrf.mxu0
    %v6038 = vadd.f32 %v6018, %v6037
    %6039 = vdwg.mxu0
    %6040 = vmatpush.msra.mxu0 %v2991
    %6041 = vmatpush.msra.mxu0 %v2975
    %6042 = vmatpush.msra.mxu0 %v2959
    %6043 = vmatpush.msra.mxu0 %v2943
    %6044 = vmatpush.msra.mxu0 %v2927
    %6045 = vmatpush.msra.mxu0 %v2911
    %6046 = vmatpush.msra.mxu0 %v2895
    %6047 = vmatpush.msra.mxu0 %v2879
    %6048 = vmatpush.msra.mxu0 %v2863
    %6049 = vmatpush.msra.mxu0 %v2847
    %6050 = vmatpush.msra.mxu0 %v2831
    %6051 = vmatpush.msra.mxu0 %v2815
    %6052 = vmatpush.msra.mxu0 %v2799
    %6053 = vmatpush.msra.mxu0 %v2783
    %6054 = vmatpush.msra.mxu0 %v2767
    %6055 = vmatpush.msra.mxu0 %v2751
    %6056 = vmatmul.f32.gmra.mxu0 %v1453
    %v6057 = vpop.f32.mrf.mxu0
    %v6058 = vadd.f32 %v6038, %v6057
    %6059 = vdwg.mxu0
    %6060 = vmatpush.msra.mxu0 %v3247
    %6061 = vmatpush.msra.mxu0 %v3231
    %6062 = vmatpush.msra.mxu0 %v3215
    %6063 = vmatpush.msra.mxu0 %v3199
    %6064 = vmatpush.msra.mxu0 %v3183
    %6065 = vmatpush.msra.mxu0 %v3167
    %6066 = vmatpush.msra.mxu0 %v3151
    %6067 = vmatpush.msra.mxu0 %v3135
    %6068 = vmatpush.msra.mxu0 %v3119
    %6069 = vmatpush.msra.mxu0 %v3103
    %6070 = vmatpush.msra.mxu0 %v3087
    %6071 = vmatpush.msra.mxu0 %v3071
    %6072 = vmatpush.msra.mxu0 %v3055
    %6073 = vmatpush.msra.mxu0 %v3039
    %6074 = vmatpush.msra.mxu0 %v3023
    %6075 = vmatpush.msra.mxu0 %v3007
    %6076 = vmatmul.f32.gmra.mxu0 %v1454
    %v6077 = vpop.f32.mrf.mxu0
    %v6078 = vadd.f32 %v6058, %v6077
    %6079 = vdwg.mxu0
    %6080 = vmatpush.msra.mxu0 %v3503
    %6081 = vmatpush.msra.mxu0 %v3487
    %6082 = vmatpush.msra.mxu0 %v3471
    %6083 = vmatpush.msra.mxu0 %v3455
    %6084 = vmatpush.msra.mxu0 %v3439
    %6085 = vmatpush.msra.mxu0 %v3423
    %6086 = vmatpush.msra.mxu0 %v3407
    %6087 = vmatpush.msra.mxu0 %v3391
    %6088 = vmatpush.msra.mxu0 %v3375
    %6089 = vmatpush.msra.mxu0 %v3359
    %6090 = vmatpush.msra.mxu0 %v3343
    %6091 = vmatpush.msra.mxu0 %v3327
    %6092 = vmatpush.msra.mxu0 %v3311
    %6093 = vmatpush.msra.mxu0 %v3295
    %6094 = vmatpush.msra.mxu0 %v3279
    %6095 = vmatpush.msra.mxu0 %v3263
    %6096 = vmatmul.f32.gmra.mxu0 %v1455
    %v6097 = vpop.f32.mrf.mxu0
    %v6098 = vadd.f32 %v6078, %v6097
    %6099 = vdwg.mxu0
    %v6100 = vmax.f32 %v3698, 0.0
    %v6101 = vmax.f32 %v3858, 0.0
    %v6102 = vmax.f32 %v4018, 0.0
    %v6103 = vmax.f32 %v4178, 0.0
    %v6104 = vmax.f32 %v4338, 0.0
    %v6105 = vmax.f32 %v4498, 0.0
    %v6106 = vmax.f32 %v4658, 0.0
    %v6107 = vmax.f32 %v4818, 0.0
    %v6108 = vmax.f32 %v4978, 0.0
    %v6109 = vmax.f32 %v5138, 0.0
    %v6110 = vmax.f32 %v5298, 0.0
    %v6111 = vmax.f32 %v5458, 0.0
    %v6112 = vmax.f32 %v5618, 0.0
    %v6113 = vmax.f32 %v5778, 0.0
    %v6114 = vmax.f32 %v5938, 0.0
    %v6115 = vmax.f32 %v6098, 0.0
    %v6116 = vld [vmem:[#allocation14] sm:$0xff]
    %v6117 = vld [vmem:[#allocation14 + $0x8] sm:$0xff]
    %v6118 = vld [vmem:[#allocation14 + $0x10] sm:$0xff]
    %v6119 = vld [vmem:[#allocation14 + $0x18] sm:$0xff]
    %v6120 = vld [vmem:[#allocation14 + $0x20] sm:$0xff]
    %v6121 = vld [vmem:[#allocation14 + $0x28] sm:$0xff]
    %v6122 = vld [vmem:[#allocation14 + $0x30] sm:$0xff]
    %v6123 = vld [vmem:[#allocation14 + $0x38] sm:$0xff]
    %v6124 = vld [vmem:[#allocation14 + $0x40] sm:$0xff]
    %v6125 = vld [vmem:[#allocation14 + $0x48] sm:$0xff]
    %v6126 = vld [vmem:[#allocation14 + $0x50] sm:$0xff]
    %v6127 = vld [vmem:[#allocation14 + $0x58] sm:$0xff]
    %v6128 = vld [vmem:[#allocation14 + $0x60] sm:$0xff]
    %v6129 = vld [vmem:[#allocation14 + $0x68] sm:$0xff]
    %v6130 = vld [vmem:[#allocation14 + $0x70] sm:$0xff]
    %v6131 = vld [vmem:[#allocation14 + $0x78] sm:$0xff]
    %v6132 = vld [vmem:[#allocation14 + $0x80] sm:$0xff]
    %v6133 = vld [vmem:[#allocation14 + $0x88] sm:$0xff]
    %v6134 = vld [vmem:[#allocation14 + $0x90] sm:$0xff]
    %v6135 = vld [vmem:[#allocation14 + $0x98] sm:$0xff]
    %v6136 = vld [vmem:[#allocation14 + $0xa0] sm:$0xff]
    %v6137 = vld [vmem:[#allocation14 + $0xa8] sm:$0xff]
    %v6138 = vld [vmem:[#allocation14 + $0xb0] sm:$0xff]
    %v6139 = vld [vmem:[#allocation14 + $0xb8] sm:$0xff]
    %v6140 = vld [vmem:[#allocation14 + $0xc0] sm:$0xff]
    %v6141 = vld [vmem:[#allocation14 + $0xc8] sm:$0xff]
    %v6142 = vld [vmem:[#allocation14 + $0xd0] sm:$0xff]
    %v6143 = vld [vmem:[#allocation14 + $0xd8] sm:$0xff]
    %v6144 = vld [vmem:[#allocation14 + $0xe0] sm:$0xff]
    %v6145 = vld [vmem:[#allocation14 + $0xe8] sm:$0xff]
    %v6146 = vld [vmem:[#allocation14 + $0xf0] sm:$0xff]
    %v6147 = vld [vmem:[#allocation14 + $0xf8] sm:$0xff]
    %v6148 = vld [vmem:[#allocation14 + $0x100] sm:$0xff]
    %v6149 = vld [vmem:[#allocation14 + $0x108] sm:$0xff]
    %v6150 = vld [vmem:[#allocation14 + $0x110] sm:$0xff]
    %v6151 = vld [vmem:[#allocation14 + $0x118] sm:$0xff]
    %v6152 = vld [vmem:[#allocation14 + $0x120] sm:$0xff]
    %v6153 = vld [vmem:[#allocation14 + $0x128] sm:$0xff]
    %v6154 = vld [vmem:[#allocation14 + $0x130] sm:$0xff]
    %v6155 = vld [vmem:[#allocation14 + $0x138] sm:$0xff]
    %v6156 = vld [vmem:[#allocation14 + $0x140] sm:$0xff]
    %v6157 = vld [vmem:[#allocation14 + $0x148] sm:$0xff]
    %v6158 = vld [vmem:[#allocation14 + $0x150] sm:$0xff]
    %v6159 = vld [vmem:[#allocation14 + $0x158] sm:$0xff]
    %v6160 = vld [vmem:[#allocation14 + $0x160] sm:$0xff]
    %v6161 = vld [vmem:[#allocation14 + $0x168] sm:$0xff]
    %v6162 = vld [vmem:[#allocation14 + $0x170] sm:$0xff]
    %v6163 = vld [vmem:[#allocation14 + $0x178] sm:$0xff]
    %v6164 = vld [vmem:[#allocation14 + $0x180] sm:$0xff]
    %v6165 = vld [vmem:[#allocation14 + $0x188] sm:$0xff]
    %v6166 = vld [vmem:[#allocation14 + $0x190] sm:$0xff]
    %v6167 = vld [vmem:[#allocation14 + $0x198] sm:$0xff]
    %v6168 = vld [vmem:[#allocation14 + $0x1a0] sm:$0xff]
    %v6169 = vld [vmem:[#allocation14 + $0x1a8] sm:$0xff]
    %v6170 = vld [vmem:[#allocation14 + $0x1b0] sm:$0xff]
    %v6171 = vld [vmem:[#allocation14 + $0x1b8] sm:$0xff]
    %v6172 = vld [vmem:[#allocation14 + $0x1c0] sm:$0xff]
    %v6173 = vld [vmem:[#allocation14 + $0x1c8] sm:$0xff]
    %v6174 = vld [vmem:[#allocation14 + $0x1d0] sm:$0xff]
    %v6175 = vld [vmem:[#allocation14 + $0x1d8] sm:$0xff]
    %v6176 = vld [vmem:[#allocation14 + $0x1e0] sm:$0xff]
    %v6177 = vld [vmem:[#allocation14 + $0x1e8] sm:$0xff]
    %v6178 = vld [vmem:[#allocation14 + $0x1f0] sm:$0xff]
    %v6179 = vld [vmem:[#allocation14 + $0x1f8] sm:$0xff]
    %v6180 = vld [vmem:[#allocation14 + $0x200] sm:$0xff]
    %v6181 = vld [vmem:[#allocation14 + $0x208] sm:$0xff]
    %v6182 = vld [vmem:[#allocation14 + $0x210] sm:$0xff]
    %v6183 = vld [vmem:[#allocation14 + $0x218] sm:$0xff]
    %v6184 = vld [vmem:[#allocation14 + $0x220] sm:$0xff]
    %v6185 = vld [vmem:[#allocation14 + $0x228] sm:$0xff]
    %v6186 = vld [vmem:[#allocation14 + $0x230] sm:$0xff]
    %v6187 = vld [vmem:[#allocation14 + $0x238] sm:$0xff]
    %v6188 = vld [vmem:[#allocation14 + $0x240] sm:$0xff]
    %v6189 = vld [vmem:[#allocation14 + $0x248] sm:$0xff]
    %v6190 = vld [vmem:[#allocation14 + $0x250] sm:$0xff]
    %v6191 = vld [vmem:[#allocation14 + $0x258] sm:$0xff]
    %v6192 = vld [vmem:[#allocation14 + $0x260] sm:$0xff]
    %v6193 = vld [vmem:[#allocation14 + $0x268] sm:$0xff]
    %v6194 = vld [vmem:[#allocation14 + $0x270] sm:$0xff]
    %v6195 = vld [vmem:[#allocation14 + $0x278] sm:$0xff]
    %v6196 = vld [vmem:[#allocation14 + $0x280] sm:$0xff]
    %v6197 = vld [vmem:[#allocation14 + $0x288] sm:$0xff]
    %v6198 = vld [vmem:[#allocation14 + $0x290] sm:$0xff]
    %v6199 = vld [vmem:[#allocation14 + $0x298] sm:$0xff]
    %v6200 = vld [vmem:[#allocation14 + $0x2a0] sm:$0xff]
    %v6201 = vld [vmem:[#allocation14 + $0x2a8] sm:$0xff]
    %v6202 = vld [vmem:[#allocation14 + $0x2b0] sm:$0xff]
    %v6203 = vld [vmem:[#allocation14 + $0x2b8] sm:$0xff]
    %v6204 = vld [vmem:[#allocation14 + $0x2c0] sm:$0xff]
    %v6205 = vld [vmem:[#allocation14 + $0x2c8] sm:$0xff]
    %v6206 = vld [vmem:[#allocation14 + $0x2d0] sm:$0xff]
    %v6207 = vld [vmem:[#allocation14 + $0x2d8] sm:$0xff]
    %v6208 = vld [vmem:[#allocation14 + $0x2e0] sm:$0xff]
    %v6209 = vld [vmem:[#allocation14 + $0x2e8] sm:$0xff]
    %v6210 = vld [vmem:[#allocation14 + $0x2f0] sm:$0xff]
    %v6211 = vld [vmem:[#allocation14 + $0x2f8] sm:$0xff]
    %v6212 = vld [vmem:[#allocation14 + $0x300] sm:$0xff]
    %v6213 = vld [vmem:[#allocation14 + $0x308] sm:$0xff]
    %v6214 = vld [vmem:[#allocation14 + $0x310] sm:$0xff]
    %v6215 = vld [vmem:[#allocation14 + $0x318] sm:$0xff]
    %v6216 = vld [vmem:[#allocation14 + $0x320] sm:$0xff]
    %v6217 = vld [vmem:[#allocation14 + $0x328] sm:$0xff]
    %v6218 = vld [vmem:[#allocation14 + $0x330] sm:$0xff]
    %v6219 = vld [vmem:[#allocation14 + $0x338] sm:$0xff]
    %v6220 = vld [vmem:[#allocation14 + $0x340] sm:$0xff]
    %v6221 = vld [vmem:[#allocation14 + $0x348] sm:$0xff]
    %v6222 = vld [vmem:[#allocation14 + $0x350] sm:$0xff]
    %v6223 = vld [vmem:[#allocation14 + $0x358] sm:$0xff]
    %v6224 = vld [vmem:[#allocation14 + $0x360] sm:$0xff]
    %v6225 = vld [vmem:[#allocation14 + $0x368] sm:$0xff]
    %v6226 = vld [vmem:[#allocation14 + $0x370] sm:$0xff]
    %v6227 = vld [vmem:[#allocation14 + $0x378] sm:$0xff]
    %v6228 = vld [vmem:[#allocation14 + $0x380] sm:$0xff]
    %v6229 = vld [vmem:[#allocation14 + $0x388] sm:$0xff]
    %v6230 = vld [vmem:[#allocation14 + $0x390] sm:$0xff]
    %v6231 = vld [vmem:[#allocation14 + $0x398] sm:$0xff]
    %v6232 = vld [vmem:[#allocation14 + $0x3a0] sm:$0xff]
    %v6233 = vld [vmem:[#allocation14 + $0x3a8] sm:$0xff]
    %v6234 = vld [vmem:[#allocation14 + $0x3b0] sm:$0xff]
    %v6235 = vld [vmem:[#allocation14 + $0x3b8] sm:$0xff]
    %v6236 = vld [vmem:[#allocation14 + $0x3c0] sm:$0xff]
    %v6237 = vld [vmem:[#allocation14 + $0x3c8] sm:$0xff]
    %v6238 = vld [vmem:[#allocation14 + $0x3d0] sm:$0xff]
    %v6239 = vld [vmem:[#allocation14 + $0x3d8] sm:$0xff]
    %v6240 = vld [vmem:[#allocation14 + $0x3e0] sm:$0xff]
    %v6241 = vld [vmem:[#allocation14 + $0x3e8] sm:$0xff]
    %v6242 = vld [vmem:[#allocation14 + $0x3f0] sm:$0xff]
    %v6243 = vld [vmem:[#allocation14 + $0x3f8] sm:$0xff]
    %v6244 = vld [vmem:[#allocation14 + $0x400] sm:$0xff]
    %v6245 = vld [vmem:[#allocation14 + $0x408] sm:$0xff]
    %v6246 = vld [vmem:[#allocation14 + $0x410] sm:$0xff]
    %v6247 = vld [vmem:[#allocation14 + $0x418] sm:$0xff]
    %v6248 = vld [vmem:[#allocation14 + $0x420] sm:$0xff]
    %v6249 = vld [vmem:[#allocation14 + $0x428] sm:$0xff]
    %v6250 = vld [vmem:[#allocation14 + $0x430] sm:$0xff]
    %v6251 = vld [vmem:[#allocation14 + $0x438] sm:$0xff]
    %v6252 = vld [vmem:[#allocation14 + $0x440] sm:$0xff]
    %v6253 = vld [vmem:[#allocation14 + $0x448] sm:$0xff]
    %v6254 = vld [vmem:[#allocation14 + $0x450] sm:$0xff]
    %v6255 = vld [vmem:[#allocation14 + $0x458] sm:$0xff]
    %v6256 = vld [vmem:[#allocation14 + $0x460] sm:$0xff]
    %v6257 = vld [vmem:[#allocation14 + $0x468] sm:$0xff]
    %v6258 = vld [vmem:[#allocation14 + $0x470] sm:$0xff]
    %v6259 = vld [vmem:[#allocation14 + $0x478] sm:$0xff]
    %v6260 = vld [vmem:[#allocation14 + $0x480] sm:$0xff]
    %v6261 = vld [vmem:[#allocation14 + $0x488] sm:$0xff]
    %v6262 = vld [vmem:[#allocation14 + $0x490] sm:$0xff]
    %v6263 = vld [vmem:[#allocation14 + $0x498] sm:$0xff]
    %v6264 = vld [vmem:[#allocation14 + $0x4a0] sm:$0xff]
    %v6265 = vld [vmem:[#allocation14 + $0x4a8] sm:$0xff]
    %v6266 = vld [vmem:[#allocation14 + $0x4b0] sm:$0xff]
    %v6267 = vld [vmem:[#allocation14 + $0x4b8] sm:$0xff]
    %v6268 = vld [vmem:[#allocation14 + $0x4c0] sm:$0xff]
    %v6269 = vld [vmem:[#allocation14 + $0x4c8] sm:$0xff]
    %v6270 = vld [vmem:[#allocation14 + $0x4d0] sm:$0xff]
    %v6271 = vld [vmem:[#allocation14 + $0x4d8] sm:$0xff]
    %v6272 = vld [vmem:[#allocation14 + $0x4e0] sm:$0xff]
    %v6273 = vld [vmem:[#allocation14 + $0x4e8] sm:$0xff]
    %v6274 = vld [vmem:[#allocation14 + $0x4f0] sm:$0xff]
    %v6275 = vld [vmem:[#allocation14 + $0x4f8] sm:$0xff]
    %v6276 = vld [vmem:[#allocation14 + $0x500] sm:$0xff]
    %v6277 = vld [vmem:[#allocation14 + $0x508] sm:$0xff]
    %v6278 = vld [vmem:[#allocation14 + $0x510] sm:$0xff]
    %v6279 = vld [vmem:[#allocation14 + $0x518] sm:$0xff]
    %v6280 = vld [vmem:[#allocation14 + $0x520] sm:$0xff]
    %v6281 = vld [vmem:[#allocation14 + $0x528] sm:$0xff]
    %v6282 = vld [vmem:[#allocation14 + $0x530] sm:$0xff]
    %v6283 = vld [vmem:[#allocation14 + $0x538] sm:$0xff]
    %v6284 = vld [vmem:[#allocation14 + $0x540] sm:$0xff]
    %v6285 = vld [vmem:[#allocation14 + $0x548] sm:$0xff]
    %v6286 = vld [vmem:[#allocation14 + $0x550] sm:$0xff]
    %v6287 = vld [vmem:[#allocation14 + $0x558] sm:$0xff]
    %v6288 = vld [vmem:[#allocation14 + $0x560] sm:$0xff]
    %v6289 = vld [vmem:[#allocation14 + $0x568] sm:$0xff]
    %v6290 = vld [vmem:[#allocation14 + $0x570] sm:$0xff]
    %v6291 = vld [vmem:[#allocation14 + $0x578] sm:$0xff]
    %v6292 = vld [vmem:[#allocation14 + $0x580] sm:$0xff]
    %v6293 = vld [vmem:[#allocation14 + $0x588] sm:$0xff]
    %v6294 = vld [vmem:[#allocation14 + $0x590] sm:$0xff]
    %v6295 = vld [vmem:[#allocation14 + $0x598] sm:$0xff]
    %v6296 = vld [vmem:[#allocation14 + $0x5a0] sm:$0xff]
    %v6297 = vld [vmem:[#allocation14 + $0x5a8] sm:$0xff]
    %v6298 = vld [vmem:[#allocation14 + $0x5b0] sm:$0xff]
    %v6299 = vld [vmem:[#allocation14 + $0x5b8] sm:$0xff]
    %v6300 = vld [vmem:[#allocation14 + $0x5c0] sm:$0xff]
    %v6301 = vld [vmem:[#allocation14 + $0x5c8] sm:$0xff]
    %v6302 = vld [vmem:[#allocation14 + $0x5d0] sm:$0xff]
    %v6303 = vld [vmem:[#allocation14 + $0x5d8] sm:$0xff]
    %v6304 = vld [vmem:[#allocation14 + $0x5e0] sm:$0xff]
    %v6305 = vld [vmem:[#allocation14 + $0x5e8] sm:$0xff]
    %v6306 = vld [vmem:[#allocation14 + $0x5f0] sm:$0xff]
    %v6307 = vld [vmem:[#allocation14 + $0x5f8] sm:$0xff]
    %v6308 = vld [vmem:[#allocation14 + $0x600] sm:$0xff]
    %v6309 = vld [vmem:[#allocation14 + $0x608] sm:$0xff]
    %v6310 = vld [vmem:[#allocation14 + $0x610] sm:$0xff]
    %v6311 = vld [vmem:[#allocation14 + $0x618] sm:$0xff]
    %v6312 = vld [vmem:[#allocation14 + $0x620] sm:$0xff]
    %v6313 = vld [vmem:[#allocation14 + $0x628] sm:$0xff]
    %v6314 = vld [vmem:[#allocation14 + $0x630] sm:$0xff]
    %v6315 = vld [vmem:[#allocation14 + $0x638] sm:$0xff]
    %v6316 = vld [vmem:[#allocation14 + $0x640] sm:$0xff]
    %v6317 = vld [vmem:[#allocation14 + $0x648] sm:$0xff]
    %v6318 = vld [vmem:[#allocation14 + $0x650] sm:$0xff]
    %v6319 = vld [vmem:[#allocation14 + $0x658] sm:$0xff]
    %v6320 = vld [vmem:[#allocation14 + $0x660] sm:$0xff]
    %v6321 = vld [vmem:[#allocation14 + $0x668] sm:$0xff]
    %v6322 = vld [vmem:[#allocation14 + $0x670] sm:$0xff]
    %v6323 = vld [vmem:[#allocation14 + $0x678] sm:$0xff]
    %v6324 = vld [vmem:[#allocation14 + $0x680] sm:$0xff]
    %v6325 = vld [vmem:[#allocation14 + $0x688] sm:$0xff]
    %v6326 = vld [vmem:[#allocation14 + $0x690] sm:$0xff]
    %v6327 = vld [vmem:[#allocation14 + $0x698] sm:$0xff]
    %v6328 = vld [vmem:[#allocation14 + $0x6a0] sm:$0xff]
    %v6329 = vld [vmem:[#allocation14 + $0x6a8] sm:$0xff]
    %v6330 = vld [vmem:[#allocation14 + $0x6b0] sm:$0xff]
    %v6331 = vld [vmem:[#allocation14 + $0x6b8] sm:$0xff]
    %v6332 = vld [vmem:[#allocation14 + $0x6c0] sm:$0xff]
    %v6333 = vld [vmem:[#allocation14 + $0x6c8] sm:$0xff]
    %v6334 = vld [vmem:[#allocation14 + $0x6d0] sm:$0xff]
    %v6335 = vld [vmem:[#allocation14 + $0x6d8] sm:$0xff]
    %v6336 = vld [vmem:[#allocation14 + $0x6e0] sm:$0xff]
    %v6337 = vld [vmem:[#allocation14 + $0x6e8] sm:$0xff]
    %v6338 = vld [vmem:[#allocation14 + $0x6f0] sm:$0xff]
    %v6339 = vld [vmem:[#allocation14 + $0x6f8] sm:$0xff]
    %v6340 = vld [vmem:[#allocation14 + $0x700] sm:$0xff]
    %v6341 = vld [vmem:[#allocation14 + $0x708] sm:$0xff]
    %v6342 = vld [vmem:[#allocation14 + $0x710] sm:$0xff]
    %v6343 = vld [vmem:[#allocation14 + $0x718] sm:$0xff]
    %v6344 = vld [vmem:[#allocation14 + $0x720] sm:$0xff]
    %v6345 = vld [vmem:[#allocation14 + $0x728] sm:$0xff]
    %v6346 = vld [vmem:[#allocation14 + $0x730] sm:$0xff]
    %v6347 = vld [vmem:[#allocation14 + $0x738] sm:$0xff]
    %v6348 = vld [vmem:[#allocation14 + $0x740] sm:$0xff]
    %v6349 = vld [vmem:[#allocation14 + $0x748] sm:$0xff]
    %v6350 = vld [vmem:[#allocation14 + $0x750] sm:$0xff]
    %v6351 = vld [vmem:[#allocation14 + $0x758] sm:$0xff]
    %v6352 = vld [vmem:[#allocation14 + $0x760] sm:$0xff]
    %v6353 = vld [vmem:[#allocation14 + $0x768] sm:$0xff]
    %v6354 = vld [vmem:[#allocation14 + $0x770] sm:$0xff]
    %v6355 = vld [vmem:[#allocation14 + $0x778] sm:$0xff]
    %v6356 = vld [vmem:[#allocation14 + $0x780] sm:$0xff]
    %v6357 = vld [vmem:[#allocation14 + $0x788] sm:$0xff]
    %v6358 = vld [vmem:[#allocation14 + $0x790] sm:$0xff]
    %v6359 = vld [vmem:[#allocation14 + $0x798] sm:$0xff]
    %v6360 = vld [vmem:[#allocation14 + $0x7a0] sm:$0xff]
    %v6361 = vld [vmem:[#allocation14 + $0x7a8] sm:$0xff]
    %v6362 = vld [vmem:[#allocation14 + $0x7b0] sm:$0xff]
    %v6363 = vld [vmem:[#allocation14 + $0x7b8] sm:$0xff]
    %v6364 = vld [vmem:[#allocation14 + $0x7c0] sm:$0xff]
    %v6365 = vld [vmem:[#allocation14 + $0x7c8] sm:$0xff]
    %v6366 = vld [vmem:[#allocation14 + $0x7d0] sm:$0xff]
    %v6367 = vld [vmem:[#allocation14 + $0x7d8] sm:$0xff]
    %v6368 = vld [vmem:[#allocation14 + $0x7e0] sm:$0xff]
    %v6369 = vld [vmem:[#allocation14 + $0x7e8] sm:$0xff]
    %v6370 = vld [vmem:[#allocation14 + $0x7f0] sm:$0xff]
    %v6371 = vld [vmem:[#allocation14 + $0x7f8] sm:$0xff]
    %v6372 = vld [vmem:[#allocation14 + $0x800] sm:$0xff]
    %v6373 = vld [vmem:[#allocation14 + $0x808] sm:$0xff]
    %v6374 = vld [vmem:[#allocation14 + $0x810] sm:$0xff]
    %v6375 = vld [vmem:[#allocation14 + $0x818] sm:$0xff]
    %v6376 = vld [vmem:[#allocation14 + $0x820] sm:$0xff]
    %v6377 = vld [vmem:[#allocation14 + $0x828] sm:$0xff]
    %v6378 = vld [vmem:[#allocation14 + $0x830] sm:$0xff]
    %v6379 = vld [vmem:[#allocation14 + $0x838] sm:$0xff]
    %v6380 = vld [vmem:[#allocation14 + $0x840] sm:$0xff]
    %v6381 = vld [vmem:[#allocation14 + $0x848] sm:$0xff]
    %v6382 = vld [vmem:[#allocation14 + $0x850] sm:$0xff]
    %v6383 = vld [vmem:[#allocation14 + $0x858] sm:$0xff]
    %v6384 = vld [vmem:[#allocation14 + $0x860] sm:$0xff]
    %v6385 = vld [vmem:[#allocation14 + $0x868] sm:$0xff]
    %v6386 = vld [vmem:[#allocation14 + $0x870] sm:$0xff]
    %v6387 = vld [vmem:[#allocation14 + $0x878] sm:$0xff]
    %v6388 = vld [vmem:[#allocation14 + $0x880] sm:$0xff]
    %v6389 = vld [vmem:[#allocation14 + $0x888] sm:$0xff]
    %v6390 = vld [vmem:[#allocation14 + $0x890] sm:$0xff]
    %v6391 = vld [vmem:[#allocation14 + $0x898] sm:$0xff]
    %v6392 = vld [vmem:[#allocation14 + $0x8a0] sm:$0xff]
    %v6393 = vld [vmem:[#allocation14 + $0x8a8] sm:$0xff]
    %v6394 = vld [vmem:[#allocation14 + $0x8b0] sm:$0xff]
    %v6395 = vld [vmem:[#allocation14 + $0x8b8] sm:$0xff]
    %v6396 = vld [vmem:[#allocation14 + $0x8c0] sm:$0xff]
    %v6397 = vld [vmem:[#allocation14 + $0x8c8] sm:$0xff]
    %v6398 = vld [vmem:[#allocation14 + $0x8d0] sm:$0xff]
    %v6399 = vld [vmem:[#allocation14 + $0x8d8] sm:$0xff]
    %v6400 = vld [vmem:[#allocation14 + $0x8e0] sm:$0xff]
    %v6401 = vld [vmem:[#allocation14 + $0x8e8] sm:$0xff]
    %v6402 = vld [vmem:[#allocation14 + $0x8f0] sm:$0xff]
    %v6403 = vld [vmem:[#allocation14 + $0x8f8] sm:$0xff]
    %v6404 = vld [vmem:[#allocation14 + $0x900] sm:$0xff]
    %v6405 = vld [vmem:[#allocation14 + $0x908] sm:$0xff]
    %v6406 = vld [vmem:[#allocation14 + $0x910] sm:$0xff]
    %v6407 = vld [vmem:[#allocation14 + $0x918] sm:$0xff]
    %v6408 = vld [vmem:[#allocation14 + $0x920] sm:$0xff]
    %v6409 = vld [vmem:[#allocation14 + $0x928] sm:$0xff]
    %v6410 = vld [vmem:[#allocation14 + $0x930] sm:$0xff]
    %v6411 = vld [vmem:[#allocation14 + $0x938] sm:$0xff]
    %v6412 = vld [vmem:[#allocation14 + $0x940] sm:$0xff]
    %v6413 = vld [vmem:[#allocation14 + $0x948] sm:$0xff]
    %v6414 = vld [vmem:[#allocation14 + $0x950] sm:$0xff]
    %v6415 = vld [vmem:[#allocation14 + $0x958] sm:$0xff]
    %v6416 = vld [vmem:[#allocation14 + $0x960] sm:$0xff]
    %v6417 = vld [vmem:[#allocation14 + $0x968] sm:$0xff]
    %v6418 = vld [vmem:[#allocation14 + $0x970] sm:$0xff]
    %v6419 = vld [vmem:[#allocation14 + $0x978] sm:$0xff]
    %v6420 = vld [vmem:[#allocation14 + $0x980] sm:$0xff]
    %v6421 = vld [vmem:[#allocation14 + $0x988] sm:$0xff]
    %v6422 = vld [vmem:[#allocation14 + $0x990] sm:$0xff]
    %v6423 = vld [vmem:[#allocation14 + $0x998] sm:$0xff]
    %v6424 = vld [vmem:[#allocation14 + $0x9a0] sm:$0xff]
    %v6425 = vld [vmem:[#allocation14 + $0x9a8] sm:$0xff]
    %v6426 = vld [vmem:[#allocation14 + $0x9b0] sm:$0xff]
    %v6427 = vld [vmem:[#allocation14 + $0x9b8] sm:$0xff]
    %v6428 = vld [vmem:[#allocation14 + $0x9c0] sm:$0xff]
    %v6429 = vld [vmem:[#allocation14 + $0x9c8] sm:$0xff]
    %v6430 = vld [vmem:[#allocation14 + $0x9d0] sm:$0xff]
    %v6431 = vld [vmem:[#allocation14 + $0x9d8] sm:$0xff]
    %v6432 = vld [vmem:[#allocation14 + $0x9e0] sm:$0xff]
    %v6433 = vld [vmem:[#allocation14 + $0x9e8] sm:$0xff]
    %v6434 = vld [vmem:[#allocation14 + $0x9f0] sm:$0xff]
    %v6435 = vld [vmem:[#allocation14 + $0x9f8] sm:$0xff]
    %v6436 = vld [vmem:[#allocation14 + $0xa00] sm:$0xff]
    %v6437 = vld [vmem:[#allocation14 + $0xa08] sm:$0xff]
    %v6438 = vld [vmem:[#allocation14 + $0xa10] sm:$0xff]
    %v6439 = vld [vmem:[#allocation14 + $0xa18] sm:$0xff]
    %v6440 = vld [vmem:[#allocation14 + $0xa20] sm:$0xff]
    %v6441 = vld [vmem:[#allocation14 + $0xa28] sm:$0xff]
    %v6442 = vld [vmem:[#allocation14 + $0xa30] sm:$0xff]
    %v6443 = vld [vmem:[#allocation14 + $0xa38] sm:$0xff]
    %v6444 = vld [vmem:[#allocation14 + $0xa40] sm:$0xff]
    %v6445 = vld [vmem:[#allocation14 + $0xa48] sm:$0xff]
    %v6446 = vld [vmem:[#allocation14 + $0xa50] sm:$0xff]
    %v6447 = vld [vmem:[#allocation14 + $0xa58] sm:$0xff]
    %v6448 = vld [vmem:[#allocation14 + $0xa60] sm:$0xff]
    %v6449 = vld [vmem:[#allocation14 + $0xa68] sm:$0xff]
    %v6450 = vld [vmem:[#allocation14 + $0xa70] sm:$0xff]
    %v6451 = vld [vmem:[#allocation14 + $0xa78] sm:$0xff]
    %v6452 = vld [vmem:[#allocation14 + $0xa80] sm:$0xff]
    %v6453 = vld [vmem:[#allocation14 + $0xa88] sm:$0xff]
    %v6454 = vld [vmem:[#allocation14 + $0xa90] sm:$0xff]
    %v6455 = vld [vmem:[#allocation14 + $0xa98] sm:$0xff]
    %v6456 = vld [vmem:[#allocation14 + $0xaa0] sm:$0xff]
    %v6457 = vld [vmem:[#allocation14 + $0xaa8] sm:$0xff]
    %v6458 = vld [vmem:[#allocation14 + $0xab0] sm:$0xff]
    %v6459 = vld [vmem:[#allocation14 + $0xab8] sm:$0xff]
    %v6460 = vld [vmem:[#allocation14 + $0xac0] sm:$0xff]
    %v6461 = vld [vmem:[#allocation14 + $0xac8] sm:$0xff]
    %v6462 = vld [vmem:[#allocation14 + $0xad0] sm:$0xff]
    %v6463 = vld [vmem:[#allocation14 + $0xad8] sm:$0xff]
    %v6464 = vld [vmem:[#allocation14 + $0xae0] sm:$0xff]
    %v6465 = vld [vmem:[#allocation14 + $0xae8] sm:$0xff]
    %v6466 = vld [vmem:[#allocation14 + $0xaf0] sm:$0xff]
    %v6467 = vld [vmem:[#allocation14 + $0xaf8] sm:$0xff]
    %v6468 = vld [vmem:[#allocation14 + $0xb00] sm:$0xff]
    %v6469 = vld [vmem:[#allocation14 + $0xb08] sm:$0xff]
    %v6470 = vld [vmem:[#allocation14 + $0xb10] sm:$0xff]
    %v6471 = vld [vmem:[#allocation14 + $0xb18] sm:$0xff]
    %v6472 = vld [vmem:[#allocation14 + $0xb20] sm:$0xff]
    %v6473 = vld [vmem:[#allocation14 + $0xb28] sm:$0xff]
    %v6474 = vld [vmem:[#allocation14 + $0xb30] sm:$0xff]
    %v6475 = vld [vmem:[#allocation14 + $0xb38] sm:$0xff]
    %v6476 = vld [vmem:[#allocation14 + $0xb40] sm:$0xff]
    %v6477 = vld [vmem:[#allocation14 + $0xb48] sm:$0xff]
    %v6478 = vld [vmem:[#allocation14 + $0xb50] sm:$0xff]
    %v6479 = vld [vmem:[#allocation14 + $0xb58] sm:$0xff]
    %v6480 = vld [vmem:[#allocation14 + $0xb60] sm:$0xff]
    %v6481 = vld [vmem:[#allocation14 + $0xb68] sm:$0xff]
    %v6482 = vld [vmem:[#allocation14 + $0xb70] sm:$0xff]
    %v6483 = vld [vmem:[#allocation14 + $0xb78] sm:$0xff]
    %v6484 = vld [vmem:[#allocation14 + $0xb80] sm:$0xff]
    %v6485 = vld [vmem:[#allocation14 + $0xb88] sm:$0xff]
    %v6486 = vld [vmem:[#allocation14 + $0xb90] sm:$0xff]
    %v6487 = vld [vmem:[#allocation14 + $0xb98] sm:$0xff]
    %v6488 = vld [vmem:[#allocation14 + $0xba0] sm:$0xff]
    %v6489 = vld [vmem:[#allocation14 + $0xba8] sm:$0xff]
    %v6490 = vld [vmem:[#allocation14 + $0xbb0] sm:$0xff]
    %v6491 = vld [vmem:[#allocation14 + $0xbb8] sm:$0xff]
    %v6492 = vld [vmem:[#allocation14 + $0xbc0] sm:$0xff]
    %v6493 = vld [vmem:[#allocation14 + $0xbc8] sm:$0xff]
    %v6494 = vld [vmem:[#allocation14 + $0xbd0] sm:$0xff]
    %v6495 = vld [vmem:[#allocation14 + $0xbd8] sm:$0xff]
    %v6496 = vld [vmem:[#allocation14 + $0xbe0] sm:$0xff]
    %v6497 = vld [vmem:[#allocation14 + $0xbe8] sm:$0xff]
    %v6498 = vld [vmem:[#allocation14 + $0xbf0] sm:$0xff]
    %v6499 = vld [vmem:[#allocation14 + $0xbf8] sm:$0xff]
    %v6500 = vld [vmem:[#allocation14 + $0xc00] sm:$0xff]
    %v6501 = vld [vmem:[#allocation14 + $0xc08] sm:$0xff]
    %v6502 = vld [vmem:[#allocation14 + $0xc10] sm:$0xff]
    %v6503 = vld [vmem:[#allocation14 + $0xc18] sm:$0xff]
    %v6504 = vld [vmem:[#allocation14 + $0xc20] sm:$0xff]
    %v6505 = vld [vmem:[#allocation14 + $0xc28] sm:$0xff]
    %v6506 = vld [vmem:[#allocation14 + $0xc30] sm:$0xff]
    %v6507 = vld [vmem:[#allocation14 + $0xc38] sm:$0xff]
    %v6508 = vld [vmem:[#allocation14 + $0xc40] sm:$0xff]
    %v6509 = vld [vmem:[#allocation14 + $0xc48] sm:$0xff]
    %v6510 = vld [vmem:[#allocation14 + $0xc50] sm:$0xff]
    %v6511 = vld [vmem:[#allocation14 + $0xc58] sm:$0xff]
    %v6512 = vld [vmem:[#allocation14 + $0xc60] sm:$0xff]
    %v6513 = vld [vmem:[#allocation14 + $0xc68] sm:$0xff]
    %v6514 = vld [vmem:[#allocation14 + $0xc70] sm:$0xff]
    %v6515 = vld [vmem:[#allocation14 + $0xc78] sm:$0xff]
    %v6516 = vld [vmem:[#allocation14 + $0xc80] sm:$0xff]
    %v6517 = vld [vmem:[#allocation14 + $0xc88] sm:$0xff]
    %v6518 = vld [vmem:[#allocation14 + $0xc90] sm:$0xff]
    %v6519 = vld [vmem:[#allocation14 + $0xc98] sm:$0xff]
    %v6520 = vld [vmem:[#allocation14 + $0xca0] sm:$0xff]
    %v6521 = vld [vmem:[#allocation14 + $0xca8] sm:$0xff]
    %v6522 = vld [vmem:[#allocation14 + $0xcb0] sm:$0xff]
    %v6523 = vld [vmem:[#allocation14 + $0xcb8] sm:$0xff]
    %v6524 = vld [vmem:[#allocation14 + $0xcc0] sm:$0xff]
    %v6525 = vld [vmem:[#allocation14 + $0xcc8] sm:$0xff]
    %v6526 = vld [vmem:[#allocation14 + $0xcd0] sm:$0xff]
    %v6527 = vld [vmem:[#allocation14 + $0xcd8] sm:$0xff]
    %v6528 = vld [vmem:[#allocation14 + $0xce0] sm:$0xff]
    %v6529 = vld [vmem:[#allocation14 + $0xce8] sm:$0xff]
    %v6530 = vld [vmem:[#allocation14 + $0xcf0] sm:$0xff]
    %v6531 = vld [vmem:[#allocation14 + $0xcf8] sm:$0xff]
    %v6532 = vld [vmem:[#allocation14 + $0xd00] sm:$0xff]
    %v6533 = vld [vmem:[#allocation14 + $0xd08] sm:$0xff]
    %v6534 = vld [vmem:[#allocation14 + $0xd10] sm:$0xff]
    %v6535 = vld [vmem:[#allocation14 + $0xd18] sm:$0xff]
    %v6536 = vld [vmem:[#allocation14 + $0xd20] sm:$0xff]
    %v6537 = vld [vmem:[#allocation14 + $0xd28] sm:$0xff]
    %v6538 = vld [vmem:[#allocation14 + $0xd30] sm:$0xff]
    %v6539 = vld [vmem:[#allocation14 + $0xd38] sm:$0xff]
    %v6540 = vld [vmem:[#allocation14 + $0xd40] sm:$0xff]
    %v6541 = vld [vmem:[#allocation14 + $0xd48] sm:$0xff]
    %v6542 = vld [vmem:[#allocation14 + $0xd50] sm:$0xff]
    %v6543 = vld [vmem:[#allocation14 + $0xd58] sm:$0xff]
    %v6544 = vld [vmem:[#allocation14 + $0xd60] sm:$0xff]
    %v6545 = vld [vmem:[#allocation14 + $0xd68] sm:$0xff]
    %v6546 = vld [vmem:[#allocation14 + $0xd70] sm:$0xff]
    %v6547 = vld [vmem:[#allocation14 + $0xd78] sm:$0xff]
    %v6548 = vld [vmem:[#allocation14 + $0xd80] sm:$0xff]
    %v6549 = vld [vmem:[#allocation14 + $0xd88] sm:$0xff]
    %v6550 = vld [vmem:[#allocation14 + $0xd90] sm:$0xff]
    %v6551 = vld [vmem:[#allocation14 + $0xd98] sm:$0xff]
    %v6552 = vld [vmem:[#allocation14 + $0xda0] sm:$0xff]
    %v6553 = vld [vmem:[#allocation14 + $0xda8] sm:$0xff]
    %v6554 = vld [vmem:[#allocation14 + $0xdb0] sm:$0xff]
    %v6555 = vld [vmem:[#allocation14 + $0xdb8] sm:$0xff]
    %v6556 = vld [vmem:[#allocation14 + $0xdc0] sm:$0xff]
    %v6557 = vld [vmem:[#allocation14 + $0xdc8] sm:$0xff]
    %v6558 = vld [vmem:[#allocation14 + $0xdd0] sm:$0xff]
    %v6559 = vld [vmem:[#allocation14 + $0xdd8] sm:$0xff]
    %v6560 = vld [vmem:[#allocation14 + $0xde0] sm:$0xff]
    %v6561 = vld [vmem:[#allocation14 + $0xde8] sm:$0xff]
    %v6562 = vld [vmem:[#allocation14 + $0xdf0] sm:$0xff]
    %v6563 = vld [vmem:[#allocation14 + $0xdf8] sm:$0xff]
    %v6564 = vld [vmem:[#allocation14 + $0xe00] sm:$0xff]
    %v6565 = vld [vmem:[#allocation14 + $0xe08] sm:$0xff]
    %v6566 = vld [vmem:[#allocation14 + $0xe10] sm:$0xff]
    %v6567 = vld [vmem:[#allocation14 + $0xe18] sm:$0xff]
    %v6568 = vld [vmem:[#allocation14 + $0xe20] sm:$0xff]
    %v6569 = vld [vmem:[#allocation14 + $0xe28] sm:$0xff]
    %v6570 = vld [vmem:[#allocation14 + $0xe30] sm:$0xff]
    %v6571 = vld [vmem:[#allocation14 + $0xe38] sm:$0xff]
    %v6572 = vld [vmem:[#allocation14 + $0xe40] sm:$0xff]
    %v6573 = vld [vmem:[#allocation14 + $0xe48] sm:$0xff]
    %v6574 = vld [vmem:[#allocation14 + $0xe50] sm:$0xff]
    %v6575 = vld [vmem:[#allocation14 + $0xe58] sm:$0xff]
    %v6576 = vld [vmem:[#allocation14 + $0xe60] sm:$0xff]
    %v6577 = vld [vmem:[#allocation14 + $0xe68] sm:$0xff]
    %v6578 = vld [vmem:[#allocation14 + $0xe70] sm:$0xff]
    %v6579 = vld [vmem:[#allocation14 + $0xe78] sm:$0xff]
    %v6580 = vld [vmem:[#allocation14 + $0xe80] sm:$0xff]
    %v6581 = vld [vmem:[#allocation14 + $0xe88] sm:$0xff]
    %v6582 = vld [vmem:[#allocation14 + $0xe90] sm:$0xff]
    %v6583 = vld [vmem:[#allocation14 + $0xe98] sm:$0xff]
    %v6584 = vld [vmem:[#allocation14 + $0xea0] sm:$0xff]
    %v6585 = vld [vmem:[#allocation14 + $0xea8] sm:$0xff]
    %v6586 = vld [vmem:[#allocation14 + $0xeb0] sm:$0xff]
    %v6587 = vld [vmem:[#allocation14 + $0xeb8] sm:$0xff]
    %v6588 = vld [vmem:[#allocation14 + $0xec0] sm:$0xff]
    %v6589 = vld [vmem:[#allocation14 + $0xec8] sm:$0xff]
    %v6590 = vld [vmem:[#allocation14 + $0xed0] sm:$0xff]
    %v6591 = vld [vmem:[#allocation14 + $0xed8] sm:$0xff]
    %v6592 = vld [vmem:[#allocation14 + $0xee0] sm:$0xff]
    %v6593 = vld [vmem:[#allocation14 + $0xee8] sm:$0xff]
    %v6594 = vld [vmem:[#allocation14 + $0xef0] sm:$0xff]
    %v6595 = vld [vmem:[#allocation14 + $0xef8] sm:$0xff]
    %v6596 = vld [vmem:[#allocation14 + $0xf00] sm:$0xff]
    %v6597 = vld [vmem:[#allocation14 + $0xf08] sm:$0xff]
    %v6598 = vld [vmem:[#allocation14 + $0xf10] sm:$0xff]
    %v6599 = vld [vmem:[#allocation14 + $0xf18] sm:$0xff]
    %v6600 = vld [vmem:[#allocation14 + $0xf20] sm:$0xff]
    %v6601 = vld [vmem:[#allocation14 + $0xf28] sm:$0xff]
    %v6602 = vld [vmem:[#allocation14 + $0xf30] sm:$0xff]
    %v6603 = vld [vmem:[#allocation14 + $0xf38] sm:$0xff]
    %v6604 = vld [vmem:[#allocation14 + $0xf40] sm:$0xff]
    %v6605 = vld [vmem:[#allocation14 + $0xf48] sm:$0xff]
    %v6606 = vld [vmem:[#allocation14 + $0xf50] sm:$0xff]
    %v6607 = vld [vmem:[#allocation14 + $0xf58] sm:$0xff]
    %v6608 = vld [vmem:[#allocation14 + $0xf60] sm:$0xff]
    %v6609 = vld [vmem:[#allocation14 + $0xf68] sm:$0xff]
    %v6610 = vld [vmem:[#allocation14 + $0xf70] sm:$0xff]
    %v6611 = vld [vmem:[#allocation14 + $0xf78] sm:$0xff]
    %v6612 = vld [vmem:[#allocation14 + $0xf80] sm:$0xff]
    %v6613 = vld [vmem:[#allocation14 + $0xf88] sm:$0xff]
    %v6614 = vld [vmem:[#allocation14 + $0xf90] sm:$0xff]
    %v6615 = vld [vmem:[#allocation14 + $0xf98] sm:$0xff]
    %v6616 = vld [vmem:[#allocation14 + $0xfa0] sm:$0xff]
    %v6617 = vld [vmem:[#allocation14 + $0xfa8] sm:$0xff]
    %v6618 = vld [vmem:[#allocation14 + $0xfb0] sm:$0xff]
    %v6619 = vld [vmem:[#allocation14 + $0xfb8] sm:$0xff]
    %v6620 = vld [vmem:[#allocation14 + $0xfc0] sm:$0xff]
    %v6621 = vld [vmem:[#allocation14 + $0xfc8] sm:$0xff]
    %v6622 = vld [vmem:[#allocation14 + $0xfd0] sm:$0xff]
    %v6623 = vld [vmem:[#allocation14 + $0xfd8] sm:$0xff]
    %v6624 = vld [vmem:[#allocation14 + $0xfe0] sm:$0xff]
    %v6625 = vld [vmem:[#allocation14 + $0xfe8] sm:$0xff]
    %v6626 = vld [vmem:[#allocation14 + $0xff0] sm:$0xff]
    %v6627 = vld [vmem:[#allocation14 + $0xff8] sm:$0xff]
    %v6628 = vld [vmem:[#allocation14 + $0x1000] sm:$0xff]
    %v6629 = vld [vmem:[#allocation14 + $0x1008] sm:$0xff]
    %v6630 = vld [vmem:[#allocation14 + $0x1010] sm:$0xff]
    %v6631 = vld [vmem:[#allocation14 + $0x1018] sm:$0xff]
    %v6632 = vld [vmem:[#allocation14 + $0x1020] sm:$0xff]
    %v6633 = vld [vmem:[#allocation14 + $0x1028] sm:$0xff]
    %v6634 = vld [vmem:[#allocation14 + $0x1030] sm:$0xff]
    %v6635 = vld [vmem:[#allocation14 + $0x1038] sm:$0xff]
    %v6636 = vld [vmem:[#allocation14 + $0x1040] sm:$0xff]
    %v6637 = vld [vmem:[#allocation14 + $0x1048] sm:$0xff]
    %v6638 = vld [vmem:[#allocation14 + $0x1050] sm:$0xff]
    %v6639 = vld [vmem:[#allocation14 + $0x1058] sm:$0xff]
    %v6640 = vld [vmem:[#allocation14 + $0x1060] sm:$0xff]
    %v6641 = vld [vmem:[#allocation14 + $0x1068] sm:$0xff]
    %v6642 = vld [vmem:[#allocation14 + $0x1070] sm:$0xff]
    %v6643 = vld [vmem:[#allocation14 + $0x1078] sm:$0xff]
    %v6644 = vld [vmem:[#allocation14 + $0x1080] sm:$0xff]
    %v6645 = vld [vmem:[#allocation14 + $0x1088] sm:$0xff]
    %v6646 = vld [vmem:[#allocation14 + $0x1090] sm:$0xff]
    %v6647 = vld [vmem:[#allocation14 + $0x1098] sm:$0xff]
    %v6648 = vld [vmem:[#allocation14 + $0x10a0] sm:$0xff]
    %v6649 = vld [vmem:[#allocation14 + $0x10a8] sm:$0xff]
    %v6650 = vld [vmem:[#allocation14 + $0x10b0] sm:$0xff]
    %v6651 = vld [vmem:[#allocation14 + $0x10b8] sm:$0xff]
    %v6652 = vld [vmem:[#allocation14 + $0x10c0] sm:$0xff]
    %v6653 = vld [vmem:[#allocation14 + $0x10c8] sm:$0xff]
    %v6654 = vld [vmem:[#allocation14 + $0x10d0] sm:$0xff]
    %v6655 = vld [vmem:[#allocation14 + $0x10d8] sm:$0xff]
    %v6656 = vld [vmem:[#allocation14 + $0x10e0] sm:$0xff]
    %v6657 = vld [vmem:[#allocation14 + $0x10e8] sm:$0xff]
    %v6658 = vld [vmem:[#allocation14 + $0x10f0] sm:$0xff]
    %v6659 = vld [vmem:[#allocation14 + $0x10f8] sm:$0xff]
    %v6660 = vld [vmem:[#allocation14 + $0x1100] sm:$0xff]
    %v6661 = vld [vmem:[#allocation14 + $0x1108] sm:$0xff]
    %v6662 = vld [vmem:[#allocation14 + $0x1110] sm:$0xff]
    %v6663 = vld [vmem:[#allocation14 + $0x1118] sm:$0xff]
    %v6664 = vld [vmem:[#allocation14 + $0x1120] sm:$0xff]
    %v6665 = vld [vmem:[#allocation14 + $0x1128] sm:$0xff]
    %v6666 = vld [vmem:[#allocation14 + $0x1130] sm:$0xff]
    %v6667 = vld [vmem:[#allocation14 + $0x1138] sm:$0xff]
    %v6668 = vld [vmem:[#allocation14 + $0x1140] sm:$0xff]
    %v6669 = vld [vmem:[#allocation14 + $0x1148] sm:$0xff]
    %v6670 = vld [vmem:[#allocation14 + $0x1150] sm:$0xff]
    %v6671 = vld [vmem:[#allocation14 + $0x1158] sm:$0xff]
    %v6672 = vld [vmem:[#allocation14 + $0x1160] sm:$0xff]
    %v6673 = vld [vmem:[#allocation14 + $0x1168] sm:$0xff]
    %v6674 = vld [vmem:[#allocation14 + $0x1170] sm:$0xff]
    %v6675 = vld [vmem:[#allocation14 + $0x1178] sm:$0xff]
    %v6676 = vld [vmem:[#allocation14 + $0x1180] sm:$0xff]
    %v6677 = vld [vmem:[#allocation14 + $0x1188] sm:$0xff]
    %v6678 = vld [vmem:[#allocation14 + $0x1190] sm:$0xff]
    %v6679 = vld [vmem:[#allocation14 + $0x1198] sm:$0xff]
    %v6680 = vld [vmem:[#allocation14 + $0x11a0] sm:$0xff]
    %v6681 = vld [vmem:[#allocation14 + $0x11a8] sm:$0xff]
    %v6682 = vld [vmem:[#allocation14 + $0x11b0] sm:$0xff]
    %v6683 = vld [vmem:[#allocation14 + $0x11b8] sm:$0xff]
    %v6684 = vld [vmem:[#allocation14 + $0x11c0] sm:$0xff]
    %v6685 = vld [vmem:[#allocation14 + $0x11c8] sm:$0xff]
    %v6686 = vld [vmem:[#allocation14 + $0x11d0] sm:$0xff]
    %v6687 = vld [vmem:[#allocation14 + $0x11d8] sm:$0xff]
    %v6688 = vld [vmem:[#allocation14 + $0x11e0] sm:$0xff]
    %v6689 = vld [vmem:[#allocation14 + $0x11e8] sm:$0xff]
    %v6690 = vld [vmem:[#allocation14 + $0x11f0] sm:$0xff]
    %v6691 = vld [vmem:[#allocation14 + $0x11f8] sm:$0xff]
    %v6692 = vld [vmem:[#allocation14 + $0x1200] sm:$0xff]
    %v6693 = vld [vmem:[#allocation14 + $0x1208] sm:$0xff]
    %v6694 = vld [vmem:[#allocation14 + $0x1210] sm:$0xff]
    %v6695 = vld [vmem:[#allocation14 + $0x1218] sm:$0xff]
    %v6696 = vld [vmem:[#allocation14 + $0x1220] sm:$0xff]
    %v6697 = vld [vmem:[#allocation14 + $0x1228] sm:$0xff]
    %v6698 = vld [vmem:[#allocation14 + $0x1230] sm:$0xff]
    %v6699 = vld [vmem:[#allocation14 + $0x1238] sm:$0xff]
    %v6700 = vld [vmem:[#allocation14 + $0x1240] sm:$0xff]
    %v6701 = vld [vmem:[#allocation14 + $0x1248] sm:$0xff]
    %v6702 = vld [vmem:[#allocation14 + $0x1250] sm:$0xff]
    %v6703 = vld [vmem:[#allocation14 + $0x1258] sm:$0xff]
    %v6704 = vld [vmem:[#allocation14 + $0x1260] sm:$0xff]
    %v6705 = vld [vmem:[#allocation14 + $0x1268] sm:$0xff]
    %v6706 = vld [vmem:[#allocation14 + $0x1270] sm:$0xff]
    %v6707 = vld [vmem:[#allocation14 + $0x1278] sm:$0xff]
    %v6708 = vld [vmem:[#allocation14 + $0x1280] sm:$0xff]
    %v6709 = vld [vmem:[#allocation14 + $0x1288] sm:$0xff]
    %v6710 = vld [vmem:[#allocation14 + $0x1290] sm:$0xff]
    %v6711 = vld [vmem:[#allocation14 + $0x1298] sm:$0xff]
    %v6712 = vld [vmem:[#allocation14 + $0x12a0] sm:$0xff]
    %v6713 = vld [vmem:[#allocation14 + $0x12a8] sm:$0xff]
    %v6714 = vld [vmem:[#allocation14 + $0x12b0] sm:$0xff]
    %v6715 = vld [vmem:[#allocation14 + $0x12b8] sm:$0xff]
    %v6716 = vld [vmem:[#allocation14 + $0x12c0] sm:$0xff]
    %v6717 = vld [vmem:[#allocation14 + $0x12c8] sm:$0xff]
    %v6718 = vld [vmem:[#allocation14 + $0x12d0] sm:$0xff]
    %v6719 = vld [vmem:[#allocation14 + $0x12d8] sm:$0xff]
    %v6720 = vld [vmem:[#allocation14 + $0x12e0] sm:$0xff]
    %v6721 = vld [vmem:[#allocation14 + $0x12e8] sm:$0xff]
    %v6722 = vld [vmem:[#allocation14 + $0x12f0] sm:$0xff]
    %v6723 = vld [vmem:[#allocation14 + $0x12f8] sm:$0xff]
    %v6724 = vld [vmem:[#allocation14 + $0x1300] sm:$0xff]
    %v6725 = vld [vmem:[#allocation14 + $0x1308] sm:$0xff]
    %v6726 = vld [vmem:[#allocation14 + $0x1310] sm:$0xff]
    %v6727 = vld [vmem:[#allocation14 + $0x1318] sm:$0xff]
    %v6728 = vld [vmem:[#allocation14 + $0x1320] sm:$0xff]
    %v6729 = vld [vmem:[#allocation14 + $0x1328] sm:$0xff]
    %v6730 = vld [vmem:[#allocation14 + $0x1330] sm:$0xff]
    %v6731 = vld [vmem:[#allocation14 + $0x1338] sm:$0xff]
    %v6732 = vld [vmem:[#allocation14 + $0x1340] sm:$0xff]
    %v6733 = vld [vmem:[#allocation14 + $0x1348] sm:$0xff]
    %v6734 = vld [vmem:[#allocation14 + $0x1350] sm:$0xff]
    %v6735 = vld [vmem:[#allocation14 + $0x1358] sm:$0xff]
    %v6736 = vld [vmem:[#allocation14 + $0x1360] sm:$0xff]
    %v6737 = vld [vmem:[#allocation14 + $0x1368] sm:$0xff]
    %v6738 = vld [vmem:[#allocation14 + $0x1370] sm:$0xff]
    %v6739 = vld [vmem:[#allocation14 + $0x1378] sm:$0xff]
    %v6740 = vld [vmem:[#allocation14 + $0x1380] sm:$0xff]
    %v6741 = vld [vmem:[#allocation14 + $0x1388] sm:$0xff]
    %v6742 = vld [vmem:[#allocation14 + $0x1390] sm:$0xff]
    %v6743 = vld [vmem:[#allocation14 + $0x1398] sm:$0xff]
    %v6744 = vld [vmem:[#allocation14 + $0x13a0] sm:$0xff]
    %v6745 = vld [vmem:[#allocation14 + $0x13a8] sm:$0xff]
    %v6746 = vld [vmem:[#allocation14 + $0x13b0] sm:$0xff]
    %v6747 = vld [vmem:[#allocation14 + $0x13b8] sm:$0xff]
    %v6748 = vld [vmem:[#allocation14 + $0x13c0] sm:$0xff]
    %v6749 = vld [vmem:[#allocation14 + $0x13c8] sm:$0xff]
    %v6750 = vld [vmem:[#allocation14 + $0x13d0] sm:$0xff]
    %v6751 = vld [vmem:[#allocation14 + $0x13d8] sm:$0xff]
    %v6752 = vld [vmem:[#allocation14 + $0x13e0] sm:$0xff]
    %v6753 = vld [vmem:[#allocation14 + $0x13e8] sm:$0xff]
    %v6754 = vld [vmem:[#allocation14 + $0x13f0] sm:$0xff]
    %v6755 = vld [vmem:[#allocation14 + $0x13f8] sm:$0xff]
    %v6756 = vld [vmem:[#allocation14 + $0x1400] sm:$0xff]
    %v6757 = vld [vmem:[#allocation14 + $0x1408] sm:$0xff]
    %v6758 = vld [vmem:[#allocation14 + $0x1410] sm:$0xff]
    %v6759 = vld [vmem:[#allocation14 + $0x1418] sm:$0xff]
    %v6760 = vld [vmem:[#allocation14 + $0x1420] sm:$0xff]
    %v6761 = vld [vmem:[#allocation14 + $0x1428] sm:$0xff]
    %v6762 = vld [vmem:[#allocation14 + $0x1430] sm:$0xff]
    %v6763 = vld [vmem:[#allocation14 + $0x1438] sm:$0xff]
    %v6764 = vld [vmem:[#allocation14 + $0x1440] sm:$0xff]
    %v6765 = vld [vmem:[#allocation14 + $0x1448] sm:$0xff]
    %v6766 = vld [vmem:[#allocation14 + $0x1450] sm:$0xff]
    %v6767 = vld [vmem:[#allocation14 + $0x1458] sm:$0xff]
    %v6768 = vld [vmem:[#allocation14 + $0x1460] sm:$0xff]
    %v6769 = vld [vmem:[#allocation14 + $0x1468] sm:$0xff]
    %v6770 = vld [vmem:[#allocation14 + $0x1470] sm:$0xff]
    %v6771 = vld [vmem:[#allocation14 + $0x1478] sm:$0xff]
    %v6772 = vld [vmem:[#allocation14 + $0x1480] sm:$0xff]
    %v6773 = vld [vmem:[#allocation14 + $0x1488] sm:$0xff]
    %v6774 = vld [vmem:[#allocation14 + $0x1490] sm:$0xff]
    %v6775 = vld [vmem:[#allocation14 + $0x1498] sm:$0xff]
    %v6776 = vld [vmem:[#allocation14 + $0x14a0] sm:$0xff]
    %v6777 = vld [vmem:[#allocation14 + $0x14a8] sm:$0xff]
    %v6778 = vld [vmem:[#allocation14 + $0x14b0] sm:$0xff]
    %v6779 = vld [vmem:[#allocation14 + $0x14b8] sm:$0xff]
    %v6780 = vld [vmem:[#allocation14 + $0x14c0] sm:$0xff]
    %v6781 = vld [vmem:[#allocation14 + $0x14c8] sm:$0xff]
    %v6782 = vld [vmem:[#allocation14 + $0x14d0] sm:$0xff]
    %v6783 = vld [vmem:[#allocation14 + $0x14d8] sm:$0xff]
    %v6784 = vld [vmem:[#allocation14 + $0x14e0] sm:$0xff]
    %v6785 = vld [vmem:[#allocation14 + $0x14e8] sm:$0xff]
    %v6786 = vld [vmem:[#allocation14 + $0x14f0] sm:$0xff]
    %v6787 = vld [vmem:[#allocation14 + $0x14f8] sm:$0xff]
    %v6788 = vld [vmem:[#allocation14 + $0x1500] sm:$0xff]
    %v6789 = vld [vmem:[#allocation14 + $0x1508] sm:$0xff]
    %v6790 = vld [vmem:[#allocation14 + $0x1510] sm:$0xff]
    %v6791 = vld [vmem:[#allocation14 + $0x1518] sm:$0xff]
    %v6792 = vld [vmem:[#allocation14 + $0x1520] sm:$0xff]
    %v6793 = vld [vmem:[#allocation14 + $0x1528] sm:$0xff]
    %v6794 = vld [vmem:[#allocation14 + $0x1530] sm:$0xff]
    %v6795 = vld [vmem:[#allocation14 + $0x1538] sm:$0xff]
    %v6796 = vld [vmem:[#allocation14 + $0x1540] sm:$0xff]
    %v6797 = vld [vmem:[#allocation14 + $0x1548] sm:$0xff]
    %v6798 = vld [vmem:[#allocation14 + $0x1550] sm:$0xff]
    %v6799 = vld [vmem:[#allocation14 + $0x1558] sm:$0xff]
    %v6800 = vld [vmem:[#allocation14 + $0x1560] sm:$0xff]
    %v6801 = vld [vmem:[#allocation14 + $0x1568] sm:$0xff]
    %v6802 = vld [vmem:[#allocation14 + $0x1570] sm:$0xff]
    %v6803 = vld [vmem:[#allocation14 + $0x1578] sm:$0xff]
    %v6804 = vld [vmem:[#allocation14 + $0x1580] sm:$0xff]
    %v6805 = vld [vmem:[#allocation14 + $0x1588] sm:$0xff]
    %v6806 = vld [vmem:[#allocation14 + $0x1590] sm:$0xff]
    %v6807 = vld [vmem:[#allocation14 + $0x1598] sm:$0xff]
    %v6808 = vld [vmem:[#allocation14 + $0x15a0] sm:$0xff]
    %v6809 = vld [vmem:[#allocation14 + $0x15a8] sm:$0xff]
    %v6810 = vld [vmem:[#allocation14 + $0x15b0] sm:$0xff]
    %v6811 = vld [vmem:[#allocation14 + $0x15b8] sm:$0xff]
    %v6812 = vld [vmem:[#allocation14 + $0x15c0] sm:$0xff]
    %v6813 = vld [vmem:[#allocation14 + $0x15c8] sm:$0xff]
    %v6814 = vld [vmem:[#allocation14 + $0x15d0] sm:$0xff]
    %v6815 = vld [vmem:[#allocation14 + $0x15d8] sm:$0xff]
    %v6816 = vld [vmem:[#allocation14 + $0x15e0] sm:$0xff]
    %v6817 = vld [vmem:[#allocation14 + $0x15e8] sm:$0xff]
    %v6818 = vld [vmem:[#allocation14 + $0x15f0] sm:$0xff]
    %v6819 = vld [vmem:[#allocation14 + $0x15f8] sm:$0xff]
    %v6820 = vld [vmem:[#allocation14 + $0x1600] sm:$0xff]
    %v6821 = vld [vmem:[#allocation14 + $0x1608] sm:$0xff]
    %v6822 = vld [vmem:[#allocation14 + $0x1610] sm:$0xff]
    %v6823 = vld [vmem:[#allocation14 + $0x1618] sm:$0xff]
    %v6824 = vld [vmem:[#allocation14 + $0x1620] sm:$0xff]
    %v6825 = vld [vmem:[#allocation14 + $0x1628] sm:$0xff]
    %v6826 = vld [vmem:[#allocation14 + $0x1630] sm:$0xff]
    %v6827 = vld [vmem:[#allocation14 + $0x1638] sm:$0xff]
    %v6828 = vld [vmem:[#allocation14 + $0x1640] sm:$0xff]
    %v6829 = vld [vmem:[#allocation14 + $0x1648] sm:$0xff]
    %v6830 = vld [vmem:[#allocation14 + $0x1650] sm:$0xff]
    %v6831 = vld [vmem:[#allocation14 + $0x1658] sm:$0xff]
    %v6832 = vld [vmem:[#allocation14 + $0x1660] sm:$0xff]
    %v6833 = vld [vmem:[#allocation14 + $0x1668] sm:$0xff]
    %v6834 = vld [vmem:[#allocation14 + $0x1670] sm:$0xff]
    %v6835 = vld [vmem:[#allocation14 + $0x1678] sm:$0xff]
    %v6836 = vld [vmem:[#allocation14 + $0x1680] sm:$0xff]
    %v6837 = vld [vmem:[#allocation14 + $0x1688] sm:$0xff]
    %v6838 = vld [vmem:[#allocation14 + $0x1690] sm:$0xff]
    %v6839 = vld [vmem:[#allocation14 + $0x1698] sm:$0xff]
    %v6840 = vld [vmem:[#allocation14 + $0x16a0] sm:$0xff]
    %v6841 = vld [vmem:[#allocation14 + $0x16a8] sm:$0xff]
    %v6842 = vld [vmem:[#allocation14 + $0x16b0] sm:$0xff]
    %v6843 = vld [vmem:[#allocation14 + $0x16b8] sm:$0xff]
    %v6844 = vld [vmem:[#allocation14 + $0x16c0] sm:$0xff]
    %v6845 = vld [vmem:[#allocation14 + $0x16c8] sm:$0xff]
    %v6846 = vld [vmem:[#allocation14 + $0x16d0] sm:$0xff]
    %v6847 = vld [vmem:[#allocation14 + $0x16d8] sm:$0xff]
    %v6848 = vld [vmem:[#allocation14 + $0x16e0] sm:$0xff]
    %v6849 = vld [vmem:[#allocation14 + $0x16e8] sm:$0xff]
    %v6850 = vld [vmem:[#allocation14 + $0x16f0] sm:$0xff]
    %v6851 = vld [vmem:[#allocation14 + $0x16f8] sm:$0xff]
    %v6852 = vld [vmem:[#allocation14 + $0x1700] sm:$0xff]
    %v6853 = vld [vmem:[#allocation14 + $0x1708] sm:$0xff]
    %v6854 = vld [vmem:[#allocation14 + $0x1710] sm:$0xff]
    %v6855 = vld [vmem:[#allocation14 + $0x1718] sm:$0xff]
    %v6856 = vld [vmem:[#allocation14 + $0x1720] sm:$0xff]
    %v6857 = vld [vmem:[#allocation14 + $0x1728] sm:$0xff]
    %v6858 = vld [vmem:[#allocation14 + $0x1730] sm:$0xff]
    %v6859 = vld [vmem:[#allocation14 + $0x1738] sm:$0xff]
    %v6860 = vld [vmem:[#allocation14 + $0x1740] sm:$0xff]
    %v6861 = vld [vmem:[#allocation14 + $0x1748] sm:$0xff]
    %v6862 = vld [vmem:[#allocation14 + $0x1750] sm:$0xff]
    %v6863 = vld [vmem:[#allocation14 + $0x1758] sm:$0xff]
    %v6864 = vld [vmem:[#allocation14 + $0x1760] sm:$0xff]
    %v6865 = vld [vmem:[#allocation14 + $0x1768] sm:$0xff]
    %v6866 = vld [vmem:[#allocation14 + $0x1770] sm:$0xff]
    %v6867 = vld [vmem:[#allocation14 + $0x1778] sm:$0xff]
    %v6868 = vld [vmem:[#allocation14 + $0x1780] sm:$0xff]
    %v6869 = vld [vmem:[#allocation14 + $0x1788] sm:$0xff]
    %v6870 = vld [vmem:[#allocation14 + $0x1790] sm:$0xff]
    %v6871 = vld [vmem:[#allocation14 + $0x1798] sm:$0xff]
    %v6872 = vld [vmem:[#allocation14 + $0x17a0] sm:$0xff]
    %v6873 = vld [vmem:[#allocation14 + $0x17a8] sm:$0xff]
    %v6874 = vld [vmem:[#allocation14 + $0x17b0] sm:$0xff]
    %v6875 = vld [vmem:[#allocation14 + $0x17b8] sm:$0xff]
    %v6876 = vld [vmem:[#allocation14 + $0x17c0] sm:$0xff]
    %v6877 = vld [vmem:[#allocation14 + $0x17c8] sm:$0xff]
    %v6878 = vld [vmem:[#allocation14 + $0x17d0] sm:$0xff]
    %v6879 = vld [vmem:[#allocation14 + $0x17d8] sm:$0xff]
    %v6880 = vld [vmem:[#allocation14 + $0x17e0] sm:$0xff]
    %v6881 = vld [vmem:[#allocation14 + $0x17e8] sm:$0xff]
    %v6882 = vld [vmem:[#allocation14 + $0x17f0] sm:$0xff]
    %v6883 = vld [vmem:[#allocation14 + $0x17f8] sm:$0xff]
    %v6884 = vld [vmem:[#allocation16] sm:$0x7]
    %v6886 = vperm.slane %v6884, 0
    %v6887 = vperm.slane %v6884, 1
    %v6888 = vperm.slane %v6884, 2
    %6892 = vmatpush.msra.mxu0 %v6161
    %6893 = vmatpush.msra.mxu0 %v6158
    %6894 = vmatpush.msra.mxu0 %v6155
    %6895 = vmatpush.msra.mxu0 %v6152
    %6896 = vmatpush.msra.mxu0 %v6149
    %6897 = vmatpush.msra.mxu0 %v6146
    %6898 = vmatpush.msra.mxu0 %v6143
    %6899 = vmatpush.msra.mxu0 %v6140
    %6900 = vmatpush.msra.mxu0 %v6137
    %6901 = vmatpush.msra.mxu0 %v6134
    %6902 = vmatpush.msra.mxu0 %v6131
    %6903 = vmatpush.msra.mxu0 %v6128
    %6904 = vmatpush.msra.mxu0 %v6125
    %6905 = vmatpush.msra.mxu0 %v6122
    %6906 = vmatpush.msra.mxu0 %v6119
    %6907 = vmatpush.msra.mxu0 %v6116
    %6908 = vmatmul.f32.gmra.mxu0 %v6100
    %v6909 = vpop.f32.mrf.mxu0
    %v6910 = vadd.f32 %v6886, %v6909
    %6911 = vdwg.mxu0
    %6912 = vmatpush.msra.mxu0 %v6209
    %6913 = vmatpush.msra.mxu0 %v6206
    %6914 = vmatpush.msra.mxu0 %v6203
    %6915 = vmatpush.msra.mxu0 %v6200
    %6916 = vmatpush.msra.mxu0 %v6197
    %6917 = vmatpush.msra.mxu0 %v6194
    %6918 = vmatpush.msra.mxu0 %v6191
    %6919 = vmatpush.msra.mxu0 %v6188
    %6920 = vmatpush.msra.mxu0 %v6185
    %6921 = vmatpush.msra.mxu0 %v6182
    %6922 = vmatpush.msra.mxu0 %v6179
    %6923 = vmatpush.msra.mxu0 %v6176
    %6924 = vmatpush.msra.mxu0 %v6173
    %6925 = vmatpush.msra.mxu0 %v6170
    %6926 = vmatpush.msra.mxu0 %v6167
    %6927 = vmatpush.msra.mxu0 %v6164
    %6928 = vmatmul.f32.gmra.mxu0 %v6101
    %v6929 = vpop.f32.mrf.mxu0
    %v6930 = vadd.f32 %v6910, %v6929
    %6931 = vdwg.mxu0
    %6932 = vmatpush.msra.mxu0 %v6257
    %6933 = vmatpush.msra.mxu0 %v6254
    %6934 = vmatpush.msra.mxu0 %v6251
    %6935 = vmatpush.msra.mxu0 %v6248
    %6936 = vmatpush.msra.mxu0 %v6245
    %6937 = vmatpush.msra.mxu0 %v6242
    %6938 = vmatpush.msra.mxu0 %v6239
    %6939 = vmatpush.msra.mxu0 %v6236
    %6940 = vmatpush.msra.mxu0 %v6233
    %6941 = vmatpush.msra.mxu0 %v6230
    %6942 = vmatpush.msra.mxu0 %v6227
    %6943 = vmatpush.msra.mxu0 %v6224
    %6944 = vmatpush.msra.mxu0 %v6221
    %6945 = vmatpush.msra.mxu0 %v6218
    %6946 = vmatpush.msra.mxu0 %v6215
    %6947 = vmatpush.msra.mxu0 %v6212
    %6948 = vmatmul.f32.gmra.mxu0 %v6102
    %v6949 = vpop.f32.mrf.mxu0
    %v6950 = vadd.f32 %v6930, %v6949
    %6951 = vdwg.mxu0
    %6952 = vmatpush.msra.mxu0 %v6305
    %6953 = vmatpush.msra.mxu0 %v6302
    %6954 = vmatpush.msra.mxu0 %v6299
    %6955 = vmatpush.msra.mxu0 %v6296
    %6956 = vmatpush.msra.mxu0 %v6293
    %6957 = vmatpush.msra.mxu0 %v6290
    %6958 = vmatpush.msra.mxu0 %v6287
    %6959 = vmatpush.msra.mxu0 %v6284
    %6960 = vmatpush.msra.mxu0 %v6281
    %6961 = vmatpush.msra.mxu0 %v6278
    %6962 = vmatpush.msra.mxu0 %v6275
    %6963 = vmatpush.msra.mxu0 %v6272
    %6964 = vmatpush.msra.mxu0 %v6269
    %6965 = vmatpush.msra.mxu0 %v6266
    %6966 = vmatpush.msra.mxu0 %v6263
    %6967 = vmatpush.msra.mxu0 %v6260
    %6968 = vmatmul.f32.gmra.mxu0 %v6103
    %v6969 = vpop.f32.mrf.mxu0
    %v6970 = vadd.f32 %v6950, %v6969
    %6971 = vdwg.mxu0
    %6972 = vmatpush.msra.mxu0 %v6353
    %6973 = vmatpush.msra.mxu0 %v6350
    %6974 = vmatpush.msra.mxu0 %v6347
    %6975 = vmatpush.msra.mxu0 %v6344
    %6976 = vmatpush.msra.mxu0 %v6341
    %6977 = vmatpush.msra.mxu0 %v6338
    %6978 = vmatpush.msra.mxu0 %v6335
    %6979 = vmatpush.msra.mxu0 %v6332
    %6980 = vmatpush.msra.mxu0 %v6329
    %6981 = vmatpush.msra.mxu0 %v6326
    %6982 = vmatpush.msra.mxu0 %v6323
    %6983 = vmatpush.msra.mxu0 %v6320
    %6984 = vmatpush.msra.mxu0 %v6317
    %6985 = vmatpush.msra.mxu0 %v6314
    %6986 = vmatpush.msra.mxu0 %v6311
    %6987 = vmatpush.msra.mxu0 %v6308
    %6988 = vmatmul.f32.gmra.mxu0 %v6104
    %v6989 = vpop.f32.mrf.mxu0
    %v6990 = vadd.f32 %v6970, %v6989
    %6991 = vdwg.mxu0
    %6992 = vmatpush.msra.mxu0 %v6401
    %6993 = vmatpush.msra.mxu0 %v6398
    %6994 = vmatpush.msra.mxu0 %v6395
    %6995 = vmatpush.msra.mxu0 %v6392
    %6996 = vmatpush.msra.mxu0 %v6389
    %6997 = vmatpush.msra.mxu0 %v6386
    %6998 = vmatpush.msra.mxu0 %v6383
    %6999 = vmatpush.msra.mxu0 %v6380
    %7000 = vmatpush.msra.mxu0 %v6377
    %7001 = vmatpush.msra.mxu0 %v6374
    %7002 = vmatpush.msra.mxu0 %v6371
    %7003 = vmatpush.msra.mxu0 %v6368
    %7004 = vmatpush.msra.mxu0 %v6365
    %7005 = vmatpush.msra.mxu0 %v6362
    %7006 = vmatpush.msra.mxu0 %v6359
    %7007 = vmatpush.msra.mxu0 %v6356
    %7008 = vmatmul.f32.gmra.mxu0 %v6105
    %v7009 = vpop.f32.mrf.mxu0
    %v7010 = vadd.f32 %v6990, %v7009
    %7011 = vdwg.mxu0
    %7012 = vmatpush.msra.mxu0 %v6449
    %7013 = vmatpush.msra.mxu0 %v6446
    %7014 = vmatpush.msra.mxu0 %v6443
    %7015 = vmatpush.msra.mxu0 %v6440
    %7016 = vmatpush.msra.mxu0 %v6437
    %7017 = vmatpush.msra.mxu0 %v6434
    %7018 = vmatpush.msra.mxu0 %v6431
    %7019 = vmatpush.msra.mxu0 %v6428
    %7020 = vmatpush.msra.mxu0 %v6425
    %7021 = vmatpush.msra.mxu0 %v6422
    %7022 = vmatpush.msra.mxu0 %v6419
    %7023 = vmatpush.msra.mxu0 %v6416
    %7024 = vmatpush.msra.mxu0 %v6413
    %7025 = vmatpush.msra.mxu0 %v6410
    %7026 = vmatpush.msra.mxu0 %v6407
    %7027 = vmatpush.msra.mxu0 %v6404
    %7028 = vmatmul.f32.gmra.mxu0 %v6106
    %v7029 = vpop.f32.mrf.mxu0
    %v7030 = vadd.f32 %v7010, %v7029
    %7031 = vdwg.mxu0
    %7032 = vmatpush.msra.mxu0 %v6497
    %7033 = vmatpush.msra.mxu0 %v6494
    %7034 = vmatpush.msra.mxu0 %v6491
    %7035 = vmatpush.msra.mxu0 %v6488
    %7036 = vmatpush.msra.mxu0 %v6485
    %7037 = vmatpush.msra.mxu0 %v6482
    %7038 = vmatpush.msra.mxu0 %v6479
    %7039 = vmatpush.msra.mxu0 %v6476
    %7040 = vmatpush.msra.mxu0 %v6473
    %7041 = vmatpush.msra.mxu0 %v6470
    %7042 = vmatpush.msra.mxu0 %v6467
    %7043 = vmatpush.msra.mxu0 %v6464
    %7044 = vmatpush.msra.mxu0 %v6461
    %7045 = vmatpush.msra.mxu0 %v6458
    %7046 = vmatpush.msra.mxu0 %v6455
    %7047 = vmatpush.msra.mxu0 %v6452
    %7048 = vmatmul.f32.gmra.mxu0 %v6107
    %v7049 = vpop.f32.mrf.mxu0
    %v7050 = vadd.f32 %v7030, %v7049
    %7051 = vdwg.mxu0
    %7052 = vmatpush.msra.mxu0 %v6545
    %7053 = vmatpush.msra.mxu0 %v6542
    %7054 = vmatpush.msra.mxu0 %v6539
    %7055 = vmatpush.msra.mxu0 %v6536
    %7056 = vmatpush.msra.mxu0 %v6533
    %7057 = vmatpush.msra.mxu0 %v6530
    %7058 = vmatpush.msra.mxu0 %v6527
    %7059 = vmatpush.msra.mxu0 %v6524
    %7060 = vmatpush.msra.mxu0 %v6521
    %7061 = vmatpush.msra.mxu0 %v6518
    %7062 = vmatpush.msra.mxu0 %v6515
    %7063 = vmatpush.msra.mxu0 %v6512
    %7064 = vmatpush.msra.mxu0 %v6509
    %7065 = vmatpush.msra.mxu0 %v6506
    %7066 = vmatpush.msra.mxu0 %v6503
    %7067 = vmatpush.msra.mxu0 %v6500
    %7068 = vmatmul.f32.gmra.mxu0 %v6108
    %v7069 = vpop.f32.mrf.mxu0
    %v7070 = vadd.f32 %v7050, %v7069
    %7071 = vdwg.mxu0
    %7072 = vmatpush.msra.mxu0 %v6593
    %7073 = vmatpush.msra.mxu0 %v6590
    %7074 = vmatpush.msra.mxu0 %v6587
    %7075 = vmatpush.msra.mxu0 %v6584
    %7076 = vmatpush.msra.mxu0 %v6581
    %7077 = vmatpush.msra.mxu0 %v6578
    %7078 = vmatpush.msra.mxu0 %v6575
    %7079 = vmatpush.msra.mxu0 %v6572
    %7080 = vmatpush.msra.mxu0 %v6569
    %7081 = vmatpush.msra.mxu0 %v6566
    %7082 = vmatpush.msra.mxu0 %v6563
    %7083 = vmatpush.msra.mxu0 %v6560
    %7084 = vmatpush.msra.mxu0 %v6557
    %7085 = vmatpush.msra.mxu0 %v6554
    %7086 = vmatpush.msra.mxu0 %v6551
    %7087 = vmatpush.msra.mxu0 %v6548
    %7088 = vmatmul.f32.gmra.mxu0 %v6109
    %v7089 = vpop.f32.mrf.mxu0
    %v7090 = vadd.f32 %v7070, %v7089
    %7091 = vdwg.mxu0
    %7092 = vmatpush.msra.mxu0 %v6641
    %7093 = vmatpush.msra.mxu0 %v6638
    %7094 = vmatpush.msra.mxu0 %v6635
    %7095 = vmatpush.msra.mxu0 %v6632
    %7096 = vmatpush.msra.mxu0 %v6629
    %7097 = vmatpush.msra.mxu0 %v6626
    %7098 = vmatpush.msra.mxu0 %v6623
    %7099 = vmatpush.msra.mxu0 %v6620
    %7100 = vmatpush.msra.mxu0 %v6617
    %7101 = vmatpush.msra.mxu0 %v6614
    %7102 = vmatpush.msra.mxu0 %v6611
    %7103 = vmatpush.msra.mxu0 %v6608
    %7104 = vmatpush.msra.mxu0 %v6605
    %7105 = vmatpush.msra.mxu0 %v6602
    %7106 = vmatpush.msra.mxu0 %v6599
    %7107 = vmatpush.msra.mxu0 %v6596
    %7108 = vmatmul.f32.gmra.mxu0 %v6110
    %v7109 = vpop.f32.mrf.mxu0
    %v7110 = vadd.f32 %v7090, %v7109
    %7111 = vdwg.mxu0
    %7112 = vmatpush.msra.mxu0 %v6689
    %7113 = vmatpush.msra.mxu0 %v6686
    %7114 = vmatpush.msra.mxu0 %v6683
    %7115 = vmatpush.msra.mxu0 %v6680
    %7116 = vmatpush.msra.mxu0 %v6677
    %7117 = vmatpush.msra.mxu0 %v6674
    %7118 = vmatpush.msra.mxu0 %v6671
    %7119 = vmatpush.msra.mxu0 %v6668
    %7120 = vmatpush.msra.mxu0 %v6665
    %7121 = vmatpush.msra.mxu0 %v6662
    %7122 = vmatpush.msra.mxu0 %v6659
    %7123 = vmatpush.msra.mxu0 %v6656
    %7124 = vmatpush.msra.mxu0 %v6653
    %7125 = vmatpush.msra.mxu0 %v6650
    %7126 = vmatpush.msra.mxu0 %v6647
    %7127 = vmatpush.msra.mxu0 %v6644
    %7128 = vmatmul.f32.gmra.mxu0 %v6111
    %v7129 = vpop.f32.mrf.mxu0
    %v7130 = vadd.f32 %v7110, %v7129
    %7131 = vdwg.mxu0
    %7132 = vmatpush.msra.mxu0 %v6737
    %7133 = vmatpush.msra.mxu0 %v6734
    %7134 = vmatpush.msra.mxu0 %v6731
    %7135 = vmatpush.msra.mxu0 %v6728
    %7136 = vmatpush.msra.mxu0 %v6725
    %7137 = vmatpush.msra.mxu0 %v6722
    %7138 = vmatpush.msra.mxu0 %v6719
    %7139 = vmatpush.msra.mxu0 %v6716
    %7140 = vmatpush.msra.mxu0 %v6713
    %7141 = vmatpush.msra.mxu0 %v6710
    %7142 = vmatpush.msra.mxu0 %v6707
    %7143 = vmatpush.msra.mxu0 %v6704
    %7144 = vmatpush.msra.mxu0 %v6701
    %7145 = vmatpush.msra.mxu0 %v6698
    %7146 = vmatpush.msra.mxu0 %v6695
    %7147 = vmatpush.msra.mxu0 %v6692
    %7148 = vmatmul.f32.gmra.mxu0 %v6112
    %v7149 = vpop.f32.mrf.mxu0
    %v7150 = vadd.f32 %v7130, %v7149
    %7151 = vdwg.mxu0
    %7152 = vmatpush.msra.mxu0 %v6785
    %7153 = vmatpush.msra.mxu0 %v6782
    %7154 = vmatpush.msra.mxu0 %v6779
    %7155 = vmatpush.msra.mxu0 %v6776
    %7156 = vmatpush.msra.mxu0 %v6773
    %7157 = vmatpush.msra.mxu0 %v6770
    %7158 = vmatpush.msra.mxu0 %v6767
    %7159 = vmatpush.msra.mxu0 %v6764
    %7160 = vmatpush.msra.mxu0 %v6761
    %7161 = vmatpush.msra.mxu0 %v6758
    %7162 = vmatpush.msra.mxu0 %v6755
    %7163 = vmatpush.msra.mxu0 %v6752
    %7164 = vmatpush.msra.mxu0 %v6749
    %7165 = vmatpush.msra.mxu0 %v6746
    %7166 = vmatpush.msra.mxu0 %v6743
    %7167 = vmatpush.msra.mxu0 %v6740
    %7168 = vmatmul.f32.gmra.mxu0 %v6113
    %v7169 = vpop.f32.mrf.mxu0
    %v7170 = vadd.f32 %v7150, %v7169
    %7171 = vdwg.mxu0
    %7172 = vmatpush.msra.mxu0 %v6833
    %7173 = vmatpush.msra.mxu0 %v6830
    %7174 = vmatpush.msra.mxu0 %v6827
    %7175 = vmatpush.msra.mxu0 %v6824
    %7176 = vmatpush.msra.mxu0 %v6821
    %7177 = vmatpush.msra.mxu0 %v6818
    %7178 = vmatpush.msra.mxu0 %v6815
    %7179 = vmatpush.msra.mxu0 %v6812
    %7180 = vmatpush.msra.mxu0 %v6809
    %7181 = vmatpush.msra.mxu0 %v6806
    %7182 = vmatpush.msra.mxu0 %v6803
    %7183 = vmatpush.msra.mxu0 %v6800
    %7184 = vmatpush.msra.mxu0 %v6797
    %7185 = vmatpush.msra.mxu0 %v6794
    %7186 = vmatpush.msra.mxu0 %v6791
    %7187 = vmatpush.msra.mxu0 %v6788
    %7188 = vmatmul.f32.gmra.mxu0 %v6114
    %v7189 = vpop.f32.mrf.mxu0
    %v7190 = vadd.f32 %v7170, %v7189
    %7191 = vdwg.mxu0
    %7192 = vmatpush.msra.mxu0 %v6881
    %7193 = vmatpush.msra.mxu0 %v6878
    %7194 = vmatpush.msra.mxu0 %v6875
    %7195 = vmatpush.msra.mxu0 %v6872
    %7196 = vmatpush.msra.mxu0 %v6869
    %7197 = vmatpush.msra.mxu0 %v6866
    %7198 = vmatpush.msra.mxu0 %v6863
    %7199 = vmatpush.msra.mxu0 %v6860
    %7200 = vmatpush.msra.mxu0 %v6857
    %7201 = vmatpush.msra.mxu0 %v6854
    %7202 = vmatpush.msra.mxu0 %v6851
    %7203 = vmatpush.msra.mxu0 %v6848
    %7204 = vmatpush.msra.mxu0 %v6845
    %7205 = vmatpush.msra.mxu0 %v6842
    %7206 = vmatpush.msra.mxu0 %v6839
    %7207 = vmatpush.msra.mxu0 %v6836
    %7208 = vmatmul.f32.gmra.mxu0 %v6115
    %v7209 = vpop.f32.mrf.mxu0
    %v7210 = vadd.f32 %v7190, %v7209
    %7211 = vdwg.mxu0
    %7212 = vmatpush.msra.mxu0 %v6162
    %7213 = vmatpush.msra.mxu0 %v6159
    %7214 = vmatpush.msra.mxu0 %v6156
    %7215 = vmatpush.msra.mxu0 %v6153
    %7216 = vmatpush.msra.mxu0 %v6150
    %7217 = vmatpush.msra.mxu0 %v6147
    %7218 = vmatpush.msra.mxu0 %v6144
    %7219 = vmatpush.msra.mxu0 %v6141
    %7220 = vmatpush.msra.mxu0 %v6138
    %7221 = vmatpush.msra.mxu0 %v6135
    %7222 = vmatpush.msra.mxu0 %v6132
    %7223 = vmatpush.msra.mxu0 %v6129
    %7224 = vmatpush.msra.mxu0 %v6126
    %7225 = vmatpush.msra.mxu0 %v6123
    %7226 = vmatpush.msra.mxu0 %v6120
    %7227 = vmatpush.msra.mxu0 %v6117
    %7228 = vmatmul.f32.gmra.mxu0 %v6100
    %v7229 = vpop.f32.mrf.mxu0
    %v7230 = vadd.f32 %v6887, %v7229
    %7231 = vdwg.mxu0
    %7232 = vmatpush.msra.mxu0 %v6210
    %7233 = vmatpush.msra.mxu0 %v6207
    %7234 = vmatpush.msra.mxu0 %v6204
    %7235 = vmatpush.msra.mxu0 %v6201
    %7236 = vmatpush.msra.mxu0 %v6198
    %7237 = vmatpush.msra.mxu0 %v6195
    %7238 = vmatpush.msra.mxu0 %v6192
    %7239 = vmatpush.msra.mxu0 %v6189
    %7240 = vmatpush.msra.mxu0 %v6186
    %7241 = vmatpush.msra.mxu0 %v6183
    %7242 = vmatpush.msra.mxu0 %v6180
    %7243 = vmatpush.msra.mxu0 %v6177
    %7244 = vmatpush.msra.mxu0 %v6174
    %7245 = vmatpush.msra.mxu0 %v6171
    %7246 = vmatpush.msra.mxu0 %v6168
    %7247 = vmatpush.msra.mxu0 %v6165
    %7248 = vmatmul.f32.gmra.mxu0 %v6101
    %v7249 = vpop.f32.mrf.mxu0
    %v7250 = vadd.f32 %v7230, %v7249
    %7251 = vdwg.mxu0
    %7252 = vmatpush.msra.mxu0 %v6258
    %7253 = vmatpush.msra.mxu0 %v6255
    %7254 = vmatpush.msra.mxu0 %v6252
    %7255 = vmatpush.msra.mxu0 %v6249
    %7256 = vmatpush.msra.mxu0 %v6246
    %7257 = vmatpush.msra.mxu0 %v6243
    %7258 = vmatpush.msra.mxu0 %v6240
    %7259 = vmatpush.msra.mxu0 %v6237
    %7260 = vmatpush.msra.mxu0 %v6234
    %7261 = vmatpush.msra.mxu0 %v6231
    %7262 = vmatpush.msra.mxu0 %v6228
    %7263 = vmatpush.msra.mxu0 %v6225
    %7264 = vmatpush.msra.mxu0 %v6222
    %7265 = vmatpush.msra.mxu0 %v6219
    %7266 = vmatpush.msra.mxu0 %v6216
    %7267 = vmatpush.msra.mxu0 %v6213
    %7268 = vmatmul.f32.gmra.mxu0 %v6102
    %v7269 = vpop.f32.mrf.mxu0
    %v7270 = vadd.f32 %v7250, %v7269
    %7271 = vdwg.mxu0
    %7272 = vmatpush.msra.mxu0 %v6306
    %7273 = vmatpush.msra.mxu0 %v6303
    %7274 = vmatpush.msra.mxu0 %v6300
    %7275 = vmatpush.msra.mxu0 %v6297
    %7276 = vmatpush.msra.mxu0 %v6294
    %7277 = vmatpush.msra.mxu0 %v6291
    %7278 = vmatpush.msra.mxu0 %v6288
    %7279 = vmatpush.msra.mxu0 %v6285
    %7280 = vmatpush.msra.mxu0 %v6282
    %7281 = vmatpush.msra.mxu0 %v6279
    %7282 = vmatpush.msra.mxu0 %v6276
    %7283 = vmatpush.msra.mxu0 %v6273
    %7284 = vmatpush.msra.mxu0 %v6270
    %7285 = vmatpush.msra.mxu0 %v6267
    %7286 = vmatpush.msra.mxu0 %v6264
    %7287 = vmatpush.msra.mxu0 %v6261
    %7288 = vmatmul.f32.gmra.mxu0 %v6103
    %v7289 = vpop.f32.mrf.mxu0
    %v7290 = vadd.f32 %v7270, %v7289
    %7291 = vdwg.mxu0
    %7292 = vmatpush.msra.mxu0 %v6354
    %7293 = vmatpush.msra.mxu0 %v6351
    %7294 = vmatpush.msra.mxu0 %v6348
    %7295 = vmatpush.msra.mxu0 %v6345
    %7296 = vmatpush.msra.mxu0 %v6342
    %7297 = vmatpush.msra.mxu0 %v6339
    %7298 = vmatpush.msra.mxu0 %v6336
    %7299 = vmatpush.msra.mxu0 %v6333
    %7300 = vmatpush.msra.mxu0 %v6330
    %7301 = vmatpush.msra.mxu0 %v6327
    %7302 = vmatpush.msra.mxu0 %v6324
    %7303 = vmatpush.msra.mxu0 %v6321
    %7304 = vmatpush.msra.mxu0 %v6318
    %7305 = vmatpush.msra.mxu0 %v6315
    %7306 = vmatpush.msra.mxu0 %v6312
    %7307 = vmatpush.msra.mxu0 %v6309
    %7308 = vmatmul.f32.gmra.mxu0 %v6104
    %v7309 = vpop.f32.mrf.mxu0
    %v7310 = vadd.f32 %v7290, %v7309
    %7311 = vdwg.mxu0
    %7312 = vmatpush.msra.mxu0 %v6402
    %7313 = vmatpush.msra.mxu0 %v6399
    %7314 = vmatpush.msra.mxu0 %v6396
    %7315 = vmatpush.msra.mxu0 %v6393
    %7316 = vmatpush.msra.mxu0 %v6390
    %7317 = vmatpush.msra.mxu0 %v6387
    %7318 = vmatpush.msra.mxu0 %v6384
    %7319 = vmatpush.msra.mxu0 %v6381
    %7320 = vmatpush.msra.mxu0 %v6378
    %7321 = vmatpush.msra.mxu0 %v6375
    %7322 = vmatpush.msra.mxu0 %v6372
    %7323 = vmatpush.msra.mxu0 %v6369
    %7324 = vmatpush.msra.mxu0 %v6366
    %7325 = vmatpush.msra.mxu0 %v6363
    %7326 = vmatpush.msra.mxu0 %v6360
    %7327 = vmatpush.msra.mxu0 %v6357
    %7328 = vmatmul.f32.gmra.mxu0 %v6105
    %v7329 = vpop.f32.mrf.mxu0
    %v7330 = vadd.f32 %v7310, %v7329
    %7331 = vdwg.mxu0
    %7332 = vmatpush.msra.mxu0 %v6450
    %7333 = vmatpush.msra.mxu0 %v6447
    %7334 = vmatpush.msra.mxu0 %v6444
    %7335 = vmatpush.msra.mxu0 %v6441
    %7336 = vmatpush.msra.mxu0 %v6438
    %7337 = vmatpush.msra.mxu0 %v6435
    %7338 = vmatpush.msra.mxu0 %v6432
    %7339 = vmatpush.msra.mxu0 %v6429
    %7340 = vmatpush.msra.mxu0 %v6426
    %7341 = vmatpush.msra.mxu0 %v6423
    %7342 = vmatpush.msra.mxu0 %v6420
    %7343 = vmatpush.msra.mxu0 %v6417
    %7344 = vmatpush.msra.mxu0 %v6414
    %7345 = vmatpush.msra.mxu0 %v6411
    %7346 = vmatpush.msra.mxu0 %v6408
    %7347 = vmatpush.msra.mxu0 %v6405
    %7348 = vmatmul.f32.gmra.mxu0 %v6106
    %v7349 = vpop.f32.mrf.mxu0
    %v7350 = vadd.f32 %v7330, %v7349
    %7351 = vdwg.mxu0
    %7352 = vmatpush.msra.mxu0 %v6498
    %7353 = vmatpush.msra.mxu0 %v6495
    %7354 = vmatpush.msra.mxu0 %v6492
    %7355 = vmatpush.msra.mxu0 %v6489
    %7356 = vmatpush.msra.mxu0 %v6486
    %7357 = vmatpush.msra.mxu0 %v6483
    %7358 = vmatpush.msra.mxu0 %v6480
    %7359 = vmatpush.msra.mxu0 %v6477
    %7360 = vmatpush.msra.mxu0 %v6474
    %7361 = vmatpush.msra.mxu0 %v6471
    %7362 = vmatpush.msra.mxu0 %v6468
    %7363 = vmatpush.msra.mxu0 %v6465
    %7364 = vmatpush.msra.mxu0 %v6462
    %7365 = vmatpush.msra.mxu0 %v6459
    %7366 = vmatpush.msra.mxu0 %v6456
    %7367 = vmatpush.msra.mxu0 %v6453
    %7368 = vmatmul.f32.gmra.mxu0 %v6107
    %v7369 = vpop.f32.mrf.mxu0
    %v7370 = vadd.f32 %v7350, %v7369
    %7371 = vdwg.mxu0
    %7372 = vmatpush.msra.mxu0 %v6546
    %7373 = vmatpush.msra.mxu0 %v6543
    %7374 = vmatpush.msra.mxu0 %v6540
    %7375 = vmatpush.msra.mxu0 %v6537
    %7376 = vmatpush.msra.mxu0 %v6534
    %7377 = vmatpush.msra.mxu0 %v6531
    %7378 = vmatpush.msra.mxu0 %v6528
    %7379 = vmatpush.msra.mxu0 %v6525
    %7380 = vmatpush.msra.mxu0 %v6522
    %7381 = vmatpush.msra.mxu0 %v6519
    %7382 = vmatpush.msra.mxu0 %v6516
    %7383 = vmatpush.msra.mxu0 %v6513
    %7384 = vmatpush.msra.mxu0 %v6510
    %7385 = vmatpush.msra.mxu0 %v6507
    %7386 = vmatpush.msra.mxu0 %v6504
    %7387 = vmatpush.msra.mxu0 %v6501
    %7388 = vmatmul.f32.gmra.mxu0 %v6108
    %v7389 = vpop.f32.mrf.mxu0
    %v7390 = vadd.f32 %v7370, %v7389
    %7391 = vdwg.mxu0
    %7392 = vmatpush.msra.mxu0 %v6594
    %7393 = vmatpush.msra.mxu0 %v6591
    %7394 = vmatpush.msra.mxu0 %v6588
    %7395 = vmatpush.msra.mxu0 %v6585
    %7396 = vmatpush.msra.mxu0 %v6582
    %7397 = vmatpush.msra.mxu0 %v6579
    %7398 = vmatpush.msra.mxu0 %v6576
    %7399 = vmatpush.msra.mxu0 %v6573
    %7400 = vmatpush.msra.mxu0 %v6570
    %7401 = vmatpush.msra.mxu0 %v6567
    %7402 = vmatpush.msra.mxu0 %v6564
    %7403 = vmatpush.msra.mxu0 %v6561
    %7404 = vmatpush.msra.mxu0 %v6558
    %7405 = vmatpush.msra.mxu0 %v6555
    %7406 = vmatpush.msra.mxu0 %v6552
    %7407 = vmatpush.msra.mxu0 %v6549
    %7408 = vmatmul.f32.gmra.mxu0 %v6109
    %v7409 = vpop.f32.mrf.mxu0
    %v7410 = vadd.f32 %v7390, %v7409
    %7411 = vdwg.mxu0
    %7412 = vmatpush.msra.mxu0 %v6642
    %7413 = vmatpush.msra.mxu0 %v6639
    %7414 = vmatpush.msra.mxu0 %v6636
    %7415 = vmatpush.msra.mxu0 %v6633
    %7416 = vmatpush.msra.mxu0 %v6630
    %7417 = vmatpush.msra.mxu0 %v6627
    %7418 = vmatpush.msra.mxu0 %v6624
    %7419 = vmatpush.msra.mxu0 %v6621
    %7420 = vmatpush.msra.mxu0 %v6618
    %7421 = vmatpush.msra.mxu0 %v6615
    %7422 = vmatpush.msra.mxu0 %v6612
    %7423 = vmatpush.msra.mxu0 %v6609
    %7424 = vmatpush.msra.mxu0 %v6606
    %7425 = vmatpush.msra.mxu0 %v6603
    %7426 = vmatpush.msra.mxu0 %v6600
    %7427 = vmatpush.msra.mxu0 %v6597
    %7428 = vmatmul.f32.gmra.mxu0 %v6110
    %v7429 = vpop.f32.mrf.mxu0
    %v7430 = vadd.f32 %v7410, %v7429
    %7431 = vdwg.mxu0
    %7432 = vmatpush.msra.mxu0 %v6690
    %7433 = vmatpush.msra.mxu0 %v6687
    %7434 = vmatpush.msra.mxu0 %v6684
    %7435 = vmatpush.msra.mxu0 %v6681
    %7436 = vmatpush.msra.mxu0 %v6678
    %7437 = vmatpush.msra.mxu0 %v6675
    %7438 = vmatpush.msra.mxu0 %v6672
    %7439 = vmatpush.msra.mxu0 %v6669
    %7440 = vmatpush.msra.mxu0 %v6666
    %7441 = vmatpush.msra.mxu0 %v6663
    %7442 = vmatpush.msra.mxu0 %v6660
    %7443 = vmatpush.msra.mxu0 %v6657
    %7444 = vmatpush.msra.mxu0 %v6654
    %7445 = vmatpush.msra.mxu0 %v6651
    %7446 = vmatpush.msra.mxu0 %v6648
    %7447 = vmatpush.msra.mxu0 %v6645
    %7448 = vmatmul.f32.gmra.mxu0 %v6111
    %v7449 = vpop.f32.mrf.mxu0
    %v7450 = vadd.f32 %v7430, %v7449
    %7451 = vdwg.mxu0
    %7452 = vmatpush.msra.mxu0 %v6738
    %7453 = vmatpush.msra.mxu0 %v6735
    %7454 = vmatpush.msra.mxu0 %v6732
    %7455 = vmatpush.msra.mxu0 %v6729
    %7456 = vmatpush.msra.mxu0 %v6726
    %7457 = vmatpush.msra.mxu0 %v6723
    %7458 = vmatpush.msra.mxu0 %v6720
    %7459 = vmatpush.msra.mxu0 %v6717
    %7460 = vmatpush.msra.mxu0 %v6714
    %7461 = vmatpush.msra.mxu0 %v6711
    %7462 = vmatpush.msra.mxu0 %v6708
    %7463 = vmatpush.msra.mxu0 %v6705
    %7464 = vmatpush.msra.mxu0 %v6702
    %7465 = vmatpush.msra.mxu0 %v6699
    %7466 = vmatpush.msra.mxu0 %v6696
    %7467 = vmatpush.msra.mxu0 %v6693
    %7468 = vmatmul.f32.gmra.mxu0 %v6112
    %v7469 = vpop.f32.mrf.mxu0
    %v7470 = vadd.f32 %v7450, %v7469
    %7471 = vdwg.mxu0
    %7472 = vmatpush.msra.mxu0 %v6786
    %7473 = vmatpush.msra.mxu0 %v6783
    %7474 = vmatpush.msra.mxu0 %v6780
    %7475 = vmatpush.msra.mxu0 %v6777
    %7476 = vmatpush.msra.mxu0 %v6774
    %7477 = vmatpush.msra.mxu0 %v6771
    %7478 = vmatpush.msra.mxu0 %v6768
    %7479 = vmatpush.msra.mxu0 %v6765
    %7480 = vmatpush.msra.mxu0 %v6762
    %7481 = vmatpush.msra.mxu0 %v6759
    %7482 = vmatpush.msra.mxu0 %v6756
    %7483 = vmatpush.msra.mxu0 %v6753
    %7484 = vmatpush.msra.mxu0 %v6750
    %7485 = vmatpush.msra.mxu0 %v6747
    %7486 = vmatpush.msra.mxu0 %v6744
    %7487 = vmatpush.msra.mxu0 %v6741
    %7488 = vmatmul.f32.gmra.mxu0 %v6113
    %v7489 = vpop.f32.mrf.mxu0
    %v7490 = vadd.f32 %v7470, %v7489
    %7491 = vdwg.mxu0
    %7492 = vmatpush.msra.mxu0 %v6834
    %7493 = vmatpush.msra.mxu0 %v6831
    %7494 = vmatpush.msra.mxu0 %v6828
    %7495 = vmatpush.msra.mxu0 %v6825
    %7496 = vmatpush.msra.mxu0 %v6822
    %7497 = vmatpush.msra.mxu0 %v6819
    %7498 = vmatpush.msra.mxu0 %v6816
    %7499 = vmatpush.msra.mxu0 %v6813
    %7500 = vmatpush.msra.mxu0 %v6810
    %7501 = vmatpush.msra.mxu0 %v6807
    %7502 = vmatpush.msra.mxu0 %v6804
    %7503 = vmatpush.msra.mxu0 %v6801
    %7504 = vmatpush.msra.mxu0 %v6798
    %7505 = vmatpush.msra.mxu0 %v6795
    %7506 = vmatpush.msra.mxu0 %v6792
    %7507 = vmatpush.msra.mxu0 %v6789
    %7508 = vmatmul.f32.gmra.mxu0 %v6114
    %v7509 = vpop.f32.mrf.mxu0
    %v7510 = vadd.f32 %v7490, %v7509
    %7511 = vdwg.mxu0
    %7512 = vmatpush.msra.mxu0 %v6882
    %7513 = vmatpush.msra.mxu0 %v6879
    %7514 = vmatpush.msra.mxu0 %v6876
    %7515 = vmatpush.msra.mxu0 %v6873
    %7516 = vmatpush.msra.mxu0 %v6870
    %7517 = vmatpush.msra.mxu0 %v6867
    %7518 = vmatpush.msra.mxu0 %v6864
    %7519 = vmatpush.msra.mxu0 %v6861
    %7520 = vmatpush.msra.mxu0 %v6858
    %7521 = vmatpush.msra.mxu0 %v6855
    %7522 = vmatpush.msra.mxu0 %v6852
    %7523 = vmatpush.msra.mxu0 %v6849
    %7524 = vmatpush.msra.mxu0 %v6846
    %7525 = vmatpush.msra.mxu0 %v6843
    %7526 = vmatpush.msra.mxu0 %v6840
    %7527 = vmatpush.msra.mxu0 %v6837
    %7528 = vmatmul.f32.gmra.mxu0 %v6115
    %v7529 = vpop.f32.mrf.mxu0
    %v7530 = vadd.f32 %v7510, %v7529
    %7531 = vdwg.mxu0
    %7532 = vmatpush.msra.mxu0 %v6163
    %7533 = vmatpush.msra.mxu0 %v6160
    %7534 = vmatpush.msra.mxu0 %v6157
    %7535 = vmatpush.msra.mxu0 %v6154
    %7536 = vmatpush.msra.mxu0 %v6151
    %7537 = vmatpush.msra.mxu0 %v6148
    %7538 = vmatpush.msra.mxu0 %v6145
    %7539 = vmatpush.msra.mxu0 %v6142
    %7540 = vmatpush.msra.mxu0 %v6139
    %7541 = vmatpush.msra.mxu0 %v6136
    %7542 = vmatpush.msra.mxu0 %v6133
    %7543 = vmatpush.msra.mxu0 %v6130
    %7544 = vmatpush.msra.mxu0 %v6127
    %7545 = vmatpush.msra.mxu0 %v6124
    %7546 = vmatpush.msra.mxu0 %v6121
    %7547 = vmatpush.msra.mxu0 %v6118
    %7548 = vmatmul.f32.gmra.mxu0 %v6100
    %v7549 = vpop.f32.mrf.mxu0
    %v7550 = vadd.f32 %v6888, %v7549
    %7551 = vdwg.mxu0
    %7552 = vmatpush.msra.mxu0 %v6211
    %7553 = vmatpush.msra.mxu0 %v6208
    %7554 = vmatpush.msra.mxu0 %v6205
    %7555 = vmatpush.msra.mxu0 %v6202
    %7556 = vmatpush.msra.mxu0 %v6199
    %7557 = vmatpush.msra.mxu0 %v6196
    %7558 = vmatpush.msra.mxu0 %v6193
    %7559 = vmatpush.msra.mxu0 %v6190
    %7560 = vmatpush.msra.mxu0 %v6187
    %7561 = vmatpush.msra.mxu0 %v6184
    %7562 = vmatpush.msra.mxu0 %v6181
    %7563 = vmatpush.msra.mxu0 %v6178
    %7564 = vmatpush.msra.mxu0 %v6175
    %7565 = vmatpush.msra.mxu0 %v6172
    %7566 = vmatpush.msra.mxu0 %v6169
    %7567 = vmatpush.msra.mxu0 %v6166
    %7568 = vmatmul.f32.gmra.mxu0 %v6101
    %v7569 = vpop.f32.mrf.mxu0
    %v7570 = vadd.f32 %v7550, %v7569
    %7571 = vdwg.mxu0
    %7572 = vmatpush.msra.mxu0 %v6259
    %7573 = vmatpush.msra.mxu0 %v6256
    %7574 = vmatpush.msra.mxu0 %v6253
    %7575 = vmatpush.msra.mxu0 %v6250
    %7576 = vmatpush.msra.mxu0 %v6247
    %7577 = vmatpush.msra.mxu0 %v6244
    %7578 = vmatpush.msra.mxu0 %v6241
    %7579 = vmatpush.msra.mxu0 %v6238
    %7580 = vmatpush.msra.mxu0 %v6235
    %7581 = vmatpush.msra.mxu0 %v6232
    %7582 = vmatpush.msra.mxu0 %v6229
    %7583 = vmatpush.msra.mxu0 %v6226
    %7584 = vmatpush.msra.mxu0 %v6223
    %7585 = vmatpush.msra.mxu0 %v6220
    %7586 = vmatpush.msra.mxu0 %v6217
    %7587 = vmatpush.msra.mxu0 %v6214
    %7588 = vmatmul.f32.gmra.mxu0 %v6102
    %v7589 = vpop.f32.mrf.mxu0
    %v7590 = vadd.f32 %v7570, %v7589
    %7591 = vdwg.mxu0
    %7592 = vmatpush.msra.mxu0 %v6307
    %7593 = vmatpush.msra.mxu0 %v6304
    %7594 = vmatpush.msra.mxu0 %v6301
    %7595 = vmatpush.msra.mxu0 %v6298
    %7596 = vmatpush.msra.mxu0 %v6295
    %7597 = vmatpush.msra.mxu0 %v6292
    %7598 = vmatpush.msra.mxu0 %v6289
    %7599 = vmatpush.msra.mxu0 %v6286
    %7600 = vmatpush.msra.mxu0 %v6283
    %7601 = vmatpush.msra.mxu0 %v6280
    %7602 = vmatpush.msra.mxu0 %v6277
    %7603 = vmatpush.msra.mxu0 %v6274
    %7604 = vmatpush.msra.mxu0 %v6271
    %7605 = vmatpush.msra.mxu0 %v6268
    %7606 = vmatpush.msra.mxu0 %v6265
    %7607 = vmatpush.msra.mxu0 %v6262
    %7608 = vmatmul.f32.gmra.mxu0 %v6103
    %v7609 = vpop.f32.mrf.mxu0
    %v7610 = vadd.f32 %v7590, %v7609
    %7611 = vdwg.mxu0
    %7612 = vmatpush.msra.mxu0 %v6355
    %7613 = vmatpush.msra.mxu0 %v6352
    %7614 = vmatpush.msra.mxu0 %v6349
    %7615 = vmatpush.msra.mxu0 %v6346
    %7616 = vmatpush.msra.mxu0 %v6343
    %7617 = vmatpush.msra.mxu0 %v6340
    %7618 = vmatpush.msra.mxu0 %v6337
    %7619 = vmatpush.msra.mxu0 %v6334
    %7620 = vmatpush.msra.mxu0 %v6331
    %7621 = vmatpush.msra.mxu0 %v6328
    %7622 = vmatpush.msra.mxu0 %v6325
    %7623 = vmatpush.msra.mxu0 %v6322
    %7624 = vmatpush.msra.mxu0 %v6319
    %7625 = vmatpush.msra.mxu0 %v6316
    %7626 = vmatpush.msra.mxu0 %v6313
    %7627 = vmatpush.msra.mxu0 %v6310
    %7628 = vmatmul.f32.gmra.mxu0 %v6104
    %v7629 = vpop.f32.mrf.mxu0
    %v7630 = vadd.f32 %v7610, %v7629
    %7631 = vdwg.mxu0
    %7632 = vmatpush.msra.mxu0 %v6403
    %7633 = vmatpush.msra.mxu0 %v6400
    %7634 = vmatpush.msra.mxu0 %v6397
    %7635 = vmatpush.msra.mxu0 %v6394
    %7636 = vmatpush.msra.mxu0 %v6391
    %7637 = vmatpush.msra.mxu0 %v6388
    %7638 = vmatpush.msra.mxu0 %v6385
    %7639 = vmatpush.msra.mxu0 %v6382
    %7640 = vmatpush.msra.mxu0 %v6379
    %7641 = vmatpush.msra.mxu0 %v6376
    %7642 = vmatpush.msra.mxu0 %v6373
    %7643 = vmatpush.msra.mxu0 %v6370
    %7644 = vmatpush.msra.mxu0 %v6367
    %7645 = vmatpush.msra.mxu0 %v6364
    %7646 = vmatpush.msra.mxu0 %v6361
    %7647 = vmatpush.msra.mxu0 %v6358
    %7648 = vmatmul.f32.gmra.mxu0 %v6105
    %v7649 = vpop.f32.mrf.mxu0
    %v7650 = vadd.f32 %v7630, %v7649
    %7651 = vdwg.mxu0
    %7652 = vmatpush.msra.mxu0 %v6451
    %7653 = vmatpush.msra.mxu0 %v6448
    %7654 = vmatpush.msra.mxu0 %v6445
    %7655 = vmatpush.msra.mxu0 %v6442
    %7656 = vmatpush.msra.mxu0 %v6439
    %7657 = vmatpush.msra.mxu0 %v6436
    %7658 = vmatpush.msra.mxu0 %v6433
    %7659 = vmatpush.msra.mxu0 %v6430
    %7660 = vmatpush.msra.mxu0 %v6427
    %7661 = vmatpush.msra.mxu0 %v6424
    %7662 = vmatpush.msra.mxu0 %v6421
    %7663 = vmatpush.msra.mxu0 %v6418
    %7664 = vmatpush.msra.mxu0 %v6415
    %7665 = vmatpush.msra.mxu0 %v6412
    %7666 = vmatpush.msra.mxu0 %v6409
    %7667 = vmatpush.msra.mxu0 %v6406
    %7668 = vmatmul.f32.gmra.mxu0 %v6106
    %v7669 = vpop.f32.mrf.mxu0
    %v7670 = vadd.f32 %v7650, %v7669
    %7671 = vdwg.mxu0
    %7672 = vmatpush.msra.mxu0 %v6499
    %7673 = vmatpush.msra.mxu0 %v6496
    %7674 = vmatpush.msra.mxu0 %v6493
    %7675 = vmatpush.msra.mxu0 %v6490
    %7676 = vmatpush.msra.mxu0 %v6487
    %7677 = vmatpush.msra.mxu0 %v6484
    %7678 = vmatpush.msra.mxu0 %v6481
    %7679 = vmatpush.msra.mxu0 %v6478
    %7680 = vmatpush.msra.mxu0 %v6475
    %7681 = vmatpush.msra.mxu0 %v6472
    %7682 = vmatpush.msra.mxu0 %v6469
    %7683 = vmatpush.msra.mxu0 %v6466
    %7684 = vmatpush.msra.mxu0 %v6463
    %7685 = vmatpush.msra.mxu0 %v6460
    %7686 = vmatpush.msra.mxu0 %v6457
    %7687 = vmatpush.msra.mxu0 %v6454
    %7688 = vmatmul.f32.gmra.mxu0 %v6107
    %v7689 = vpop.f32.mrf.mxu0
    %v7690 = vadd.f32 %v7670, %v7689
    %7691 = vdwg.mxu0
    %7692 = vmatpush.msra.mxu0 %v6547
    %7693 = vmatpush.msra.mxu0 %v6544
    %7694 = vmatpush.msra.mxu0 %v6541
    %7695 = vmatpush.msra.mxu0 %v6538
    %7696 = vmatpush.msra.mxu0 %v6535
    %7697 = vmatpush.msra.mxu0 %v6532
    %7698 = vmatpush.msra.mxu0 %v6529
    %7699 = vmatpush.msra.mxu0 %v6526
    %7700 = vmatpush.msra.mxu0 %v6523
    %7701 = vmatpush.msra.mxu0 %v6520
    %7702 = vmatpush.msra.mxu0 %v6517
    %7703 = vmatpush.msra.mxu0 %v6514
    %7704 = vmatpush.msra.mxu0 %v6511
    %7705 = vmatpush.msra.mxu0 %v6508
    %7706 = vmatpush.msra.mxu0 %v6505
    %7707 = vmatpush.msra.mxu0 %v6502
    %7708 = vmatmul.f32.gmra.mxu0 %v6108
    %v7709 = vpop.f32.mrf.mxu0
    %v7710 = vadd.f32 %v7690, %v7709
    %7711 = vdwg.mxu0
    %7712 = vmatpush.msra.mxu0 %v6595
    %7713 = vmatpush.msra.mxu0 %v6592
    %7714 = vmatpush.msra.mxu0 %v6589
    %7715 = vmatpush.msra.mxu0 %v6586
    %7716 = vmatpush.msra.mxu0 %v6583
    %7717 = vmatpush.msra.mxu0 %v6580
    %7718 = vmatpush.msra.mxu0 %v6577
    %7719 = vmatpush.msra.mxu0 %v6574
    %7720 = vmatpush.msra.mxu0 %v6571
    %7721 = vmatpush.msra.mxu0 %v6568
    %7722 = vmatpush.msra.mxu0 %v6565
    %7723 = vmatpush.msra.mxu0 %v6562
    %7724 = vmatpush.msra.mxu0 %v6559
    %7725 = vmatpush.msra.mxu0 %v6556
    %7726 = vmatpush.msra.mxu0 %v6553
    %7727 = vmatpush.msra.mxu0 %v6550
    %7728 = vmatmul.f32.gmra.mxu0 %v6109
    %v7729 = vpop.f32.mrf.mxu0
    %v7730 = vadd.f32 %v7710, %v7729
    %7731 = vdwg.mxu0
    %7732 = vmatpush.msra.mxu0 %v6643
    %7733 = vmatpush.msra.mxu0 %v6640
    %7734 = vmatpush.msra.mxu0 %v6637
    %7735 = vmatpush.msra.mxu0 %v6634
    %7736 = vmatpush.msra.mxu0 %v6631
    %7737 = vmatpush.msra.mxu0 %v6628
    %7738 = vmatpush.msra.mxu0 %v6625
    %7739 = vmatpush.msra.mxu0 %v6622
    %7740 = vmatpush.msra.mxu0 %v6619
    %7741 = vmatpush.msra.mxu0 %v6616
    %7742 = vmatpush.msra.mxu0 %v6613
    %7743 = vmatpush.msra.mxu0 %v6610
    %7744 = vmatpush.msra.mxu0 %v6607
    %7745 = vmatpush.msra.mxu0 %v6604
    %7746 = vmatpush.msra.mxu0 %v6601
    %7747 = vmatpush.msra.mxu0 %v6598
    %7748 = vmatmul.f32.gmra.mxu0 %v6110
    %v7749 = vpop.f32.mrf.mxu0
    %v7750 = vadd.f32 %v7730, %v7749
    %7751 = vdwg.mxu0
    %7752 = vmatpush.msra.mxu0 %v6691
    %7753 = vmatpush.msra.mxu0 %v6688
    %7754 = vmatpush.msra.mxu0 %v6685
    %7755 = vmatpush.msra.mxu0 %v6682
    %7756 = vmatpush.msra.mxu0 %v6679
    %7757 = vmatpush.msra.mxu0 %v6676
    %7758 = vmatpush.msra.mxu0 %v6673
    %7759 = vmatpush.msra.mxu0 %v6670
    %7760 = vmatpush.msra.mxu0 %v6667
    %7761 = vmatpush.msra.mxu0 %v6664
    %7762 = vmatpush.msra.mxu0 %v6661
    %7763 = vmatpush.msra.mxu0 %v6658
    %7764 = vmatpush.msra.mxu0 %v6655
    %7765 = vmatpush.msra.mxu0 %v6652
    %7766 = vmatpush.msra.mxu0 %v6649
    %7767 = vmatpush.msra.mxu0 %v6646
    %7768 = vmatmul.f32.gmra.mxu0 %v6111
    %v7769 = vpop.f32.mrf.mxu0
    %v7770 = vadd.f32 %v7750, %v7769
    %7771 = vdwg.mxu0
    %7772 = vmatpush.msra.mxu0 %v6739
    %7773 = vmatpush.msra.mxu0 %v6736
    %7774 = vmatpush.msra.mxu0 %v6733
    %7775 = vmatpush.msra.mxu0 %v6730
    %7776 = vmatpush.msra.mxu0 %v6727
    %7777 = vmatpush.msra.mxu0 %v6724
    %7778 = vmatpush.msra.mxu0 %v6721
    %7779 = vmatpush.msra.mxu0 %v6718
    %7780 = vmatpush.msra.mxu0 %v6715
    %7781 = vmatpush.msra.mxu0 %v6712
    %7782 = vmatpush.msra.mxu0 %v6709
    %7783 = vmatpush.msra.mxu0 %v6706
    %7784 = vmatpush.msra.mxu0 %v6703
    %7785 = vmatpush.msra.mxu0 %v6700
    %7786 = vmatpush.msra.mxu0 %v6697
    %7787 = vmatpush.msra.mxu0 %v6694
    %7788 = vmatmul.f32.gmra.mxu0 %v6112
    %v7789 = vpop.f32.mrf.mxu0
    %v7790 = vadd.f32 %v7770, %v7789
    %7791 = vdwg.mxu0
    %7792 = vmatpush.msra.mxu0 %v6787
    %7793 = vmatpush.msra.mxu0 %v6784
    %7794 = vmatpush.msra.mxu0 %v6781
    %7795 = vmatpush.msra.mxu0 %v6778
    %7796 = vmatpush.msra.mxu0 %v6775
    %7797 = vmatpush.msra.mxu0 %v6772
    %7798 = vmatpush.msra.mxu0 %v6769
    %7799 = vmatpush.msra.mxu0 %v6766
    %7800 = vmatpush.msra.mxu0 %v6763
    %7801 = vmatpush.msra.mxu0 %v6760
    %7802 = vmatpush.msra.mxu0 %v6757
    %7803 = vmatpush.msra.mxu0 %v6754
    %7804 = vmatpush.msra.mxu0 %v6751
    %7805 = vmatpush.msra.mxu0 %v6748
    %7806 = vmatpush.msra.mxu0 %v6745
    %7807 = vmatpush.msra.mxu0 %v6742
    %7808 = vmatmul.f32.gmra.mxu0 %v6113
    %v7809 = vpop.f32.mrf.mxu0
    %v7810 = vadd.f32 %v7790, %v7809
    %7811 = vdwg.mxu0
    %7812 = vmatpush.msra.mxu0 %v6835
    %7813 = vmatpush.msra.mxu0 %v6832
    %7814 = vmatpush.msra.mxu0 %v6829
    %7815 = vmatpush.msra.mxu0 %v6826
    %7816 = vmatpush.msra.mxu0 %v6823
    %7817 = vmatpush.msra.mxu0 %v6820
    %7818 = vmatpush.msra.mxu0 %v6817
    %7819 = vmatpush.msra.mxu0 %v6814
    %7820 = vmatpush.msra.mxu0 %v6811
    %7821 = vmatpush.msra.mxu0 %v6808
    %7822 = vmatpush.msra.mxu0 %v6805
    %7823 = vmatpush.msra.mxu0 %v6802
    %7824 = vmatpush.msra.mxu0 %v6799
    %7825 = vmatpush.msra.mxu0 %v6796
    %7826 = vmatpush.msra.mxu0 %v6793
    %7827 = vmatpush.msra.mxu0 %v6790
    %7828 = vmatmul.f32.gmra.mxu0 %v6114
    %v7829 = vpop.f32.mrf.mxu0
    %v7830 = vadd.f32 %v7810, %v7829
    %7831 = vdwg.mxu0
    %7832 = vmatpush.msra.mxu0 %v6883
    %7833 = vmatpush.msra.mxu0 %v6880
    %7834 = vmatpush.msra.mxu0 %v6877
    %7835 = vmatpush.msra.mxu0 %v6874
    %7836 = vmatpush.msra.mxu0 %v6871
    %7837 = vmatpush.msra.mxu0 %v6868
    %7838 = vmatpush.msra.mxu0 %v6865
    %7839 = vmatpush.msra.mxu0 %v6862
    %7840 = vmatpush.msra.mxu0 %v6859
    %7841 = vmatpush.msra.mxu0 %v6856
    %7842 = vmatpush.msra.mxu0 %v6853
    %7843 = vmatpush.msra.mxu0 %v6850
    %7844 = vmatpush.msra.mxu0 %v6847
    %7845 = vmatpush.msra.mxu0 %v6844
    %7846 = vmatpush.msra.mxu0 %v6841
    %7847 = vmatpush.msra.mxu0 %v6838
    %7848 = vmatmul.f32.gmra.mxu0 %v6115
    %v7849 = vpop.f32.mrf.mxu0
    %v7850 = vadd.f32 %v7830, %v7849
    %7851 = vdwg.mxu0
    %7852 = vst [vmem:[#allocation17] sm:$0xff] %v7210
    %7853 = vst [vmem:[#allocation17 + $0x8] sm:$0xff] %v7530
    %7854 = vst [vmem:[#allocation17 + $0x10] sm:$0xff] %v7850
    // Predicated region
    $region74: #{tpu_custom_call.1} parent=1 // pred_check
      _
    $region75: #{tpu_custom_call.1} parent=1 // pred_check_branch
      %7856 = sbr.rel (0) target = $region77
    $region76: #{tpu_custom_call.1} parent=1 // pred_region
      %7858 = vsyncadd [#allocation4], 0
      %s7860 = sshll.u32 [#allocation17], 4
      %s7861 = int_to_ptr.vmem [resolvable:$true] %s7860
      %s7862 = sshll.u32 %s9, 4
      %s7863 = int_to_ptr.hbm [resolvable:$true] %s7862
      %7865 = dma.vmem_to_hbm [thread:$0]  %s7861, 384, %s7863, [#allocation4]
    $region77: #{tpu_custom_call.1} parent=1 // pred_fallthru
      _
    // Predicated region
    $region78: #{tpu_custom_call.1} parent=1 // pred_check
      _
    $region79: #{tpu_custom_call.1} parent=1 // pred_check_branch
      %7867 = sbr.rel (0) target = $region81
    $region80: #{tpu_custom_call.1} parent=1 // pred_region
      %7869 = dma.done [#allocation4], 384
    $region81: #{tpu_custom_call.1} parent=1 // pred_fallthru
      _
    %7870 = vsyncpa [#allocation3], 1
    %7871 = vsyncpa [#allocation6], 1
    %7872 = vsyncpa [#allocation9], 1
    %7873 = vsyncpa [#allocation12], 1
    %7874 = vsyncpa [#allocation15], 1
    %7875 = vsyncpa [#allocation4], 1

</llo_original>
